<compile_context>
chip_gen: v7x
topology: tpu7x:2x2x1
jax: 0.10.0
libtpu: 0.0.40
codegen_flags: <defaults>
</compile_context>

<pallas_src>
import jax
import jax.numpy as jnp
from jax import lax
from jax.experimental import pallas as pl
from jax.experimental.pallas import tpu as pltpu


_LPAD = 8  # left zero margin inside the padded scratch; multiple of 8 so the
           # interior (image) stores are sublane-aligned.


def _round_up(x, m):
    return (x + m - 1) // m * m


def _const_spec(block_shape):
    """BlockSpec for an operand that is identical at every grid step.

    Requests pipeline_mode=pl.Buffered(1) (single-buffered) when available so
    constant weights / BN vectors are not duplicated in VMEM by the default
    double-buffering (matters for large C; perf-review item 7)."""
    zeros = (0,) * len(block_shape)
    index_map = lambda i: zeros
    try:
        return pl.BlockSpec(block_shape, index_map, pipeline_mode=pl.Buffered(1))
    except (TypeError, AttributeError):   # older jax without pipeline_mode/Buffered
        return pl.BlockSpec(block_shape, index_map)


def _device_hints():
    """Returns (num_tensorcores, vmem budget for block picking, vmem_limit_bytes)."""
    try:
        kind = jax.devices()[0].device_kind.lower()
    except Exception:
        kind = ""
    if "7" in kind:                # v7x: 2 TensorCores/chip, 64 MiB VMEM per core
        return 2, 36 << 20, 56 << 20
    if "v6" in kind:               # v6e: 1 TensorCore, 128 MiB VMEM
        return 1, 80 << 20, 110 << 20
    if "v5" in kind:               # v5e: 1 TensorCore, 128 MiB VMEM (16 MiB default scoped)
        return 1, 64 << 20, 100 << 20
    return 1, 32 << 20, None


def _pick_block_b(n, h, w, c, cp, num_cores, vmem_budget_bytes, matmul_dtype):
    """Largest batch-block that divides N, fits a conservative VMEM budget and
    (on multi-TensorCore chips) keeps the grid evenly divisible across cores."""
    mm_bytes = jnp.dtype(matmul_dtype).itemsize
    per_img = (
        2 * h * w * c * 4                        # input block (double-buffered)
        + 2 * h * w * cp * 4                     # lane-padded output block (double-buffered)
        + (h + 2) * (_LPAD + w + 1) * c * 4      # padded VMEM scratch (f32)
        + h * w * 9 * c * (4 + mm_bytes)         # im2col taps (f32) + matmul-dtype copy
        + h * w * cp * 4                         # matmul / elementwise result
    )
    best = 1
    for b in range(1, n + 1):
        if n % b:
            continue
        if b * per_img > vmem_budget_bytes:
            break
        g = n // b
        if num_cores > 1 and n >= num_cores:
            if g < num_cores:          # would leave a TensorCore idle
                continue
            if g % num_cores != 0:     # unbalanced work across TensorCores
                continue
        best = b
    return best


def _basic_block_kernel(x_ref, w1_ref, t1_ref, w2_ref, t2_ref, o_ref, p_ref):
    """Fused conv3x3+BN+ReLU+conv3x3+BN+residual+ReLU for a block of B images.

    x_ref:  (B, H, W, C)            input block (NHWC, f32)
    w1_ref: (9C, C)                 conv1 weights, im2col layout, BN1 scale folded in
    t1_ref: (1, C)                  folded BN1 shift (conv1 bias folded in)
    w2_ref: (9C, Cp)                conv2 weights, C_out zero-padded to Cp lanes
    t2_ref: (1, Cp)                 folded BN2 shift (zero-padded)
    o_ref:  (B*H*W, Cp)             lane-dense flat output block
    p_ref:  (B, H+2, LPAD+W+1, C)   VMEM scratch holding the zero-padded image
    """
    B, H, W, C = x_ref.shape
    Cp = o_ref.shape[-1]
    Wp = p_ref.shape[2]
    lpad = Wp - W - 1                 # == _LPAD
    M = B * H * W
    mm_dtype = w1_ref.dtype
    f32 = jnp.float32

    # ---- zero only the border strips (interior is fully overwritten below) ----
    zrow = jnp.zeros((B, 1, Wp, C), p_ref.dtype)
    p_ref[:, 0:1, :, :] = zrow
    p_ref[:, H + 1:H + 2, :, :] = zrow
    p_ref[:, 1:H + 1, 0:lpad, :] = jnp.zeros((B, H, lpad, C), p_ref.dtype)
    p_ref[:, 1:H + 1, lpad + W:lpad + W + 1, :] = jnp.zeros((B, H, 1, C), p_ref.dtype)

    def conv3x3(w_ref):
        # im2col: 3 ref-sliced W-strips (one per kw), free leading-axis kh
        # slices, lane-concat of the 9 taps, then ONE MXU matmul.
        strips = [p_ref[:, :, lpad - 1 + kw: lpad - 1 + kw + W, :]   # (B, H+2, W, C)
                  for kw in range(3)]
        taps = [strips[kw][:, kh:kh + H]                              # (B, H, W, C) free slice
                for kh in range(3) for kw in range(3)]
        patches = jnp.concatenate(taps, axis=-1)                      # (B, H, W, 9C)
        patches = patches.reshape(M, 9 * C).astype(mm_dtype)          # free reshape (W % 8 == 0)
        if jnp.dtype(mm_dtype) == jnp.dtype(jnp.float32):
            return jnp.dot(patches, w_ref[...], preferred_element_type=f32,
                           precision=lax.Precision.HIGHEST)
        return jnp.dot(patches, w_ref[...], preferred_element_type=f32)

    xv = x_ref[...]                                                   # (B, H, W, C) f32
    p_ref[:, 1:H + 1, lpad:lpad + W, :] = xv

    # ---- conv1 (BN1 scale folded into weights) -> shift -> ReLU ----
    y1 = jnp.maximum(conv3x3(w1_ref) + t1_ref[...], 0.0)             # (M, C) f32
    # re-pad the intermediate (borders are still zero) and run conv2
    p_ref[:, 1:H + 1, lpad:lpad + W, :] = y1.reshape(B, H, W, C)

    # ---- conv2 (BN2 folded, C_out padded to Cp for a lane-dense store) ----
    y2 = conv3x3(w2_ref) + t2_ref[...]                                # (M, Cp) f32

    # ---- residual (exact f32, zero-padded on the lane axis) + ReLU ----
    res = xv.reshape(M, C)
    if Cp > C:
        res = jnp.concatenate([res, jnp.zeros((M, Cp - C), f32)], axis=-1)
    o_ref[...] = jnp.maximum(y2 + res, 0.0)


def basic_block_forward(x_nchw, params, *, eps=1e-5, block_b=None,
                        matmul_dtype=jnp.bfloat16):
    """x_nchw: (N, C, H, W) float32.  params = (w1, b1, g1, be1, m1, v1,
    w2, b2, g2, be2, m2, v2) with PyTorch layouts (conv weight OIHW, BN vectors
    of length C).  Returns (N, C, H, W)."""
    w1, b1, g1, be1, m1, v1, w2, b2, g2, be2, m2, v2 = params
    N, C_in, H, W = x_nchw.shape
    C = int(w1.shape[0])
    assert C_in == C, "residual add in BasicBlock requires filter_in == filter_out"
    assert W % 8 == 0, "W must be a multiple of 8 (sublane tile)"

    Cp = _round_up(C, 128)   # lane-dense output width

    # Fold conv bias + eval-mode BatchNorm into the weights (scale) and a shift.
    s1 = (g1 / jnp.sqrt(v1 + eps)).astype(jnp.float32)
    t1 = ((b1 - m1) * s1 + be1).astype(jnp.float32)
    s2 = (g2 / jnp.sqrt(v2 + eps)).astype(jnp.float32)
    t2 = ((b2 - m2) * s2 + be2).astype(jnp.float32)

    def prep_w(w, s, c_out_pad):
        # OIHW -> (kh, kw, C_in, C_out) -> (9*C_in, C_out), scaled by the BN
        # scale along C_out, optionally zero-padded to c_out_pad lanes.
        wk = jnp.transpose(w, (2, 3, 1, 0)).reshape(9 * C, C).astype(jnp.float32)
        wk = wk * s[None, :]
        if c_out_pad > C:
            wk = jnp.pad(wk, ((0, 0), (0, c_out_pad - C)))
        return wk.astype(matmul_dtype)

    w1_k = prep_w(w1, s1, C)          # (9C, C)
    w2_k = prep_w(w2, s2, Cp)         # (9C, Cp)
    t1_r = t1.reshape(1, C)
    t2_r = jnp.pad(t2, (0, Cp - C)).reshape(1, Cp)

    # NCHW -> NHWC (channels on the TPU lane axis).
    x_nhwc = jnp.transpose(x_nchw, (0, 2, 3, 1)).astype(jnp.float32)

    num_cores, vmem_budget, vmem_limit = _device_hints()
    if block_b is None:
        block_b = _pick_block_b(N, H, W, C, Cp, num_cores, vmem_budget, matmul_dtype)
    assert N % block_b == 0
    grid_n = N // block_b

    out_flat = pl.pallas_call(
        _basic_block_kernel,
        out_shape=jax.ShapeDtypeStruct((N * H * W, Cp), jnp.float32),
        grid_spec=pltpu.PrefetchScalarGridSpec(
            num_scalar_prefetch=0,
            grid=(grid_n,),
            in_specs=[
                pl.BlockSpec((block_b, H, W, C), lambda i: (i, 0, 0, 0)),
                _const_spec((9 * C, C)),
                _const_spec((1, C)),
                _const_spec((9 * C, Cp)),
                _const_spec((1, Cp)),
            ],
            out_specs=pl.BlockSpec((block_b * H * W, Cp), lambda i: (i, 0)),
            scratch_shapes=[
                pltpu.VMEM((block_b, H + 2, _LPAD + W + 1, C), jnp.float32)],
        ),
        compiler_params=pltpu.CompilerParams(
            dimension_semantics=("parallel",),
            vmem_limit_bytes=vmem_limit),
    )(x_nhwc, w1_k, t1_r, w2_k, t2_r)

    # (N*H*W, Cp) -> drop the lane padding -> (N, H, W, C) -> NCHW.
    out = out_flat[:, :C].reshape(N, H, W, C)
    return jnp.transpose(out, (0, 3, 1, 2))


def _reference(x, params, *, eps=1e-5):
    """Pure-JAX reference mirroring the PyTorch BasicBlock forward (NCHW,
    eval-mode BatchNorm with running statistics)."""
    w1, b1, g1, be1, m1, v1, w2, b2, g2, be2, m2, v2 = params

    def conv(z, w, b):
        y = lax.conv_general_dilated(
            z, w, window_strides=(1, 1), padding=((1, 1), (1, 1)),
            dimension_numbers=("NCHW", "OIHW", "NCHW"),
            precision=lax.Precision.HIGHEST)
        return y + b[None, :, None, None]

    def bn(z, g, be, m, v):
        return (z - m[None, :, None, None]) * (
            g[None, :, None, None] / jnp.sqrt(v[None, :, None, None] + eps)
        ) + be[None, :, None, None]

    out = jax.nn.relu(bn(conv(x, w1, b1), g1, be1, m1, v1))
    out = bn(conv(out, w2, b2), g2, be2, m2, v2)
    return jax.nn.relu(out + x)


if __name__ == "__main__":
    N, C, H, W = 2, 8, 16, 16

    key = jax.random.PRNGKey(0)
    ks = jax.random.split(key, 14)

    x = jax.random.normal(ks[0], (N, C, H, W), jnp.float32)
    # conv1 / conv2: PyTorch-layout weights (C_out, C_in, 3, 3) + bias
    w1 = jax.random.normal(ks[1], (C, C, 3, 3), jnp.float32) * 0.2
    b1 = jax.random.normal(ks[2], (C,), jnp.float32) * 0.1
    w2 = jax.random.normal(ks[3], (C, C, 3, 3), jnp.float32) * 0.2
    b2 = jax.random.normal(ks[4], (C,), jnp.float32) * 0.1
    # BatchNorm affine params + running statistics (eval-mode forward)
    g1 = 1.0 + 0.1 * jax.random.normal(ks[5], (C,), jnp.float32)
    be1 = 0.1 * jax.random.normal(ks[6], (C,), jnp.float32)
    m1 = 0.1 * jax.random.normal(ks[7], (C,), jnp.float32)
    v1 = 0.5 + jnp.abs(jax.random.normal(ks[8], (C,), jnp.float32))
    g2 = 1.0 + 0.1 * jax.random.normal(ks[9], (C,), jnp.float32)
    be2 = 0.1 * jax.random.normal(ks[10], (C,), jnp.float32)
    m2 = 0.1 * jax.random.normal(ks[11], (C,), jnp.float32)
    v2 = 0.5 + jnp.abs(jax.random.normal(ks[12], (C,), jnp.float32))

    params = (w1, b1, g1, be1, m1, v1, w2, b2, g2, be2, m2, v2)
    ref = _reference(x, params)

    # --- f32-matmul path: tight validation of the fused math (folding, padding,
    #     tap indexing, residual) ---
    out_f32 = jax.block_until_ready(
        basic_block_forward(x, params, matmul_dtype=jnp.float32))
    assert out_f32.shape == (N, C, H, W), out_f32.shape
    err_f32 = float(jnp.max(jnp.abs(out_f32 - ref)))
    assert err_f32 < 1e-2, err_f32

    # --- default bf16-matmul path (perf review): looser tolerance for bf16
    #     operand rounding across the two convs ---
    out_bf = jax.block_until_ready(basic_block_forward(x, params))
    err_bf = float(jnp.max(jnp.abs(out_bf - ref)))
    assert out_bf.shape == (N, C, H, W), out_bf.shape
    assert err_bf < 1.5e-1, err_bf

    # --- batched-per-step / multi-step grid path: N=4 ---
    x4 = jax.random.normal(ks[13], (4, C, H, W), jnp.float32)
    out4 = jax.block_until_ready(basic_block_forward(x4, params))
    ref4 = _reference(x4, params)
    err4 = float(jnp.max(jnp.abs(out4 - ref4)))
    assert out4.shape == (4, C, H, W), out4.shape
    assert err4 < 1.5e-1, err4

    print("KERNEL_OK")
</pallas_src>

<mosaic_0001>
module attributes {stable_mosaic.version = 11 : i64} {
  func.func @_basic_block_kernel(%arg0: i32, %arg1: memref<2x16x16x8xf32, #tpu.memory_space<vmem>>, %arg2: memref<72x8xf32, #tpu.memory_space<vmem>>, %arg3: memref<1x8xf32, #tpu.memory_space<vmem>>, %arg4: memref<72x128xf32, #tpu.memory_space<vmem>>, %arg5: memref<1x128xf32, #tpu.memory_space<vmem>>, %arg6: memref<512x128xf32, #tpu.memory_space<vmem>>, %arg7: memref<2x18x25x8xf32, #tpu.memory_space<vmem>>) attributes {dimension_semantics = [#tpu.dimension_semantics<parallel>], iteration_bounds = array<i64: 1>, scalar_prefetch = 0 : i64, scratch_operands = 1 : i64, tpu.core_type = #tpu.core_type<tc>, window_params = [{transform_indices = @transform_0, window_bounds = array<i64: 2, 16, 16, 8>}, {pipeline_mode = #tpu.pipeline_mode<synchronous>, transform_indices = @transform_1, window_bounds = array<i64: 72, 8>}, {pipeline_mode = #tpu.pipeline_mode<synchronous>, transform_indices = @transform_2, window_bounds = array<i64: 1, 8>}, {pipeline_mode = #tpu.pipeline_mode<synchronous>, transform_indices = @transform_3, window_bounds = array<i64: 72, 128>}, {pipeline_mode = #tpu.pipeline_mode<synchronous>, transform_indices = @transform_4, window_bounds = array<i64: 1, 128>}, {transform_indices = @transform_5, window_bounds = array<i64: 512, 128>}]} {
    %cst = arith.constant 0.000000e+00 : f32
    %0 = vector.broadcast %cst : f32 to vector<2x1x25x8xf32>
    %c0 = arith.constant 0 : index
    %c0_0 = arith.constant 0 : index
    %c0_1 = arith.constant 0 : index
    %c0_2 = arith.constant 0 : index
    %1 = vector.load %arg7[%c0, %c0_0, %c0_1, %c0_2] : memref<2x18x25x8xf32, #tpu.memory_space<vmem>>, vector<2x1x25x8xf32>
    tpu.vector_store %arg7[%c0, %c0_0, %c0_1, %c0_2], %0 {strides = array<i32>} : memref<2x18x25x8xf32, #tpu.memory_space<vmem>>, vector<2x1x25x8xf32>,
    %c0_3 = arith.constant 0 : index
    %c17 = arith.constant 17 : index
    %c0_4 = arith.constant 0 : index
    %c0_5 = arith.constant 0 : index
    %2 = vector.load %arg7[%c0_3, %c17, %c0_4, %c0_5] : memref<2x18x25x8xf32, #tpu.memory_space<vmem>>, vector<2x1x25x8xf32>
    tpu.vector_store %arg7[%c0_3, %c17, %c0_4, %c0_5], %0 {strides = array<i32>} : memref<2x18x25x8xf32, #tpu.memory_space<vmem>>, vector<2x1x25x8xf32>,
    %cst_6 = arith.constant 0.000000e+00 : f32
    %3 = vector.broadcast %cst_6 : f32 to vector<2x16x8x8xf32>
    %c0_7 = arith.constant 0 : index
    %c1 = arith.constant 1 : index
    %c0_8 = arith.constant 0 : index
    %c0_9 = arith.constant 0 : index
    %4 = vector.load %arg7[%c0_7, %c1, %c0_8, %c0_9] : memref<2x18x25x8xf32, #tpu.memory_space<vmem>>, vector<2x16x8x8xf32>
    tpu.vector_store %arg7[%c0_7, %c1, %c0_8, %c0_9], %3 {strides = array<i32>} : memref<2x18x25x8xf32, #tpu.memory_space<vmem>>, vector<2x16x8x8xf32>,
    %cst_10 = arith.constant 0.000000e+00 : f32
    %5 = vector.broadcast %cst_10 : f32 to vector<2x16x1x8xf32>
    %c0_11 = arith.constant 0 : index
    %c1_12 = arith.constant 1 : index
    %c24 = arith.constant 24 : index
    %c0_13 = arith.constant 0 : index
    %6 = vector.load %arg7[%c0_11, %c1_12, %c24, %c0_13] : memref<2x18x25x8xf32, #tpu.memory_space<vmem>>, vector<2x16x1x8xf32>
    tpu.vector_store %arg7[%c0_11, %c1_12, %c24, %c0_13], %5 {strides = array<i32>} : memref<2x18x25x8xf32, #tpu.memory_space<vmem>>, vector<2x16x1x8xf32>,
    %c0_14 = arith.constant 0 : index
    %c0_15 = arith.constant 0 : index
    %c0_16 = arith.constant 0 : index
    %c0_17 = arith.constant 0 : index
    %7 = vector.load %arg1[%c0_14, %c0_15, %c0_16, %c0_17] : memref<2x16x16x8xf32, #tpu.memory_space<vmem>>, vector<2x16x16x8xf32>
    %c0_18 = arith.constant 0 : index
    %c1_19 = arith.constant 1 : index
    %c8 = arith.constant 8 : index
    %c0_20 = arith.constant 0 : index
    %8 = vector.load %arg7[%c0_18, %c1_19, %c8, %c0_20] : memref<2x18x25x8xf32, #tpu.memory_space<vmem>>, vector<2x16x16x8xf32>
    tpu.vector_store %arg7[%c0_18, %c1_19, %c8, %c0_20], %7 {strides = array<i32>} : memref<2x18x25x8xf32, #tpu.memory_space<vmem>>, vector<2x16x16x8xf32>,
    %c0_21 = arith.constant 0 : index
    %c0_22 = arith.constant 0 : index
    %c7 = arith.constant 7 : index
    %c0_23 = arith.constant 0 : index
    %9 = vector.load %arg7[%c0_21, %c0_22, %c7, %c0_23] : memref<2x18x25x8xf32, #tpu.memory_space<vmem>>, vector<2x18x16x8xf32>
    %c0_24 = arith.constant 0 : index
    %c0_25 = arith.constant 0 : index
    %c8_26 = arith.constant 8 : index
    %c0_27 = arith.constant 0 : index
    %10 = vector.load %arg7[%c0_24, %c0_25, %c8_26, %c0_27] : memref<2x18x25x8xf32, #tpu.memory_space<vmem>>, vector<2x18x16x8xf32>
    %c0_28 = arith.constant 0 : index
    %c0_29 = arith.constant 0 : index
    %c9 = arith.constant 9 : index
    %c0_30 = arith.constant 0 : index
    %11 = vector.load %arg7[%c0_28, %c0_29, %c9, %c0_30] : memref<2x18x25x8xf32, #tpu.memory_space<vmem>>, vector<2x18x16x8xf32>
    %12 = vector.extract_strided_slice %9 {offsets = [0, 0, 0, 0], sizes = [2, 16, 16, 8], strides = [1, 1, 1, 1]} : vector<2x18x16x8xf32> to vector<2x16x16x8xf32>
    %13 = vector.extract_strided_slice %10 {offsets = [0, 0, 0, 0], sizes = [2, 16, 16, 8], strides = [1, 1, 1, 1]} : vector<2x18x16x8xf32> to vector<2x16x16x8xf32>
    %14 = vector.extract_strided_slice %11 {offsets = [0, 0, 0, 0], sizes = [2, 16, 16, 8], strides = [1, 1, 1, 1]} : vector<2x18x16x8xf32> to vector<2x16x16x8xf32>
    %15 = vector.extract_strided_slice %9 {offsets = [0, 1, 0, 0], sizes = [2, 16, 16, 8], strides = [1, 1, 1, 1]} : vector<2x18x16x8xf32> to vector<2x16x16x8xf32>
    %16 = vector.extract_strided_slice %10 {offsets = [0, 1, 0, 0], sizes = [2, 16, 16, 8], strides = [1, 1, 1, 1]} : vector<2x18x16x8xf32> to vector<2x16x16x8xf32>
    %17 = vector.extract_strided_slice %11 {offsets = [0, 1, 0, 0], sizes = [2, 16, 16, 8], strides = [1, 1, 1, 1]} : vector<2x18x16x8xf32> to vector<2x16x16x8xf32>
    %18 = vector.extract_strided_slice %9 {offsets = [0, 2, 0, 0], sizes = [2, 16, 16, 8], strides = [1, 1, 1, 1]} : vector<2x18x16x8xf32> to vector<2x16x16x8xf32>
    %19 = vector.extract_strided_slice %10 {offsets = [0, 2, 0, 0], sizes = [2, 16, 16, 8], strides = [1, 1, 1, 1]} : vector<2x18x16x8xf32> to vector<2x16x16x8xf32>
    %20 = vector.extract_strided_slice %11 {offsets = [0, 2, 0, 0], sizes = [2, 16, 16, 8], strides = [1, 1, 1, 1]} : vector<2x18x16x8xf32> to vector<2x16x16x8xf32>
    %21 = tpu.concatenate %12, %13, %14, %15, %16, %17, %18, %19, %20 in 3 : vector<2x16x16x8xf32>, vector<2x16x16x8xf32>, vector<2x16x16x8xf32>, vector<2x16x16x8xf32>, vector<2x16x16x8xf32>, vector<2x16x16x8xf32>, vector<2x16x16x8xf32>, vector<2x16x16x8xf32>, vector<2x16x16x8xf32> -> vector<2x16x16x72xf32>
    %22 = vector.shape_cast %21 : vector<2x16x16x72xf32> to vector<512x72xf32>
    %c0_31 = arith.constant 0 : index
    %c0_32 = arith.constant 0 : index
    %23 = vector.load %arg2[%c0_31, %c0_32] : memref<72x8xf32, #tpu.memory_space<vmem>>, vector<72x8xf32>
    %cst_33 = arith.constant dense<0.000000e+00> : vector<512x8xf32>
    %24 = tpu.matmul %22, %23, %cst_33 {dimension_numbers = #tpu.dot_dimension_numbers<[1], [0], [0], [1], [0, 0, 1, 1], [], []>, precision = #tpu.contract_precision<fp32>} : vector<512x72xf32>, vector<72x8xf32>, vector<512x8xf32> -> vector<512x8xf32>
    %c0_34 = arith.constant 0 : index
    %c0_35 = arith.constant 0 : index
    %25 = vector.load %arg3[%c0_34, %c0_35] : memref<1x8xf32, #tpu.memory_space<vmem>>, vector<1x8xf32>
    %26 = vector.broadcast %25 : vector<1x8xf32> to vector<512x8xf32>
    %27 = arith.addf %24, %26 : vector<512x8xf32>
    %cst_36 = arith.constant 0.000000e+00 : f32
    %28 = vector.broadcast %cst_36 : f32 to vector<512x8xf32>
    %29 = arith.maximumf %27, %28 : vector<512x8xf32>
    %30 = vector.shape_cast %29 : vector<512x8xf32> to vector<2x16x16x8xf32>
    %c0_37 = arith.constant 0 : index
    %c1_38 = arith.constant 1 : index
    %c8_39 = arith.constant 8 : index
    %c0_40 = arith.constant 0 : index
    %31 = vector.load %arg7[%c0_37, %c1_38, %c8_39, %c0_40] : memref<2x18x25x8xf32, #tpu.memory_space<vmem>>, vector<2x16x16x8xf32>
    tpu.vector_store %arg7[%c0_37, %c1_38, %c8_39, %c0_40], %30 {strides = array<i32>} : memref<2x18x25x8xf32, #tpu.memory_space<vmem>>, vector<2x16x16x8xf32>,
    %c0_41 = arith.constant 0 : index
    %c0_42 = arith.constant 0 : index
    %c7_43 = arith.constant 7 : index
    %c0_44 = arith.constant 0 : index
    %32 = vector.load %arg7[%c0_41, %c0_42, %c7_43, %c0_44] : memref<2x18x25x8xf32, #tpu.memory_space<vmem>>, vector<2x18x16x8xf32>
    %c0_45 = arith.constant 0 : index
    %c0_46 = arith.constant 0 : index
    %c8_47 = arith.constant 8 : index
    %c0_48 = arith.constant 0 : index
    %33 = vector.load %arg7[%c0_45, %c0_46, %c8_47, %c0_48] : memref<2x18x25x8xf32, #tpu.memory_space<vmem>>, vector<2x18x16x8xf32>
    %c0_49 = arith.constant 0 : index
    %c0_50 = arith.constant 0 : index
    %c9_51 = arith.constant 9 : index
    %c0_52 = arith.constant 0 : index
    %34 = vector.load %arg7[%c0_49, %c0_50, %c9_51, %c0_52] : memref<2x18x25x8xf32, #tpu.memory_space<vmem>>, vector<2x18x16x8xf32>
    %35 = vector.extract_strided_slice %32 {offsets = [0, 0, 0, 0], sizes = [2, 16, 16, 8], strides = [1, 1, 1, 1]} : vector<2x18x16x8xf32> to vector<2x16x16x8xf32>
    %36 = vector.extract_strided_slice %33 {offsets = [0, 0, 0, 0], sizes = [2, 16, 16, 8], strides = [1, 1, 1, 1]} : vector<2x18x16x8xf32> to vector<2x16x16x8xf32>
    %37 = vector.extract_strided_slice %34 {offsets = [0, 0, 0, 0], sizes = [2, 16, 16, 8], strides = [1, 1, 1, 1]} : vector<2x18x16x8xf32> to vector<2x16x16x8xf32>
    %38 = vector.extract_strided_slice %32 {offsets = [0, 1, 0, 0], sizes = [2, 16, 16, 8], strides = [1, 1, 1, 1]} : vector<2x18x16x8xf32> to vector<2x16x16x8xf32>
    %39 = vector.extract_strided_slice %33 {offsets = [0, 1, 0, 0], sizes = [2, 16, 16, 8], strides = [1, 1, 1, 1]} : vector<2x18x16x8xf32> to vector<2x16x16x8xf32>
    %40 = vector.extract_strided_slice %34 {offsets = [0, 1, 0, 0], sizes = [2, 16, 16, 8], strides = [1, 1, 1, 1]} : vector<2x18x16x8xf32> to vector<2x16x16x8xf32>
    %41 = vector.extract_strided_slice %32 {offsets = [0, 2, 0, 0], sizes = [2, 16, 16, 8], strides = [1, 1, 1, 1]} : vector<2x18x16x8xf32> to vector<2x16x16x8xf32>
    %42 = vector.extract_strided_slice %33 {offsets = [0, 2, 0, 0], sizes = [2, 16, 16, 8], strides = [1, 1, 1, 1]} : vector<2x18x16x8xf32> to vector<2x16x16x8xf32>
    %43 = vector.extract_strided_slice %34 {offsets = [0, 2, 0, 0], sizes = [2, 16, 16, 8], strides = [1, 1, 1, 1]} : vector<2x18x16x8xf32> to vector<2x16x16x8xf32>
    %44 = tpu.concatenate %35, %36, %37, %38, %39, %40, %41, %42, %43 in 3 : vector<2x16x16x8xf32>, vector<2x16x16x8xf32>, vector<2x16x16x8xf32>, vector<2x16x16x8xf32>, vector<2x16x16x8xf32>, vector<2x16x16x8xf32>, vector<2x16x16x8xf32>, vector<2x16x16x8xf32>, vector<2x16x16x8xf32> -> vector<2x16x16x72xf32>
    %45 = vector.shape_cast %44 : vector<2x16x16x72xf32> to vector<512x72xf32>
    %c0_53 = arith.constant 0 : index
    %c0_54 = arith.constant 0 : index
    %46 = vector.load %arg4[%c0_53, %c0_54] : memref<72x128xf32, #tpu.memory_space<vmem>>, vector<72x128xf32>
    %cst_55 = arith.constant dense<0.000000e+00> : vector<512x128xf32>
    %47 = tpu.matmul %45, %46, %cst_55 {dimension_numbers = #tpu.dot_dimension_numbers<[1], [0], [0], [1], [0, 0, 1, 1], [], []>, precision = #tpu.contract_precision<fp32>} : vector<512x72xf32>, vector<72x128xf32>, vector<512x128xf32> -> vector<512x128xf32>
    %c0_56 = arith.constant 0 : index
    %c0_57 = arith.constant 0 : index
    %48 = vector.load %arg5[%c0_56, %c0_57] : memref<1x128xf32, #tpu.memory_space<vmem>>, vector<1x128xf32>
    %49 = vector.broadcast %48 : vector<1x128xf32> to vector<512x128xf32>
    %50 = arith.addf %47, %49 : vector<512x128xf32>
    %51 = vector.shape_cast %7 : vector<2x16x16x8xf32> to vector<512x8xf32>
    %cst_58 = arith.constant 0.000000e+00 : f32
    %52 = vector.broadcast %cst_58 : f32 to vector<512x120xf32>
    %53 = tpu.concatenate %51, %52 in 1 : vector<512x8xf32>, vector<512x120xf32> -> vector<512x128xf32>
    %54 = arith.addf %50, %53 : vector<512x128xf32>
    %cst_59 = arith.constant 0.000000e+00 : f32
    %55 = vector.broadcast %cst_59 : f32 to vector<512x128xf32>
    %56 = arith.maximumf %54, %55 : vector<512x128xf32>
    %c0_60 = arith.constant 0 : index
    %c0_61 = arith.constant 0 : index
    %57 = vector.load %arg6[%c0_60, %c0_61] : memref<512x128xf32, #tpu.memory_space<vmem>>, vector<512x128xf32>
    tpu.vector_store %arg6[%c0_60, %c0_61], %56 {strides = array<i32>} : memref<512x128xf32, #tpu.memory_space<vmem>>, vector<512x128xf32>,
    return
  }
  func.func @transform_0(%arg0: i32) -> (i32, i32, i32, i32) {
    %c0_i32 = arith.constant 0 : i32
    %c0_i32_0 = arith.constant 0 : i32
    %c0_i32_1 = arith.constant 0 : i32
    %c0_i32_2 = arith.constant 0 : i32
    return %arg0, %c0_i32, %c0_i32_0, %c0_i32_1 : i32, i32, i32, i32
  }
  func.func @transform_1(%arg0: i32) -> (i32, i32) {
    %c0_i32 = arith.constant 0 : i32
    %c0_i32_0 = arith.constant 0 : i32
    %c0_i32_1 = arith.constant 0 : i32
    return %c0_i32, %c0_i32_0 : i32, i32
  }
  func.func @transform_2(%arg0: i32) -> (i32, i32) {
    %c0_i32 = arith.constant 0 : i32
    %c0_i32_0 = arith.constant 0 : i32
    %c0_i32_1 = arith.constant 0 : i32
    return %c0_i32, %c0_i32_0 : i32, i32
  }
  func.func @transform_3(%arg0: i32) -> (i32, i32) {
    %c0_i32 = arith.constant 0 : i32
    %c0_i32_0 = arith.constant 0 : i32
    %c0_i32_1 = arith.constant 0 : i32
    return %c0_i32, %c0_i32_0 : i32, i32
  }
  func.func @transform_4(%arg0: i32) -> (i32, i32) {
    %c0_i32 = arith.constant 0 : i32
    %c0_i32_0 = arith.constant 0 : i32
    %c0_i32_1 = arith.constant 0 : i32
    return %c0_i32, %c0_i32_0 : i32, i32
  }
  func.func @transform_5(%arg0: i32) -> (i32, i32) {
    %c0_i32 = arith.constant 0 : i32
    %c0_i32_0 = arith.constant 0 : i32
    return %arg0, %c0_i32 : i32, i32
  }
}

</mosaic_0001>

<llo_original>
// kernel: tpu_custom_call.1
$region0: #{tpu_custom_call.1}
  #allocation0 [shape = 'u32[]', space=smem, size = 0x4, offset = 0x4, fixed_abs, tag = 'smem constant byte address 0x4 - core index']
  #allocation1 [shape = 'u32[144,128]{1,0:T(1,128)}', space=vmem, size = 0x12000, scoped, tag = 'internal scratch']
  #allocation2 [shape = 'f32[2,18,25,8]{3,2,1,0:T(8,128)}', space=vmem, size = 0x90000, scoped, tag = 'scratch operand']
  %s0 = inlined_call_operand.vmem [shape: f32[2,16,16,8], index: 0, kind: input, shape index: {}]
  %s1 = inlined_call_operand.vmem [shape: f32[72,8], index: 1, kind: input, shape index: {}]
  %s2 = inlined_call_operand.vmem [shape: f32[1,8], index: 2, kind: input, shape index: {}]
  %s3 = inlined_call_operand.vmem [shape: f32[72,128], index: 3, kind: input, shape index: {}]
  %s4 = inlined_call_operand.vmem [shape: f32[1,128], index: 4, kind: input, shape index: {}]
  %s5 = inlined_call_operand.hbm [shape: f32[512,128], index: 5, kind: output, shape index: {}]
  %s6 = sld [smem:[#allocation0]]
  $region30: #{tpu_custom_call.1} parent=0
    _
  %s8 = ssub.s32 1, %s6
  %s9 = scalar_select 0, %s8, %s6
  $region1: #{tpu_custom_call.1} parent=0
    #allocation3 [shape = 'u8[262144]{0}', space=vmem, size = 0x40000, scoped, tag = 'output window, operand 0, single buffered']
    #allocation4 [shape = 's32[1]{0}', space=sflag, size = 0x4, scoped, tag = 'scoped memory for tpu_custom_call.1']
    %10 = vsyncpa [#allocation4], 0
    // Predicated region
    $region2: #{tpu_custom_call.1} parent=1 // pred_check
      _
    $region3: #{tpu_custom_call.1} parent=1 // pred_check_branch
      %12 = sbr.rel (0) target = $region5
    $region4: #{tpu_custom_call.1} parent=1 // pred_region
      _
    $region5: #{tpu_custom_call.1} parent=1 // pred_fallthru
      _
    // Predicated region
    $region6: #{tpu_custom_call.1} parent=1 // pred_check
      _
    $region7: #{tpu_custom_call.1} parent=1 // pred_check_branch
      %14 = sbr.rel (0) target = $region9
    $region8: #{tpu_custom_call.1} parent=1 // pred_region
      _
    $region9: #{tpu_custom_call.1} parent=1 // pred_fallthru
      _
    // Predicated region
    $region10: #{tpu_custom_call.1} parent=1 // pred_check
      _
    $region11: #{tpu_custom_call.1} parent=1 // pred_check_branch
      %16 = sbr.rel (0) target = $region13
    $region12: #{tpu_custom_call.1} parent=1 // pred_region
      _
    $region13: #{tpu_custom_call.1} parent=1 // pred_fallthru
      _
    // Predicated region
    $region14: #{tpu_custom_call.1} parent=1 // pred_check
      _
    $region15: #{tpu_custom_call.1} parent=1 // pred_check_branch
      %18 = sbr.rel (0) target = $region17
    $region16: #{tpu_custom_call.1} parent=1 // pred_region
      _
    $region17: #{tpu_custom_call.1} parent=1 // pred_fallthru
      _
    // Predicated region
    $region18: #{tpu_custom_call.1} parent=1 // pred_check
      _
    $region19: #{tpu_custom_call.1} parent=1 // pred_check_branch
      %20 = sbr.rel (0) target = $region21
    $region20: #{tpu_custom_call.1} parent=1 // pred_region
      _
    $region21: #{tpu_custom_call.1} parent=1 // pred_fallthru
      _
    %vm21 = vcmask 64512
    %22 = vst.msk [vmem:[#allocation2] sm:$0xff] %vm21, 0.0
    %23 = vst.msk [vmem:[#allocation2 + $0x8] sm:$0xff] %vm21, 0.0
    %24 = vst.msk [vmem:[#allocation2 + $0x10] sm:$0xff] %vm21, 0.0
    %vm25 = vcmask 57344
    %26 = vst.msk [vmem:[#allocation2 + $0x18] sm:$0x1] %vm25, 0.0
    %27 = vst.msk [vmem:[#allocation2 + $0x240] sm:$0xff] %vm21, 0.0
    %28 = vst.msk [vmem:[#allocation2 + $0x248] sm:$0xff] %vm21, 0.0
    %29 = vst.msk [vmem:[#allocation2 + $0x250] sm:$0xff] %vm21, 0.0
    %30 = vst.msk [vmem:[#allocation2 + $0x258] sm:$0x1] %vm25, 0.0
    %s31 = scalar_lea.vmem [#allocation2], 544
    %32 = vst.msk [vmem:[%s31] sm:$0xff] %vm21, 0.0
    %33 = vst.msk [vmem:[%s31 + $0x8] sm:$0xff] %vm21, 0.0
    %34 = vst.msk [vmem:[%s31 + $0x10] sm:$0xff] %vm21, 0.0
    %35 = vst.msk [vmem:[%s31 + $0x18] sm:$0x1] %vm25, 0.0
    %36 = vst.msk [vmem:[%s31 + $0x240] sm:$0xff] %vm21, 0.0
    %37 = vst.msk [vmem:[%s31 + $0x248] sm:$0xff] %vm21, 0.0
    %38 = vst.msk [vmem:[%s31 + $0x250] sm:$0xff] %vm21, 0.0
    %39 = vst.msk [vmem:[%s31 + $0x258] sm:$0x1] %vm25, 0.0
    %s40 = scalar_lea.vmem [#allocation2], 32
    %41 = vst.msk [vmem:[%s40] sm:$0xff] %vm21, 0.0
    %42 = vst.msk [vmem:[%s40 + $0x20] sm:$0xff] %vm21, 0.0
    %43 = vst.msk [vmem:[%s40 + $0x40] sm:$0xff] %vm21, 0.0
    %44 = vst.msk [vmem:[%s40 + $0x60] sm:$0xff] %vm21, 0.0
    %45 = vst.msk [vmem:[%s40 + $0x80] sm:$0xff] %vm21, 0.0
    %46 = vst.msk [vmem:[%s40 + $0xa0] sm:$0xff] %vm21, 0.0
    %47 = vst.msk [vmem:[%s40 + $0xc0] sm:$0xff] %vm21, 0.0
    %48 = vst.msk [vmem:[%s40 + $0xe0] sm:$0xff] %vm21, 0.0
    %49 = vst.msk [vmem:[%s40 + $0x100] sm:$0xff] %vm21, 0.0
    %50 = vst.msk [vmem:[%s40 + $0x120] sm:$0xff] %vm21, 0.0
    %51 = vst.msk [vmem:[%s40 + $0x140] sm:$0xff] %vm21, 0.0
    %52 = vst.msk [vmem:[%s40 + $0x160] sm:$0xff] %vm21, 0.0
    %53 = vst.msk [vmem:[%s40 + $0x180] sm:$0xff] %vm21, 0.0
    %54 = vst.msk [vmem:[%s40 + $0x1a0] sm:$0xff] %vm21, 0.0
    %55 = vst.msk [vmem:[%s40 + $0x1c0] sm:$0xff] %vm21, 0.0
    %56 = vst.msk [vmem:[%s40 + $0x1e0] sm:$0xff] %vm21, 0.0
    %57 = vst.msk [vmem:[%s40 + $0x240] sm:$0xff] %vm21, 0.0
    %58 = vst.msk [vmem:[%s40 + $0x260] sm:$0xff] %vm21, 0.0
    %59 = vst.msk [vmem:[%s40 + $0x280] sm:$0xff] %vm21, 0.0
    %60 = vst.msk [vmem:[%s40 + $0x2a0] sm:$0xff] %vm21, 0.0
    %61 = vst.msk [vmem:[%s40 + $0x2c0] sm:$0xff] %vm21, 0.0
    %62 = vst.msk [vmem:[%s40 + $0x2e0] sm:$0xff] %vm21, 0.0
    %63 = vst.msk [vmem:[%s40 + $0x300] sm:$0xff] %vm21, 0.0
    %64 = vst.msk [vmem:[%s40 + $0x320] sm:$0xff] %vm21, 0.0
    %65 = vst.msk [vmem:[%s40 + $0x340] sm:$0xff] %vm21, 0.0
    %66 = vst.msk [vmem:[%s40 + $0x360] sm:$0xff] %vm21, 0.0
    %67 = vst.msk [vmem:[%s40 + $0x380] sm:$0xff] %vm21, 0.0
    %68 = vst.msk [vmem:[%s40 + $0x3a0] sm:$0xff] %vm21, 0.0
    %69 = vst.msk [vmem:[%s40 + $0x3c0] sm:$0xff] %vm21, 0.0
    %70 = vst.msk [vmem:[%s40 + $0x3e0] sm:$0xff] %vm21, 0.0
    %71 = vst.msk [vmem:[%s40 + $0x400] sm:$0xff] %vm21, 0.0
    %72 = vst.msk [vmem:[%s40 + $0x420] sm:$0xff] %vm21, 0.0
    %73 = vst.msk [vmem:[%s40 + $0x18] sm:$0x1] %vm25, 0.0
    %74 = vst.msk [vmem:[%s40 + $0x38] sm:$0x1] %vm25, 0.0
    %75 = vst.msk [vmem:[%s40 + $0x58] sm:$0x1] %vm25, 0.0
    %76 = vst.msk [vmem:[%s40 + $0x78] sm:$0x1] %vm25, 0.0
    %77 = vst.msk [vmem:[%s40 + $0x98] sm:$0x1] %vm25, 0.0
    %78 = vst.msk [vmem:[%s40 + $0xb8] sm:$0x1] %vm25, 0.0
    %79 = vst.msk [vmem:[%s40 + $0xd8] sm:$0x1] %vm25, 0.0
    %80 = vst.msk [vmem:[%s40 + $0xf8] sm:$0x1] %vm25, 0.0
    %81 = vst.msk [vmem:[%s40 + $0x118] sm:$0x1] %vm25, 0.0
    %82 = vst.msk [vmem:[%s40 + $0x138] sm:$0x1] %vm25, 0.0
    %83 = vst.msk [vmem:[%s40 + $0x158] sm:$0x1] %vm25, 0.0
    %84 = vst.msk [vmem:[%s40 + $0x178] sm:$0x1] %vm25, 0.0
    %85 = vst.msk [vmem:[%s40 + $0x198] sm:$0x1] %vm25, 0.0
    %86 = vst.msk [vmem:[%s40 + $0x1b8] sm:$0x1] %vm25, 0.0
    %87 = vst.msk [vmem:[%s40 + $0x1d8] sm:$0x1] %vm25, 0.0
    %88 = vst.msk [vmem:[%s40 + $0x1f8] sm:$0x1] %vm25, 0.0
    %89 = vst.msk [vmem:[%s40 + $0x258] sm:$0x1] %vm25, 0.0
    %90 = vst.msk [vmem:[%s40 + $0x278] sm:$0x1] %vm25, 0.0
    %91 = vst.msk [vmem:[%s40 + $0x298] sm:$0x1] %vm25, 0.0
    %92 = vst.msk [vmem:[%s40 + $0x2b8] sm:$0x1] %vm25, 0.0
    %93 = vst.msk [vmem:[%s40 + $0x2d8] sm:$0x1] %vm25, 0.0
    %94 = vst.msk [vmem:[%s40 + $0x2f8] sm:$0x1] %vm25, 0.0
    %95 = vst.msk [vmem:[%s40 + $0x318] sm:$0x1] %vm25, 0.0
    %96 = vst.msk [vmem:[%s40 + $0x338] sm:$0x1] %vm25, 0.0
    %97 = vst.msk [vmem:[%s40 + $0x358] sm:$0x1] %vm25, 0.0
    %98 = vst.msk [vmem:[%s40 + $0x378] sm:$0x1] %vm25, 0.0
    %99 = vst.msk [vmem:[%s40 + $0x398] sm:$0x1] %vm25, 0.0
    %100 = vst.msk [vmem:[%s40 + $0x3b8] sm:$0x1] %vm25, 0.0
    %101 = vst.msk [vmem:[%s40 + $0x3d8] sm:$0x1] %vm25, 0.0
    %102 = vst.msk [vmem:[%s40 + $0x3f8] sm:$0x1] %vm25, 0.0
    %103 = vst.msk [vmem:[%s40 + $0x418] sm:$0x1] %vm25, 0.0
    %104 = vst.msk [vmem:[%s40 + $0x438] sm:$0x1] %vm25, 0.0
    %v105 = vld [vmem:[%s0] sm:$0xff]
    %v106 = vld [vmem:[%s0 + $0x8] sm:$0xff]
    %v107 = vld [vmem:[%s0 + $0x10] sm:$0xff]
    %v108 = vld [vmem:[%s0 + $0x18] sm:$0xff]
    %v109 = vld [vmem:[%s0 + $0x20] sm:$0xff]
    %v110 = vld [vmem:[%s0 + $0x28] sm:$0xff]
    %v111 = vld [vmem:[%s0 + $0x30] sm:$0xff]
    %v112 = vld [vmem:[%s0 + $0x38] sm:$0xff]
    %v113 = vld [vmem:[%s0 + $0x40] sm:$0xff]
    %v114 = vld [vmem:[%s0 + $0x48] sm:$0xff]
    %v115 = vld [vmem:[%s0 + $0x50] sm:$0xff]
    %v116 = vld [vmem:[%s0 + $0x58] sm:$0xff]
    %v117 = vld [vmem:[%s0 + $0x60] sm:$0xff]
    %v118 = vld [vmem:[%s0 + $0x68] sm:$0xff]
    %v119 = vld [vmem:[%s0 + $0x70] sm:$0xff]
    %v120 = vld [vmem:[%s0 + $0x78] sm:$0xff]
    %v121 = vld [vmem:[%s0 + $0x80] sm:$0xff]
    %v122 = vld [vmem:[%s0 + $0x88] sm:$0xff]
    %v123 = vld [vmem:[%s0 + $0x90] sm:$0xff]
    %v124 = vld [vmem:[%s0 + $0x98] sm:$0xff]
    %v125 = vld [vmem:[%s0 + $0xa0] sm:$0xff]
    %v126 = vld [vmem:[%s0 + $0xa8] sm:$0xff]
    %v127 = vld [vmem:[%s0 + $0xb0] sm:$0xff]
    %v128 = vld [vmem:[%s0 + $0xb8] sm:$0xff]
    %v129 = vld [vmem:[%s0 + $0xc0] sm:$0xff]
    %v130 = vld [vmem:[%s0 + $0xc8] sm:$0xff]
    %v131 = vld [vmem:[%s0 + $0xd0] sm:$0xff]
    %v132 = vld [vmem:[%s0 + $0xd8] sm:$0xff]
    %v133 = vld [vmem:[%s0 + $0xe0] sm:$0xff]
    %v134 = vld [vmem:[%s0 + $0xe8] sm:$0xff]
    %v135 = vld [vmem:[%s0 + $0xf0] sm:$0xff]
    %v136 = vld [vmem:[%s0 + $0xf8] sm:$0xff]
    %v137 = vld [vmem:[%s0 + $0x100] sm:$0xff]
    %v138 = vld [vmem:[%s0 + $0x108] sm:$0xff]
    %v139 = vld [vmem:[%s0 + $0x110] sm:$0xff]
    %v140 = vld [vmem:[%s0 + $0x118] sm:$0xff]
    %v141 = vld [vmem:[%s0 + $0x120] sm:$0xff]
    %v142 = vld [vmem:[%s0 + $0x128] sm:$0xff]
    %v143 = vld [vmem:[%s0 + $0x130] sm:$0xff]
    %v144 = vld [vmem:[%s0 + $0x138] sm:$0xff]
    %v145 = vld [vmem:[%s0 + $0x140] sm:$0xff]
    %v146 = vld [vmem:[%s0 + $0x148] sm:$0xff]
    %v147 = vld [vmem:[%s0 + $0x150] sm:$0xff]
    %v148 = vld [vmem:[%s0 + $0x158] sm:$0xff]
    %v149 = vld [vmem:[%s0 + $0x160] sm:$0xff]
    %v150 = vld [vmem:[%s0 + $0x168] sm:$0xff]
    %v151 = vld [vmem:[%s0 + $0x170] sm:$0xff]
    %v152 = vld [vmem:[%s0 + $0x178] sm:$0xff]
    %v153 = vld [vmem:[%s0 + $0x180] sm:$0xff]
    %v154 = vld [vmem:[%s0 + $0x188] sm:$0xff]
    %v155 = vld [vmem:[%s0 + $0x190] sm:$0xff]
    %v156 = vld [vmem:[%s0 + $0x198] sm:$0xff]
    %v157 = vld [vmem:[%s0 + $0x1a0] sm:$0xff]
    %v158 = vld [vmem:[%s0 + $0x1a8] sm:$0xff]
    %v159 = vld [vmem:[%s0 + $0x1b0] sm:$0xff]
    %v160 = vld [vmem:[%s0 + $0x1b8] sm:$0xff]
    %v161 = vld [vmem:[%s0 + $0x1c0] sm:$0xff]
    %v162 = vld [vmem:[%s0 + $0x1c8] sm:$0xff]
    %v163 = vld [vmem:[%s0 + $0x1d0] sm:$0xff]
    %v164 = vld [vmem:[%s0 + $0x1d8] sm:$0xff]
    %v165 = vld [vmem:[%s0 + $0x1e0] sm:$0xff]
    %v166 = vld [vmem:[%s0 + $0x1e8] sm:$0xff]
    %v167 = vld [vmem:[%s0 + $0x1f0] sm:$0xff]
    %v168 = vld [vmem:[%s0 + $0x1f8] sm:$0xff]
    %169 = vst.msk [vmem:[%s40 + $0x8] sm:$0xff] %vm21, %v105
    %170 = vst.msk [vmem:[%s40 + $0x10] sm:$0xff] %vm21, %v106
    %171 = vst.msk [vmem:[%s40 + $0x28] sm:$0xff] %vm21, %v107
    %172 = vst.msk [vmem:[%s40 + $0x30] sm:$0xff] %vm21, %v108
    %173 = vst.msk [vmem:[%s40 + $0x48] sm:$0xff] %vm21, %v109
    %174 = vst.msk [vmem:[%s40 + $0x50] sm:$0xff] %vm21, %v110
    %175 = vst.msk [vmem:[%s40 + $0x68] sm:$0xff] %vm21, %v111
    %176 = vst.msk [vmem:[%s40 + $0x70] sm:$0xff] %vm21, %v112
    %177 = vst.msk [vmem:[%s40 + $0x88] sm:$0xff] %vm21, %v113
    %178 = vst.msk [vmem:[%s40 + $0x90] sm:$0xff] %vm21, %v114
    %179 = vst.msk [vmem:[%s40 + $0xa8] sm:$0xff] %vm21, %v115
    %180 = vst.msk [vmem:[%s40 + $0xb0] sm:$0xff] %vm21, %v116
    %181 = vst.msk [vmem:[%s40 + $0xc8] sm:$0xff] %vm21, %v117
    %182 = vst.msk [vmem:[%s40 + $0xd0] sm:$0xff] %vm21, %v118
    %183 = vst.msk [vmem:[%s40 + $0xe8] sm:$0xff] %vm21, %v119
    %184 = vst.msk [vmem:[%s40 + $0xf0] sm:$0xff] %vm21, %v120
    %185 = vst.msk [vmem:[%s40 + $0x108] sm:$0xff] %vm21, %v121
    %186 = vst.msk [vmem:[%s40 + $0x110] sm:$0xff] %vm21, %v122
    %187 = vst.msk [vmem:[%s40 + $0x128] sm:$0xff] %vm21, %v123
    %188 = vst.msk [vmem:[%s40 + $0x130] sm:$0xff] %vm21, %v124
    %189 = vst.msk [vmem:[%s40 + $0x148] sm:$0xff] %vm21, %v125
    %190 = vst.msk [vmem:[%s40 + $0x150] sm:$0xff] %vm21, %v126
    %191 = vst.msk [vmem:[%s40 + $0x168] sm:$0xff] %vm21, %v127
    %192 = vst.msk [vmem:[%s40 + $0x170] sm:$0xff] %vm21, %v128
    %193 = vst.msk [vmem:[%s40 + $0x188] sm:$0xff] %vm21, %v129
    %194 = vst.msk [vmem:[%s40 + $0x190] sm:$0xff] %vm21, %v130
    %195 = vst.msk [vmem:[%s40 + $0x1a8] sm:$0xff] %vm21, %v131
    %196 = vst.msk [vmem:[%s40 + $0x1b0] sm:$0xff] %vm21, %v132
    %197 = vst.msk [vmem:[%s40 + $0x1c8] sm:$0xff] %vm21, %v133
    %198 = vst.msk [vmem:[%s40 + $0x1d0] sm:$0xff] %vm21, %v134
    %199 = vst.msk [vmem:[%s40 + $0x1e8] sm:$0xff] %vm21, %v135
    %200 = vst.msk [vmem:[%s40 + $0x1f0] sm:$0xff] %vm21, %v136
    %201 = vst.msk [vmem:[%s40 + $0x248] sm:$0xff] %vm21, %v137
    %202 = vst.msk [vmem:[%s40 + $0x250] sm:$0xff] %vm21, %v138
    %203 = vst.msk [vmem:[%s40 + $0x268] sm:$0xff] %vm21, %v139
    %204 = vst.msk [vmem:[%s40 + $0x270] sm:$0xff] %vm21, %v140
    %205 = vst.msk [vmem:[%s40 + $0x288] sm:$0xff] %vm21, %v141
    %206 = vst.msk [vmem:[%s40 + $0x290] sm:$0xff] %vm21, %v142
    %207 = vst.msk [vmem:[%s40 + $0x2a8] sm:$0xff] %vm21, %v143
    %208 = vst.msk [vmem:[%s40 + $0x2b0] sm:$0xff] %vm21, %v144
    %209 = vst.msk [vmem:[%s40 + $0x2c8] sm:$0xff] %vm21, %v145
    %210 = vst.msk [vmem:[%s40 + $0x2d0] sm:$0xff] %vm21, %v146
    %211 = vst.msk [vmem:[%s40 + $0x2e8] sm:$0xff] %vm21, %v147
    %212 = vst.msk [vmem:[%s40 + $0x2f0] sm:$0xff] %vm21, %v148
    %213 = vst.msk [vmem:[%s40 + $0x308] sm:$0xff] %vm21, %v149
    %214 = vst.msk [vmem:[%s40 + $0x310] sm:$0xff] %vm21, %v150
    %215 = vst.msk [vmem:[%s40 + $0x328] sm:$0xff] %vm21, %v151
    %216 = vst.msk [vmem:[%s40 + $0x330] sm:$0xff] %vm21, %v152
    %217 = vst.msk [vmem:[%s40 + $0x348] sm:$0xff] %vm21, %v153
    %218 = vst.msk [vmem:[%s40 + $0x350] sm:$0xff] %vm21, %v154
    %219 = vst.msk [vmem:[%s40 + $0x368] sm:$0xff] %vm21, %v155
    %220 = vst.msk [vmem:[%s40 + $0x370] sm:$0xff] %vm21, %v156
    %221 = vst.msk [vmem:[%s40 + $0x388] sm:$0xff] %vm21, %v157
    %222 = vst.msk [vmem:[%s40 + $0x390] sm:$0xff] %vm21, %v158
    %223 = vst.msk [vmem:[%s40 + $0x3a8] sm:$0xff] %vm21, %v159
    %224 = vst.msk [vmem:[%s40 + $0x3b0] sm:$0xff] %vm21, %v160
    %225 = vst.msk [vmem:[%s40 + $0x3c8] sm:$0xff] %vm21, %v161
    %226 = vst.msk [vmem:[%s40 + $0x3d0] sm:$0xff] %vm21, %v162
    %227 = vst.msk [vmem:[%s40 + $0x3e8] sm:$0xff] %vm21, %v163
    %228 = vst.msk [vmem:[%s40 + $0x3f0] sm:$0xff] %vm21, %v164
    %229 = vst.msk [vmem:[%s40 + $0x408] sm:$0xff] %vm21, %v165
    %230 = vst.msk [vmem:[%s40 + $0x410] sm:$0xff] %vm21, %v166
    %231 = vst.msk [vmem:[%s40 + $0x428] sm:$0xff] %vm21, %v167
    %232 = vst.msk [vmem:[%s40 + $0x430] sm:$0xff] %vm21, %v168
    %v233 = vld [vmem:[#allocation2 + $0x7] sm:$0xff]
    %v234 = vld [vmem:[#allocation2 + $0xf] sm:$0xff]
    %v235 = vld [vmem:[#allocation2 + $0x27] sm:$0xff]
    %v236 = vld [vmem:[#allocation2 + $0x2f] sm:$0xff]
    %v237 = vld [vmem:[#allocation2 + $0x47] sm:$0xff]
    %v238 = vld [vmem:[#allocation2 + $0x4f] sm:$0xff]
    %v239 = vld [vmem:[#allocation2 + $0x67] sm:$0xff]
    %v240 = vld [vmem:[#allocation2 + $0x6f] sm:$0xff]
    %v241 = vld [vmem:[#allocation2 + $0x87] sm:$0xff]
    %v242 = vld [vmem:[#allocation2 + $0x8f] sm:$0xff]
    %v243 = vld [vmem:[#allocation2 + $0xa7] sm:$0xff]
    %v244 = vld [vmem:[#allocation2 + $0xaf] sm:$0xff]
    %v245 = vld [vmem:[#allocation2 + $0xc7] sm:$0xff]
    %v246 = vld [vmem:[#allocation2 + $0xcf] sm:$0xff]
    %v247 = vld [vmem:[#allocation2 + $0xe7] sm:$0xff]
    %v248 = vld [vmem:[#allocation2 + $0xef] sm:$0xff]
    %v249 = vld [vmem:[#allocation2 + $0x107] sm:$0xff]
    %v250 = vld [vmem:[#allocation2 + $0x10f] sm:$0xff]
    %v251 = vld [vmem:[#allocation2 + $0x127] sm:$0xff]
    %v252 = vld [vmem:[#allocation2 + $0x12f] sm:$0xff]
    %v253 = vld [vmem:[#allocation2 + $0x147] sm:$0xff]
    %v254 = vld [vmem:[#allocation2 + $0x14f] sm:$0xff]
    %v255 = vld [vmem:[#allocation2 + $0x167] sm:$0xff]
    %v256 = vld [vmem:[#allocation2 + $0x16f] sm:$0xff]
    %v257 = vld [vmem:[#allocation2 + $0x187] sm:$0xff]
    %v258 = vld [vmem:[#allocation2 + $0x18f] sm:$0xff]
    %v259 = vld [vmem:[#allocation2 + $0x1a7] sm:$0xff]
    %v260 = vld [vmem:[#allocation2 + $0x1af] sm:$0xff]
    %v261 = vld [vmem:[#allocation2 + $0x1c7] sm:$0xff]
    %v262 = vld [vmem:[#allocation2 + $0x1cf] sm:$0xff]
    %v263 = vld [vmem:[#allocation2 + $0x1e7] sm:$0xff]
    %v264 = vld [vmem:[#allocation2 + $0x1ef] sm:$0xff]
    %v265 = vld [vmem:[#allocation2 + $0x207] sm:$0xff]
    %v266 = vld [vmem:[#allocation2 + $0x20f] sm:$0xff]
    %v267 = vld [vmem:[#allocation2 + $0x227] sm:$0xff]
    %v268 = vld [vmem:[#allocation2 + $0x22f] sm:$0xff]
    %v269 = vld [vmem:[#allocation2 + $0x247] sm:$0xff]
    %v270 = vld [vmem:[#allocation2 + $0x24f] sm:$0xff]
    %v271 = vld [vmem:[#allocation2 + $0x267] sm:$0xff]
    %v272 = vld [vmem:[#allocation2 + $0x26f] sm:$0xff]
    %v273 = vld [vmem:[#allocation2 + $0x287] sm:$0xff]
    %v274 = vld [vmem:[#allocation2 + $0x28f] sm:$0xff]
    %v275 = vld [vmem:[#allocation2 + $0x2a7] sm:$0xff]
    %v276 = vld [vmem:[#allocation2 + $0x2af] sm:$0xff]
    %v277 = vld [vmem:[#allocation2 + $0x2c7] sm:$0xff]
    %v278 = vld [vmem:[#allocation2 + $0x2cf] sm:$0xff]
    %v279 = vld [vmem:[#allocation2 + $0x2e7] sm:$0xff]
    %v280 = vld [vmem:[#allocation2 + $0x2ef] sm:$0xff]
    %v281 = vld [vmem:[#allocation2 + $0x307] sm:$0xff]
    %v282 = vld [vmem:[#allocation2 + $0x30f] sm:$0xff]
    %v283 = vld [vmem:[#allocation2 + $0x327] sm:$0xff]
    %v284 = vld [vmem:[#allocation2 + $0x32f] sm:$0xff]
    %v285 = vld [vmem:[#allocation2 + $0x347] sm:$0xff]
    %v286 = vld [vmem:[#allocation2 + $0x34f] sm:$0xff]
    %v287 = vld [vmem:[#allocation2 + $0x367] sm:$0xff]
    %v288 = vld [vmem:[#allocation2 + $0x36f] sm:$0xff]
    %v289 = vld [vmem:[#allocation2 + $0x387] sm:$0xff]
    %v290 = vld [vmem:[#allocation2 + $0x38f] sm:$0xff]
    %v291 = vld [vmem:[#allocation2 + $0x3a7] sm:$0xff]
    %v292 = vld [vmem:[#allocation2 + $0x3af] sm:$0xff]
    %v293 = vld [vmem:[#allocation2 + $0x3c7] sm:$0xff]
    %v294 = vld [vmem:[#allocation2 + $0x3cf] sm:$0xff]
    %v295 = vld [vmem:[#allocation2 + $0x3e7] sm:$0xff]
    %v296 = vld [vmem:[#allocation2 + $0x3ef] sm:$0xff]
    %v297 = vld [vmem:[#allocation2 + $0x407] sm:$0xff]
    %v298 = vld [vmem:[#allocation2 + $0x40f] sm:$0xff]
    %v299 = vld [vmem:[#allocation2 + $0x427] sm:$0xff]
    %v300 = vld [vmem:[#allocation2 + $0x42f] sm:$0xff]
    %v301 = vld [vmem:[#allocation2 + $0x447] sm:$0xff]
    %v302 = vld [vmem:[#allocation2 + $0x44f] sm:$0xff]
    %v303 = vld [vmem:[#allocation2 + $0x467] sm:$0xff]
    %v304 = vld [vmem:[#allocation2 + $0x46f] sm:$0xff]
    %v305 = vld [vmem:[#allocation2 + $0x8] sm:$0xff]
    %v306 = vld [vmem:[#allocation2 + $0x10] sm:$0xff]
    %v307 = vld [vmem:[#allocation2 + $0x28] sm:$0xff]
    %v308 = vld [vmem:[#allocation2 + $0x30] sm:$0xff]
    %v309 = vld [vmem:[#allocation2 + $0x48] sm:$0xff]
    %v310 = vld [vmem:[#allocation2 + $0x50] sm:$0xff]
    %v311 = vld [vmem:[#allocation2 + $0x68] sm:$0xff]
    %v312 = vld [vmem:[#allocation2 + $0x70] sm:$0xff]
    %v313 = vld [vmem:[#allocation2 + $0x88] sm:$0xff]
    %v314 = vld [vmem:[#allocation2 + $0x90] sm:$0xff]
    %v315 = vld [vmem:[#allocation2 + $0xa8] sm:$0xff]
    %v316 = vld [vmem:[#allocation2 + $0xb0] sm:$0xff]
    %v317 = vld [vmem:[#allocation2 + $0xc8] sm:$0xff]
    %v318 = vld [vmem:[#allocation2 + $0xd0] sm:$0xff]
    %v319 = vld [vmem:[#allocation2 + $0xe8] sm:$0xff]
    %v320 = vld [vmem:[#allocation2 + $0xf0] sm:$0xff]
    %v321 = vld [vmem:[#allocation2 + $0x108] sm:$0xff]
    %v322 = vld [vmem:[#allocation2 + $0x110] sm:$0xff]
    %v323 = vld [vmem:[#allocation2 + $0x128] sm:$0xff]
    %v324 = vld [vmem:[#allocation2 + $0x130] sm:$0xff]
    %v325 = vld [vmem:[#allocation2 + $0x148] sm:$0xff]
    %v326 = vld [vmem:[#allocation2 + $0x150] sm:$0xff]
    %v327 = vld [vmem:[#allocation2 + $0x168] sm:$0xff]
    %v328 = vld [vmem:[#allocation2 + $0x170] sm:$0xff]
    %v329 = vld [vmem:[#allocation2 + $0x188] sm:$0xff]
    %v330 = vld [vmem:[#allocation2 + $0x190] sm:$0xff]
    %v331 = vld [vmem:[#allocation2 + $0x1a8] sm:$0xff]
    %v332 = vld [vmem:[#allocation2 + $0x1b0] sm:$0xff]
    %v333 = vld [vmem:[#allocation2 + $0x1c8] sm:$0xff]
    %v334 = vld [vmem:[#allocation2 + $0x1d0] sm:$0xff]
    %v335 = vld [vmem:[#allocation2 + $0x1e8] sm:$0xff]
    %v336 = vld [vmem:[#allocation2 + $0x1f0] sm:$0xff]
    %v337 = vld [vmem:[#allocation2 + $0x208] sm:$0xff]
    %v338 = vld [vmem:[#allocation2 + $0x210] sm:$0xff]
    %v339 = vld [vmem:[#allocation2 + $0x228] sm:$0xff]
    %v340 = vld [vmem:[#allocation2 + $0x230] sm:$0xff]
    %v341 = vld [vmem:[#allocation2 + $0x248] sm:$0xff]
    %v342 = vld [vmem:[#allocation2 + $0x250] sm:$0xff]
    %v343 = vld [vmem:[#allocation2 + $0x268] sm:$0xff]
    %v344 = vld [vmem:[#allocation2 + $0x270] sm:$0xff]
    %v345 = vld [vmem:[#allocation2 + $0x288] sm:$0xff]
    %v346 = vld [vmem:[#allocation2 + $0x290] sm:$0xff]
    %v347 = vld [vmem:[#allocation2 + $0x2a8] sm:$0xff]
    %v348 = vld [vmem:[#allocation2 + $0x2b0] sm:$0xff]
    %v349 = vld [vmem:[#allocation2 + $0x2c8] sm:$0xff]
    %v350 = vld [vmem:[#allocation2 + $0x2d0] sm:$0xff]
    %v351 = vld [vmem:[#allocation2 + $0x2e8] sm:$0xff]
    %v352 = vld [vmem:[#allocation2 + $0x2f0] sm:$0xff]
    %v353 = vld [vmem:[#allocation2 + $0x308] sm:$0xff]
    %v354 = vld [vmem:[#allocation2 + $0x310] sm:$0xff]
    %v355 = vld [vmem:[#allocation2 + $0x328] sm:$0xff]
    %v356 = vld [vmem:[#allocation2 + $0x330] sm:$0xff]
    %v357 = vld [vmem:[#allocation2 + $0x348] sm:$0xff]
    %v358 = vld [vmem:[#allocation2 + $0x350] sm:$0xff]
    %v359 = vld [vmem:[#allocation2 + $0x368] sm:$0xff]
    %v360 = vld [vmem:[#allocation2 + $0x370] sm:$0xff]
    %v361 = vld [vmem:[#allocation2 + $0x388] sm:$0xff]
    %v362 = vld [vmem:[#allocation2 + $0x390] sm:$0xff]
    %v363 = vld [vmem:[#allocation2 + $0x3a8] sm:$0xff]
    %v364 = vld [vmem:[#allocation2 + $0x3b0] sm:$0xff]
    %v365 = vld [vmem:[#allocation2 + $0x3c8] sm:$0xff]
    %v366 = vld [vmem:[#allocation2 + $0x3d0] sm:$0xff]
    %v367 = vld [vmem:[#allocation2 + $0x3e8] sm:$0xff]
    %v368 = vld [vmem:[#allocation2 + $0x3f0] sm:$0xff]
    %v369 = vld [vmem:[#allocation2 + $0x408] sm:$0xff]
    %v370 = vld [vmem:[#allocation2 + $0x410] sm:$0xff]
    %v371 = vld [vmem:[#allocation2 + $0x428] sm:$0xff]
    %v372 = vld [vmem:[#allocation2 + $0x430] sm:$0xff]
    %v373 = vld [vmem:[#allocation2 + $0x448] sm:$0xff]
    %v374 = vld [vmem:[#allocation2 + $0x450] sm:$0xff]
    %v375 = vld [vmem:[#allocation2 + $0x468] sm:$0xff]
    %v376 = vld [vmem:[#allocation2 + $0x470] sm:$0xff]
    %v377 = vld [vmem:[#allocation2 + $0x9] sm:$0xff]
    %v378 = vld [vmem:[#allocation2 + $0x11] sm:$0xff]
    %v379 = vld [vmem:[#allocation2 + $0x29] sm:$0xff]
    %v380 = vld [vmem:[#allocation2 + $0x31] sm:$0xff]
    %v381 = vld [vmem:[#allocation2 + $0x49] sm:$0xff]
    %v382 = vld [vmem:[#allocation2 + $0x51] sm:$0xff]
    %v383 = vld [vmem:[#allocation2 + $0x69] sm:$0xff]
    %v384 = vld [vmem:[#allocation2 + $0x71] sm:$0xff]
    %v385 = vld [vmem:[#allocation2 + $0x89] sm:$0xff]
    %v386 = vld [vmem:[#allocation2 + $0x91] sm:$0xff]
    %v387 = vld [vmem:[#allocation2 + $0xa9] sm:$0xff]
    %v388 = vld [vmem:[#allocation2 + $0xb1] sm:$0xff]
    %v389 = vld [vmem:[#allocation2 + $0xc9] sm:$0xff]
    %v390 = vld [vmem:[#allocation2 + $0xd1] sm:$0xff]
    %v391 = vld [vmem:[#allocation2 + $0xe9] sm:$0xff]
    %v392 = vld [vmem:[#allocation2 + $0xf1] sm:$0xff]
    %v393 = vld [vmem:[#allocation2 + $0x109] sm:$0xff]
    %v394 = vld [vmem:[#allocation2 + $0x111] sm:$0xff]
    %v395 = vld [vmem:[#allocation2 + $0x129] sm:$0xff]
    %v396 = vld [vmem:[#allocation2 + $0x131] sm:$0xff]
    %v397 = vld [vmem:[#allocation2 + $0x149] sm:$0xff]
    %v398 = vld [vmem:[#allocation2 + $0x151] sm:$0xff]
    %v399 = vld [vmem:[#allocation2 + $0x169] sm:$0xff]
    %v400 = vld [vmem:[#allocation2 + $0x171] sm:$0xff]
    %v401 = vld [vmem:[#allocation2 + $0x189] sm:$0xff]
    %v402 = vld [vmem:[#allocation2 + $0x191] sm:$0xff]
    %v403 = vld [vmem:[#allocation2 + $0x1a9] sm:$0xff]
    %v404 = vld [vmem:[#allocation2 + $0x1b1] sm:$0xff]
    %v405 = vld [vmem:[#allocation2 + $0x1c9] sm:$0xff]
    %v406 = vld [vmem:[#allocation2 + $0x1d1] sm:$0xff]
    %v407 = vld [vmem:[#allocation2 + $0x1e9] sm:$0xff]
    %v408 = vld [vmem:[#allocation2 + $0x1f1] sm:$0xff]
    %v409 = vld [vmem:[#allocation2 + $0x209] sm:$0xff]
    %v410 = vld [vmem:[#allocation2 + $0x211] sm:$0xff]
    %v411 = vld [vmem:[#allocation2 + $0x229] sm:$0xff]
    %v412 = vld [vmem:[#allocation2 + $0x231] sm:$0xff]
    %v413 = vld [vmem:[#allocation2 + $0x249] sm:$0xff]
    %v414 = vld [vmem:[#allocation2 + $0x251] sm:$0xff]
    %v415 = vld [vmem:[#allocation2 + $0x269] sm:$0xff]
    %v416 = vld [vmem:[#allocation2 + $0x271] sm:$0xff]
    %v417 = vld [vmem:[#allocation2 + $0x289] sm:$0xff]
    %v418 = vld [vmem:[#allocation2 + $0x291] sm:$0xff]
    %v419 = vld [vmem:[#allocation2 + $0x2a9] sm:$0xff]
    %v420 = vld [vmem:[#allocation2 + $0x2b1] sm:$0xff]
    %v421 = vld [vmem:[#allocation2 + $0x2c9] sm:$0xff]
    %v422 = vld [vmem:[#allocation2 + $0x2d1] sm:$0xff]
    %v423 = vld [vmem:[#allocation2 + $0x2e9] sm:$0xff]
    %v424 = vld [vmem:[#allocation2 + $0x2f1] sm:$0xff]
    %v425 = vld [vmem:[#allocation2 + $0x309] sm:$0xff]
    %v426 = vld [vmem:[#allocation2 + $0x311] sm:$0xff]
    %v427 = vld [vmem:[#allocation2 + $0x329] sm:$0xff]
    %v428 = vld [vmem:[#allocation2 + $0x331] sm:$0xff]
    %v429 = vld [vmem:[#allocation2 + $0x349] sm:$0xff]
    %v430 = vld [vmem:[#allocation2 + $0x351] sm:$0xff]
    %v431 = vld [vmem:[#allocation2 + $0x369] sm:$0xff]
    %v432 = vld [vmem:[#allocation2 + $0x371] sm:$0xff]
    %v433 = vld [vmem:[#allocation2 + $0x389] sm:$0xff]
    %v434 = vld [vmem:[#allocation2 + $0x391] sm:$0xff]
    %v435 = vld [vmem:[#allocation2 + $0x3a9] sm:$0xff]
    %v436 = vld [vmem:[#allocation2 + $0x3b1] sm:$0xff]
    %v437 = vld [vmem:[#allocation2 + $0x3c9] sm:$0xff]
    %v438 = vld [vmem:[#allocation2 + $0x3d1] sm:$0xff]
    %v439 = vld [vmem:[#allocation2 + $0x3e9] sm:$0xff]
    %v440 = vld [vmem:[#allocation2 + $0x3f1] sm:$0xff]
    %v441 = vld [vmem:[#allocation2 + $0x409] sm:$0xff]
    %v442 = vld [vmem:[#allocation2 + $0x411] sm:$0xff]
    %v443 = vld [vmem:[#allocation2 + $0x429] sm:$0xff]
    %v444 = vld [vmem:[#allocation2 + $0x431] sm:$0xff]
    %v445 = vld [vmem:[#allocation2 + $0x449] sm:$0xff]
    %v446 = vld [vmem:[#allocation2 + $0x451] sm:$0xff]
    %v447 = vld [vmem:[#allocation2 + $0x469] sm:$0xff]
    %v448 = vld [vmem:[#allocation2 + $0x471] sm:$0xff]
    %513 = vrot.lane.b32.xlu0 %v305, 8
    %v514 = vpop.permute.xlu0 %513
    %515 = vrot.lane.b32.xlu0 %v306, 8
    %v516 = vpop.permute.xlu0 %515
    %517 = vrot.lane.b32.xlu0 %v307, 8
    %v518 = vpop.permute.xlu0 %517
    %519 = vrot.lane.b32.xlu0 %v308, 8
    %v520 = vpop.permute.xlu0 %519
    %521 = vrot.lane.b32.xlu0 %v309, 8
    %v522 = vpop.permute.xlu0 %521
    %523 = vrot.lane.b32.xlu0 %v310, 8
    %v524 = vpop.permute.xlu0 %523
    %525 = vrot.lane.b32.xlu0 %v311, 8
    %v526 = vpop.permute.xlu0 %525
    %527 = vrot.lane.b32.xlu0 %v312, 8
    %v528 = vpop.permute.xlu0 %527
    %529 = vrot.lane.b32.xlu0 %v313, 8
    %v530 = vpop.permute.xlu0 %529
    %531 = vrot.lane.b32.xlu0 %v314, 8
    %v532 = vpop.permute.xlu0 %531
    %533 = vrot.lane.b32.xlu0 %v315, 8
    %v534 = vpop.permute.xlu0 %533
    %535 = vrot.lane.b32.xlu0 %v316, 8
    %v536 = vpop.permute.xlu0 %535
    %537 = vrot.lane.b32.xlu0 %v317, 8
    %v538 = vpop.permute.xlu0 %537
    %539 = vrot.lane.b32.xlu0 %v318, 8
    %v540 = vpop.permute.xlu0 %539
    %541 = vrot.lane.b32.xlu0 %v319, 8
    %v542 = vpop.permute.xlu0 %541
    %543 = vrot.lane.b32.xlu0 %v320, 8
    %v544 = vpop.permute.xlu0 %543
    %545 = vrot.lane.b32.xlu0 %v321, 8
    %v546 = vpop.permute.xlu0 %545
    %547 = vrot.lane.b32.xlu0 %v322, 8
    %v548 = vpop.permute.xlu0 %547
    %549 = vrot.lane.b32.xlu0 %v323, 8
    %v550 = vpop.permute.xlu0 %549
    %551 = vrot.lane.b32.xlu0 %v324, 8
    %v552 = vpop.permute.xlu0 %551
    %553 = vrot.lane.b32.xlu0 %v325, 8
    %v554 = vpop.permute.xlu0 %553
    %555 = vrot.lane.b32.xlu0 %v326, 8
    %v556 = vpop.permute.xlu0 %555
    %557 = vrot.lane.b32.xlu0 %v327, 8
    %v558 = vpop.permute.xlu0 %557
    %559 = vrot.lane.b32.xlu0 %v328, 8
    %v560 = vpop.permute.xlu0 %559
    %561 = vrot.lane.b32.xlu0 %v329, 8
    %v562 = vpop.permute.xlu0 %561
    %563 = vrot.lane.b32.xlu0 %v330, 8
    %v564 = vpop.permute.xlu0 %563
    %565 = vrot.lane.b32.xlu0 %v331, 8
    %v566 = vpop.permute.xlu0 %565
    %567 = vrot.lane.b32.xlu0 %v332, 8
    %v568 = vpop.permute.xlu0 %567
    %569 = vrot.lane.b32.xlu0 %v333, 8
    %v570 = vpop.permute.xlu0 %569
    %571 = vrot.lane.b32.xlu0 %v334, 8
    %v572 = vpop.permute.xlu0 %571
    %573 = vrot.lane.b32.xlu0 %v335, 8
    %v574 = vpop.permute.xlu0 %573
    %575 = vrot.lane.b32.xlu0 %v336, 8
    %v576 = vpop.permute.xlu0 %575
    %577 = vrot.lane.b32.xlu0 %v341, 8
    %v578 = vpop.permute.xlu0 %577
    %579 = vrot.lane.b32.xlu0 %v342, 8
    %v580 = vpop.permute.xlu0 %579
    %581 = vrot.lane.b32.xlu0 %v343, 8
    %v582 = vpop.permute.xlu0 %581
    %583 = vrot.lane.b32.xlu0 %v344, 8
    %v584 = vpop.permute.xlu0 %583
    %585 = vrot.lane.b32.xlu0 %v345, 8
    %v586 = vpop.permute.xlu0 %585
    %587 = vrot.lane.b32.xlu0 %v346, 8
    %v588 = vpop.permute.xlu0 %587
    %589 = vrot.lane.b32.xlu0 %v347, 8
    %v590 = vpop.permute.xlu0 %589
    %591 = vrot.lane.b32.xlu0 %v348, 8
    %v592 = vpop.permute.xlu0 %591
    %593 = vrot.lane.b32.xlu0 %v349, 8
    %v594 = vpop.permute.xlu0 %593
    %595 = vrot.lane.b32.xlu0 %v350, 8
    %v596 = vpop.permute.xlu0 %595
    %597 = vrot.lane.b32.xlu0 %v351, 8
    %v598 = vpop.permute.xlu0 %597
    %599 = vrot.lane.b32.xlu0 %v352, 8
    %v600 = vpop.permute.xlu0 %599
    %601 = vrot.lane.b32.xlu0 %v353, 8
    %v602 = vpop.permute.xlu0 %601
    %603 = vrot.lane.b32.xlu0 %v354, 8
    %v604 = vpop.permute.xlu0 %603
    %605 = vrot.lane.b32.xlu0 %v355, 8
    %v606 = vpop.permute.xlu0 %605
    %607 = vrot.lane.b32.xlu0 %v356, 8
    %v608 = vpop.permute.xlu0 %607
    %609 = vrot.lane.b32.xlu0 %v357, 8
    %v610 = vpop.permute.xlu0 %609
    %611 = vrot.lane.b32.xlu0 %v358, 8
    %v612 = vpop.permute.xlu0 %611
    %613 = vrot.lane.b32.xlu0 %v359, 8
    %v614 = vpop.permute.xlu0 %613
    %615 = vrot.lane.b32.xlu0 %v360, 8
    %v616 = vpop.permute.xlu0 %615
    %617 = vrot.lane.b32.xlu0 %v361, 8
    %v618 = vpop.permute.xlu0 %617
    %619 = vrot.lane.b32.xlu0 %v362, 8
    %v620 = vpop.permute.xlu0 %619
    %621 = vrot.lane.b32.xlu0 %v363, 8
    %v622 = vpop.permute.xlu0 %621
    %623 = vrot.lane.b32.xlu0 %v364, 8
    %v624 = vpop.permute.xlu0 %623
    %625 = vrot.lane.b32.xlu0 %v365, 8
    %v626 = vpop.permute.xlu0 %625
    %627 = vrot.lane.b32.xlu0 %v366, 8
    %v628 = vpop.permute.xlu0 %627
    %629 = vrot.lane.b32.xlu0 %v367, 8
    %v630 = vpop.permute.xlu0 %629
    %631 = vrot.lane.b32.xlu0 %v368, 8
    %v632 = vpop.permute.xlu0 %631
    %633 = vrot.lane.b32.xlu0 %v369, 8
    %v634 = vpop.permute.xlu0 %633
    %635 = vrot.lane.b32.xlu0 %v370, 8
    %v636 = vpop.permute.xlu0 %635
    %637 = vrot.lane.b32.xlu0 %v371, 8
    %v638 = vpop.permute.xlu0 %637
    %639 = vrot.lane.b32.xlu0 %v372, 8
    %v640 = vpop.permute.xlu0 %639
    %769 = vrot.lane.b32.xlu0 %v377, 16
    %v770 = vpop.permute.xlu0 %769
    %771 = vrot.lane.b32.xlu0 %v378, 16
    %v772 = vpop.permute.xlu0 %771
    %773 = vrot.lane.b32.xlu0 %v379, 16
    %v774 = vpop.permute.xlu0 %773
    %775 = vrot.lane.b32.xlu0 %v380, 16
    %v776 = vpop.permute.xlu0 %775
    %777 = vrot.lane.b32.xlu0 %v381, 16
    %v778 = vpop.permute.xlu0 %777
    %779 = vrot.lane.b32.xlu0 %v382, 16
    %v780 = vpop.permute.xlu0 %779
    %781 = vrot.lane.b32.xlu0 %v383, 16
    %v782 = vpop.permute.xlu0 %781
    %783 = vrot.lane.b32.xlu0 %v384, 16
    %v784 = vpop.permute.xlu0 %783
    %785 = vrot.lane.b32.xlu0 %v385, 16
    %v786 = vpop.permute.xlu0 %785
    %787 = vrot.lane.b32.xlu0 %v386, 16
    %v788 = vpop.permute.xlu0 %787
    %789 = vrot.lane.b32.xlu0 %v387, 16
    %v790 = vpop.permute.xlu0 %789
    %791 = vrot.lane.b32.xlu0 %v388, 16
    %v792 = vpop.permute.xlu0 %791
    %793 = vrot.lane.b32.xlu0 %v389, 16
    %v794 = vpop.permute.xlu0 %793
    %795 = vrot.lane.b32.xlu0 %v390, 16
    %v796 = vpop.permute.xlu0 %795
    %797 = vrot.lane.b32.xlu0 %v391, 16
    %v798 = vpop.permute.xlu0 %797
    %799 = vrot.lane.b32.xlu0 %v392, 16
    %v800 = vpop.permute.xlu0 %799
    %801 = vrot.lane.b32.xlu0 %v393, 16
    %v802 = vpop.permute.xlu0 %801
    %803 = vrot.lane.b32.xlu0 %v394, 16
    %v804 = vpop.permute.xlu0 %803
    %805 = vrot.lane.b32.xlu0 %v395, 16
    %v806 = vpop.permute.xlu0 %805
    %807 = vrot.lane.b32.xlu0 %v396, 16
    %v808 = vpop.permute.xlu0 %807
    %809 = vrot.lane.b32.xlu0 %v397, 16
    %v810 = vpop.permute.xlu0 %809
    %811 = vrot.lane.b32.xlu0 %v398, 16
    %v812 = vpop.permute.xlu0 %811
    %813 = vrot.lane.b32.xlu0 %v399, 16
    %v814 = vpop.permute.xlu0 %813
    %815 = vrot.lane.b32.xlu0 %v400, 16
    %v816 = vpop.permute.xlu0 %815
    %817 = vrot.lane.b32.xlu0 %v401, 16
    %v818 = vpop.permute.xlu0 %817
    %819 = vrot.lane.b32.xlu0 %v402, 16
    %v820 = vpop.permute.xlu0 %819
    %821 = vrot.lane.b32.xlu0 %v403, 16
    %v822 = vpop.permute.xlu0 %821
    %823 = vrot.lane.b32.xlu0 %v404, 16
    %v824 = vpop.permute.xlu0 %823
    %825 = vrot.lane.b32.xlu0 %v405, 16
    %v826 = vpop.permute.xlu0 %825
    %827 = vrot.lane.b32.xlu0 %v406, 16
    %v828 = vpop.permute.xlu0 %827
    %829 = vrot.lane.b32.xlu0 %v407, 16
    %v830 = vpop.permute.xlu0 %829
    %831 = vrot.lane.b32.xlu0 %v408, 16
    %v832 = vpop.permute.xlu0 %831
    %833 = vrot.lane.b32.xlu0 %v413, 16
    %v834 = vpop.permute.xlu0 %833
    %835 = vrot.lane.b32.xlu0 %v414, 16
    %v836 = vpop.permute.xlu0 %835
    %837 = vrot.lane.b32.xlu0 %v415, 16
    %v838 = vpop.permute.xlu0 %837
    %839 = vrot.lane.b32.xlu0 %v416, 16
    %v840 = vpop.permute.xlu0 %839
    %841 = vrot.lane.b32.xlu0 %v417, 16
    %v842 = vpop.permute.xlu0 %841
    %843 = vrot.lane.b32.xlu0 %v418, 16
    %v844 = vpop.permute.xlu0 %843
    %845 = vrot.lane.b32.xlu0 %v419, 16
    %v846 = vpop.permute.xlu0 %845
    %847 = vrot.lane.b32.xlu0 %v420, 16
    %v848 = vpop.permute.xlu0 %847
    %849 = vrot.lane.b32.xlu0 %v421, 16
    %v850 = vpop.permute.xlu0 %849
    %851 = vrot.lane.b32.xlu0 %v422, 16
    %v852 = vpop.permute.xlu0 %851
    %853 = vrot.lane.b32.xlu0 %v423, 16
    %v854 = vpop.permute.xlu0 %853
    %855 = vrot.lane.b32.xlu0 %v424, 16
    %v856 = vpop.permute.xlu0 %855
    %857 = vrot.lane.b32.xlu0 %v425, 16
    %v858 = vpop.permute.xlu0 %857
    %859 = vrot.lane.b32.xlu0 %v426, 16
    %v860 = vpop.permute.xlu0 %859
    %861 = vrot.lane.b32.xlu0 %v427, 16
    %v862 = vpop.permute.xlu0 %861
    %863 = vrot.lane.b32.xlu0 %v428, 16
    %v864 = vpop.permute.xlu0 %863
    %865 = vrot.lane.b32.xlu0 %v429, 16
    %v866 = vpop.permute.xlu0 %865
    %867 = vrot.lane.b32.xlu0 %v430, 16
    %v868 = vpop.permute.xlu0 %867
    %869 = vrot.lane.b32.xlu0 %v431, 16
    %v870 = vpop.permute.xlu0 %869
    %871 = vrot.lane.b32.xlu0 %v432, 16
    %v872 = vpop.permute.xlu0 %871
    %873 = vrot.lane.b32.xlu0 %v433, 16
    %v874 = vpop.permute.xlu0 %873
    %875 = vrot.lane.b32.xlu0 %v434, 16
    %v876 = vpop.permute.xlu0 %875
    %877 = vrot.lane.b32.xlu0 %v435, 16
    %v878 = vpop.permute.xlu0 %877
    %879 = vrot.lane.b32.xlu0 %v436, 16
    %v880 = vpop.permute.xlu0 %879
    %881 = vrot.lane.b32.xlu0 %v437, 16
    %v882 = vpop.permute.xlu0 %881
    %883 = vrot.lane.b32.xlu0 %v438, 16
    %v884 = vpop.permute.xlu0 %883
    %885 = vrot.lane.b32.xlu0 %v439, 16
    %v886 = vpop.permute.xlu0 %885
    %887 = vrot.lane.b32.xlu0 %v440, 16
    %v888 = vpop.permute.xlu0 %887
    %889 = vrot.lane.b32.xlu0 %v441, 16
    %v890 = vpop.permute.xlu0 %889
    %891 = vrot.lane.b32.xlu0 %v442, 16
    %v892 = vpop.permute.xlu0 %891
    %893 = vrot.lane.b32.xlu0 %v443, 16
    %v894 = vpop.permute.xlu0 %893
    %895 = vrot.lane.b32.xlu0 %v444, 16
    %v896 = vpop.permute.xlu0 %895
    %1025 = vrot.lane.b32.xlu0 %v235, 24
    %v1026 = vpop.permute.xlu0 %1025
    %1027 = vrot.lane.b32.xlu0 %v236, 24
    %v1028 = vpop.permute.xlu0 %1027
    %1029 = vrot.lane.b32.xlu0 %v237, 24
    %v1030 = vpop.permute.xlu0 %1029
    %1031 = vrot.lane.b32.xlu0 %v238, 24
    %v1032 = vpop.permute.xlu0 %1031
    %1033 = vrot.lane.b32.xlu0 %v239, 24
    %v1034 = vpop.permute.xlu0 %1033
    %1035 = vrot.lane.b32.xlu0 %v240, 24
    %v1036 = vpop.permute.xlu0 %1035
    %1037 = vrot.lane.b32.xlu0 %v241, 24
    %v1038 = vpop.permute.xlu0 %1037
    %1039 = vrot.lane.b32.xlu0 %v242, 24
    %v1040 = vpop.permute.xlu0 %1039
    %1041 = vrot.lane.b32.xlu0 %v243, 24
    %v1042 = vpop.permute.xlu0 %1041
    %1043 = vrot.lane.b32.xlu0 %v244, 24
    %v1044 = vpop.permute.xlu0 %1043
    %1045 = vrot.lane.b32.xlu0 %v245, 24
    %v1046 = vpop.permute.xlu0 %1045
    %1047 = vrot.lane.b32.xlu0 %v246, 24
    %v1048 = vpop.permute.xlu0 %1047
    %1049 = vrot.lane.b32.xlu0 %v247, 24
    %v1050 = vpop.permute.xlu0 %1049
    %1051 = vrot.lane.b32.xlu0 %v248, 24
    %v1052 = vpop.permute.xlu0 %1051
    %1053 = vrot.lane.b32.xlu0 %v249, 24
    %v1054 = vpop.permute.xlu0 %1053
    %1055 = vrot.lane.b32.xlu0 %v250, 24
    %v1056 = vpop.permute.xlu0 %1055
    %1057 = vrot.lane.b32.xlu0 %v251, 24
    %v1058 = vpop.permute.xlu0 %1057
    %1059 = vrot.lane.b32.xlu0 %v252, 24
    %v1060 = vpop.permute.xlu0 %1059
    %1061 = vrot.lane.b32.xlu0 %v253, 24
    %v1062 = vpop.permute.xlu0 %1061
    %1063 = vrot.lane.b32.xlu0 %v254, 24
    %v1064 = vpop.permute.xlu0 %1063
    %1065 = vrot.lane.b32.xlu0 %v255, 24
    %v1066 = vpop.permute.xlu0 %1065
    %1067 = vrot.lane.b32.xlu0 %v256, 24
    %v1068 = vpop.permute.xlu0 %1067
    %1069 = vrot.lane.b32.xlu0 %v257, 24
    %v1070 = vpop.permute.xlu0 %1069
    %1071 = vrot.lane.b32.xlu0 %v258, 24
    %v1072 = vpop.permute.xlu0 %1071
    %1073 = vrot.lane.b32.xlu0 %v259, 24
    %v1074 = vpop.permute.xlu0 %1073
    %1075 = vrot.lane.b32.xlu0 %v260, 24
    %v1076 = vpop.permute.xlu0 %1075
    %1077 = vrot.lane.b32.xlu0 %v261, 24
    %v1078 = vpop.permute.xlu0 %1077
    %1079 = vrot.lane.b32.xlu0 %v262, 24
    %v1080 = vpop.permute.xlu0 %1079
    %1081 = vrot.lane.b32.xlu0 %v263, 24
    %v1082 = vpop.permute.xlu0 %1081
    %1083 = vrot.lane.b32.xlu0 %v264, 24
    %v1084 = vpop.permute.xlu0 %1083
    %1085 = vrot.lane.b32.xlu0 %v265, 24
    %v1086 = vpop.permute.xlu0 %1085
    %1087 = vrot.lane.b32.xlu0 %v266, 24
    %v1088 = vpop.permute.xlu0 %1087
    %1089 = vrot.lane.b32.xlu0 %v271, 24
    %v1090 = vpop.permute.xlu0 %1089
    %1091 = vrot.lane.b32.xlu0 %v272, 24
    %v1092 = vpop.permute.xlu0 %1091
    %1093 = vrot.lane.b32.xlu0 %v273, 24
    %v1094 = vpop.permute.xlu0 %1093
    %1095 = vrot.lane.b32.xlu0 %v274, 24
    %v1096 = vpop.permute.xlu0 %1095
    %1097 = vrot.lane.b32.xlu0 %v275, 24
    %v1098 = vpop.permute.xlu0 %1097
    %1099 = vrot.lane.b32.xlu0 %v276, 24
    %v1100 = vpop.permute.xlu0 %1099
    %1101 = vrot.lane.b32.xlu0 %v277, 24
    %v1102 = vpop.permute.xlu0 %1101
    %1103 = vrot.lane.b32.xlu0 %v278, 24
    %v1104 = vpop.permute.xlu0 %1103
    %1105 = vrot.lane.b32.xlu0 %v279, 24
    %v1106 = vpop.permute.xlu0 %1105
    %1107 = vrot.lane.b32.xlu0 %v280, 24
    %v1108 = vpop.permute.xlu0 %1107
    %1109 = vrot.lane.b32.xlu0 %v281, 24
    %v1110 = vpop.permute.xlu0 %1109
    %1111 = vrot.lane.b32.xlu0 %v282, 24
    %v1112 = vpop.permute.xlu0 %1111
    %1113 = vrot.lane.b32.xlu0 %v283, 24
    %v1114 = vpop.permute.xlu0 %1113
    %1115 = vrot.lane.b32.xlu0 %v284, 24
    %v1116 = vpop.permute.xlu0 %1115
    %1117 = vrot.lane.b32.xlu0 %v285, 24
    %v1118 = vpop.permute.xlu0 %1117
    %1119 = vrot.lane.b32.xlu0 %v286, 24
    %v1120 = vpop.permute.xlu0 %1119
    %1121 = vrot.lane.b32.xlu0 %v287, 24
    %v1122 = vpop.permute.xlu0 %1121
    %1123 = vrot.lane.b32.xlu0 %v288, 24
    %v1124 = vpop.permute.xlu0 %1123
    %1125 = vrot.lane.b32.xlu0 %v289, 24
    %v1126 = vpop.permute.xlu0 %1125
    %1127 = vrot.lane.b32.xlu0 %v290, 24
    %v1128 = vpop.permute.xlu0 %1127
    %1129 = vrot.lane.b32.xlu0 %v291, 24
    %v1130 = vpop.permute.xlu0 %1129
    %1131 = vrot.lane.b32.xlu0 %v292, 24
    %v1132 = vpop.permute.xlu0 %1131
    %1133 = vrot.lane.b32.xlu0 %v293, 24
    %v1134 = vpop.permute.xlu0 %1133
    %1135 = vrot.lane.b32.xlu0 %v294, 24
    %v1136 = vpop.permute.xlu0 %1135
    %1137 = vrot.lane.b32.xlu0 %v295, 24
    %v1138 = vpop.permute.xlu0 %1137
    %1139 = vrot.lane.b32.xlu0 %v296, 24
    %v1140 = vpop.permute.xlu0 %1139
    %1141 = vrot.lane.b32.xlu0 %v297, 24
    %v1142 = vpop.permute.xlu0 %1141
    %1143 = vrot.lane.b32.xlu0 %v298, 24
    %v1144 = vpop.permute.xlu0 %1143
    %1145 = vrot.lane.b32.xlu0 %v299, 24
    %v1146 = vpop.permute.xlu0 %1145
    %1147 = vrot.lane.b32.xlu0 %v300, 24
    %v1148 = vpop.permute.xlu0 %1147
    %1149 = vrot.lane.b32.xlu0 %v301, 24
    %v1150 = vpop.permute.xlu0 %1149
    %1151 = vrot.lane.b32.xlu0 %v302, 24
    %v1152 = vpop.permute.xlu0 %1151
    %1221 = vrot.lane.b32.xlu0 %v307, 32
    %v1222 = vpop.permute.xlu0 %1221
    %1223 = vrot.lane.b32.xlu0 %v308, 32
    %v1224 = vpop.permute.xlu0 %1223
    %1225 = vrot.lane.b32.xlu0 %v309, 32
    %v1226 = vpop.permute.xlu0 %1225
    %1227 = vrot.lane.b32.xlu0 %v310, 32
    %v1228 = vpop.permute.xlu0 %1227
    %1229 = vrot.lane.b32.xlu0 %v311, 32
    %v1230 = vpop.permute.xlu0 %1229
    %1231 = vrot.lane.b32.xlu0 %v312, 32
    %v1232 = vpop.permute.xlu0 %1231
    %1233 = vrot.lane.b32.xlu0 %v313, 32
    %v1234 = vpop.permute.xlu0 %1233
    %1235 = vrot.lane.b32.xlu0 %v314, 32
    %v1236 = vpop.permute.xlu0 %1235
    %1237 = vrot.lane.b32.xlu0 %v315, 32
    %v1238 = vpop.permute.xlu0 %1237
    %1239 = vrot.lane.b32.xlu0 %v316, 32
    %v1240 = vpop.permute.xlu0 %1239
    %1241 = vrot.lane.b32.xlu0 %v317, 32
    %v1242 = vpop.permute.xlu0 %1241
    %1243 = vrot.lane.b32.xlu0 %v318, 32
    %v1244 = vpop.permute.xlu0 %1243
    %1245 = vrot.lane.b32.xlu0 %v319, 32
    %v1246 = vpop.permute.xlu0 %1245
    %1247 = vrot.lane.b32.xlu0 %v320, 32
    %v1248 = vpop.permute.xlu0 %1247
    %1249 = vrot.lane.b32.xlu0 %v321, 32
    %v1250 = vpop.permute.xlu0 %1249
    %1251 = vrot.lane.b32.xlu0 %v322, 32
    %v1252 = vpop.permute.xlu0 %1251
    %1253 = vrot.lane.b32.xlu0 %v323, 32
    %v1254 = vpop.permute.xlu0 %1253
    %1255 = vrot.lane.b32.xlu0 %v324, 32
    %v1256 = vpop.permute.xlu0 %1255
    %1257 = vrot.lane.b32.xlu0 %v325, 32
    %v1258 = vpop.permute.xlu0 %1257
    %1259 = vrot.lane.b32.xlu0 %v326, 32
    %v1260 = vpop.permute.xlu0 %1259
    %1261 = vrot.lane.b32.xlu0 %v327, 32
    %v1262 = vpop.permute.xlu0 %1261
    %1263 = vrot.lane.b32.xlu0 %v328, 32
    %v1264 = vpop.permute.xlu0 %1263
    %1265 = vrot.lane.b32.xlu0 %v329, 32
    %v1266 = vpop.permute.xlu0 %1265
    %1267 = vrot.lane.b32.xlu0 %v330, 32
    %v1268 = vpop.permute.xlu0 %1267
    %1269 = vrot.lane.b32.xlu0 %v331, 32
    %v1270 = vpop.permute.xlu0 %1269
    %1271 = vrot.lane.b32.xlu0 %v332, 32
    %v1272 = vpop.permute.xlu0 %1271
    %1273 = vrot.lane.b32.xlu0 %v333, 32
    %v1274 = vpop.permute.xlu0 %1273
    %1275 = vrot.lane.b32.xlu0 %v334, 32
    %v1276 = vpop.permute.xlu0 %1275
    %1277 = vrot.lane.b32.xlu0 %v335, 32
    %v1278 = vpop.permute.xlu0 %1277
    %1279 = vrot.lane.b32.xlu0 %v336, 32
    %v1280 = vpop.permute.xlu0 %1279
    %1281 = vrot.lane.b32.xlu0 %v337, 32
    %v1282 = vpop.permute.xlu0 %1281
    %1283 = vrot.lane.b32.xlu0 %v338, 32
    %v1284 = vpop.permute.xlu0 %1283
    %1285 = vrot.lane.b32.xlu0 %v343, 32
    %v1286 = vpop.permute.xlu0 %1285
    %1287 = vrot.lane.b32.xlu0 %v344, 32
    %v1288 = vpop.permute.xlu0 %1287
    %1289 = vrot.lane.b32.xlu0 %v345, 32
    %v1290 = vpop.permute.xlu0 %1289
    %1291 = vrot.lane.b32.xlu0 %v346, 32
    %v1292 = vpop.permute.xlu0 %1291
    %1293 = vrot.lane.b32.xlu0 %v347, 32
    %v1294 = vpop.permute.xlu0 %1293
    %1295 = vrot.lane.b32.xlu0 %v348, 32
    %v1296 = vpop.permute.xlu0 %1295
    %1297 = vrot.lane.b32.xlu0 %v349, 32
    %v1298 = vpop.permute.xlu0 %1297
    %1299 = vrot.lane.b32.xlu0 %v350, 32
    %v1300 = vpop.permute.xlu0 %1299
    %1301 = vrot.lane.b32.xlu0 %v351, 32
    %v1302 = vpop.permute.xlu0 %1301
    %1303 = vrot.lane.b32.xlu0 %v352, 32
    %v1304 = vpop.permute.xlu0 %1303
    %1305 = vrot.lane.b32.xlu0 %v353, 32
    %v1306 = vpop.permute.xlu0 %1305
    %1307 = vrot.lane.b32.xlu0 %v354, 32
    %v1308 = vpop.permute.xlu0 %1307
    %1309 = vrot.lane.b32.xlu0 %v355, 32
    %v1310 = vpop.permute.xlu0 %1309
    %1311 = vrot.lane.b32.xlu0 %v356, 32
    %v1312 = vpop.permute.xlu0 %1311
    %1313 = vrot.lane.b32.xlu0 %v357, 32
    %v1314 = vpop.permute.xlu0 %1313
    %1315 = vrot.lane.b32.xlu0 %v358, 32
    %v1316 = vpop.permute.xlu0 %1315
    %1317 = vrot.lane.b32.xlu0 %v359, 32
    %v1318 = vpop.permute.xlu0 %1317
    %1319 = vrot.lane.b32.xlu0 %v360, 32
    %v1320 = vpop.permute.xlu0 %1319
    %1321 = vrot.lane.b32.xlu0 %v361, 32
    %v1322 = vpop.permute.xlu0 %1321
    %1323 = vrot.lane.b32.xlu0 %v362, 32
    %v1324 = vpop.permute.xlu0 %1323
    %1325 = vrot.lane.b32.xlu0 %v363, 32
    %v1326 = vpop.permute.xlu0 %1325
    %1327 = vrot.lane.b32.xlu0 %v364, 32
    %v1328 = vpop.permute.xlu0 %1327
    %1329 = vrot.lane.b32.xlu0 %v365, 32
    %v1330 = vpop.permute.xlu0 %1329
    %1331 = vrot.lane.b32.xlu0 %v366, 32
    %v1332 = vpop.permute.xlu0 %1331
    %1333 = vrot.lane.b32.xlu0 %v367, 32
    %v1334 = vpop.permute.xlu0 %1333
    %1335 = vrot.lane.b32.xlu0 %v368, 32
    %v1336 = vpop.permute.xlu0 %1335
    %1337 = vrot.lane.b32.xlu0 %v369, 32
    %v1338 = vpop.permute.xlu0 %1337
    %1339 = vrot.lane.b32.xlu0 %v370, 32
    %v1340 = vpop.permute.xlu0 %1339
    %1341 = vrot.lane.b32.xlu0 %v371, 32
    %v1342 = vpop.permute.xlu0 %1341
    %1343 = vrot.lane.b32.xlu0 %v372, 32
    %v1344 = vpop.permute.xlu0 %1343
    %1345 = vrot.lane.b32.xlu0 %v373, 32
    %v1346 = vpop.permute.xlu0 %1345
    %1347 = vrot.lane.b32.xlu0 %v374, 32
    %v1348 = vpop.permute.xlu0 %1347
    %1417 = vrot.lane.b32.xlu0 %v379, 40
    %v1418 = vpop.permute.xlu0 %1417
    %1419 = vrot.lane.b32.xlu0 %v380, 40
    %v1420 = vpop.permute.xlu0 %1419
    %1421 = vrot.lane.b32.xlu0 %v381, 40
    %v1422 = vpop.permute.xlu0 %1421
    %1423 = vrot.lane.b32.xlu0 %v382, 40
    %v1424 = vpop.permute.xlu0 %1423
    %1425 = vrot.lane.b32.xlu0 %v383, 40
    %v1426 = vpop.permute.xlu0 %1425
    %1427 = vrot.lane.b32.xlu0 %v384, 40
    %v1428 = vpop.permute.xlu0 %1427
    %1429 = vrot.lane.b32.xlu0 %v385, 40
    %v1430 = vpop.permute.xlu0 %1429
    %1431 = vrot.lane.b32.xlu0 %v386, 40
    %v1432 = vpop.permute.xlu0 %1431
    %1433 = vrot.lane.b32.xlu0 %v387, 40
    %v1434 = vpop.permute.xlu0 %1433
    %1435 = vrot.lane.b32.xlu0 %v388, 40
    %v1436 = vpop.permute.xlu0 %1435
    %1437 = vrot.lane.b32.xlu0 %v389, 40
    %v1438 = vpop.permute.xlu0 %1437
    %1439 = vrot.lane.b32.xlu0 %v390, 40
    %v1440 = vpop.permute.xlu0 %1439
    %1441 = vrot.lane.b32.xlu0 %v391, 40
    %v1442 = vpop.permute.xlu0 %1441
    %1443 = vrot.lane.b32.xlu0 %v392, 40
    %v1444 = vpop.permute.xlu0 %1443
    %1445 = vrot.lane.b32.xlu0 %v393, 40
    %v1446 = vpop.permute.xlu0 %1445
    %1447 = vrot.lane.b32.xlu0 %v394, 40
    %v1448 = vpop.permute.xlu0 %1447
    %1449 = vrot.lane.b32.xlu0 %v395, 40
    %v1450 = vpop.permute.xlu0 %1449
    %1451 = vrot.lane.b32.xlu0 %v396, 40
    %v1452 = vpop.permute.xlu0 %1451
    %1453 = vrot.lane.b32.xlu0 %v397, 40
    %v1454 = vpop.permute.xlu0 %1453
    %1455 = vrot.lane.b32.xlu0 %v398, 40
    %v1456 = vpop.permute.xlu0 %1455
    %1457 = vrot.lane.b32.xlu0 %v399, 40
    %v1458 = vpop.permute.xlu0 %1457
    %1459 = vrot.lane.b32.xlu0 %v400, 40
    %v1460 = vpop.permute.xlu0 %1459
    %1461 = vrot.lane.b32.xlu0 %v401, 40
    %v1462 = vpop.permute.xlu0 %1461
    %1463 = vrot.lane.b32.xlu0 %v402, 40
    %v1464 = vpop.permute.xlu0 %1463
    %1465 = vrot.lane.b32.xlu0 %v403, 40
    %v1466 = vpop.permute.xlu0 %1465
    %1467 = vrot.lane.b32.xlu0 %v404, 40
    %v1468 = vpop.permute.xlu0 %1467
    %1469 = vrot.lane.b32.xlu0 %v405, 40
    %v1470 = vpop.permute.xlu0 %1469
    %1471 = vrot.lane.b32.xlu0 %v406, 40
    %v1472 = vpop.permute.xlu0 %1471
    %1473 = vrot.lane.b32.xlu0 %v407, 40
    %v1474 = vpop.permute.xlu0 %1473
    %1475 = vrot.lane.b32.xlu0 %v408, 40
    %v1476 = vpop.permute.xlu0 %1475
    %1477 = vrot.lane.b32.xlu0 %v409, 40
    %v1478 = vpop.permute.xlu0 %1477
    %1479 = vrot.lane.b32.xlu0 %v410, 40
    %v1480 = vpop.permute.xlu0 %1479
    %1481 = vrot.lane.b32.xlu0 %v415, 40
    %v1482 = vpop.permute.xlu0 %1481
    %1483 = vrot.lane.b32.xlu0 %v416, 40
    %v1484 = vpop.permute.xlu0 %1483
    %1485 = vrot.lane.b32.xlu0 %v417, 40
    %v1486 = vpop.permute.xlu0 %1485
    %1487 = vrot.lane.b32.xlu0 %v418, 40
    %v1488 = vpop.permute.xlu0 %1487
    %1489 = vrot.lane.b32.xlu0 %v419, 40
    %v1490 = vpop.permute.xlu0 %1489
    %1491 = vrot.lane.b32.xlu0 %v420, 40
    %v1492 = vpop.permute.xlu0 %1491
    %1493 = vrot.lane.b32.xlu0 %v421, 40
    %v1494 = vpop.permute.xlu0 %1493
    %1495 = vrot.lane.b32.xlu0 %v422, 40
    %v1496 = vpop.permute.xlu0 %1495
    %1497 = vrot.lane.b32.xlu0 %v423, 40
    %v1498 = vpop.permute.xlu0 %1497
    %1499 = vrot.lane.b32.xlu0 %v424, 40
    %v1500 = vpop.permute.xlu0 %1499
    %1501 = vrot.lane.b32.xlu0 %v425, 40
    %v1502 = vpop.permute.xlu0 %1501
    %1503 = vrot.lane.b32.xlu0 %v426, 40
    %v1504 = vpop.permute.xlu0 %1503
    %1505 = vrot.lane.b32.xlu0 %v427, 40
    %v1506 = vpop.permute.xlu0 %1505
    %1507 = vrot.lane.b32.xlu0 %v428, 40
    %v1508 = vpop.permute.xlu0 %1507
    %1509 = vrot.lane.b32.xlu0 %v429, 40
    %v1510 = vpop.permute.xlu0 %1509
    %1511 = vrot.lane.b32.xlu0 %v430, 40
    %v1512 = vpop.permute.xlu0 %1511
    %1513 = vrot.lane.b32.xlu0 %v431, 40
    %v1514 = vpop.permute.xlu0 %1513
    %1515 = vrot.lane.b32.xlu0 %v432, 40
    %v1516 = vpop.permute.xlu0 %1515
    %1517 = vrot.lane.b32.xlu0 %v433, 40
    %v1518 = vpop.permute.xlu0 %1517
    %1519 = vrot.lane.b32.xlu0 %v434, 40
    %v1520 = vpop.permute.xlu0 %1519
    %1521 = vrot.lane.b32.xlu0 %v435, 40
    %v1522 = vpop.permute.xlu0 %1521
    %1523 = vrot.lane.b32.xlu0 %v436, 40
    %v1524 = vpop.permute.xlu0 %1523
    %1525 = vrot.lane.b32.xlu0 %v437, 40
    %v1526 = vpop.permute.xlu0 %1525
    %1527 = vrot.lane.b32.xlu0 %v438, 40
    %v1528 = vpop.permute.xlu0 %1527
    %1529 = vrot.lane.b32.xlu0 %v439, 40
    %v1530 = vpop.permute.xlu0 %1529
    %1531 = vrot.lane.b32.xlu0 %v440, 40
    %v1532 = vpop.permute.xlu0 %1531
    %1533 = vrot.lane.b32.xlu0 %v441, 40
    %v1534 = vpop.permute.xlu0 %1533
    %1535 = vrot.lane.b32.xlu0 %v442, 40
    %v1536 = vpop.permute.xlu0 %1535
    %1537 = vrot.lane.b32.xlu0 %v443, 40
    %v1538 = vpop.permute.xlu0 %1537
    %1539 = vrot.lane.b32.xlu0 %v444, 40
    %v1540 = vpop.permute.xlu0 %1539
    %1541 = vrot.lane.b32.xlu0 %v445, 40
    %v1542 = vpop.permute.xlu0 %1541
    %1543 = vrot.lane.b32.xlu0 %v446, 40
    %v1544 = vpop.permute.xlu0 %1543
    %1613 = vrot.lane.b32.xlu0 %v237, 48
    %v1614 = vpop.permute.xlu0 %1613
    %1615 = vrot.lane.b32.xlu0 %v238, 48
    %v1616 = vpop.permute.xlu0 %1615
    %1617 = vrot.lane.b32.xlu0 %v239, 48
    %v1618 = vpop.permute.xlu0 %1617
    %1619 = vrot.lane.b32.xlu0 %v240, 48
    %v1620 = vpop.permute.xlu0 %1619
    %1621 = vrot.lane.b32.xlu0 %v241, 48
    %v1622 = vpop.permute.xlu0 %1621
    %1623 = vrot.lane.b32.xlu0 %v242, 48
    %v1624 = vpop.permute.xlu0 %1623
    %1625 = vrot.lane.b32.xlu0 %v243, 48
    %v1626 = vpop.permute.xlu0 %1625
    %1627 = vrot.lane.b32.xlu0 %v244, 48
    %v1628 = vpop.permute.xlu0 %1627
    %1629 = vrot.lane.b32.xlu0 %v245, 48
    %v1630 = vpop.permute.xlu0 %1629
    %1631 = vrot.lane.b32.xlu0 %v246, 48
    %v1632 = vpop.permute.xlu0 %1631
    %1633 = vrot.lane.b32.xlu0 %v247, 48
    %v1634 = vpop.permute.xlu0 %1633
    %1635 = vrot.lane.b32.xlu0 %v248, 48
    %v1636 = vpop.permute.xlu0 %1635
    %1637 = vrot.lane.b32.xlu0 %v249, 48
    %v1638 = vpop.permute.xlu0 %1637
    %1639 = vrot.lane.b32.xlu0 %v250, 48
    %v1640 = vpop.permute.xlu0 %1639
    %1641 = vrot.lane.b32.xlu0 %v251, 48
    %v1642 = vpop.permute.xlu0 %1641
    %1643 = vrot.lane.b32.xlu0 %v252, 48
    %v1644 = vpop.permute.xlu0 %1643
    %1645 = vrot.lane.b32.xlu0 %v253, 48
    %v1646 = vpop.permute.xlu0 %1645
    %1647 = vrot.lane.b32.xlu0 %v254, 48
    %v1648 = vpop.permute.xlu0 %1647
    %1649 = vrot.lane.b32.xlu0 %v255, 48
    %v1650 = vpop.permute.xlu0 %1649
    %1651 = vrot.lane.b32.xlu0 %v256, 48
    %v1652 = vpop.permute.xlu0 %1651
    %1653 = vrot.lane.b32.xlu0 %v257, 48
    %v1654 = vpop.permute.xlu0 %1653
    %1655 = vrot.lane.b32.xlu0 %v258, 48
    %v1656 = vpop.permute.xlu0 %1655
    %1657 = vrot.lane.b32.xlu0 %v259, 48
    %v1658 = vpop.permute.xlu0 %1657
    %1659 = vrot.lane.b32.xlu0 %v260, 48
    %v1660 = vpop.permute.xlu0 %1659
    %1661 = vrot.lane.b32.xlu0 %v261, 48
    %v1662 = vpop.permute.xlu0 %1661
    %1663 = vrot.lane.b32.xlu0 %v262, 48
    %v1664 = vpop.permute.xlu0 %1663
    %1665 = vrot.lane.b32.xlu0 %v263, 48
    %v1666 = vpop.permute.xlu0 %1665
    %1667 = vrot.lane.b32.xlu0 %v264, 48
    %v1668 = vpop.permute.xlu0 %1667
    %1669 = vrot.lane.b32.xlu0 %v265, 48
    %v1670 = vpop.permute.xlu0 %1669
    %1671 = vrot.lane.b32.xlu0 %v266, 48
    %v1672 = vpop.permute.xlu0 %1671
    %1673 = vrot.lane.b32.xlu0 %v267, 48
    %v1674 = vpop.permute.xlu0 %1673
    %1675 = vrot.lane.b32.xlu0 %v268, 48
    %v1676 = vpop.permute.xlu0 %1675
    %1677 = vrot.lane.b32.xlu0 %v273, 48
    %v1678 = vpop.permute.xlu0 %1677
    %1679 = vrot.lane.b32.xlu0 %v274, 48
    %v1680 = vpop.permute.xlu0 %1679
    %1681 = vrot.lane.b32.xlu0 %v275, 48
    %v1682 = vpop.permute.xlu0 %1681
    %1683 = vrot.lane.b32.xlu0 %v276, 48
    %v1684 = vpop.permute.xlu0 %1683
    %1685 = vrot.lane.b32.xlu0 %v277, 48
    %v1686 = vpop.permute.xlu0 %1685
    %1687 = vrot.lane.b32.xlu0 %v278, 48
    %v1688 = vpop.permute.xlu0 %1687
    %1689 = vrot.lane.b32.xlu0 %v279, 48
    %v1690 = vpop.permute.xlu0 %1689
    %1691 = vrot.lane.b32.xlu0 %v280, 48
    %v1692 = vpop.permute.xlu0 %1691
    %1693 = vrot.lane.b32.xlu0 %v281, 48
    %v1694 = vpop.permute.xlu0 %1693
    %1695 = vrot.lane.b32.xlu0 %v282, 48
    %v1696 = vpop.permute.xlu0 %1695
    %1697 = vrot.lane.b32.xlu0 %v283, 48
    %v1698 = vpop.permute.xlu0 %1697
    %1699 = vrot.lane.b32.xlu0 %v284, 48
    %v1700 = vpop.permute.xlu0 %1699
    %1701 = vrot.lane.b32.xlu0 %v285, 48
    %v1702 = vpop.permute.xlu0 %1701
    %1703 = vrot.lane.b32.xlu0 %v286, 48
    %v1704 = vpop.permute.xlu0 %1703
    %1705 = vrot.lane.b32.xlu0 %v287, 48
    %v1706 = vpop.permute.xlu0 %1705
    %1707 = vrot.lane.b32.xlu0 %v288, 48
    %v1708 = vpop.permute.xlu0 %1707
    %1709 = vrot.lane.b32.xlu0 %v289, 48
    %v1710 = vpop.permute.xlu0 %1709
    %1711 = vrot.lane.b32.xlu0 %v290, 48
    %v1712 = vpop.permute.xlu0 %1711
    %1713 = vrot.lane.b32.xlu0 %v291, 48
    %v1714 = vpop.permute.xlu0 %1713
    %1715 = vrot.lane.b32.xlu0 %v292, 48
    %v1716 = vpop.permute.xlu0 %1715
    %1717 = vrot.lane.b32.xlu0 %v293, 48
    %v1718 = vpop.permute.xlu0 %1717
    %1719 = vrot.lane.b32.xlu0 %v294, 48
    %v1720 = vpop.permute.xlu0 %1719
    %1721 = vrot.lane.b32.xlu0 %v295, 48
    %v1722 = vpop.permute.xlu0 %1721
    %1723 = vrot.lane.b32.xlu0 %v296, 48
    %v1724 = vpop.permute.xlu0 %1723
    %1725 = vrot.lane.b32.xlu0 %v297, 48
    %v1726 = vpop.permute.xlu0 %1725
    %1727 = vrot.lane.b32.xlu0 %v298, 48
    %v1728 = vpop.permute.xlu0 %1727
    %1729 = vrot.lane.b32.xlu0 %v299, 48
    %v1730 = vpop.permute.xlu0 %1729
    %1731 = vrot.lane.b32.xlu0 %v300, 48
    %v1732 = vpop.permute.xlu0 %1731
    %1733 = vrot.lane.b32.xlu0 %v301, 48
    %v1734 = vpop.permute.xlu0 %1733
    %1735 = vrot.lane.b32.xlu0 %v302, 48
    %v1736 = vpop.permute.xlu0 %1735
    %1737 = vrot.lane.b32.xlu0 %v303, 48
    %v1738 = vpop.permute.xlu0 %1737
    %1739 = vrot.lane.b32.xlu0 %v304, 48
    %v1740 = vpop.permute.xlu0 %1739
    %1809 = vrot.lane.b32.xlu0 %v309, 56
    %v1810 = vpop.permute.xlu0 %1809
    %1811 = vrot.lane.b32.xlu0 %v310, 56
    %v1812 = vpop.permute.xlu0 %1811
    %1813 = vrot.lane.b32.xlu0 %v311, 56
    %v1814 = vpop.permute.xlu0 %1813
    %1815 = vrot.lane.b32.xlu0 %v312, 56
    %v1816 = vpop.permute.xlu0 %1815
    %1817 = vrot.lane.b32.xlu0 %v313, 56
    %v1818 = vpop.permute.xlu0 %1817
    %1819 = vrot.lane.b32.xlu0 %v314, 56
    %v1820 = vpop.permute.xlu0 %1819
    %1821 = vrot.lane.b32.xlu0 %v315, 56
    %v1822 = vpop.permute.xlu0 %1821
    %1823 = vrot.lane.b32.xlu0 %v316, 56
    %v1824 = vpop.permute.xlu0 %1823
    %1825 = vrot.lane.b32.xlu0 %v317, 56
    %v1826 = vpop.permute.xlu0 %1825
    %1827 = vrot.lane.b32.xlu0 %v318, 56
    %v1828 = vpop.permute.xlu0 %1827
    %1829 = vrot.lane.b32.xlu0 %v319, 56
    %v1830 = vpop.permute.xlu0 %1829
    %1831 = vrot.lane.b32.xlu0 %v320, 56
    %v1832 = vpop.permute.xlu0 %1831
    %1833 = vrot.lane.b32.xlu0 %v321, 56
    %v1834 = vpop.permute.xlu0 %1833
    %1835 = vrot.lane.b32.xlu0 %v322, 56
    %v1836 = vpop.permute.xlu0 %1835
    %1837 = vrot.lane.b32.xlu0 %v323, 56
    %v1838 = vpop.permute.xlu0 %1837
    %1839 = vrot.lane.b32.xlu0 %v324, 56
    %v1840 = vpop.permute.xlu0 %1839
    %1841 = vrot.lane.b32.xlu0 %v325, 56
    %v1842 = vpop.permute.xlu0 %1841
    %1843 = vrot.lane.b32.xlu0 %v326, 56
    %v1844 = vpop.permute.xlu0 %1843
    %1845 = vrot.lane.b32.xlu0 %v327, 56
    %v1846 = vpop.permute.xlu0 %1845
    %1847 = vrot.lane.b32.xlu0 %v328, 56
    %v1848 = vpop.permute.xlu0 %1847
    %1849 = vrot.lane.b32.xlu0 %v329, 56
    %v1850 = vpop.permute.xlu0 %1849
    %1851 = vrot.lane.b32.xlu0 %v330, 56
    %v1852 = vpop.permute.xlu0 %1851
    %1853 = vrot.lane.b32.xlu0 %v331, 56
    %v1854 = vpop.permute.xlu0 %1853
    %1855 = vrot.lane.b32.xlu0 %v332, 56
    %v1856 = vpop.permute.xlu0 %1855
    %1857 = vrot.lane.b32.xlu0 %v333, 56
    %v1858 = vpop.permute.xlu0 %1857
    %1859 = vrot.lane.b32.xlu0 %v334, 56
    %v1860 = vpop.permute.xlu0 %1859
    %1861 = vrot.lane.b32.xlu0 %v335, 56
    %v1862 = vpop.permute.xlu0 %1861
    %1863 = vrot.lane.b32.xlu0 %v336, 56
    %v1864 = vpop.permute.xlu0 %1863
    %1865 = vrot.lane.b32.xlu0 %v337, 56
    %v1866 = vpop.permute.xlu0 %1865
    %1867 = vrot.lane.b32.xlu0 %v338, 56
    %v1868 = vpop.permute.xlu0 %1867
    %1869 = vrot.lane.b32.xlu0 %v339, 56
    %v1870 = vpop.permute.xlu0 %1869
    %1871 = vrot.lane.b32.xlu0 %v340, 56
    %v1872 = vpop.permute.xlu0 %1871
    %1873 = vrot.lane.b32.xlu0 %v345, 56
    %v1874 = vpop.permute.xlu0 %1873
    %1875 = vrot.lane.b32.xlu0 %v346, 56
    %v1876 = vpop.permute.xlu0 %1875
    %1877 = vrot.lane.b32.xlu0 %v347, 56
    %v1878 = vpop.permute.xlu0 %1877
    %1879 = vrot.lane.b32.xlu0 %v348, 56
    %v1880 = vpop.permute.xlu0 %1879
    %1881 = vrot.lane.b32.xlu0 %v349, 56
    %v1882 = vpop.permute.xlu0 %1881
    %1883 = vrot.lane.b32.xlu0 %v350, 56
    %v1884 = vpop.permute.xlu0 %1883
    %1885 = vrot.lane.b32.xlu0 %v351, 56
    %v1886 = vpop.permute.xlu0 %1885
    %1887 = vrot.lane.b32.xlu0 %v352, 56
    %v1888 = vpop.permute.xlu0 %1887
    %1889 = vrot.lane.b32.xlu0 %v353, 56
    %v1890 = vpop.permute.xlu0 %1889
    %1891 = vrot.lane.b32.xlu0 %v354, 56
    %v1892 = vpop.permute.xlu0 %1891
    %1893 = vrot.lane.b32.xlu0 %v355, 56
    %v1894 = vpop.permute.xlu0 %1893
    %1895 = vrot.lane.b32.xlu0 %v356, 56
    %v1896 = vpop.permute.xlu0 %1895
    %1897 = vrot.lane.b32.xlu0 %v357, 56
    %v1898 = vpop.permute.xlu0 %1897
    %1899 = vrot.lane.b32.xlu0 %v358, 56
    %v1900 = vpop.permute.xlu0 %1899
    %1901 = vrot.lane.b32.xlu0 %v359, 56
    %v1902 = vpop.permute.xlu0 %1901
    %1903 = vrot.lane.b32.xlu0 %v360, 56
    %v1904 = vpop.permute.xlu0 %1903
    %1905 = vrot.lane.b32.xlu0 %v361, 56
    %v1906 = vpop.permute.xlu0 %1905
    %1907 = vrot.lane.b32.xlu0 %v362, 56
    %v1908 = vpop.permute.xlu0 %1907
    %1909 = vrot.lane.b32.xlu0 %v363, 56
    %v1910 = vpop.permute.xlu0 %1909
    %1911 = vrot.lane.b32.xlu0 %v364, 56
    %v1912 = vpop.permute.xlu0 %1911
    %1913 = vrot.lane.b32.xlu0 %v365, 56
    %v1914 = vpop.permute.xlu0 %1913
    %1915 = vrot.lane.b32.xlu0 %v366, 56
    %v1916 = vpop.permute.xlu0 %1915
    %1917 = vrot.lane.b32.xlu0 %v367, 56
    %v1918 = vpop.permute.xlu0 %1917
    %1919 = vrot.lane.b32.xlu0 %v368, 56
    %v1920 = vpop.permute.xlu0 %1919
    %1921 = vrot.lane.b32.xlu0 %v369, 56
    %v1922 = vpop.permute.xlu0 %1921
    %1923 = vrot.lane.b32.xlu0 %v370, 56
    %v1924 = vpop.permute.xlu0 %1923
    %1925 = vrot.lane.b32.xlu0 %v371, 56
    %v1926 = vpop.permute.xlu0 %1925
    %1927 = vrot.lane.b32.xlu0 %v372, 56
    %v1928 = vpop.permute.xlu0 %1927
    %1929 = vrot.lane.b32.xlu0 %v373, 56
    %v1930 = vpop.permute.xlu0 %1929
    %1931 = vrot.lane.b32.xlu0 %v374, 56
    %v1932 = vpop.permute.xlu0 %1931
    %1933 = vrot.lane.b32.xlu0 %v375, 56
    %v1934 = vpop.permute.xlu0 %1933
    %1935 = vrot.lane.b32.xlu0 %v376, 56
    %v1936 = vpop.permute.xlu0 %1935
    %2005 = vrot.lane.b32.xlu0 %v381, 64
    %v2006 = vpop.permute.xlu0 %2005
    %2007 = vrot.lane.b32.xlu0 %v382, 64
    %v2008 = vpop.permute.xlu0 %2007
    %2009 = vrot.lane.b32.xlu0 %v383, 64
    %v2010 = vpop.permute.xlu0 %2009
    %2011 = vrot.lane.b32.xlu0 %v384, 64
    %v2012 = vpop.permute.xlu0 %2011
    %2013 = vrot.lane.b32.xlu0 %v385, 64
    %v2014 = vpop.permute.xlu0 %2013
    %2015 = vrot.lane.b32.xlu0 %v386, 64
    %v2016 = vpop.permute.xlu0 %2015
    %2017 = vrot.lane.b32.xlu0 %v387, 64
    %v2018 = vpop.permute.xlu0 %2017
    %2019 = vrot.lane.b32.xlu0 %v388, 64
    %v2020 = vpop.permute.xlu0 %2019
    %2021 = vrot.lane.b32.xlu0 %v389, 64
    %v2022 = vpop.permute.xlu0 %2021
    %2023 = vrot.lane.b32.xlu0 %v390, 64
    %v2024 = vpop.permute.xlu0 %2023
    %2025 = vrot.lane.b32.xlu0 %v391, 64
    %v2026 = vpop.permute.xlu0 %2025
    %2027 = vrot.lane.b32.xlu0 %v392, 64
    %v2028 = vpop.permute.xlu0 %2027
    %2029 = vrot.lane.b32.xlu0 %v393, 64
    %v2030 = vpop.permute.xlu0 %2029
    %2031 = vrot.lane.b32.xlu0 %v394, 64
    %v2032 = vpop.permute.xlu0 %2031
    %2033 = vrot.lane.b32.xlu0 %v395, 64
    %v2034 = vpop.permute.xlu0 %2033
    %2035 = vrot.lane.b32.xlu0 %v396, 64
    %v2036 = vpop.permute.xlu0 %2035
    %2037 = vrot.lane.b32.xlu0 %v397, 64
    %v2038 = vpop.permute.xlu0 %2037
    %2039 = vrot.lane.b32.xlu0 %v398, 64
    %v2040 = vpop.permute.xlu0 %2039
    %2041 = vrot.lane.b32.xlu0 %v399, 64
    %v2042 = vpop.permute.xlu0 %2041
    %2043 = vrot.lane.b32.xlu0 %v400, 64
    %v2044 = vpop.permute.xlu0 %2043
    %2045 = vrot.lane.b32.xlu0 %v401, 64
    %v2046 = vpop.permute.xlu0 %2045
    %2047 = vrot.lane.b32.xlu0 %v402, 64
    %v2048 = vpop.permute.xlu0 %2047
    %2049 = vrot.lane.b32.xlu0 %v403, 64
    %v2050 = vpop.permute.xlu0 %2049
    %2051 = vrot.lane.b32.xlu0 %v404, 64
    %v2052 = vpop.permute.xlu0 %2051
    %2053 = vrot.lane.b32.xlu0 %v405, 64
    %v2054 = vpop.permute.xlu0 %2053
    %2055 = vrot.lane.b32.xlu0 %v406, 64
    %v2056 = vpop.permute.xlu0 %2055
    %2057 = vrot.lane.b32.xlu0 %v407, 64
    %v2058 = vpop.permute.xlu0 %2057
    %2059 = vrot.lane.b32.xlu0 %v408, 64
    %v2060 = vpop.permute.xlu0 %2059
    %2061 = vrot.lane.b32.xlu0 %v409, 64
    %v2062 = vpop.permute.xlu0 %2061
    %2063 = vrot.lane.b32.xlu0 %v410, 64
    %v2064 = vpop.permute.xlu0 %2063
    %2065 = vrot.lane.b32.xlu0 %v411, 64
    %v2066 = vpop.permute.xlu0 %2065
    %2067 = vrot.lane.b32.xlu0 %v412, 64
    %v2068 = vpop.permute.xlu0 %2067
    %2069 = vrot.lane.b32.xlu0 %v417, 64
    %v2070 = vpop.permute.xlu0 %2069
    %2071 = vrot.lane.b32.xlu0 %v418, 64
    %v2072 = vpop.permute.xlu0 %2071
    %2073 = vrot.lane.b32.xlu0 %v419, 64
    %v2074 = vpop.permute.xlu0 %2073
    %2075 = vrot.lane.b32.xlu0 %v420, 64
    %v2076 = vpop.permute.xlu0 %2075
    %2077 = vrot.lane.b32.xlu0 %v421, 64
    %v2078 = vpop.permute.xlu0 %2077
    %2079 = vrot.lane.b32.xlu0 %v422, 64
    %v2080 = vpop.permute.xlu0 %2079
    %2081 = vrot.lane.b32.xlu0 %v423, 64
    %v2082 = vpop.permute.xlu0 %2081
    %2083 = vrot.lane.b32.xlu0 %v424, 64
    %v2084 = vpop.permute.xlu0 %2083
    %2085 = vrot.lane.b32.xlu0 %v425, 64
    %v2086 = vpop.permute.xlu0 %2085
    %2087 = vrot.lane.b32.xlu0 %v426, 64
    %v2088 = vpop.permute.xlu0 %2087
    %2089 = vrot.lane.b32.xlu0 %v427, 64
    %v2090 = vpop.permute.xlu0 %2089
    %2091 = vrot.lane.b32.xlu0 %v428, 64
    %v2092 = vpop.permute.xlu0 %2091
    %2093 = vrot.lane.b32.xlu0 %v429, 64
    %v2094 = vpop.permute.xlu0 %2093
    %2095 = vrot.lane.b32.xlu0 %v430, 64
    %v2096 = vpop.permute.xlu0 %2095
    %2097 = vrot.lane.b32.xlu0 %v431, 64
    %v2098 = vpop.permute.xlu0 %2097
    %2099 = vrot.lane.b32.xlu0 %v432, 64
    %v2100 = vpop.permute.xlu0 %2099
    %2101 = vrot.lane.b32.xlu0 %v433, 64
    %v2102 = vpop.permute.xlu0 %2101
    %2103 = vrot.lane.b32.xlu0 %v434, 64
    %v2104 = vpop.permute.xlu0 %2103
    %2105 = vrot.lane.b32.xlu0 %v435, 64
    %v2106 = vpop.permute.xlu0 %2105
    %2107 = vrot.lane.b32.xlu0 %v436, 64
    %v2108 = vpop.permute.xlu0 %2107
    %2109 = vrot.lane.b32.xlu0 %v437, 64
    %v2110 = vpop.permute.xlu0 %2109
    %2111 = vrot.lane.b32.xlu0 %v438, 64
    %v2112 = vpop.permute.xlu0 %2111
    %2113 = vrot.lane.b32.xlu0 %v439, 64
    %v2114 = vpop.permute.xlu0 %2113
    %2115 = vrot.lane.b32.xlu0 %v440, 64
    %v2116 = vpop.permute.xlu0 %2115
    %2117 = vrot.lane.b32.xlu0 %v441, 64
    %v2118 = vpop.permute.xlu0 %2117
    %2119 = vrot.lane.b32.xlu0 %v442, 64
    %v2120 = vpop.permute.xlu0 %2119
    %2121 = vrot.lane.b32.xlu0 %v443, 64
    %v2122 = vpop.permute.xlu0 %2121
    %2123 = vrot.lane.b32.xlu0 %v444, 64
    %v2124 = vpop.permute.xlu0 %2123
    %2125 = vrot.lane.b32.xlu0 %v445, 64
    %v2126 = vpop.permute.xlu0 %2125
    %2127 = vrot.lane.b32.xlu0 %v446, 64
    %v2128 = vpop.permute.xlu0 %2127
    %2129 = vrot.lane.b32.xlu0 %v447, 64
    %v2130 = vpop.permute.xlu0 %2129
    %2131 = vrot.lane.b32.xlu0 %v448, 64
    %v2132 = vpop.permute.xlu0 %2131
    %v2197 = vsel %vm21, %v233, %v514
    %v2198 = vsel %vm21, %v234, %v516
    %v2199 = vsel %vm21, %v235, %v518
    %v2200 = vsel %vm21, %v236, %v520
    %v2201 = vsel %vm21, %v237, %v522
    %v2202 = vsel %vm21, %v238, %v524
    %v2203 = vsel %vm21, %v239, %v526
    %v2204 = vsel %vm21, %v240, %v528
    %v2205 = vsel %vm21, %v241, %v530
    %v2206 = vsel %vm21, %v242, %v532
    %v2207 = vsel %vm21, %v243, %v534
    %v2208 = vsel %vm21, %v244, %v536
    %v2209 = vsel %vm21, %v245, %v538
    %v2210 = vsel %vm21, %v246, %v540
    %v2211 = vsel %vm21, %v247, %v542
    %v2212 = vsel %vm21, %v248, %v544
    %v2213 = vsel %vm21, %v249, %v546
    %v2214 = vsel %vm21, %v250, %v548
    %v2215 = vsel %vm21, %v251, %v550
    %v2216 = vsel %vm21, %v252, %v552
    %v2217 = vsel %vm21, %v253, %v554
    %v2218 = vsel %vm21, %v254, %v556
    %v2219 = vsel %vm21, %v255, %v558
    %v2220 = vsel %vm21, %v256, %v560
    %v2221 = vsel %vm21, %v257, %v562
    %v2222 = vsel %vm21, %v258, %v564
    %v2223 = vsel %vm21, %v259, %v566
    %v2224 = vsel %vm21, %v260, %v568
    %v2225 = vsel %vm21, %v261, %v570
    %v2226 = vsel %vm21, %v262, %v572
    %v2227 = vsel %vm21, %v263, %v574
    %v2228 = vsel %vm21, %v264, %v576
    %v2229 = vsel %vm21, %v269, %v578
    %v2230 = vsel %vm21, %v270, %v580
    %v2231 = vsel %vm21, %v271, %v582
    %v2232 = vsel %vm21, %v272, %v584
    %v2233 = vsel %vm21, %v273, %v586
    %v2234 = vsel %vm21, %v274, %v588
    %v2235 = vsel %vm21, %v275, %v590
    %v2236 = vsel %vm21, %v276, %v592
    %v2237 = vsel %vm21, %v277, %v594
    %v2238 = vsel %vm21, %v278, %v596
    %v2239 = vsel %vm21, %v279, %v598
    %v2240 = vsel %vm21, %v280, %v600
    %v2241 = vsel %vm21, %v281, %v602
    %v2242 = vsel %vm21, %v282, %v604
    %v2243 = vsel %vm21, %v283, %v606
    %v2244 = vsel %vm21, %v284, %v608
    %v2245 = vsel %vm21, %v285, %v610
    %v2246 = vsel %vm21, %v286, %v612
    %v2247 = vsel %vm21, %v287, %v614
    %v2248 = vsel %vm21, %v288, %v616
    %v2249 = vsel %vm21, %v289, %v618
    %v2250 = vsel %vm21, %v290, %v620
    %v2251 = vsel %vm21, %v291, %v622
    %v2252 = vsel %vm21, %v292, %v624
    %v2253 = vsel %vm21, %v293, %v626
    %v2254 = vsel %vm21, %v294, %v628
    %v2255 = vsel %vm21, %v295, %v630
    %v2256 = vsel %vm21, %v296, %v632
    %v2257 = vsel %vm21, %v297, %v634
    %v2258 = vsel %vm21, %v298, %v636
    %v2259 = vsel %vm21, %v299, %v638
    %v2260 = vsel %vm21, %v300, %v640
    %vm2261 = vcmask 130048
    %v2262 = vsel %vm2261, %v2197, %v770
    %v2263 = vsel %vm2261, %v2198, %v772
    %v2264 = vsel %vm2261, %v2199, %v774
    %v2265 = vsel %vm2261, %v2200, %v776
    %v2266 = vsel %vm2261, %v2201, %v778
    %v2267 = vsel %vm2261, %v2202, %v780
    %v2268 = vsel %vm2261, %v2203, %v782
    %v2269 = vsel %vm2261, %v2204, %v784
    %v2270 = vsel %vm2261, %v2205, %v786
    %v2271 = vsel %vm2261, %v2206, %v788
    %v2272 = vsel %vm2261, %v2207, %v790
    %v2273 = vsel %vm2261, %v2208, %v792
    %v2274 = vsel %vm2261, %v2209, %v794
    %v2275 = vsel %vm2261, %v2210, %v796
    %v2276 = vsel %vm2261, %v2211, %v798
    %v2277 = vsel %vm2261, %v2212, %v800
    %v2278 = vsel %vm2261, %v2213, %v802
    %v2279 = vsel %vm2261, %v2214, %v804
    %v2280 = vsel %vm2261, %v2215, %v806
    %v2281 = vsel %vm2261, %v2216, %v808
    %v2282 = vsel %vm2261, %v2217, %v810
    %v2283 = vsel %vm2261, %v2218, %v812
    %v2284 = vsel %vm2261, %v2219, %v814
    %v2285 = vsel %vm2261, %v2220, %v816
    %v2286 = vsel %vm2261, %v2221, %v818
    %v2287 = vsel %vm2261, %v2222, %v820
    %v2288 = vsel %vm2261, %v2223, %v822
    %v2289 = vsel %vm2261, %v2224, %v824
    %v2290 = vsel %vm2261, %v2225, %v826
    %v2291 = vsel %vm2261, %v2226, %v828
    %v2292 = vsel %vm2261, %v2227, %v830
    %v2293 = vsel %vm2261, %v2228, %v832
    %v2294 = vsel %vm2261, %v2229, %v834
    %v2295 = vsel %vm2261, %v2230, %v836
    %v2296 = vsel %vm2261, %v2231, %v838
    %v2297 = vsel %vm2261, %v2232, %v840
    %v2298 = vsel %vm2261, %v2233, %v842
    %v2299 = vsel %vm2261, %v2234, %v844
    %v2300 = vsel %vm2261, %v2235, %v846
    %v2301 = vsel %vm2261, %v2236, %v848
    %v2302 = vsel %vm2261, %v2237, %v850
    %v2303 = vsel %vm2261, %v2238, %v852
    %v2304 = vsel %vm2261, %v2239, %v854
    %v2305 = vsel %vm2261, %v2240, %v856
    %v2306 = vsel %vm2261, %v2241, %v858
    %v2307 = vsel %vm2261, %v2242, %v860
    %v2308 = vsel %vm2261, %v2243, %v862
    %v2309 = vsel %vm2261, %v2244, %v864
    %v2310 = vsel %vm2261, %v2245, %v866
    %v2311 = vsel %vm2261, %v2246, %v868
    %v2312 = vsel %vm2261, %v2247, %v870
    %v2313 = vsel %vm2261, %v2248, %v872
    %v2314 = vsel %vm2261, %v2249, %v874
    %v2315 = vsel %vm2261, %v2250, %v876
    %v2316 = vsel %vm2261, %v2251, %v878
    %v2317 = vsel %vm2261, %v2252, %v880
    %v2318 = vsel %vm2261, %v2253, %v882
    %v2319 = vsel %vm2261, %v2254, %v884
    %v2320 = vsel %vm2261, %v2255, %v886
    %v2321 = vsel %vm2261, %v2256, %v888
    %v2322 = vsel %vm2261, %v2257, %v890
    %v2323 = vsel %vm2261, %v2258, %v892
    %v2324 = vsel %vm2261, %v2259, %v894
    %v2325 = vsel %vm2261, %v2260, %v896
    %vm2326 = vcmask 195584
    %v2327 = vsel %vm2326, %v2262, %v1026
    %v2328 = vsel %vm2326, %v2263, %v1028
    %v2329 = vsel %vm2326, %v2264, %v1030
    %v2330 = vsel %vm2326, %v2265, %v1032
    %v2331 = vsel %vm2326, %v2266, %v1034
    %v2332 = vsel %vm2326, %v2267, %v1036
    %v2333 = vsel %vm2326, %v2268, %v1038
    %v2334 = vsel %vm2326, %v2269, %v1040
    %v2335 = vsel %vm2326, %v2270, %v1042
    %v2336 = vsel %vm2326, %v2271, %v1044
    %v2337 = vsel %vm2326, %v2272, %v1046
    %v2338 = vsel %vm2326, %v2273, %v1048
    %v2339 = vsel %vm2326, %v2274, %v1050
    %v2340 = vsel %vm2326, %v2275, %v1052
    %v2341 = vsel %vm2326, %v2276, %v1054
    %v2342 = vsel %vm2326, %v2277, %v1056
    %v2343 = vsel %vm2326, %v2278, %v1058
    %v2344 = vsel %vm2326, %v2279, %v1060
    %v2345 = vsel %vm2326, %v2280, %v1062
    %v2346 = vsel %vm2326, %v2281, %v1064
    %v2347 = vsel %vm2326, %v2282, %v1066
    %v2348 = vsel %vm2326, %v2283, %v1068
    %v2349 = vsel %vm2326, %v2284, %v1070
    %v2350 = vsel %vm2326, %v2285, %v1072
    %v2351 = vsel %vm2326, %v2286, %v1074
    %v2352 = vsel %vm2326, %v2287, %v1076
    %v2353 = vsel %vm2326, %v2288, %v1078
    %v2354 = vsel %vm2326, %v2289, %v1080
    %v2355 = vsel %vm2326, %v2290, %v1082
    %v2356 = vsel %vm2326, %v2291, %v1084
    %v2357 = vsel %vm2326, %v2292, %v1086
    %v2358 = vsel %vm2326, %v2293, %v1088
    %v2359 = vsel %vm2326, %v2294, %v1090
    %v2360 = vsel %vm2326, %v2295, %v1092
    %v2361 = vsel %vm2326, %v2296, %v1094
    %v2362 = vsel %vm2326, %v2297, %v1096
    %v2363 = vsel %vm2326, %v2298, %v1098
    %v2364 = vsel %vm2326, %v2299, %v1100
    %v2365 = vsel %vm2326, %v2300, %v1102
    %v2366 = vsel %vm2326, %v2301, %v1104
    %v2367 = vsel %vm2326, %v2302, %v1106
    %v2368 = vsel %vm2326, %v2303, %v1108
    %v2369 = vsel %vm2326, %v2304, %v1110
    %v2370 = vsel %vm2326, %v2305, %v1112
    %v2371 = vsel %vm2326, %v2306, %v1114
    %v2372 = vsel %vm2326, %v2307, %v1116
    %v2373 = vsel %vm2326, %v2308, %v1118
    %v2374 = vsel %vm2326, %v2309, %v1120
    %v2375 = vsel %vm2326, %v2310, %v1122
    %v2376 = vsel %vm2326, %v2311, %v1124
    %v2377 = vsel %vm2326, %v2312, %v1126
    %v2378 = vsel %vm2326, %v2313, %v1128
    %v2379 = vsel %vm2326, %v2314, %v1130
    %v2380 = vsel %vm2326, %v2315, %v1132
    %v2381 = vsel %vm2326, %v2316, %v1134
    %v2382 = vsel %vm2326, %v2317, %v1136
    %v2383 = vsel %vm2326, %v2318, %v1138
    %v2384 = vsel %vm2326, %v2319, %v1140
    %v2385 = vsel %vm2326, %v2320, %v1142
    %v2386 = vsel %vm2326, %v2321, %v1144
    %v2387 = vsel %vm2326, %v2322, %v1146
    %v2388 = vsel %vm2326, %v2323, %v1148
    %v2389 = vsel %vm2326, %v2324, %v1150
    %v2390 = vsel %vm2326, %v2325, %v1152
    %vm2391 = vcmask 261120
    %v2392 = vsel %vm2391, %v2327, %v1222
    %v2393 = vsel %vm2391, %v2328, %v1224
    %v2394 = vsel %vm2391, %v2329, %v1226
    %v2395 = vsel %vm2391, %v2330, %v1228
    %v2396 = vsel %vm2391, %v2331, %v1230
    %v2397 = vsel %vm2391, %v2332, %v1232
    %v2398 = vsel %vm2391, %v2333, %v1234
    %v2399 = vsel %vm2391, %v2334, %v1236
    %v2400 = vsel %vm2391, %v2335, %v1238
    %v2401 = vsel %vm2391, %v2336, %v1240
    %v2402 = vsel %vm2391, %v2337, %v1242
    %v2403 = vsel %vm2391, %v2338, %v1244
    %v2404 = vsel %vm2391, %v2339, %v1246
    %v2405 = vsel %vm2391, %v2340, %v1248
    %v2406 = vsel %vm2391, %v2341, %v1250
    %v2407 = vsel %vm2391, %v2342, %v1252
    %v2408 = vsel %vm2391, %v2343, %v1254
    %v2409 = vsel %vm2391, %v2344, %v1256
    %v2410 = vsel %vm2391, %v2345, %v1258
    %v2411 = vsel %vm2391, %v2346, %v1260
    %v2412 = vsel %vm2391, %v2347, %v1262
    %v2413 = vsel %vm2391, %v2348, %v1264
    %v2414 = vsel %vm2391, %v2349, %v1266
    %v2415 = vsel %vm2391, %v2350, %v1268
    %v2416 = vsel %vm2391, %v2351, %v1270
    %v2417 = vsel %vm2391, %v2352, %v1272
    %v2418 = vsel %vm2391, %v2353, %v1274
    %v2419 = vsel %vm2391, %v2354, %v1276
    %v2420 = vsel %vm2391, %v2355, %v1278
    %v2421 = vsel %vm2391, %v2356, %v1280
    %v2422 = vsel %vm2391, %v2357, %v1282
    %v2423 = vsel %vm2391, %v2358, %v1284
    %v2424 = vsel %vm2391, %v2359, %v1286
    %v2425 = vsel %vm2391, %v2360, %v1288
    %v2426 = vsel %vm2391, %v2361, %v1290
    %v2427 = vsel %vm2391, %v2362, %v1292
    %v2428 = vsel %vm2391, %v2363, %v1294
    %v2429 = vsel %vm2391, %v2364, %v1296
    %v2430 = vsel %vm2391, %v2365, %v1298
    %v2431 = vsel %vm2391, %v2366, %v1300
    %v2432 = vsel %vm2391, %v2367, %v1302
    %v2433 = vsel %vm2391, %v2368, %v1304
    %v2434 = vsel %vm2391, %v2369, %v1306
    %v2435 = vsel %vm2391, %v2370, %v1308
    %v2436 = vsel %vm2391, %v2371, %v1310
    %v2437 = vsel %vm2391, %v2372, %v1312
    %v2438 = vsel %vm2391, %v2373, %v1314
    %v2439 = vsel %vm2391, %v2374, %v1316
    %v2440 = vsel %vm2391, %v2375, %v1318
    %v2441 = vsel %vm2391, %v2376, %v1320
    %v2442 = vsel %vm2391, %v2377, %v1322
    %v2443 = vsel %vm2391, %v2378, %v1324
    %v2444 = vsel %vm2391, %v2379, %v1326
    %v2445 = vsel %vm2391, %v2380, %v1328
    %v2446 = vsel %vm2391, %v2381, %v1330
    %v2447 = vsel %vm2391, %v2382, %v1332
    %v2448 = vsel %vm2391, %v2383, %v1334
    %v2449 = vsel %vm2391, %v2384, %v1336
    %v2450 = vsel %vm2391, %v2385, %v1338
    %v2451 = vsel %vm2391, %v2386, %v1340
    %v2452 = vsel %vm2391, %v2387, %v1342
    %v2453 = vsel %vm2391, %v2388, %v1344
    %v2454 = vsel %vm2391, %v2389, %v1346
    %v2455 = vsel %vm2391, %v2390, %v1348
    %vm2456 = vcmask 326656
    %v2457 = vsel %vm2456, %v2392, %v1418
    %v2458 = vsel %vm2456, %v2393, %v1420
    %v2459 = vsel %vm2456, %v2394, %v1422
    %v2460 = vsel %vm2456, %v2395, %v1424
    %v2461 = vsel %vm2456, %v2396, %v1426
    %v2462 = vsel %vm2456, %v2397, %v1428
    %v2463 = vsel %vm2456, %v2398, %v1430
    %v2464 = vsel %vm2456, %v2399, %v1432
    %v2465 = vsel %vm2456, %v2400, %v1434
    %v2466 = vsel %vm2456, %v2401, %v1436
    %v2467 = vsel %vm2456, %v2402, %v1438
    %v2468 = vsel %vm2456, %v2403, %v1440
    %v2469 = vsel %vm2456, %v2404, %v1442
    %v2470 = vsel %vm2456, %v2405, %v1444
    %v2471 = vsel %vm2456, %v2406, %v1446
    %v2472 = vsel %vm2456, %v2407, %v1448
    %v2473 = vsel %vm2456, %v2408, %v1450
    %v2474 = vsel %vm2456, %v2409, %v1452
    %v2475 = vsel %vm2456, %v2410, %v1454
    %v2476 = vsel %vm2456, %v2411, %v1456
    %v2477 = vsel %vm2456, %v2412, %v1458
    %v2478 = vsel %vm2456, %v2413, %v1460
    %v2479 = vsel %vm2456, %v2414, %v1462
    %v2480 = vsel %vm2456, %v2415, %v1464
    %v2481 = vsel %vm2456, %v2416, %v1466
    %v2482 = vsel %vm2456, %v2417, %v1468
    %v2483 = vsel %vm2456, %v2418, %v1470
    %v2484 = vsel %vm2456, %v2419, %v1472
    %v2485 = vsel %vm2456, %v2420, %v1474
    %v2486 = vsel %vm2456, %v2421, %v1476
    %v2487 = vsel %vm2456, %v2422, %v1478
    %v2488 = vsel %vm2456, %v2423, %v1480
    %v2489 = vsel %vm2456, %v2424, %v1482
    %v2490 = vsel %vm2456, %v2425, %v1484
    %v2491 = vsel %vm2456, %v2426, %v1486
    %v2492 = vsel %vm2456, %v2427, %v1488
    %v2493 = vsel %vm2456, %v2428, %v1490
    %v2494 = vsel %vm2456, %v2429, %v1492
    %v2495 = vsel %vm2456, %v2430, %v1494
    %v2496 = vsel %vm2456, %v2431, %v1496
    %v2497 = vsel %vm2456, %v2432, %v1498
    %v2498 = vsel %vm2456, %v2433, %v1500
    %v2499 = vsel %vm2456, %v2434, %v1502
    %v2500 = vsel %vm2456, %v2435, %v1504
    %v2501 = vsel %vm2456, %v2436, %v1506
    %v2502 = vsel %vm2456, %v2437, %v1508
    %v2503 = vsel %vm2456, %v2438, %v1510
    %v2504 = vsel %vm2456, %v2439, %v1512
    %v2505 = vsel %vm2456, %v2440, %v1514
    %v2506 = vsel %vm2456, %v2441, %v1516
    %v2507 = vsel %vm2456, %v2442, %v1518
    %v2508 = vsel %vm2456, %v2443, %v1520
    %v2509 = vsel %vm2456, %v2444, %v1522
    %v2510 = vsel %vm2456, %v2445, %v1524
    %v2511 = vsel %vm2456, %v2446, %v1526
    %v2512 = vsel %vm2456, %v2447, %v1528
    %v2513 = vsel %vm2456, %v2448, %v1530
    %v2514 = vsel %vm2456, %v2449, %v1532
    %v2515 = vsel %vm2456, %v2450, %v1534
    %v2516 = vsel %vm2456, %v2451, %v1536
    %v2517 = vsel %vm2456, %v2452, %v1538
    %v2518 = vsel %vm2456, %v2453, %v1540
    %v2519 = vsel %vm2456, %v2454, %v1542
    %v2520 = vsel %vm2456, %v2455, %v1544
    %vm2521 = vcmask 392192
    %v2522 = vsel %vm2521, %v2457, %v1614
    %v2523 = vsel %vm2521, %v2458, %v1616
    %v2524 = vsel %vm2521, %v2459, %v1618
    %v2525 = vsel %vm2521, %v2460, %v1620
    %v2526 = vsel %vm2521, %v2461, %v1622
    %v2527 = vsel %vm2521, %v2462, %v1624
    %v2528 = vsel %vm2521, %v2463, %v1626
    %v2529 = vsel %vm2521, %v2464, %v1628
    %v2530 = vsel %vm2521, %v2465, %v1630
    %v2531 = vsel %vm2521, %v2466, %v1632
    %v2532 = vsel %vm2521, %v2467, %v1634
    %v2533 = vsel %vm2521, %v2468, %v1636
    %v2534 = vsel %vm2521, %v2469, %v1638
    %v2535 = vsel %vm2521, %v2470, %v1640
    %v2536 = vsel %vm2521, %v2471, %v1642
    %v2537 = vsel %vm2521, %v2472, %v1644
    %v2538 = vsel %vm2521, %v2473, %v1646
    %v2539 = vsel %vm2521, %v2474, %v1648
    %v2540 = vsel %vm2521, %v2475, %v1650
    %v2541 = vsel %vm2521, %v2476, %v1652
    %v2542 = vsel %vm2521, %v2477, %v1654
    %v2543 = vsel %vm2521, %v2478, %v1656
    %v2544 = vsel %vm2521, %v2479, %v1658
    %v2545 = vsel %vm2521, %v2480, %v1660
    %v2546 = vsel %vm2521, %v2481, %v1662
    %v2547 = vsel %vm2521, %v2482, %v1664
    %v2548 = vsel %vm2521, %v2483, %v1666
    %v2549 = vsel %vm2521, %v2484, %v1668
    %v2550 = vsel %vm2521, %v2485, %v1670
    %v2551 = vsel %vm2521, %v2486, %v1672
    %v2552 = vsel %vm2521, %v2487, %v1674
    %v2553 = vsel %vm2521, %v2488, %v1676
    %v2554 = vsel %vm2521, %v2489, %v1678
    %v2555 = vsel %vm2521, %v2490, %v1680
    %v2556 = vsel %vm2521, %v2491, %v1682
    %v2557 = vsel %vm2521, %v2492, %v1684
    %v2558 = vsel %vm2521, %v2493, %v1686
    %v2559 = vsel %vm2521, %v2494, %v1688
    %v2560 = vsel %vm2521, %v2495, %v1690
    %v2561 = vsel %vm2521, %v2496, %v1692
    %v2562 = vsel %vm2521, %v2497, %v1694
    %v2563 = vsel %vm2521, %v2498, %v1696
    %v2564 = vsel %vm2521, %v2499, %v1698
    %v2565 = vsel %vm2521, %v2500, %v1700
    %v2566 = vsel %vm2521, %v2501, %v1702
    %v2567 = vsel %vm2521, %v2502, %v1704
    %v2568 = vsel %vm2521, %v2503, %v1706
    %v2569 = vsel %vm2521, %v2504, %v1708
    %v2570 = vsel %vm2521, %v2505, %v1710
    %v2571 = vsel %vm2521, %v2506, %v1712
    %v2572 = vsel %vm2521, %v2507, %v1714
    %v2573 = vsel %vm2521, %v2508, %v1716
    %v2574 = vsel %vm2521, %v2509, %v1718
    %v2575 = vsel %vm2521, %v2510, %v1720
    %v2576 = vsel %vm2521, %v2511, %v1722
    %v2577 = vsel %vm2521, %v2512, %v1724
    %v2578 = vsel %vm2521, %v2513, %v1726
    %v2579 = vsel %vm2521, %v2514, %v1728
    %v2580 = vsel %vm2521, %v2515, %v1730
    %v2581 = vsel %vm2521, %v2516, %v1732
    %v2582 = vsel %vm2521, %v2517, %v1734
    %v2583 = vsel %vm2521, %v2518, %v1736
    %v2584 = vsel %vm2521, %v2519, %v1738
    %v2585 = vsel %vm2521, %v2520, %v1740
    %vm2586 = vcmask 457728
    %v2587 = vsel %vm2586, %v2522, %v1810
    %v2588 = vsel %vm2586, %v2523, %v1812
    %v2589 = vsel %vm2586, %v2524, %v1814
    %v2590 = vsel %vm2586, %v2525, %v1816
    %v2591 = vsel %vm2586, %v2526, %v1818
    %v2592 = vsel %vm2586, %v2527, %v1820
    %v2593 = vsel %vm2586, %v2528, %v1822
    %v2594 = vsel %vm2586, %v2529, %v1824
    %v2595 = vsel %vm2586, %v2530, %v1826
    %v2596 = vsel %vm2586, %v2531, %v1828
    %v2597 = vsel %vm2586, %v2532, %v1830
    %v2598 = vsel %vm2586, %v2533, %v1832
    %v2599 = vsel %vm2586, %v2534, %v1834
    %v2600 = vsel %vm2586, %v2535, %v1836
    %v2601 = vsel %vm2586, %v2536, %v1838
    %v2602 = vsel %vm2586, %v2537, %v1840
    %v2603 = vsel %vm2586, %v2538, %v1842
    %v2604 = vsel %vm2586, %v2539, %v1844
    %v2605 = vsel %vm2586, %v2540, %v1846
    %v2606 = vsel %vm2586, %v2541, %v1848
    %v2607 = vsel %vm2586, %v2542, %v1850
    %v2608 = vsel %vm2586, %v2543, %v1852
    %v2609 = vsel %vm2586, %v2544, %v1854
    %v2610 = vsel %vm2586, %v2545, %v1856
    %v2611 = vsel %vm2586, %v2546, %v1858
    %v2612 = vsel %vm2586, %v2547, %v1860
    %v2613 = vsel %vm2586, %v2548, %v1862
    %v2614 = vsel %vm2586, %v2549, %v1864
    %v2615 = vsel %vm2586, %v2550, %v1866
    %v2616 = vsel %vm2586, %v2551, %v1868
    %v2617 = vsel %vm2586, %v2552, %v1870
    %v2618 = vsel %vm2586, %v2553, %v1872
    %v2619 = vsel %vm2586, %v2554, %v1874
    %v2620 = vsel %vm2586, %v2555, %v1876
    %v2621 = vsel %vm2586, %v2556, %v1878
    %v2622 = vsel %vm2586, %v2557, %v1880
    %v2623 = vsel %vm2586, %v2558, %v1882
    %v2624 = vsel %vm2586, %v2559, %v1884
    %v2625 = vsel %vm2586, %v2560, %v1886
    %v2626 = vsel %vm2586, %v2561, %v1888
    %v2627 = vsel %vm2586, %v2562, %v1890
    %v2628 = vsel %vm2586, %v2563, %v1892
    %v2629 = vsel %vm2586, %v2564, %v1894
    %v2630 = vsel %vm2586, %v2565, %v1896
    %v2631 = vsel %vm2586, %v2566, %v1898
    %v2632 = vsel %vm2586, %v2567, %v1900
    %v2633 = vsel %vm2586, %v2568, %v1902
    %v2634 = vsel %vm2586, %v2569, %v1904
    %v2635 = vsel %vm2586, %v2570, %v1906
    %v2636 = vsel %vm2586, %v2571, %v1908
    %v2637 = vsel %vm2586, %v2572, %v1910
    %v2638 = vsel %vm2586, %v2573, %v1912
    %v2639 = vsel %vm2586, %v2574, %v1914
    %v2640 = vsel %vm2586, %v2575, %v1916
    %v2641 = vsel %vm2586, %v2576, %v1918
    %v2642 = vsel %vm2586, %v2577, %v1920
    %v2643 = vsel %vm2586, %v2578, %v1922
    %v2644 = vsel %vm2586, %v2579, %v1924
    %v2645 = vsel %vm2586, %v2580, %v1926
    %v2646 = vsel %vm2586, %v2581, %v1928
    %v2647 = vsel %vm2586, %v2582, %v1930
    %v2648 = vsel %vm2586, %v2583, %v1932
    %v2649 = vsel %vm2586, %v2584, %v1934
    %v2650 = vsel %vm2586, %v2585, %v1936
    %vm2651 = vcmask 523264
    %v2652 = vsel %vm2651, %v2587, %v2006
    %v2653 = vsel %vm2651, %v2588, %v2008
    %v2654 = vsel %vm2651, %v2589, %v2010
    %v2655 = vsel %vm2651, %v2590, %v2012
    %v2656 = vsel %vm2651, %v2591, %v2014
    %v2657 = vsel %vm2651, %v2592, %v2016
    %v2658 = vsel %vm2651, %v2593, %v2018
    %v2659 = vsel %vm2651, %v2594, %v2020
    %v2660 = vsel %vm2651, %v2595, %v2022
    %v2661 = vsel %vm2651, %v2596, %v2024
    %v2662 = vsel %vm2651, %v2597, %v2026
    %v2663 = vsel %vm2651, %v2598, %v2028
    %v2664 = vsel %vm2651, %v2599, %v2030
    %v2665 = vsel %vm2651, %v2600, %v2032
    %v2666 = vsel %vm2651, %v2601, %v2034
    %v2667 = vsel %vm2651, %v2602, %v2036
    %v2668 = vsel %vm2651, %v2603, %v2038
    %v2669 = vsel %vm2651, %v2604, %v2040
    %v2670 = vsel %vm2651, %v2605, %v2042
    %v2671 = vsel %vm2651, %v2606, %v2044
    %v2672 = vsel %vm2651, %v2607, %v2046
    %v2673 = vsel %vm2651, %v2608, %v2048
    %v2674 = vsel %vm2651, %v2609, %v2050
    %v2675 = vsel %vm2651, %v2610, %v2052
    %v2676 = vsel %vm2651, %v2611, %v2054
    %v2677 = vsel %vm2651, %v2612, %v2056
    %v2678 = vsel %vm2651, %v2613, %v2058
    %v2679 = vsel %vm2651, %v2614, %v2060
    %v2680 = vsel %vm2651, %v2615, %v2062
    %v2681 = vsel %vm2651, %v2616, %v2064
    %v2682 = vsel %vm2651, %v2617, %v2066
    %v2683 = vsel %vm2651, %v2618, %v2068
    %v2684 = vsel %vm2651, %v2619, %v2070
    %v2685 = vsel %vm2651, %v2620, %v2072
    %v2686 = vsel %vm2651, %v2621, %v2074
    %v2687 = vsel %vm2651, %v2622, %v2076
    %v2688 = vsel %vm2651, %v2623, %v2078
    %v2689 = vsel %vm2651, %v2624, %v2080
    %v2690 = vsel %vm2651, %v2625, %v2082
    %v2691 = vsel %vm2651, %v2626, %v2084
    %v2692 = vsel %vm2651, %v2627, %v2086
    %v2693 = vsel %vm2651, %v2628, %v2088
    %v2694 = vsel %vm2651, %v2629, %v2090
    %v2695 = vsel %vm2651, %v2630, %v2092
    %v2696 = vsel %vm2651, %v2631, %v2094
    %v2697 = vsel %vm2651, %v2632, %v2096
    %v2698 = vsel %vm2651, %v2633, %v2098
    %v2699 = vsel %vm2651, %v2634, %v2100
    %v2700 = vsel %vm2651, %v2635, %v2102
    %v2701 = vsel %vm2651, %v2636, %v2104
    %v2702 = vsel %vm2651, %v2637, %v2106
    %v2703 = vsel %vm2651, %v2638, %v2108
    %v2704 = vsel %vm2651, %v2639, %v2110
    %v2705 = vsel %vm2651, %v2640, %v2112
    %v2706 = vsel %vm2651, %v2641, %v2114
    %v2707 = vsel %vm2651, %v2642, %v2116
    %v2708 = vsel %vm2651, %v2643, %v2118
    %v2709 = vsel %vm2651, %v2644, %v2120
    %v2710 = vsel %vm2651, %v2645, %v2122
    %v2711 = vsel %vm2651, %v2646, %v2124
    %v2712 = vsel %vm2651, %v2647, %v2126
    %v2713 = vsel %vm2651, %v2648, %v2128
    %v2714 = vsel %vm2651, %v2649, %v2130
    %v2715 = vsel %vm2651, %v2650, %v2132
    %v2716 = vld [vmem:[%s1] sm:$0xff]
    %v2717 = vld [vmem:[%s1 + $0x8] sm:$0xff]
    %v2718 = vld [vmem:[%s1 + $0x10] sm:$0xff]
    %v2719 = vld [vmem:[%s1 + $0x18] sm:$0xff]
    %v2720 = vld [vmem:[%s1 + $0x20] sm:$0xff]
    %v2721 = vld [vmem:[%s1 + $0x28] sm:$0xff]
    %v2722 = vld [vmem:[%s1 + $0x30] sm:$0xff]
    %v2723 = vld [vmem:[%s1 + $0x38] sm:$0xff]
    %v2724 = vld [vmem:[%s1 + $0x40] sm:$0xff]
    %v2725 = vld [vmem:[%s2] sm:$0x1]
    %v2727 = vlaneseq
    %v2728 = vshrl.u32 %v2727, 7
    %v2729 = vsub.s32 0, %v2728
    %v2730 = vrot.slane %v2725, %v2729
    %vm2732 = vcmask 588800
    %v2734 = vsel %vm2732, %v2652, 0
    %v2737 = vsel %vm2732, %v2653, 0
    %v2740 = vsel %vm2732, %v2654, 0
    %v2743 = vsel %vm2732, %v2655, 0
    %v2746 = vsel %vm2732, %v2656, 0
    %v2749 = vsel %vm2732, %v2657, 0
    %v2752 = vsel %vm2732, %v2658, 0
    %v2755 = vsel %vm2732, %v2659, 0
    %v2758 = vsel %vm2732, %v2660, 0
    %v2761 = vsel %vm2732, %v2661, 0
    %v2764 = vsel %vm2732, %v2662, 0
    %v2767 = vsel %vm2732, %v2663, 0
    %v2770 = vsel %vm2732, %v2664, 0
    %v2773 = vsel %vm2732, %v2665, 0
    %v2776 = vsel %vm2732, %v2666, 0
    %v2779 = vsel %vm2732, %v2667, 0
    %v2782 = vsel %vm2732, %v2668, 0
    %v2785 = vsel %vm2732, %v2669, 0
    %v2788 = vsel %vm2732, %v2670, 0
    %v2791 = vsel %vm2732, %v2671, 0
    %v2794 = vsel %vm2732, %v2672, 0
    %v2797 = vsel %vm2732, %v2673, 0
    %v2800 = vsel %vm2732, %v2674, 0
    %v2803 = vsel %vm2732, %v2675, 0
    %v2806 = vsel %vm2732, %v2676, 0
    %v2809 = vsel %vm2732, %v2677, 0
    %v2812 = vsel %vm2732, %v2678, 0
    %v2815 = vsel %vm2732, %v2679, 0
    %v2818 = vsel %vm2732, %v2680, 0
    %v2821 = vsel %vm2732, %v2681, 0
    %v2824 = vsel %vm2732, %v2682, 0
    %v2827 = vsel %vm2732, %v2683, 0
    %v2830 = vsel %vm2732, %v2684, 0
    %v2833 = vsel %vm2732, %v2685, 0
    %v2836 = vsel %vm2732, %v2686, 0
    %v2839 = vsel %vm2732, %v2687, 0
    %v2842 = vsel %vm2732, %v2688, 0
    %v2845 = vsel %vm2732, %v2689, 0
    %v2848 = vsel %vm2732, %v2690, 0
    %v2851 = vsel %vm2732, %v2691, 0
    %v2854 = vsel %vm2732, %v2692, 0
    %v2857 = vsel %vm2732, %v2693, 0
    %v2860 = vsel %vm2732, %v2694, 0
    %v2863 = vsel %vm2732, %v2695, 0
    %v2866 = vsel %vm2732, %v2696, 0
    %v2869 = vsel %vm2732, %v2697, 0
    %v2872 = vsel %vm2732, %v2698, 0
    %v2875 = vsel %vm2732, %v2699, 0
    %v2878 = vsel %vm2732, %v2700, 0
    %v2881 = vsel %vm2732, %v2701, 0
    %v2884 = vsel %vm2732, %v2702, 0
    %v2887 = vsel %vm2732, %v2703, 0
    %v2890 = vsel %vm2732, %v2704, 0
    %v2893 = vsel %vm2732, %v2705, 0
    %v2896 = vsel %vm2732, %v2706, 0
    %v2899 = vsel %vm2732, %v2707, 0
    %v2902 = vsel %vm2732, %v2708, 0
    %v2905 = vsel %vm2732, %v2709, 0
    %v2908 = vsel %vm2732, %v2710, 0
    %v2911 = vsel %vm2732, %v2711, 0
    %v2914 = vsel %vm2732, %v2712, 0
    %v2917 = vsel %vm2732, %v2713, 0
    %v2920 = vsel %vm2732, %v2714, 0
    %v2923 = vsel %vm2732, %v2715, 0
    %2925 = vmatprep.subr.mxu0 0.0
    %v2926 = vand.u32 %v2716, 4294901760
    %2927 = vmatpush1.msra.mxu0 %v2926
    %2928 = vmatprep.subr.mxu0 0.0
    %v2929 = vand.u32 %v2717, 4294901760
    %2930 = vmatpush1.msra.mxu0 %v2929
    %2931 = vmatprep.subr.mxu0 0.0
    %v2932 = vand.u32 %v2718, 4294901760
    %2933 = vmatpush1.msra.mxu0 %v2932
    %2934 = vmatprep.subr.mxu0 0.0
    %v2935 = vand.u32 %v2719, 4294901760
    %2936 = vmatpush1.msra.mxu0 %v2935
    %2937 = vmatprep.subr.mxu0 0.0
    %v2938 = vand.u32 %v2720, 4294901760
    %2939 = vmatpush1.msra.mxu0 %v2938
    %2940 = vmatprep.subr.mxu0 0.0
    %v2941 = vand.u32 %v2721, 4294901760
    %2942 = vmatpush1.msra.mxu0 %v2941
    %2943 = vmatprep.subr.mxu0 0.0
    %v2944 = vand.u32 %v2722, 4294901760
    %2945 = vmatpush1.msra.mxu0 %v2944
    %2946 = vmatprep.subr.mxu0 0.0
    %v2947 = vand.u32 %v2723, 4294901760
    %2948 = vmatpush1.msra.mxu0 %v2947
    %2949 = vmatprep.subr.mxu0 0.0
    %v2950 = vand.u32 %v2724, 4294901760
    %2951 = vmatpush1.msra.mxu0 %v2950
    %2952 = vmatprep.subr.mxu0 0.0
    %2953 = vmatpush1.msra.mxu0 0.0
    %2954 = vmatprep.subr.mxu0 0.0
    %2955 = vmatpush1.msra.mxu0 0.0
    %2956 = vmatprep.subr.mxu0 0.0
    %2957 = vmatpush1.msra.mxu0 0.0
    %2958 = vmatprep.subr.mxu0 0.0
    %2959 = vmatpush1.msra.mxu0 0.0
    %2960 = vmatprep.subr.mxu0 0.0
    %2961 = vmatpush1.msra.mxu0 0.0
    %2962 = vmatprep.subr.mxu0 0.0
    %2963 = vmatpush1.msra.mxu0 0.0
    %2964 = vmatprep.subr.mxu0 0.0
    %2965 = vmatpush1.msra.mxu0 0.0
    %2966 = vmatprep.subr.mxu0 0.0
    %2967 = vmatpush1.msra.mxu0 0.0
    %2968 = vmatprep.subr.mxu0 0.0
    %2969 = vmatpush1.msra.mxu0 0.0
    %2970 = vmatprep.subr.mxu0 0.0
    %2971 = vmatpush1.msra.mxu0 0.0
    %2972 = vmatprep.subr.mxu0 0.0
    %2973 = vmatpush1.msra.mxu0 0.0
    %2974 = vmatprep.subr.mxu0 0.0
    %2975 = vmatpush1.msra.mxu0 0.0
    %2976 = vmatprep.subr.mxu0 0.0
    %2977 = vmatpush1.msra.mxu0 0.0
    %2978 = vmatprep.subr.mxu0 0.0
    %2979 = vmatpush1.msra.mxu0 0.0
    %2980 = vmatprep.subr.mxu0 0.0
    %2981 = vmatpush1.msra.mxu0 0.0
    %2982 = vmatprep.subr.mxu0 0.0
    %2983 = vmatpush1.msra.mxu0 0.0
    %2984 = vmatprep.subr.mxu0 0.0
    %2985 = vmatpush1.msra.mxu0 0.0
    %2986 = vmatprep.subr.mxu0 0.0
    %2987 = vmatpush1.msra.mxu0 0.0
    %2988 = vmatprep.subr.mxu0 0.0
    %2989 = vmatpush1.msra.mxu0 0.0
    %2990 = vmatprep.subr.mxu0 0.0
    %2991 = vmatpush1.msra.mxu0 0.0
    %2992 = vmatprep.subr.mxu0 0.0
    %2993 = vmatpush1.msra.mxu0 0.0
    %2994 = vmatprep.subr.mxu0 0.0
    %2995 = vmatpush1.msra.mxu0 0.0
    %2996 = vmatprep.subr.mxu0 0.0
    %2997 = vmatpush1.msra.mxu0 0.0
    %2998 = vmatprep.mubr.f32.mxu0 0.0
    %v2999 = vand.u32 %v2734, 4294901760
    %v3000 = vsub.f32 %v2734, %v2999
    %v3001 = vand.u32 %v3000, 4294901760
    %v3002 = vsub.f32 %v3000, %v3001
    %v3003 = vand.u32 %v3002, 4294901760
    %3004 = vmatmul.mubr.f32.gmra.mrb[0].mxu0 %v3003
    %v3005 = vpop.f32.mrb[0].mxu0
    %v3006 = vadd.f32 %v2730, %v3005
    %v3007 = vpop.f32.mrb[0].mxu0
    %3008 = vmatprep.mubr.f32.mxu0 0.0
    %v3009 = vand.u32 %v2737, 4294901760
    %v3010 = vsub.f32 %v2737, %v3009
    %v3011 = vand.u32 %v3010, 4294901760
    %v3012 = vsub.f32 %v3010, %v3011
    %v3013 = vand.u32 %v3012, 4294901760
    %3014 = vmatmul.mubr.f32.gmra.mrb[0].mxu0 %v3013
    %v3015 = vpop.f32.mrb[0].mxu0
    %v3016 = vadd.f32 %v2730, %v3015
    %v3017 = vpop.f32.mrb[0].mxu0
    %3018 = vmatprep.mubr.f32.mxu0 0.0
    %v3019 = vand.u32 %v2740, 4294901760
    %v3020 = vsub.f32 %v2740, %v3019
    %v3021 = vand.u32 %v3020, 4294901760
    %v3022 = vsub.f32 %v3020, %v3021
    %v3023 = vand.u32 %v3022, 4294901760
    %3024 = vmatmul.mubr.f32.gmra.mrb[0].mxu0 %v3023
    %v3025 = vpop.f32.mrb[0].mxu0
    %v3026 = vadd.f32 %v2730, %v3025
    %v3027 = vpop.f32.mrb[0].mxu0
    %3028 = vmatprep.mubr.f32.mxu0 0.0
    %v3029 = vand.u32 %v2743, 4294901760
    %v3030 = vsub.f32 %v2743, %v3029
    %v3031 = vand.u32 %v3030, 4294901760
    %v3032 = vsub.f32 %v3030, %v3031
    %v3033 = vand.u32 %v3032, 4294901760
    %3034 = vmatmul.mubr.f32.gmra.mrb[0].mxu0 %v3033
    %v3035 = vpop.f32.mrb[0].mxu0
    %v3036 = vadd.f32 %v2730, %v3035
    %v3037 = vpop.f32.mrb[0].mxu0
    %3038 = vmatprep.mubr.f32.mxu0 0.0
    %v3039 = vand.u32 %v2746, 4294901760
    %v3040 = vsub.f32 %v2746, %v3039
    %v3041 = vand.u32 %v3040, 4294901760
    %v3042 = vsub.f32 %v3040, %v3041
    %v3043 = vand.u32 %v3042, 4294901760
    %3044 = vmatmul.mubr.f32.gmra.mrb[0].mxu0 %v3043
    %v3045 = vpop.f32.mrb[0].mxu0
    %v3046 = vadd.f32 %v2730, %v3045
    %v3047 = vpop.f32.mrb[0].mxu0
    %3048 = vmatprep.mubr.f32.mxu0 0.0
    %v3049 = vand.u32 %v2749, 4294901760
    %v3050 = vsub.f32 %v2749, %v3049
    %v3051 = vand.u32 %v3050, 4294901760
    %v3052 = vsub.f32 %v3050, %v3051
    %v3053 = vand.u32 %v3052, 4294901760
    %3054 = vmatmul.mubr.f32.gmra.mrb[0].mxu0 %v3053
    %v3055 = vpop.f32.mrb[0].mxu0
    %v3056 = vadd.f32 %v2730, %v3055
    %v3057 = vpop.f32.mrb[0].mxu0
    %3058 = vmatprep.mubr.f32.mxu0 0.0
    %v3059 = vand.u32 %v2752, 4294901760
    %v3060 = vsub.f32 %v2752, %v3059
    %v3061 = vand.u32 %v3060, 4294901760
    %v3062 = vsub.f32 %v3060, %v3061
    %v3063 = vand.u32 %v3062, 4294901760
    %3064 = vmatmul.mubr.f32.gmra.mrb[0].mxu0 %v3063
    %v3065 = vpop.f32.mrb[0].mxu0
    %v3066 = vadd.f32 %v2730, %v3065
    %v3067 = vpop.f32.mrb[0].mxu0
    %3068 = vmatprep.mubr.f32.mxu0 0.0
    %v3069 = vand.u32 %v2755, 4294901760
    %v3070 = vsub.f32 %v2755, %v3069
    %v3071 = vand.u32 %v3070, 4294901760
    %v3072 = vsub.f32 %v3070, %v3071
    %v3073 = vand.u32 %v3072, 4294901760
    %3074 = vmatmul.mubr.f32.gmra.mrb[0].mxu0 %v3073
    %v3075 = vpop.f32.mrb[0].mxu0
    %v3076 = vadd.f32 %v2730, %v3075
    %v3077 = vpop.f32.mrb[0].mxu0
    %3078 = vmatprep.mubr.f32.mxu0 0.0
    %v3079 = vand.u32 %v2758, 4294901760
    %v3080 = vsub.f32 %v2758, %v3079
    %v3081 = vand.u32 %v3080, 4294901760
    %v3082 = vsub.f32 %v3080, %v3081
    %v3083 = vand.u32 %v3082, 4294901760
    %3084 = vmatmul.mubr.f32.gmra.mrb[0].mxu0 %v3083
    %v3085 = vpop.f32.mrb[0].mxu0
    %v3086 = vadd.f32 %v2730, %v3085
    %v3087 = vpop.f32.mrb[0].mxu0
    %3088 = vmatprep.mubr.f32.mxu0 0.0
    %v3089 = vand.u32 %v2761, 4294901760
    %v3090 = vsub.f32 %v2761, %v3089
    %v3091 = vand.u32 %v3090, 4294901760
    %v3092 = vsub.f32 %v3090, %v3091
    %v3093 = vand.u32 %v3092, 4294901760
    %3094 = vmatmul.mubr.f32.gmra.mrb[0].mxu0 %v3093
    %v3095 = vpop.f32.mrb[0].mxu0
    %v3096 = vadd.f32 %v2730, %v3095
    %v3097 = vpop.f32.mrb[0].mxu0
    %3098 = vmatprep.mubr.f32.mxu0 0.0
    %v3099 = vand.u32 %v2764, 4294901760
    %v3100 = vsub.f32 %v2764, %v3099
    %v3101 = vand.u32 %v3100, 4294901760
    %v3102 = vsub.f32 %v3100, %v3101
    %v3103 = vand.u32 %v3102, 4294901760
    %3104 = vmatmul.mubr.f32.gmra.mrb[0].mxu0 %v3103
    %v3105 = vpop.f32.mrb[0].mxu0
    %v3106 = vadd.f32 %v2730, %v3105
    %v3107 = vpop.f32.mrb[0].mxu0
    %3108 = vmatprep.mubr.f32.mxu0 0.0
    %v3109 = vand.u32 %v2767, 4294901760
    %v3110 = vsub.f32 %v2767, %v3109
    %v3111 = vand.u32 %v3110, 4294901760
    %v3112 = vsub.f32 %v3110, %v3111
    %v3113 = vand.u32 %v3112, 4294901760
    %3114 = vmatmul.mubr.f32.gmra.mrb[0].mxu0 %v3113
    %v3115 = vpop.f32.mrb[0].mxu0
    %v3116 = vadd.f32 %v2730, %v3115
    %v3117 = vpop.f32.mrb[0].mxu0
    %3118 = vmatprep.mubr.f32.mxu0 0.0
    %v3119 = vand.u32 %v2770, 4294901760
    %v3120 = vsub.f32 %v2770, %v3119
    %v3121 = vand.u32 %v3120, 4294901760
    %v3122 = vsub.f32 %v3120, %v3121
    %v3123 = vand.u32 %v3122, 4294901760
    %3124 = vmatmul.mubr.f32.gmra.mrb[0].mxu0 %v3123
    %v3125 = vpop.f32.mrb[0].mxu0
    %v3126 = vadd.f32 %v2730, %v3125
    %v3127 = vpop.f32.mrb[0].mxu0
    %3128 = vmatprep.mubr.f32.mxu0 0.0
    %v3129 = vand.u32 %v2773, 4294901760
    %v3130 = vsub.f32 %v2773, %v3129
    %v3131 = vand.u32 %v3130, 4294901760
    %v3132 = vsub.f32 %v3130, %v3131
    %v3133 = vand.u32 %v3132, 4294901760
    %3134 = vmatmul.mubr.f32.gmra.mrb[0].mxu0 %v3133
    %v3135 = vpop.f32.mrb[0].mxu0
    %v3136 = vadd.f32 %v2730, %v3135
    %v3137 = vpop.f32.mrb[0].mxu0
    %3138 = vmatprep.mubr.f32.mxu0 0.0
    %v3139 = vand.u32 %v2776, 4294901760
    %v3140 = vsub.f32 %v2776, %v3139
    %v3141 = vand.u32 %v3140, 4294901760
    %v3142 = vsub.f32 %v3140, %v3141
    %v3143 = vand.u32 %v3142, 4294901760
    %3144 = vmatmul.mubr.f32.gmra.mrb[0].mxu0 %v3143
    %v3145 = vpop.f32.mrb[0].mxu0
    %v3146 = vadd.f32 %v2730, %v3145
    %v3147 = vpop.f32.mrb[0].mxu0
    %3148 = vmatprep.mubr.f32.mxu0 0.0
    %v3149 = vand.u32 %v2779, 4294901760
    %v3150 = vsub.f32 %v2779, %v3149
    %v3151 = vand.u32 %v3150, 4294901760
    %v3152 = vsub.f32 %v3150, %v3151
    %v3153 = vand.u32 %v3152, 4294901760
    %3154 = vmatmul.mubr.f32.gmra.mrb[0].mxu0 %v3153
    %v3155 = vpop.f32.mrb[0].mxu0
    %v3156 = vadd.f32 %v2730, %v3155
    %v3157 = vpop.f32.mrb[0].mxu0
    %3158 = vmatprep.mubr.f32.mxu0 0.0
    %v3159 = vand.u32 %v2782, 4294901760
    %v3160 = vsub.f32 %v2782, %v3159
    %v3161 = vand.u32 %v3160, 4294901760
    %v3162 = vsub.f32 %v3160, %v3161
    %v3163 = vand.u32 %v3162, 4294901760
    %3164 = vmatmul.mubr.f32.gmra.mrb[0].mxu0 %v3163
    %v3165 = vpop.f32.mrb[0].mxu0
    %v3166 = vadd.f32 %v2730, %v3165
    %v3167 = vpop.f32.mrb[0].mxu0
    %3168 = vmatprep.mubr.f32.mxu0 0.0
    %v3169 = vand.u32 %v2785, 4294901760
    %v3170 = vsub.f32 %v2785, %v3169
    %v3171 = vand.u32 %v3170, 4294901760
    %v3172 = vsub.f32 %v3170, %v3171
    %v3173 = vand.u32 %v3172, 4294901760
    %3174 = vmatmul.mubr.f32.gmra.mrb[0].mxu0 %v3173
    %v3175 = vpop.f32.mrb[0].mxu0
    %v3176 = vadd.f32 %v2730, %v3175
    %v3177 = vpop.f32.mrb[0].mxu0
    %3178 = vmatprep.mubr.f32.mxu0 0.0
    %v3179 = vand.u32 %v2788, 4294901760
    %v3180 = vsub.f32 %v2788, %v3179
    %v3181 = vand.u32 %v3180, 4294901760
    %v3182 = vsub.f32 %v3180, %v3181
    %v3183 = vand.u32 %v3182, 4294901760
    %3184 = vmatmul.mubr.f32.gmra.mrb[0].mxu0 %v3183
    %v3185 = vpop.f32.mrb[0].mxu0
    %v3186 = vadd.f32 %v2730, %v3185
    %v3187 = vpop.f32.mrb[0].mxu0
    %3188 = vmatprep.mubr.f32.mxu0 0.0
    %v3189 = vand.u32 %v2791, 4294901760
    %v3190 = vsub.f32 %v2791, %v3189
    %v3191 = vand.u32 %v3190, 4294901760
    %v3192 = vsub.f32 %v3190, %v3191
    %v3193 = vand.u32 %v3192, 4294901760
    %3194 = vmatmul.mubr.f32.gmra.mrb[0].mxu0 %v3193
    %v3195 = vpop.f32.mrb[0].mxu0
    %v3196 = vadd.f32 %v2730, %v3195
    %v3197 = vpop.f32.mrb[0].mxu0
    %3198 = vmatprep.mubr.f32.mxu0 0.0
    %v3199 = vand.u32 %v2794, 4294901760
    %v3200 = vsub.f32 %v2794, %v3199
    %v3201 = vand.u32 %v3200, 4294901760
    %v3202 = vsub.f32 %v3200, %v3201
    %v3203 = vand.u32 %v3202, 4294901760
    %3204 = vmatmul.mubr.f32.gmra.mrb[0].mxu0 %v3203
    %v3205 = vpop.f32.mrb[0].mxu0
    %v3206 = vadd.f32 %v2730, %v3205
    %v3207 = vpop.f32.mrb[0].mxu0
    %3208 = vmatprep.mubr.f32.mxu0 0.0
    %v3209 = vand.u32 %v2797, 4294901760
    %v3210 = vsub.f32 %v2797, %v3209
    %v3211 = vand.u32 %v3210, 4294901760
    %v3212 = vsub.f32 %v3210, %v3211
    %v3213 = vand.u32 %v3212, 4294901760
    %3214 = vmatmul.mubr.f32.gmra.mrb[0].mxu0 %v3213
    %v3215 = vpop.f32.mrb[0].mxu0
    %v3216 = vadd.f32 %v2730, %v3215
    %v3217 = vpop.f32.mrb[0].mxu0
    %3218 = vmatprep.mubr.f32.mxu0 0.0
    %v3219 = vand.u32 %v2800, 4294901760
    %v3220 = vsub.f32 %v2800, %v3219
    %v3221 = vand.u32 %v3220, 4294901760
    %v3222 = vsub.f32 %v3220, %v3221
    %v3223 = vand.u32 %v3222, 4294901760
    %3224 = vmatmul.mubr.f32.gmra.mrb[0].mxu0 %v3223
    %v3225 = vpop.f32.mrb[0].mxu0
    %v3226 = vadd.f32 %v2730, %v3225
    %v3227 = vpop.f32.mrb[0].mxu0
    %3228 = vmatprep.mubr.f32.mxu0 0.0
    %v3229 = vand.u32 %v2803, 4294901760
    %v3230 = vsub.f32 %v2803, %v3229
    %v3231 = vand.u32 %v3230, 4294901760
    %v3232 = vsub.f32 %v3230, %v3231
    %v3233 = vand.u32 %v3232, 4294901760
    %3234 = vmatmul.mubr.f32.gmra.mrb[0].mxu0 %v3233
    %v3235 = vpop.f32.mrb[0].mxu0
    %v3236 = vadd.f32 %v2730, %v3235
    %v3237 = vpop.f32.mrb[0].mxu0
    %3238 = vmatprep.mubr.f32.mxu0 0.0
    %v3239 = vand.u32 %v2806, 4294901760
    %v3240 = vsub.f32 %v2806, %v3239
    %v3241 = vand.u32 %v3240, 4294901760
    %v3242 = vsub.f32 %v3240, %v3241
    %v3243 = vand.u32 %v3242, 4294901760
    %3244 = vmatmul.mubr.f32.gmra.mrb[0].mxu0 %v3243
    %v3245 = vpop.f32.mrb[0].mxu0
    %v3246 = vadd.f32 %v2730, %v3245
    %v3247 = vpop.f32.mrb[0].mxu0
    %3248 = vmatprep.mubr.f32.mxu0 0.0
    %v3249 = vand.u32 %v2809, 4294901760
    %v3250 = vsub.f32 %v2809, %v3249
    %v3251 = vand.u32 %v3250, 4294901760
    %v3252 = vsub.f32 %v3250, %v3251
    %v3253 = vand.u32 %v3252, 4294901760
    %3254 = vmatmul.mubr.f32.gmra.mrb[0].mxu0 %v3253
    %v3255 = vpop.f32.mrb[0].mxu0
    %v3256 = vadd.f32 %v2730, %v3255
    %v3257 = vpop.f32.mrb[0].mxu0
    %3258 = vmatprep.mubr.f32.mxu0 0.0
    %v3259 = vand.u32 %v2812, 4294901760
    %v3260 = vsub.f32 %v2812, %v3259
    %v3261 = vand.u32 %v3260, 4294901760
    %v3262 = vsub.f32 %v3260, %v3261
    %v3263 = vand.u32 %v3262, 4294901760
    %3264 = vmatmul.mubr.f32.gmra.mrb[0].mxu0 %v3263
    %v3265 = vpop.f32.mrb[0].mxu0
    %v3266 = vadd.f32 %v2730, %v3265
    %v3267 = vpop.f32.mrb[0].mxu0
    %3268 = vmatprep.mubr.f32.mxu0 0.0
    %v3269 = vand.u32 %v2815, 4294901760
    %v3270 = vsub.f32 %v2815, %v3269
    %v3271 = vand.u32 %v3270, 4294901760
    %v3272 = vsub.f32 %v3270, %v3271
    %v3273 = vand.u32 %v3272, 4294901760
    %3274 = vmatmul.mubr.f32.gmra.mrb[0].mxu0 %v3273
    %v3275 = vpop.f32.mrb[0].mxu0
    %v3276 = vadd.f32 %v2730, %v3275
    %v3277 = vpop.f32.mrb[0].mxu0
    %3278 = vmatprep.mubr.f32.mxu0 0.0
    %v3279 = vand.u32 %v2818, 4294901760
    %v3280 = vsub.f32 %v2818, %v3279
    %v3281 = vand.u32 %v3280, 4294901760
    %v3282 = vsub.f32 %v3280, %v3281
    %v3283 = vand.u32 %v3282, 4294901760
    %3284 = vmatmul.mubr.f32.gmra.mrb[0].mxu0 %v3283
    %v3285 = vpop.f32.mrb[0].mxu0
    %v3286 = vadd.f32 %v2730, %v3285
    %v3287 = vpop.f32.mrb[0].mxu0
    %3288 = vmatprep.mubr.f32.mxu0 0.0
    %v3289 = vand.u32 %v2821, 4294901760
    %v3290 = vsub.f32 %v2821, %v3289
    %v3291 = vand.u32 %v3290, 4294901760
    %v3292 = vsub.f32 %v3290, %v3291
    %v3293 = vand.u32 %v3292, 4294901760
    %3294 = vmatmul.mubr.f32.gmra.mrb[0].mxu0 %v3293
    %v3295 = vpop.f32.mrb[0].mxu0
    %v3296 = vadd.f32 %v2730, %v3295
    %v3297 = vpop.f32.mrb[0].mxu0
    %3298 = vmatprep.mubr.f32.mxu0 0.0
    %v3299 = vand.u32 %v2824, 4294901760
    %v3300 = vsub.f32 %v2824, %v3299
    %v3301 = vand.u32 %v3300, 4294901760
    %v3302 = vsub.f32 %v3300, %v3301
    %v3303 = vand.u32 %v3302, 4294901760
    %3304 = vmatmul.mubr.f32.gmra.mrb[0].mxu0 %v3303
    %v3305 = vpop.f32.mrb[0].mxu0
    %v3306 = vadd.f32 %v2730, %v3305
    %v3307 = vpop.f32.mrb[0].mxu0
    %3308 = vmatprep.mubr.f32.mxu0 0.0
    %v3309 = vand.u32 %v2827, 4294901760
    %v3310 = vsub.f32 %v2827, %v3309
    %v3311 = vand.u32 %v3310, 4294901760
    %v3312 = vsub.f32 %v3310, %v3311
    %v3313 = vand.u32 %v3312, 4294901760
    %3314 = vmatmul.mubr.f32.gmra.mrb[0].mxu0 %v3313
    %v3315 = vpop.f32.mrb[0].mxu0
    %v3316 = vadd.f32 %v2730, %v3315
    %v3317 = vpop.f32.mrb[0].mxu0
    %3318 = vmatprep.mubr.f32.mxu0 0.0
    %v3319 = vand.u32 %v2830, 4294901760
    %v3320 = vsub.f32 %v2830, %v3319
    %v3321 = vand.u32 %v3320, 4294901760
    %v3322 = vsub.f32 %v3320, %v3321
    %v3323 = vand.u32 %v3322, 4294901760
    %3324 = vmatmul.mubr.f32.gmra.mrb[0].mxu0 %v3323
    %v3325 = vpop.f32.mrb[0].mxu0
    %v3326 = vadd.f32 %v2730, %v3325
    %v3327 = vpop.f32.mrb[0].mxu0
    %3328 = vmatprep.mubr.f32.mxu0 0.0
    %v3329 = vand.u32 %v2833, 4294901760
    %v3330 = vsub.f32 %v2833, %v3329
    %v3331 = vand.u32 %v3330, 4294901760
    %v3332 = vsub.f32 %v3330, %v3331
    %v3333 = vand.u32 %v3332, 4294901760
    %3334 = vmatmul.mubr.f32.gmra.mrb[0].mxu0 %v3333
    %v3335 = vpop.f32.mrb[0].mxu0
    %v3336 = vadd.f32 %v2730, %v3335
    %v3337 = vpop.f32.mrb[0].mxu0
    %3338 = vmatprep.mubr.f32.mxu0 0.0
    %v3339 = vand.u32 %v2836, 4294901760
    %v3340 = vsub.f32 %v2836, %v3339
    %v3341 = vand.u32 %v3340, 4294901760
    %v3342 = vsub.f32 %v3340, %v3341
    %v3343 = vand.u32 %v3342, 4294901760
    %3344 = vmatmul.mubr.f32.gmra.mrb[0].mxu0 %v3343
    %v3345 = vpop.f32.mrb[0].mxu0
    %v3346 = vadd.f32 %v2730, %v3345
    %v3347 = vpop.f32.mrb[0].mxu0
    %3348 = vmatprep.mubr.f32.mxu0 0.0
    %v3349 = vand.u32 %v2839, 4294901760
    %v3350 = vsub.f32 %v2839, %v3349
    %v3351 = vand.u32 %v3350, 4294901760
    %v3352 = vsub.f32 %v3350, %v3351
    %v3353 = vand.u32 %v3352, 4294901760
    %3354 = vmatmul.mubr.f32.gmra.mrb[0].mxu0 %v3353
    %v3355 = vpop.f32.mrb[0].mxu0
    %v3356 = vadd.f32 %v2730, %v3355
    %v3357 = vpop.f32.mrb[0].mxu0
    %3358 = vmatprep.mubr.f32.mxu0 0.0
    %v3359 = vand.u32 %v2842, 4294901760
    %v3360 = vsub.f32 %v2842, %v3359
    %v3361 = vand.u32 %v3360, 4294901760
    %v3362 = vsub.f32 %v3360, %v3361
    %v3363 = vand.u32 %v3362, 4294901760
    %3364 = vmatmul.mubr.f32.gmra.mrb[0].mxu0 %v3363
    %v3365 = vpop.f32.mrb[0].mxu0
    %v3366 = vadd.f32 %v2730, %v3365
    %v3367 = vpop.f32.mrb[0].mxu0
    %3368 = vmatprep.mubr.f32.mxu0 0.0
    %v3369 = vand.u32 %v2845, 4294901760
    %v3370 = vsub.f32 %v2845, %v3369
    %v3371 = vand.u32 %v3370, 4294901760
    %v3372 = vsub.f32 %v3370, %v3371
    %v3373 = vand.u32 %v3372, 4294901760
    %3374 = vmatmul.mubr.f32.gmra.mrb[0].mxu0 %v3373
    %v3375 = vpop.f32.mrb[0].mxu0
    %v3376 = vadd.f32 %v2730, %v3375
    %v3377 = vpop.f32.mrb[0].mxu0
    %3378 = vmatprep.mubr.f32.mxu0 0.0
    %v3379 = vand.u32 %v2848, 4294901760
    %v3380 = vsub.f32 %v2848, %v3379
    %v3381 = vand.u32 %v3380, 4294901760
    %v3382 = vsub.f32 %v3380, %v3381
    %v3383 = vand.u32 %v3382, 4294901760
    %3384 = vmatmul.mubr.f32.gmra.mrb[0].mxu0 %v3383
    %v3385 = vpop.f32.mrb[0].mxu0
    %v3386 = vadd.f32 %v2730, %v3385
    %v3387 = vpop.f32.mrb[0].mxu0
    %3388 = vmatprep.mubr.f32.mxu0 0.0
    %v3389 = vand.u32 %v2851, 4294901760
    %v3390 = vsub.f32 %v2851, %v3389
    %v3391 = vand.u32 %v3390, 4294901760
    %v3392 = vsub.f32 %v3390, %v3391
    %v3393 = vand.u32 %v3392, 4294901760
    %3394 = vmatmul.mubr.f32.gmra.mrb[0].mxu0 %v3393
    %v3395 = vpop.f32.mrb[0].mxu0
    %v3396 = vadd.f32 %v2730, %v3395
    %v3397 = vpop.f32.mrb[0].mxu0
    %3398 = vmatprep.mubr.f32.mxu0 0.0
    %v3399 = vand.u32 %v2854, 4294901760
    %v3400 = vsub.f32 %v2854, %v3399
    %v3401 = vand.u32 %v3400, 4294901760
    %v3402 = vsub.f32 %v3400, %v3401
    %v3403 = vand.u32 %v3402, 4294901760
    %3404 = vmatmul.mubr.f32.gmra.mrb[0].mxu0 %v3403
    %v3405 = vpop.f32.mrb[0].mxu0
    %v3406 = vadd.f32 %v2730, %v3405
    %v3407 = vpop.f32.mrb[0].mxu0
    %3408 = vmatprep.mubr.f32.mxu0 0.0
    %v3409 = vand.u32 %v2857, 4294901760
    %v3410 = vsub.f32 %v2857, %v3409
    %v3411 = vand.u32 %v3410, 4294901760
    %v3412 = vsub.f32 %v3410, %v3411
    %v3413 = vand.u32 %v3412, 4294901760
    %3414 = vmatmul.mubr.f32.gmra.mrb[0].mxu0 %v3413
    %v3415 = vpop.f32.mrb[0].mxu0
    %v3416 = vadd.f32 %v2730, %v3415
    %v3417 = vpop.f32.mrb[0].mxu0
    %3418 = vmatprep.mubr.f32.mxu0 0.0
    %v3419 = vand.u32 %v2860, 4294901760
    %v3420 = vsub.f32 %v2860, %v3419
    %v3421 = vand.u32 %v3420, 4294901760
    %v3422 = vsub.f32 %v3420, %v3421
    %v3423 = vand.u32 %v3422, 4294901760
    %3424 = vmatmul.mubr.f32.gmra.mrb[0].mxu0 %v3423
    %v3425 = vpop.f32.mrb[0].mxu0
    %v3426 = vadd.f32 %v2730, %v3425
    %v3427 = vpop.f32.mrb[0].mxu0
    %3428 = vmatprep.mubr.f32.mxu0 0.0
    %v3429 = vand.u32 %v2863, 4294901760
    %v3430 = vsub.f32 %v2863, %v3429
    %v3431 = vand.u32 %v3430, 4294901760
    %v3432 = vsub.f32 %v3430, %v3431
    %v3433 = vand.u32 %v3432, 4294901760
    %3434 = vmatmul.mubr.f32.gmra.mrb[0].mxu0 %v3433
    %v3435 = vpop.f32.mrb[0].mxu0
    %v3436 = vadd.f32 %v2730, %v3435
    %v3437 = vpop.f32.mrb[0].mxu0
    %3438 = vmatprep.mubr.f32.mxu0 0.0
    %v3439 = vand.u32 %v2866, 4294901760
    %v3440 = vsub.f32 %v2866, %v3439
    %v3441 = vand.u32 %v3440, 4294901760
    %v3442 = vsub.f32 %v3440, %v3441
    %v3443 = vand.u32 %v3442, 4294901760
    %3444 = vmatmul.mubr.f32.gmra.mrb[0].mxu0 %v3443
    %v3445 = vpop.f32.mrb[0].mxu0
    %v3446 = vadd.f32 %v2730, %v3445
    %v3447 = vpop.f32.mrb[0].mxu0
    %3448 = vmatprep.mubr.f32.mxu0 0.0
    %v3449 = vand.u32 %v2869, 4294901760
    %v3450 = vsub.f32 %v2869, %v3449
    %v3451 = vand.u32 %v3450, 4294901760
    %v3452 = vsub.f32 %v3450, %v3451
    %v3453 = vand.u32 %v3452, 4294901760
    %3454 = vmatmul.mubr.f32.gmra.mrb[0].mxu0 %v3453
    %v3455 = vpop.f32.mrb[0].mxu0
    %v3456 = vadd.f32 %v2730, %v3455
    %v3457 = vpop.f32.mrb[0].mxu0
    %3458 = vmatprep.mubr.f32.mxu0 0.0
    %v3459 = vand.u32 %v2872, 4294901760
    %v3460 = vsub.f32 %v2872, %v3459
    %v3461 = vand.u32 %v3460, 4294901760
    %v3462 = vsub.f32 %v3460, %v3461
    %v3463 = vand.u32 %v3462, 4294901760
    %3464 = vmatmul.mubr.f32.gmra.mrb[0].mxu0 %v3463
    %v3465 = vpop.f32.mrb[0].mxu0
    %v3466 = vadd.f32 %v2730, %v3465
    %v3467 = vpop.f32.mrb[0].mxu0
    %3468 = vmatprep.mubr.f32.mxu0 0.0
    %v3469 = vand.u32 %v2875, 4294901760
    %v3470 = vsub.f32 %v2875, %v3469
    %v3471 = vand.u32 %v3470, 4294901760
    %v3472 = vsub.f32 %v3470, %v3471
    %v3473 = vand.u32 %v3472, 4294901760
    %3474 = vmatmul.mubr.f32.gmra.mrb[0].mxu0 %v3473
    %v3475 = vpop.f32.mrb[0].mxu0
    %v3476 = vadd.f32 %v2730, %v3475
    %v3477 = vpop.f32.mrb[0].mxu0
    %3478 = vmatprep.mubr.f32.mxu0 0.0
    %v3479 = vand.u32 %v2878, 4294901760
    %v3480 = vsub.f32 %v2878, %v3479
    %v3481 = vand.u32 %v3480, 4294901760
    %v3482 = vsub.f32 %v3480, %v3481
    %v3483 = vand.u32 %v3482, 4294901760
    %3484 = vmatmul.mubr.f32.gmra.mrb[0].mxu0 %v3483
    %v3485 = vpop.f32.mrb[0].mxu0
    %v3486 = vadd.f32 %v2730, %v3485
    %v3487 = vpop.f32.mrb[0].mxu0
    %3488 = vmatprep.mubr.f32.mxu0 0.0
    %v3489 = vand.u32 %v2881, 4294901760
    %v3490 = vsub.f32 %v2881, %v3489
    %v3491 = vand.u32 %v3490, 4294901760
    %v3492 = vsub.f32 %v3490, %v3491
    %v3493 = vand.u32 %v3492, 4294901760
    %3494 = vmatmul.mubr.f32.gmra.mrb[0].mxu0 %v3493
    %v3495 = vpop.f32.mrb[0].mxu0
    %v3496 = vadd.f32 %v2730, %v3495
    %v3497 = vpop.f32.mrb[0].mxu0
    %3498 = vmatprep.mubr.f32.mxu0 0.0
    %v3499 = vand.u32 %v2884, 4294901760
    %v3500 = vsub.f32 %v2884, %v3499
    %v3501 = vand.u32 %v3500, 4294901760
    %v3502 = vsub.f32 %v3500, %v3501
    %v3503 = vand.u32 %v3502, 4294901760
    %3504 = vmatmul.mubr.f32.gmra.mrb[0].mxu0 %v3503
    %v3505 = vpop.f32.mrb[0].mxu0
    %v3506 = vadd.f32 %v2730, %v3505
    %v3507 = vpop.f32.mrb[0].mxu0
    %3508 = vmatprep.mubr.f32.mxu0 0.0
    %v3509 = vand.u32 %v2887, 4294901760
    %v3510 = vsub.f32 %v2887, %v3509
    %v3511 = vand.u32 %v3510, 4294901760
    %v3512 = vsub.f32 %v3510, %v3511
    %v3513 = vand.u32 %v3512, 4294901760
    %3514 = vmatmul.mubr.f32.gmra.mrb[0].mxu0 %v3513
    %v3515 = vpop.f32.mrb[0].mxu0
    %v3516 = vadd.f32 %v2730, %v3515
    %v3517 = vpop.f32.mrb[0].mxu0
    %3518 = vmatprep.mubr.f32.mxu0 0.0
    %v3519 = vand.u32 %v2890, 4294901760
    %v3520 = vsub.f32 %v2890, %v3519
    %v3521 = vand.u32 %v3520, 4294901760
    %v3522 = vsub.f32 %v3520, %v3521
    %v3523 = vand.u32 %v3522, 4294901760
    %3524 = vmatmul.mubr.f32.gmra.mrb[0].mxu0 %v3523
    %v3525 = vpop.f32.mrb[0].mxu0
    %v3526 = vadd.f32 %v2730, %v3525
    %v3527 = vpop.f32.mrb[0].mxu0
    %3528 = vmatprep.mubr.f32.mxu0 0.0
    %v3529 = vand.u32 %v2893, 4294901760
    %v3530 = vsub.f32 %v2893, %v3529
    %v3531 = vand.u32 %v3530, 4294901760
    %v3532 = vsub.f32 %v3530, %v3531
    %v3533 = vand.u32 %v3532, 4294901760
    %3534 = vmatmul.mubr.f32.gmra.mrb[0].mxu0 %v3533
    %v3535 = vpop.f32.mrb[0].mxu0
    %v3536 = vadd.f32 %v2730, %v3535
    %v3537 = vpop.f32.mrb[0].mxu0
    %3538 = vmatprep.mubr.f32.mxu0 0.0
    %v3539 = vand.u32 %v2896, 4294901760
    %v3540 = vsub.f32 %v2896, %v3539
    %v3541 = vand.u32 %v3540, 4294901760
    %v3542 = vsub.f32 %v3540, %v3541
    %v3543 = vand.u32 %v3542, 4294901760
    %3544 = vmatmul.mubr.f32.gmra.mrb[0].mxu0 %v3543
    %v3545 = vpop.f32.mrb[0].mxu0
    %v3546 = vadd.f32 %v2730, %v3545
    %v3547 = vpop.f32.mrb[0].mxu0
    %3548 = vmatprep.mubr.f32.mxu0 0.0
    %v3549 = vand.u32 %v2899, 4294901760
    %v3550 = vsub.f32 %v2899, %v3549
    %v3551 = vand.u32 %v3550, 4294901760
    %v3552 = vsub.f32 %v3550, %v3551
    %v3553 = vand.u32 %v3552, 4294901760
    %3554 = vmatmul.mubr.f32.gmra.mrb[0].mxu0 %v3553
    %v3555 = vpop.f32.mrb[0].mxu0
    %v3556 = vadd.f32 %v2730, %v3555
    %v3557 = vpop.f32.mrb[0].mxu0
    %3558 = vmatprep.mubr.f32.mxu0 0.0
    %v3559 = vand.u32 %v2902, 4294901760
    %v3560 = vsub.f32 %v2902, %v3559
    %v3561 = vand.u32 %v3560, 4294901760
    %v3562 = vsub.f32 %v3560, %v3561
    %v3563 = vand.u32 %v3562, 4294901760
    %3564 = vmatmul.mubr.f32.gmra.mrb[0].mxu0 %v3563
    %v3565 = vpop.f32.mrb[0].mxu0
    %v3566 = vadd.f32 %v2730, %v3565
    %v3567 = vpop.f32.mrb[0].mxu0
    %3568 = vmatprep.mubr.f32.mxu0 0.0
    %v3569 = vand.u32 %v2905, 4294901760
    %v3570 = vsub.f32 %v2905, %v3569
    %v3571 = vand.u32 %v3570, 4294901760
    %v3572 = vsub.f32 %v3570, %v3571
    %v3573 = vand.u32 %v3572, 4294901760
    %3574 = vmatmul.mubr.f32.gmra.mrb[0].mxu0 %v3573
    %v3575 = vpop.f32.mrb[0].mxu0
    %v3576 = vadd.f32 %v2730, %v3575
    %v3577 = vpop.f32.mrb[0].mxu0
    %3578 = vmatprep.mubr.f32.mxu0 0.0
    %v3579 = vand.u32 %v2908, 4294901760
    %v3580 = vsub.f32 %v2908, %v3579
    %v3581 = vand.u32 %v3580, 4294901760
    %v3582 = vsub.f32 %v3580, %v3581
    %v3583 = vand.u32 %v3582, 4294901760
    %3584 = vmatmul.mubr.f32.gmra.mrb[0].mxu0 %v3583
    %v3585 = vpop.f32.mrb[0].mxu0
    %v3586 = vadd.f32 %v2730, %v3585
    %v3587 = vpop.f32.mrb[0].mxu0
    %3588 = vmatprep.mubr.f32.mxu0 0.0
    %v3589 = vand.u32 %v2911, 4294901760
    %v3590 = vsub.f32 %v2911, %v3589
    %v3591 = vand.u32 %v3590, 4294901760
    %v3592 = vsub.f32 %v3590, %v3591
    %v3593 = vand.u32 %v3592, 4294901760
    %3594 = vmatmul.mubr.f32.gmra.mrb[0].mxu0 %v3593
    %v3595 = vpop.f32.mrb[0].mxu0
    %v3596 = vadd.f32 %v2730, %v3595
    %v3597 = vpop.f32.mrb[0].mxu0
    %3598 = vmatprep.mubr.f32.mxu0 0.0
    %v3599 = vand.u32 %v2914, 4294901760
    %v3600 = vsub.f32 %v2914, %v3599
    %v3601 = vand.u32 %v3600, 4294901760
    %v3602 = vsub.f32 %v3600, %v3601
    %v3603 = vand.u32 %v3602, 4294901760
    %3604 = vmatmul.mubr.f32.gmra.mrb[0].mxu0 %v3603
    %v3605 = vpop.f32.mrb[0].mxu0
    %v3606 = vadd.f32 %v2730, %v3605
    %v3607 = vpop.f32.mrb[0].mxu0
    %3608 = vmatprep.mubr.f32.mxu0 0.0
    %v3609 = vand.u32 %v2917, 4294901760
    %v3610 = vsub.f32 %v2917, %v3609
    %v3611 = vand.u32 %v3610, 4294901760
    %v3612 = vsub.f32 %v3610, %v3611
    %v3613 = vand.u32 %v3612, 4294901760
    %3614 = vmatmul.mubr.f32.gmra.mrb[0].mxu0 %v3613
    %v3615 = vpop.f32.mrb[0].mxu0
    %v3616 = vadd.f32 %v2730, %v3615
    %v3617 = vpop.f32.mrb[0].mxu0
    %3618 = vmatprep.mubr.f32.mxu0 0.0
    %v3619 = vand.u32 %v2920, 4294901760
    %v3620 = vsub.f32 %v2920, %v3619
    %v3621 = vand.u32 %v3620, 4294901760
    %v3622 = vsub.f32 %v3620, %v3621
    %v3623 = vand.u32 %v3622, 4294901760
    %3624 = vmatmul.mubr.f32.gmra.mrb[0].mxu0 %v3623
    %v3625 = vpop.f32.mrb[0].mxu0
    %v3626 = vadd.f32 %v2730, %v3625
    %v3627 = vpop.f32.mrb[0].mxu0
    %3628 = vmatprep.mubr.f32.mxu0 0.0
    %v3629 = vand.u32 %v2923, 4294901760
    %v3630 = vsub.f32 %v2923, %v3629
    %v3631 = vand.u32 %v3630, 4294901760
    %v3632 = vsub.f32 %v3630, %v3631
    %v3633 = vand.u32 %v3632, 4294901760
    %3634 = vmatmul.mubr.f32.gmra.mrb[0].mxu0 %v3633
    %v3635 = vpop.f32.mrb[0].mxu0
    %v3636 = vadd.f32 %v2730, %v3635
    %v3637 = vpop.f32.mrb[0].mxu0
    %3638 = vdwg.mxu0
    %3639 = vmatprep.subr.mxu0 0.0
    %v3640 = vand.u32 %v2716, 4294901760
    %v3641 = vsub.f32 %v2716, %v3640
    %v3642 = vand.u32 %v3641, 4294901760
    %v3643 = vsub.f32 %v3641, %v3642
    %v3644 = vand.u32 %v3643, 4294901760
    %3645 = vmatpush1.msra.mxu0 %v3644
    %3646 = vmatprep.subr.mxu0 0.0
    %v3647 = vand.u32 %v2717, 4294901760
    %v3648 = vsub.f32 %v2717, %v3647
    %v3649 = vand.u32 %v3648, 4294901760
    %v3650 = vsub.f32 %v3648, %v3649
    %v3651 = vand.u32 %v3650, 4294901760
    %3652 = vmatpush1.msra.mxu0 %v3651
    %3653 = vmatprep.subr.mxu0 0.0
    %v3654 = vand.u32 %v2718, 4294901760
    %v3655 = vsub.f32 %v2718, %v3654
    %v3656 = vand.u32 %v3655, 4294901760
    %v3657 = vsub.f32 %v3655, %v3656
    %v3658 = vand.u32 %v3657, 4294901760
    %3659 = vmatpush1.msra.mxu0 %v3658
    %3660 = vmatprep.subr.mxu0 0.0
    %v3661 = vand.u32 %v2719, 4294901760
    %v3662 = vsub.f32 %v2719, %v3661
    %v3663 = vand.u32 %v3662, 4294901760
    %v3664 = vsub.f32 %v3662, %v3663
    %v3665 = vand.u32 %v3664, 4294901760
    %3666 = vmatpush1.msra.mxu0 %v3665
    %3667 = vmatprep.subr.mxu0 0.0
    %v3668 = vand.u32 %v2720, 4294901760
    %v3669 = vsub.f32 %v2720, %v3668
    %v3670 = vand.u32 %v3669, 4294901760
    %v3671 = vsub.f32 %v3669, %v3670
    %v3672 = vand.u32 %v3671, 4294901760
    %3673 = vmatpush1.msra.mxu0 %v3672
    %3674 = vmatprep.subr.mxu0 0.0
    %v3675 = vand.u32 %v2721, 4294901760
    %v3676 = vsub.f32 %v2721, %v3675
    %v3677 = vand.u32 %v3676, 4294901760
    %v3678 = vsub.f32 %v3676, %v3677
    %v3679 = vand.u32 %v3678, 4294901760
    %3680 = vmatpush1.msra.mxu0 %v3679
    %3681 = vmatprep.subr.mxu0 0.0
    %v3682 = vand.u32 %v2722, 4294901760
    %v3683 = vsub.f32 %v2722, %v3682
    %v3684 = vand.u32 %v3683, 4294901760
    %v3685 = vsub.f32 %v3683, %v3684
    %v3686 = vand.u32 %v3685, 4294901760
    %3687 = vmatpush1.msra.mxu0 %v3686
    %3688 = vmatprep.subr.mxu0 0.0
    %v3689 = vand.u32 %v2723, 4294901760
    %v3690 = vsub.f32 %v2723, %v3689
    %v3691 = vand.u32 %v3690, 4294901760
    %v3692 = vsub.f32 %v3690, %v3691
    %v3693 = vand.u32 %v3692, 4294901760
    %3694 = vmatpush1.msra.mxu0 %v3693
    %3695 = vmatprep.subr.mxu0 0.0
    %v3696 = vand.u32 %v2724, 4294901760
    %v3697 = vsub.f32 %v2724, %v3696
    %v3698 = vand.u32 %v3697, 4294901760
    %v3699 = vsub.f32 %v3697, %v3698
    %v3700 = vand.u32 %v3699, 4294901760
    %3701 = vmatpush1.msra.mxu0 %v3700
    %3702 = vmatprep.subr.mxu0 0.0
    %3703 = vmatpush1.msra.mxu0 0.0
    %3704 = vmatprep.subr.mxu0 0.0
    %3705 = vmatpush1.msra.mxu0 0.0
    %3706 = vmatprep.subr.mxu0 0.0
    %3707 = vmatpush1.msra.mxu0 0.0
    %3708 = vmatprep.subr.mxu0 0.0
    %3709 = vmatpush1.msra.mxu0 0.0
    %3710 = vmatprep.subr.mxu0 0.0
    %3711 = vmatpush1.msra.mxu0 0.0
    %3712 = vmatprep.subr.mxu0 0.0
    %3713 = vmatpush1.msra.mxu0 0.0
    %3714 = vmatprep.subr.mxu0 0.0
    %3715 = vmatpush1.msra.mxu0 0.0
    %3716 = vmatprep.subr.mxu0 0.0
    %3717 = vmatpush1.msra.mxu0 0.0
    %3718 = vmatprep.subr.mxu0 0.0
    %3719 = vmatpush1.msra.mxu0 0.0
    %3720 = vmatprep.subr.mxu0 0.0
    %3721 = vmatpush1.msra.mxu0 0.0
    %3722 = vmatprep.subr.mxu0 0.0
    %3723 = vmatpush1.msra.mxu0 0.0
    %3724 = vmatprep.subr.mxu0 0.0
    %3725 = vmatpush1.msra.mxu0 0.0
    %3726 = vmatprep.subr.mxu0 0.0
    %3727 = vmatpush1.msra.mxu0 0.0
    %3728 = vmatprep.subr.mxu0 0.0
    %3729 = vmatpush1.msra.mxu0 0.0
    %3730 = vmatprep.subr.mxu0 0.0
    %3731 = vmatpush1.msra.mxu0 0.0
    %3732 = vmatprep.subr.mxu0 0.0
    %3733 = vmatpush1.msra.mxu0 0.0
    %3734 = vmatprep.subr.mxu0 0.0
    %3735 = vmatpush1.msra.mxu0 0.0
    %3736 = vmatprep.subr.mxu0 0.0
    %3737 = vmatpush1.msra.mxu0 0.0
    %3738 = vmatprep.subr.mxu0 0.0
    %3739 = vmatpush1.msra.mxu0 0.0
    %3740 = vmatprep.subr.mxu0 0.0
    %3741 = vmatpush1.msra.mxu0 0.0
    %3742 = vmatprep.subr.mxu0 0.0
    %3743 = vmatpush1.msra.mxu0 0.0
    %3744 = vmatprep.subr.mxu0 0.0
    %3745 = vmatpush1.msra.mxu0 0.0
    %3746 = vmatprep.subr.mxu0 0.0
    %3747 = vmatpush1.msra.mxu0 0.0
    %3748 = vmatprep.mubr.f32.mxu0 0.0
    %v3749 = vand.u32 %v2734, 4294901760
    %3750 = vmatmul.mubr.f32.gmra.mrb[0].mxu0 %v3749
    %v3751 = vpop.f32.mrb[0].mxu0
    %v3752 = vadd.f32 %v3006, %v3751
    %v3753 = vpop.f32.mrb[0].mxu0
    %3754 = vmatprep.mubr.f32.mxu0 0.0
    %v3755 = vand.u32 %v2737, 4294901760
    %3756 = vmatmul.mubr.f32.gmra.mrb[0].mxu0 %v3755
    %v3757 = vpop.f32.mrb[0].mxu0
    %v3758 = vadd.f32 %v3016, %v3757
    %v3759 = vpop.f32.mrb[0].mxu0
    %3760 = vmatprep.mubr.f32.mxu0 0.0
    %v3761 = vand.u32 %v2740, 4294901760
    %3762 = vmatmul.mubr.f32.gmra.mrb[0].mxu0 %v3761
    %v3763 = vpop.f32.mrb[0].mxu0
    %v3764 = vadd.f32 %v3026, %v3763
    %v3765 = vpop.f32.mrb[0].mxu0
    %3766 = vmatprep.mubr.f32.mxu0 0.0
    %v3767 = vand.u32 %v2743, 4294901760
    %3768 = vmatmul.mubr.f32.gmra.mrb[0].mxu0 %v3767
    %v3769 = vpop.f32.mrb[0].mxu0
    %v3770 = vadd.f32 %v3036, %v3769
    %v3771 = vpop.f32.mrb[0].mxu0
    %3772 = vmatprep.mubr.f32.mxu0 0.0
    %v3773 = vand.u32 %v2746, 4294901760
    %3774 = vmatmul.mubr.f32.gmra.mrb[0].mxu0 %v3773
    %v3775 = vpop.f32.mrb[0].mxu0
    %v3776 = vadd.f32 %v3046, %v3775
    %v3777 = vpop.f32.mrb[0].mxu0
    %3778 = vmatprep.mubr.f32.mxu0 0.0
    %v3779 = vand.u32 %v2749, 4294901760
    %3780 = vmatmul.mubr.f32.gmra.mrb[0].mxu0 %v3779
    %v3781 = vpop.f32.mrb[0].mxu0
    %v3782 = vadd.f32 %v3056, %v3781
    %v3783 = vpop.f32.mrb[0].mxu0
    %3784 = vmatprep.mubr.f32.mxu0 0.0
    %v3785 = vand.u32 %v2752, 4294901760
    %3786 = vmatmul.mubr.f32.gmra.mrb[0].mxu0 %v3785
    %v3787 = vpop.f32.mrb[0].mxu0
    %v3788 = vadd.f32 %v3066, %v3787
    %v3789 = vpop.f32.mrb[0].mxu0
    %3790 = vmatprep.mubr.f32.mxu0 0.0
    %v3791 = vand.u32 %v2755, 4294901760
    %3792 = vmatmul.mubr.f32.gmra.mrb[0].mxu0 %v3791
    %v3793 = vpop.f32.mrb[0].mxu0
    %v3794 = vadd.f32 %v3076, %v3793
    %v3795 = vpop.f32.mrb[0].mxu0
    %3796 = vmatprep.mubr.f32.mxu0 0.0
    %v3797 = vand.u32 %v2758, 4294901760
    %3798 = vmatmul.mubr.f32.gmra.mrb[0].mxu0 %v3797
    %v3799 = vpop.f32.mrb[0].mxu0
    %v3800 = vadd.f32 %v3086, %v3799
    %v3801 = vpop.f32.mrb[0].mxu0
    %3802 = vmatprep.mubr.f32.mxu0 0.0
    %v3803 = vand.u32 %v2761, 4294901760
    %3804 = vmatmul.mubr.f32.gmra.mrb[0].mxu0 %v3803
    %v3805 = vpop.f32.mrb[0].mxu0
    %v3806 = vadd.f32 %v3096, %v3805
    %v3807 = vpop.f32.mrb[0].mxu0
    %3808 = vmatprep.mubr.f32.mxu0 0.0
    %v3809 = vand.u32 %v2764, 4294901760
    %3810 = vmatmul.mubr.f32.gmra.mrb[0].mxu0 %v3809
    %v3811 = vpop.f32.mrb[0].mxu0
    %v3812 = vadd.f32 %v3106, %v3811
    %v3813 = vpop.f32.mrb[0].mxu0
    %3814 = vmatprep.mubr.f32.mxu0 0.0
    %v3815 = vand.u32 %v2767, 4294901760
    %3816 = vmatmul.mubr.f32.gmra.mrb[0].mxu0 %v3815
    %v3817 = vpop.f32.mrb[0].mxu0
    %v3818 = vadd.f32 %v3116, %v3817
    %v3819 = vpop.f32.mrb[0].mxu0
    %3820 = vmatprep.mubr.f32.mxu0 0.0
    %v3821 = vand.u32 %v2770, 4294901760
    %3822 = vmatmul.mubr.f32.gmra.mrb[0].mxu0 %v3821
    %v3823 = vpop.f32.mrb[0].mxu0
    %v3824 = vadd.f32 %v3126, %v3823
    %v3825 = vpop.f32.mrb[0].mxu0
    %3826 = vmatprep.mubr.f32.mxu0 0.0
    %v3827 = vand.u32 %v2773, 4294901760
    %3828 = vmatmul.mubr.f32.gmra.mrb[0].mxu0 %v3827
    %v3829 = vpop.f32.mrb[0].mxu0
    %v3830 = vadd.f32 %v3136, %v3829
    %v3831 = vpop.f32.mrb[0].mxu0
    %3832 = vmatprep.mubr.f32.mxu0 0.0
    %v3833 = vand.u32 %v2776, 4294901760
    %3834 = vmatmul.mubr.f32.gmra.mrb[0].mxu0 %v3833
    %v3835 = vpop.f32.mrb[0].mxu0
    %v3836 = vadd.f32 %v3146, %v3835
    %v3837 = vpop.f32.mrb[0].mxu0
    %3838 = vmatprep.mubr.f32.mxu0 0.0
    %v3839 = vand.u32 %v2779, 4294901760
    %3840 = vmatmul.mubr.f32.gmra.mrb[0].mxu0 %v3839
    %v3841 = vpop.f32.mrb[0].mxu0
    %v3842 = vadd.f32 %v3156, %v3841
    %v3843 = vpop.f32.mrb[0].mxu0
    %3844 = vmatprep.mubr.f32.mxu0 0.0
    %v3845 = vand.u32 %v2782, 4294901760
    %3846 = vmatmul.mubr.f32.gmra.mrb[0].mxu0 %v3845
    %v3847 = vpop.f32.mrb[0].mxu0
    %v3848 = vadd.f32 %v3166, %v3847
    %v3849 = vpop.f32.mrb[0].mxu0
    %3850 = vmatprep.mubr.f32.mxu0 0.0
    %v3851 = vand.u32 %v2785, 4294901760
    %3852 = vmatmul.mubr.f32.gmra.mrb[0].mxu0 %v3851
    %v3853 = vpop.f32.mrb[0].mxu0
    %v3854 = vadd.f32 %v3176, %v3853
    %v3855 = vpop.f32.mrb[0].mxu0
    %3856 = vmatprep.mubr.f32.mxu0 0.0
    %v3857 = vand.u32 %v2788, 4294901760
    %3858 = vmatmul.mubr.f32.gmra.mrb[0].mxu0 %v3857
    %v3859 = vpop.f32.mrb[0].mxu0
    %v3860 = vadd.f32 %v3186, %v3859
    %v3861 = vpop.f32.mrb[0].mxu0
    %3862 = vmatprep.mubr.f32.mxu0 0.0
    %v3863 = vand.u32 %v2791, 4294901760
    %3864 = vmatmul.mubr.f32.gmra.mrb[0].mxu0 %v3863
    %v3865 = vpop.f32.mrb[0].mxu0
    %v3866 = vadd.f32 %v3196, %v3865
    %v3867 = vpop.f32.mrb[0].mxu0
    %3868 = vmatprep.mubr.f32.mxu0 0.0
    %v3869 = vand.u32 %v2794, 4294901760
    %3870 = vmatmul.mubr.f32.gmra.mrb[0].mxu0 %v3869
    %v3871 = vpop.f32.mrb[0].mxu0
    %v3872 = vadd.f32 %v3206, %v3871
    %v3873 = vpop.f32.mrb[0].mxu0
    %3874 = vmatprep.mubr.f32.mxu0 0.0
    %v3875 = vand.u32 %v2797, 4294901760
    %3876 = vmatmul.mubr.f32.gmra.mrb[0].mxu0 %v3875
    %v3877 = vpop.f32.mrb[0].mxu0
    %v3878 = vadd.f32 %v3216, %v3877
    %v3879 = vpop.f32.mrb[0].mxu0
    %3880 = vmatprep.mubr.f32.mxu0 0.0
    %v3881 = vand.u32 %v2800, 4294901760
    %3882 = vmatmul.mubr.f32.gmra.mrb[0].mxu0 %v3881
    %v3883 = vpop.f32.mrb[0].mxu0
    %v3884 = vadd.f32 %v3226, %v3883
    %v3885 = vpop.f32.mrb[0].mxu0
    %3886 = vmatprep.mubr.f32.mxu0 0.0
    %v3887 = vand.u32 %v2803, 4294901760
    %3888 = vmatmul.mubr.f32.gmra.mrb[0].mxu0 %v3887
    %v3889 = vpop.f32.mrb[0].mxu0
    %v3890 = vadd.f32 %v3236, %v3889
    %v3891 = vpop.f32.mrb[0].mxu0
    %3892 = vmatprep.mubr.f32.mxu0 0.0
    %v3893 = vand.u32 %v2806, 4294901760
    %3894 = vmatmul.mubr.f32.gmra.mrb[0].mxu0 %v3893
    %v3895 = vpop.f32.mrb[0].mxu0
    %v3896 = vadd.f32 %v3246, %v3895
    %v3897 = vpop.f32.mrb[0].mxu0
    %3898 = vmatprep.mubr.f32.mxu0 0.0
    %v3899 = vand.u32 %v2809, 4294901760
    %3900 = vmatmul.mubr.f32.gmra.mrb[0].mxu0 %v3899
    %v3901 = vpop.f32.mrb[0].mxu0
    %v3902 = vadd.f32 %v3256, %v3901
    %v3903 = vpop.f32.mrb[0].mxu0
    %3904 = vmatprep.mubr.f32.mxu0 0.0
    %v3905 = vand.u32 %v2812, 4294901760
    %3906 = vmatmul.mubr.f32.gmra.mrb[0].mxu0 %v3905
    %v3907 = vpop.f32.mrb[0].mxu0
    %v3908 = vadd.f32 %v3266, %v3907
    %v3909 = vpop.f32.mrb[0].mxu0
    %3910 = vmatprep.mubr.f32.mxu0 0.0
    %v3911 = vand.u32 %v2815, 4294901760
    %3912 = vmatmul.mubr.f32.gmra.mrb[0].mxu0 %v3911
    %v3913 = vpop.f32.mrb[0].mxu0
    %v3914 = vadd.f32 %v3276, %v3913
    %v3915 = vpop.f32.mrb[0].mxu0
    %3916 = vmatprep.mubr.f32.mxu0 0.0
    %v3917 = vand.u32 %v2818, 4294901760
    %3918 = vmatmul.mubr.f32.gmra.mrb[0].mxu0 %v3917
    %v3919 = vpop.f32.mrb[0].mxu0
    %v3920 = vadd.f32 %v3286, %v3919
    %v3921 = vpop.f32.mrb[0].mxu0
    %3922 = vmatprep.mubr.f32.mxu0 0.0
    %v3923 = vand.u32 %v2821, 4294901760
    %3924 = vmatmul.mubr.f32.gmra.mrb[0].mxu0 %v3923
    %v3925 = vpop.f32.mrb[0].mxu0
    %v3926 = vadd.f32 %v3296, %v3925
    %v3927 = vpop.f32.mrb[0].mxu0
    %3928 = vmatprep.mubr.f32.mxu0 0.0
    %v3929 = vand.u32 %v2824, 4294901760
    %3930 = vmatmul.mubr.f32.gmra.mrb[0].mxu0 %v3929
    %v3931 = vpop.f32.mrb[0].mxu0
    %v3932 = vadd.f32 %v3306, %v3931
    %v3933 = vpop.f32.mrb[0].mxu0
    %3934 = vmatprep.mubr.f32.mxu0 0.0
    %v3935 = vand.u32 %v2827, 4294901760
    %3936 = vmatmul.mubr.f32.gmra.mrb[0].mxu0 %v3935
    %v3937 = vpop.f32.mrb[0].mxu0
    %v3938 = vadd.f32 %v3316, %v3937
    %v3939 = vpop.f32.mrb[0].mxu0
    %3940 = vmatprep.mubr.f32.mxu0 0.0
    %v3941 = vand.u32 %v2830, 4294901760
    %3942 = vmatmul.mubr.f32.gmra.mrb[0].mxu0 %v3941
    %v3943 = vpop.f32.mrb[0].mxu0
    %v3944 = vadd.f32 %v3326, %v3943
    %v3945 = vpop.f32.mrb[0].mxu0
    %3946 = vmatprep.mubr.f32.mxu0 0.0
    %v3947 = vand.u32 %v2833, 4294901760
    %3948 = vmatmul.mubr.f32.gmra.mrb[0].mxu0 %v3947
    %v3949 = vpop.f32.mrb[0].mxu0
    %v3950 = vadd.f32 %v3336, %v3949
    %v3951 = vpop.f32.mrb[0].mxu0
    %3952 = vmatprep.mubr.f32.mxu0 0.0
    %v3953 = vand.u32 %v2836, 4294901760
    %3954 = vmatmul.mubr.f32.gmra.mrb[0].mxu0 %v3953
    %v3955 = vpop.f32.mrb[0].mxu0
    %v3956 = vadd.f32 %v3346, %v3955
    %v3957 = vpop.f32.mrb[0].mxu0
    %3958 = vmatprep.mubr.f32.mxu0 0.0
    %v3959 = vand.u32 %v2839, 4294901760
    %3960 = vmatmul.mubr.f32.gmra.mrb[0].mxu0 %v3959
    %v3961 = vpop.f32.mrb[0].mxu0
    %v3962 = vadd.f32 %v3356, %v3961
    %v3963 = vpop.f32.mrb[0].mxu0
    %3964 = vmatprep.mubr.f32.mxu0 0.0
    %v3965 = vand.u32 %v2842, 4294901760
    %3966 = vmatmul.mubr.f32.gmra.mrb[0].mxu0 %v3965
    %v3967 = vpop.f32.mrb[0].mxu0
    %v3968 = vadd.f32 %v3366, %v3967
    %v3969 = vpop.f32.mrb[0].mxu0
    %3970 = vmatprep.mubr.f32.mxu0 0.0
    %v3971 = vand.u32 %v2845, 4294901760
    %3972 = vmatmul.mubr.f32.gmra.mrb[0].mxu0 %v3971
    %v3973 = vpop.f32.mrb[0].mxu0
    %v3974 = vadd.f32 %v3376, %v3973
    %v3975 = vpop.f32.mrb[0].mxu0
    %3976 = vmatprep.mubr.f32.mxu0 0.0
    %v3977 = vand.u32 %v2848, 4294901760
    %3978 = vmatmul.mubr.f32.gmra.mrb[0].mxu0 %v3977
    %v3979 = vpop.f32.mrb[0].mxu0
    %v3980 = vadd.f32 %v3386, %v3979
    %v3981 = vpop.f32.mrb[0].mxu0
    %3982 = vmatprep.mubr.f32.mxu0 0.0
    %v3983 = vand.u32 %v2851, 4294901760
    %3984 = vmatmul.mubr.f32.gmra.mrb[0].mxu0 %v3983
    %v3985 = vpop.f32.mrb[0].mxu0
    %v3986 = vadd.f32 %v3396, %v3985
    %v3987 = vpop.f32.mrb[0].mxu0
    %3988 = vmatprep.mubr.f32.mxu0 0.0
    %v3989 = vand.u32 %v2854, 4294901760
    %3990 = vmatmul.mubr.f32.gmra.mrb[0].mxu0 %v3989
    %v3991 = vpop.f32.mrb[0].mxu0
    %v3992 = vadd.f32 %v3406, %v3991
    %v3993 = vpop.f32.mrb[0].mxu0
    %3994 = vmatprep.mubr.f32.mxu0 0.0
    %v3995 = vand.u32 %v2857, 4294901760
    %3996 = vmatmul.mubr.f32.gmra.mrb[0].mxu0 %v3995
    %v3997 = vpop.f32.mrb[0].mxu0
    %v3998 = vadd.f32 %v3416, %v3997
    %v3999 = vpop.f32.mrb[0].mxu0
    %4000 = vmatprep.mubr.f32.mxu0 0.0
    %v4001 = vand.u32 %v2860, 4294901760
    %4002 = vmatmul.mubr.f32.gmra.mrb[0].mxu0 %v4001
    %v4003 = vpop.f32.mrb[0].mxu0
    %v4004 = vadd.f32 %v3426, %v4003
    %v4005 = vpop.f32.mrb[0].mxu0
    %4006 = vmatprep.mubr.f32.mxu0 0.0
    %v4007 = vand.u32 %v2863, 4294901760
    %4008 = vmatmul.mubr.f32.gmra.mrb[0].mxu0 %v4007
    %v4009 = vpop.f32.mrb[0].mxu0
    %v4010 = vadd.f32 %v3436, %v4009
    %v4011 = vpop.f32.mrb[0].mxu0
    %4012 = vmatprep.mubr.f32.mxu0 0.0
    %v4013 = vand.u32 %v2866, 4294901760
    %4014 = vmatmul.mubr.f32.gmra.mrb[0].mxu0 %v4013
    %v4015 = vpop.f32.mrb[0].mxu0
    %v4016 = vadd.f32 %v3446, %v4015
    %v4017 = vpop.f32.mrb[0].mxu0
    %4018 = vmatprep.mubr.f32.mxu0 0.0
    %v4019 = vand.u32 %v2869, 4294901760
    %4020 = vmatmul.mubr.f32.gmra.mrb[0].mxu0 %v4019
    %v4021 = vpop.f32.mrb[0].mxu0
    %v4022 = vadd.f32 %v3456, %v4021
    %v4023 = vpop.f32.mrb[0].mxu0
    %4024 = vmatprep.mubr.f32.mxu0 0.0
    %v4025 = vand.u32 %v2872, 4294901760
    %4026 = vmatmul.mubr.f32.gmra.mrb[0].mxu0 %v4025
    %v4027 = vpop.f32.mrb[0].mxu0
    %v4028 = vadd.f32 %v3466, %v4027
    %v4029 = vpop.f32.mrb[0].mxu0
    %4030 = vmatprep.mubr.f32.mxu0 0.0
    %v4031 = vand.u32 %v2875, 4294901760
    %4032 = vmatmul.mubr.f32.gmra.mrb[0].mxu0 %v4031
    %v4033 = vpop.f32.mrb[0].mxu0
    %v4034 = vadd.f32 %v3476, %v4033
    %v4035 = vpop.f32.mrb[0].mxu0
    %4036 = vmatprep.mubr.f32.mxu0 0.0
    %v4037 = vand.u32 %v2878, 4294901760
    %4038 = vmatmul.mubr.f32.gmra.mrb[0].mxu0 %v4037
    %v4039 = vpop.f32.mrb[0].mxu0
    %v4040 = vadd.f32 %v3486, %v4039
    %v4041 = vpop.f32.mrb[0].mxu0
    %4042 = vmatprep.mubr.f32.mxu0 0.0
    %v4043 = vand.u32 %v2881, 4294901760
    %4044 = vmatmul.mubr.f32.gmra.mrb[0].mxu0 %v4043
    %v4045 = vpop.f32.mrb[0].mxu0
    %v4046 = vadd.f32 %v3496, %v4045
    %v4047 = vpop.f32.mrb[0].mxu0
    %4048 = vmatprep.mubr.f32.mxu0 0.0
    %v4049 = vand.u32 %v2884, 4294901760
    %4050 = vmatmul.mubr.f32.gmra.mrb[0].mxu0 %v4049
    %v4051 = vpop.f32.mrb[0].mxu0
    %v4052 = vadd.f32 %v3506, %v4051
    %v4053 = vpop.f32.mrb[0].mxu0
    %4054 = vmatprep.mubr.f32.mxu0 0.0
    %v4055 = vand.u32 %v2887, 4294901760
    %4056 = vmatmul.mubr.f32.gmra.mrb[0].mxu0 %v4055
    %v4057 = vpop.f32.mrb[0].mxu0
    %v4058 = vadd.f32 %v3516, %v4057
    %v4059 = vpop.f32.mrb[0].mxu0
    %4060 = vmatprep.mubr.f32.mxu0 0.0
    %v4061 = vand.u32 %v2890, 4294901760
    %4062 = vmatmul.mubr.f32.gmra.mrb[0].mxu0 %v4061
    %v4063 = vpop.f32.mrb[0].mxu0
    %v4064 = vadd.f32 %v3526, %v4063
    %v4065 = vpop.f32.mrb[0].mxu0
    %4066 = vmatprep.mubr.f32.mxu0 0.0
    %v4067 = vand.u32 %v2893, 4294901760
    %4068 = vmatmul.mubr.f32.gmra.mrb[0].mxu0 %v4067
    %v4069 = vpop.f32.mrb[0].mxu0
    %v4070 = vadd.f32 %v3536, %v4069
    %v4071 = vpop.f32.mrb[0].mxu0
    %4072 = vmatprep.mubr.f32.mxu0 0.0
    %v4073 = vand.u32 %v2896, 4294901760
    %4074 = vmatmul.mubr.f32.gmra.mrb[0].mxu0 %v4073
    %v4075 = vpop.f32.mrb[0].mxu0
    %v4076 = vadd.f32 %v3546, %v4075
    %v4077 = vpop.f32.mrb[0].mxu0
    %4078 = vmatprep.mubr.f32.mxu0 0.0
    %v4079 = vand.u32 %v2899, 4294901760
    %4080 = vmatmul.mubr.f32.gmra.mrb[0].mxu0 %v4079
    %v4081 = vpop.f32.mrb[0].mxu0
    %v4082 = vadd.f32 %v3556, %v4081
    %v4083 = vpop.f32.mrb[0].mxu0
    %4084 = vmatprep.mubr.f32.mxu0 0.0
    %v4085 = vand.u32 %v2902, 4294901760
    %4086 = vmatmul.mubr.f32.gmra.mrb[0].mxu0 %v4085
    %v4087 = vpop.f32.mrb[0].mxu0
    %v4088 = vadd.f32 %v3566, %v4087
    %v4089 = vpop.f32.mrb[0].mxu0
    %4090 = vmatprep.mubr.f32.mxu0 0.0
    %v4091 = vand.u32 %v2905, 4294901760
    %4092 = vmatmul.mubr.f32.gmra.mrb[0].mxu0 %v4091
    %v4093 = vpop.f32.mrb[0].mxu0
    %v4094 = vadd.f32 %v3576, %v4093
    %v4095 = vpop.f32.mrb[0].mxu0
    %4096 = vmatprep.mubr.f32.mxu0 0.0
    %v4097 = vand.u32 %v2908, 4294901760
    %4098 = vmatmul.mubr.f32.gmra.mrb[0].mxu0 %v4097
    %v4099 = vpop.f32.mrb[0].mxu0
    %v4100 = vadd.f32 %v3586, %v4099
    %v4101 = vpop.f32.mrb[0].mxu0
    %4102 = vmatprep.mubr.f32.mxu0 0.0
    %v4103 = vand.u32 %v2911, 4294901760
    %4104 = vmatmul.mubr.f32.gmra.mrb[0].mxu0 %v4103
    %v4105 = vpop.f32.mrb[0].mxu0
    %v4106 = vadd.f32 %v3596, %v4105
    %v4107 = vpop.f32.mrb[0].mxu0
    %4108 = vmatprep.mubr.f32.mxu0 0.0
    %v4109 = vand.u32 %v2914, 4294901760
    %4110 = vmatmul.mubr.f32.gmra.mrb[0].mxu0 %v4109
    %v4111 = vpop.f32.mrb[0].mxu0
    %v4112 = vadd.f32 %v3606, %v4111
    %v4113 = vpop.f32.mrb[0].mxu0
    %4114 = vmatprep.mubr.f32.mxu0 0.0
    %v4115 = vand.u32 %v2917, 4294901760
    %4116 = vmatmul.mubr.f32.gmra.mrb[0].mxu0 %v4115
    %v4117 = vpop.f32.mrb[0].mxu0
    %v4118 = vadd.f32 %v3616, %v4117
    %v4119 = vpop.f32.mrb[0].mxu0
    %4120 = vmatprep.mubr.f32.mxu0 0.0
    %v4121 = vand.u32 %v2920, 4294901760
    %4122 = vmatmul.mubr.f32.gmra.mrb[0].mxu0 %v4121
    %v4123 = vpop.f32.mrb[0].mxu0
    %v4124 = vadd.f32 %v3626, %v4123
    %v4125 = vpop.f32.mrb[0].mxu0
    %4126 = vmatprep.mubr.f32.mxu0 0.0
    %v4127 = vand.u32 %v2923, 4294901760
    %4128 = vmatmul.mubr.f32.gmra.mrb[0].mxu0 %v4127
    %v4129 = vpop.f32.mrb[0].mxu0
    %v4130 = vadd.f32 %v3636, %v4129
    %v4131 = vpop.f32.mrb[0].mxu0
    %4132 = vdwg.mxu0
    %4133 = vmatprep.subr.mxu0 0.0
    %v4134 = vand.u32 %v2716, 4294901760
    %v4135 = vsub.f32 %v2716, %v4134
    %4136 = vmatpush1.msra.mxu0 %v4135
    %4137 = vmatprep.subr.mxu0 0.0
    %v4138 = vand.u32 %v2717, 4294901760
    %v4139 = vsub.f32 %v2717, %v4138
    %4140 = vmatpush1.msra.mxu0 %v4139
    %4141 = vmatprep.subr.mxu0 0.0
    %v4142 = vand.u32 %v2718, 4294901760
    %v4143 = vsub.f32 %v2718, %v4142
    %4144 = vmatpush1.msra.mxu0 %v4143
    %4145 = vmatprep.subr.mxu0 0.0
    %v4146 = vand.u32 %v2719, 4294901760
    %v4147 = vsub.f32 %v2719, %v4146
    %4148 = vmatpush1.msra.mxu0 %v4147
    %4149 = vmatprep.subr.mxu0 0.0
    %v4150 = vand.u32 %v2720, 4294901760
    %v4151 = vsub.f32 %v2720, %v4150
    %4152 = vmatpush1.msra.mxu0 %v4151
    %4153 = vmatprep.subr.mxu0 0.0
    %v4154 = vand.u32 %v2721, 4294901760
    %v4155 = vsub.f32 %v2721, %v4154
    %4156 = vmatpush1.msra.mxu0 %v4155
    %4157 = vmatprep.subr.mxu0 0.0
    %v4158 = vand.u32 %v2722, 4294901760
    %v4159 = vsub.f32 %v2722, %v4158
    %4160 = vmatpush1.msra.mxu0 %v4159
    %4161 = vmatprep.subr.mxu0 0.0
    %v4162 = vand.u32 %v2723, 4294901760
    %v4163 = vsub.f32 %v2723, %v4162
    %4164 = vmatpush1.msra.mxu0 %v4163
    %4165 = vmatprep.subr.mxu0 0.0
    %v4166 = vand.u32 %v2724, 4294901760
    %v4167 = vsub.f32 %v2724, %v4166
    %4168 = vmatpush1.msra.mxu0 %v4167
    %4169 = vmatprep.subr.mxu0 0.0
    %4170 = vmatpush1.msra.mxu0 0.0
    %4171 = vmatprep.subr.mxu0 0.0
    %4172 = vmatpush1.msra.mxu0 0.0
    %4173 = vmatprep.subr.mxu0 0.0
    %4174 = vmatpush1.msra.mxu0 0.0
    %4175 = vmatprep.subr.mxu0 0.0
    %4176 = vmatpush1.msra.mxu0 0.0
    %4177 = vmatprep.subr.mxu0 0.0
    %4178 = vmatpush1.msra.mxu0 0.0
    %4179 = vmatprep.subr.mxu0 0.0
    %4180 = vmatpush1.msra.mxu0 0.0
    %4181 = vmatprep.subr.mxu0 0.0
    %4182 = vmatpush1.msra.mxu0 0.0
    %4183 = vmatprep.subr.mxu0 0.0
    %4184 = vmatpush1.msra.mxu0 0.0
    %4185 = vmatprep.subr.mxu0 0.0
    %4186 = vmatpush1.msra.mxu0 0.0
    %4187 = vmatprep.subr.mxu0 0.0
    %4188 = vmatpush1.msra.mxu0 0.0
    %4189 = vmatprep.subr.mxu0 0.0
    %4190 = vmatpush1.msra.mxu0 0.0
    %4191 = vmatprep.subr.mxu0 0.0
    %4192 = vmatpush1.msra.mxu0 0.0
    %4193 = vmatprep.subr.mxu0 0.0
    %4194 = vmatpush1.msra.mxu0 0.0
    %4195 = vmatprep.subr.mxu0 0.0
    %4196 = vmatpush1.msra.mxu0 0.0
    %4197 = vmatprep.subr.mxu0 0.0
    %4198 = vmatpush1.msra.mxu0 0.0
    %4199 = vmatprep.subr.mxu0 0.0
    %4200 = vmatpush1.msra.mxu0 0.0
    %4201 = vmatprep.subr.mxu0 0.0
    %4202 = vmatpush1.msra.mxu0 0.0
    %4203 = vmatprep.subr.mxu0 0.0
    %4204 = vmatpush1.msra.mxu0 0.0
    %4205 = vmatprep.subr.mxu0 0.0
    %4206 = vmatpush1.msra.mxu0 0.0
    %4207 = vmatprep.subr.mxu0 0.0
    %4208 = vmatpush1.msra.mxu0 0.0
    %4209 = vmatprep.subr.mxu0 0.0
    %4210 = vmatpush1.msra.mxu0 0.0
    %4211 = vmatprep.subr.mxu0 0.0
    %4212 = vmatpush1.msra.mxu0 0.0
    %4213 = vmatprep.subr.mxu0 0.0
    %4214 = vmatpush1.msra.mxu0 0.0
    %4215 = vmatprep.mubr.f32.mxu0 0.0
    %v4216 = vand.u32 %v2734, 4294901760
    %v4217 = vsub.f32 %v2734, %v4216
    %4218 = vmatmul.mubr.f32.gmra.mrb[0].mxu0 %v4217
    %v4219 = vpop.f32.mrb[0].mxu0
    %v4220 = vadd.f32 %v3752, %v4219
    %v4221 = vpop.f32.mrb[0].mxu0
    %4222 = vmatprep.mubr.f32.mxu0 0.0
    %v4223 = vand.u32 %v2737, 4294901760
    %v4224 = vsub.f32 %v2737, %v4223
    %4225 = vmatmul.mubr.f32.gmra.mrb[0].mxu0 %v4224
    %v4226 = vpop.f32.mrb[0].mxu0
    %v4227 = vadd.f32 %v3758, %v4226
    %v4228 = vpop.f32.mrb[0].mxu0
    %4229 = vmatprep.mubr.f32.mxu0 0.0
    %v4230 = vand.u32 %v2740, 4294901760
    %v4231 = vsub.f32 %v2740, %v4230
    %4232 = vmatmul.mubr.f32.gmra.mrb[0].mxu0 %v4231
    %v4233 = vpop.f32.mrb[0].mxu0
    %v4234 = vadd.f32 %v3764, %v4233
    %v4235 = vpop.f32.mrb[0].mxu0
    %4236 = vmatprep.mubr.f32.mxu0 0.0
    %v4237 = vand.u32 %v2743, 4294901760
    %v4238 = vsub.f32 %v2743, %v4237
    %4239 = vmatmul.mubr.f32.gmra.mrb[0].mxu0 %v4238
    %v4240 = vpop.f32.mrb[0].mxu0
    %v4241 = vadd.f32 %v3770, %v4240
    %v4242 = vpop.f32.mrb[0].mxu0
    %4243 = vmatprep.mubr.f32.mxu0 0.0
    %v4244 = vand.u32 %v2746, 4294901760
    %v4245 = vsub.f32 %v2746, %v4244
    %4246 = vmatmul.mubr.f32.gmra.mrb[0].mxu0 %v4245
    %v4247 = vpop.f32.mrb[0].mxu0
    %v4248 = vadd.f32 %v3776, %v4247
    %v4249 = vpop.f32.mrb[0].mxu0
    %4250 = vmatprep.mubr.f32.mxu0 0.0
    %v4251 = vand.u32 %v2749, 4294901760
    %v4252 = vsub.f32 %v2749, %v4251
    %4253 = vmatmul.mubr.f32.gmra.mrb[0].mxu0 %v4252
    %v4254 = vpop.f32.mrb[0].mxu0
    %v4255 = vadd.f32 %v3782, %v4254
    %v4256 = vpop.f32.mrb[0].mxu0
    %4257 = vmatprep.mubr.f32.mxu0 0.0
    %v4258 = vand.u32 %v2752, 4294901760
    %v4259 = vsub.f32 %v2752, %v4258
    %4260 = vmatmul.mubr.f32.gmra.mrb[0].mxu0 %v4259
    %v4261 = vpop.f32.mrb[0].mxu0
    %v4262 = vadd.f32 %v3788, %v4261
    %v4263 = vpop.f32.mrb[0].mxu0
    %4264 = vmatprep.mubr.f32.mxu0 0.0
    %v4265 = vand.u32 %v2755, 4294901760
    %v4266 = vsub.f32 %v2755, %v4265
    %4267 = vmatmul.mubr.f32.gmra.mrb[0].mxu0 %v4266
    %v4268 = vpop.f32.mrb[0].mxu0
    %v4269 = vadd.f32 %v3794, %v4268
    %v4270 = vpop.f32.mrb[0].mxu0
    %4271 = vmatprep.mubr.f32.mxu0 0.0
    %v4272 = vand.u32 %v2758, 4294901760
    %v4273 = vsub.f32 %v2758, %v4272
    %4274 = vmatmul.mubr.f32.gmra.mrb[0].mxu0 %v4273
    %v4275 = vpop.f32.mrb[0].mxu0
    %v4276 = vadd.f32 %v3800, %v4275
    %v4277 = vpop.f32.mrb[0].mxu0
    %4278 = vmatprep.mubr.f32.mxu0 0.0
    %v4279 = vand.u32 %v2761, 4294901760
    %v4280 = vsub.f32 %v2761, %v4279
    %4281 = vmatmul.mubr.f32.gmra.mrb[0].mxu0 %v4280
    %v4282 = vpop.f32.mrb[0].mxu0
    %v4283 = vadd.f32 %v3806, %v4282
    %v4284 = vpop.f32.mrb[0].mxu0
    %4285 = vmatprep.mubr.f32.mxu0 0.0
    %v4286 = vand.u32 %v2764, 4294901760
    %v4287 = vsub.f32 %v2764, %v4286
    %4288 = vmatmul.mubr.f32.gmra.mrb[0].mxu0 %v4287
    %v4289 = vpop.f32.mrb[0].mxu0
    %v4290 = vadd.f32 %v3812, %v4289
    %v4291 = vpop.f32.mrb[0].mxu0
    %4292 = vmatprep.mubr.f32.mxu0 0.0
    %v4293 = vand.u32 %v2767, 4294901760
    %v4294 = vsub.f32 %v2767, %v4293
    %4295 = vmatmul.mubr.f32.gmra.mrb[0].mxu0 %v4294
    %v4296 = vpop.f32.mrb[0].mxu0
    %v4297 = vadd.f32 %v3818, %v4296
    %v4298 = vpop.f32.mrb[0].mxu0
    %4299 = vmatprep.mubr.f32.mxu0 0.0
    %v4300 = vand.u32 %v2770, 4294901760
    %v4301 = vsub.f32 %v2770, %v4300
    %4302 = vmatmul.mubr.f32.gmra.mrb[0].mxu0 %v4301
    %v4303 = vpop.f32.mrb[0].mxu0
    %v4304 = vadd.f32 %v3824, %v4303
    %v4305 = vpop.f32.mrb[0].mxu0
    %4306 = vmatprep.mubr.f32.mxu0 0.0
    %v4307 = vand.u32 %v2773, 4294901760
    %v4308 = vsub.f32 %v2773, %v4307
    %4309 = vmatmul.mubr.f32.gmra.mrb[0].mxu0 %v4308
    %v4310 = vpop.f32.mrb[0].mxu0
    %v4311 = vadd.f32 %v3830, %v4310
    %v4312 = vpop.f32.mrb[0].mxu0
    %4313 = vmatprep.mubr.f32.mxu0 0.0
    %v4314 = vand.u32 %v2776, 4294901760
    %v4315 = vsub.f32 %v2776, %v4314
    %4316 = vmatmul.mubr.f32.gmra.mrb[0].mxu0 %v4315
    %v4317 = vpop.f32.mrb[0].mxu0
    %v4318 = vadd.f32 %v3836, %v4317
    %v4319 = vpop.f32.mrb[0].mxu0
    %4320 = vmatprep.mubr.f32.mxu0 0.0
    %v4321 = vand.u32 %v2779, 4294901760
    %v4322 = vsub.f32 %v2779, %v4321
    %4323 = vmatmul.mubr.f32.gmra.mrb[0].mxu0 %v4322
    %v4324 = vpop.f32.mrb[0].mxu0
    %v4325 = vadd.f32 %v3842, %v4324
    %v4326 = vpop.f32.mrb[0].mxu0
    %4327 = vmatprep.mubr.f32.mxu0 0.0
    %v4328 = vand.u32 %v2782, 4294901760
    %v4329 = vsub.f32 %v2782, %v4328
    %4330 = vmatmul.mubr.f32.gmra.mrb[0].mxu0 %v4329
    %v4331 = vpop.f32.mrb[0].mxu0
    %v4332 = vadd.f32 %v3848, %v4331
    %v4333 = vpop.f32.mrb[0].mxu0
    %4334 = vmatprep.mubr.f32.mxu0 0.0
    %v4335 = vand.u32 %v2785, 4294901760
    %v4336 = vsub.f32 %v2785, %v4335
    %4337 = vmatmul.mubr.f32.gmra.mrb[0].mxu0 %v4336
    %v4338 = vpop.f32.mrb[0].mxu0
    %v4339 = vadd.f32 %v3854, %v4338
    %v4340 = vpop.f32.mrb[0].mxu0
    %4341 = vmatprep.mubr.f32.mxu0 0.0
    %v4342 = vand.u32 %v2788, 4294901760
    %v4343 = vsub.f32 %v2788, %v4342
    %4344 = vmatmul.mubr.f32.gmra.mrb[0].mxu0 %v4343
    %v4345 = vpop.f32.mrb[0].mxu0
    %v4346 = vadd.f32 %v3860, %v4345
    %v4347 = vpop.f32.mrb[0].mxu0
    %4348 = vmatprep.mubr.f32.mxu0 0.0
    %v4349 = vand.u32 %v2791, 4294901760
    %v4350 = vsub.f32 %v2791, %v4349
    %4351 = vmatmul.mubr.f32.gmra.mrb[0].mxu0 %v4350
    %v4352 = vpop.f32.mrb[0].mxu0
    %v4353 = vadd.f32 %v3866, %v4352
    %v4354 = vpop.f32.mrb[0].mxu0
    %4355 = vmatprep.mubr.f32.mxu0 0.0
    %v4356 = vand.u32 %v2794, 4294901760
    %v4357 = vsub.f32 %v2794, %v4356
    %4358 = vmatmul.mubr.f32.gmra.mrb[0].mxu0 %v4357
    %v4359 = vpop.f32.mrb[0].mxu0
    %v4360 = vadd.f32 %v3872, %v4359
    %v4361 = vpop.f32.mrb[0].mxu0
    %4362 = vmatprep.mubr.f32.mxu0 0.0
    %v4363 = vand.u32 %v2797, 4294901760
    %v4364 = vsub.f32 %v2797, %v4363
    %4365 = vmatmul.mubr.f32.gmra.mrb[0].mxu0 %v4364
    %v4366 = vpop.f32.mrb[0].mxu0
    %v4367 = vadd.f32 %v3878, %v4366
    %v4368 = vpop.f32.mrb[0].mxu0
    %4369 = vmatprep.mubr.f32.mxu0 0.0
    %v4370 = vand.u32 %v2800, 4294901760
    %v4371 = vsub.f32 %v2800, %v4370
    %4372 = vmatmul.mubr.f32.gmra.mrb[0].mxu0 %v4371
    %v4373 = vpop.f32.mrb[0].mxu0
    %v4374 = vadd.f32 %v3884, %v4373
    %v4375 = vpop.f32.mrb[0].mxu0
    %4376 = vmatprep.mubr.f32.mxu0 0.0
    %v4377 = vand.u32 %v2803, 4294901760
    %v4378 = vsub.f32 %v2803, %v4377
    %4379 = vmatmul.mubr.f32.gmra.mrb[0].mxu0 %v4378
    %v4380 = vpop.f32.mrb[0].mxu0
    %v4381 = vadd.f32 %v3890, %v4380
    %v4382 = vpop.f32.mrb[0].mxu0
    %4383 = vmatprep.mubr.f32.mxu0 0.0
    %v4384 = vand.u32 %v2806, 4294901760
    %v4385 = vsub.f32 %v2806, %v4384
    %4386 = vmatmul.mubr.f32.gmra.mrb[0].mxu0 %v4385
    %v4387 = vpop.f32.mrb[0].mxu0
    %v4388 = vadd.f32 %v3896, %v4387
    %v4389 = vpop.f32.mrb[0].mxu0
    %4390 = vmatprep.mubr.f32.mxu0 0.0
    %v4391 = vand.u32 %v2809, 4294901760
    %v4392 = vsub.f32 %v2809, %v4391
    %4393 = vmatmul.mubr.f32.gmra.mrb[0].mxu0 %v4392
    %v4394 = vpop.f32.mrb[0].mxu0
    %v4395 = vadd.f32 %v3902, %v4394
    %v4396 = vpop.f32.mrb[0].mxu0
    %4397 = vmatprep.mubr.f32.mxu0 0.0
    %v4398 = vand.u32 %v2812, 4294901760
    %v4399 = vsub.f32 %v2812, %v4398
    %4400 = vmatmul.mubr.f32.gmra.mrb[0].mxu0 %v4399
    %v4401 = vpop.f32.mrb[0].mxu0
    %v4402 = vadd.f32 %v3908, %v4401
    %v4403 = vpop.f32.mrb[0].mxu0
    %4404 = vmatprep.mubr.f32.mxu0 0.0
    %v4405 = vand.u32 %v2815, 4294901760
    %v4406 = vsub.f32 %v2815, %v4405
    %4407 = vmatmul.mubr.f32.gmra.mrb[0].mxu0 %v4406
    %v4408 = vpop.f32.mrb[0].mxu0
    %v4409 = vadd.f32 %v3914, %v4408
    %v4410 = vpop.f32.mrb[0].mxu0
    %4411 = vmatprep.mubr.f32.mxu0 0.0
    %v4412 = vand.u32 %v2818, 4294901760
    %v4413 = vsub.f32 %v2818, %v4412
    %4414 = vmatmul.mubr.f32.gmra.mrb[0].mxu0 %v4413
    %v4415 = vpop.f32.mrb[0].mxu0
    %v4416 = vadd.f32 %v3920, %v4415
    %v4417 = vpop.f32.mrb[0].mxu0
    %4418 = vmatprep.mubr.f32.mxu0 0.0
    %v4419 = vand.u32 %v2821, 4294901760
    %v4420 = vsub.f32 %v2821, %v4419
    %4421 = vmatmul.mubr.f32.gmra.mrb[0].mxu0 %v4420
    %v4422 = vpop.f32.mrb[0].mxu0
    %v4423 = vadd.f32 %v3926, %v4422
    %v4424 = vpop.f32.mrb[0].mxu0
    %4425 = vmatprep.mubr.f32.mxu0 0.0
    %v4426 = vand.u32 %v2824, 4294901760
    %v4427 = vsub.f32 %v2824, %v4426
    %4428 = vmatmul.mubr.f32.gmra.mrb[0].mxu0 %v4427
    %v4429 = vpop.f32.mrb[0].mxu0
    %v4430 = vadd.f32 %v3932, %v4429
    %v4431 = vpop.f32.mrb[0].mxu0
    %4432 = vmatprep.mubr.f32.mxu0 0.0
    %v4433 = vand.u32 %v2827, 4294901760
    %v4434 = vsub.f32 %v2827, %v4433
    %4435 = vmatmul.mubr.f32.gmra.mrb[0].mxu0 %v4434
    %v4436 = vpop.f32.mrb[0].mxu0
    %v4437 = vadd.f32 %v3938, %v4436
    %v4438 = vpop.f32.mrb[0].mxu0
    %4439 = vmatprep.mubr.f32.mxu0 0.0
    %v4440 = vand.u32 %v2830, 4294901760
    %v4441 = vsub.f32 %v2830, %v4440
    %4442 = vmatmul.mubr.f32.gmra.mrb[0].mxu0 %v4441
    %v4443 = vpop.f32.mrb[0].mxu0
    %v4444 = vadd.f32 %v3944, %v4443
    %v4445 = vpop.f32.mrb[0].mxu0
    %4446 = vmatprep.mubr.f32.mxu0 0.0
    %v4447 = vand.u32 %v2833, 4294901760
    %v4448 = vsub.f32 %v2833, %v4447
    %4449 = vmatmul.mubr.f32.gmra.mrb[0].mxu0 %v4448
    %v4450 = vpop.f32.mrb[0].mxu0
    %v4451 = vadd.f32 %v3950, %v4450
    %v4452 = vpop.f32.mrb[0].mxu0
    %4453 = vmatprep.mubr.f32.mxu0 0.0
    %v4454 = vand.u32 %v2836, 4294901760
    %v4455 = vsub.f32 %v2836, %v4454
    %4456 = vmatmul.mubr.f32.gmra.mrb[0].mxu0 %v4455
    %v4457 = vpop.f32.mrb[0].mxu0
    %v4458 = vadd.f32 %v3956, %v4457
    %v4459 = vpop.f32.mrb[0].mxu0
    %4460 = vmatprep.mubr.f32.mxu0 0.0
    %v4461 = vand.u32 %v2839, 4294901760
    %v4462 = vsub.f32 %v2839, %v4461
    %4463 = vmatmul.mubr.f32.gmra.mrb[0].mxu0 %v4462
    %v4464 = vpop.f32.mrb[0].mxu0
    %v4465 = vadd.f32 %v3962, %v4464
    %v4466 = vpop.f32.mrb[0].mxu0
    %4467 = vmatprep.mubr.f32.mxu0 0.0
    %v4468 = vand.u32 %v2842, 4294901760
    %v4469 = vsub.f32 %v2842, %v4468
    %4470 = vmatmul.mubr.f32.gmra.mrb[0].mxu0 %v4469
    %v4471 = vpop.f32.mrb[0].mxu0
    %v4472 = vadd.f32 %v3968, %v4471
    %v4473 = vpop.f32.mrb[0].mxu0
    %4474 = vmatprep.mubr.f32.mxu0 0.0
    %v4475 = vand.u32 %v2845, 4294901760
    %v4476 = vsub.f32 %v2845, %v4475
    %4477 = vmatmul.mubr.f32.gmra.mrb[0].mxu0 %v4476
    %v4478 = vpop.f32.mrb[0].mxu0
    %v4479 = vadd.f32 %v3974, %v4478
    %v4480 = vpop.f32.mrb[0].mxu0
    %4481 = vmatprep.mubr.f32.mxu0 0.0
    %v4482 = vand.u32 %v2848, 4294901760
    %v4483 = vsub.f32 %v2848, %v4482
    %4484 = vmatmul.mubr.f32.gmra.mrb[0].mxu0 %v4483
    %v4485 = vpop.f32.mrb[0].mxu0
    %v4486 = vadd.f32 %v3980, %v4485
    %v4487 = vpop.f32.mrb[0].mxu0
    %4488 = vmatprep.mubr.f32.mxu0 0.0
    %v4489 = vand.u32 %v2851, 4294901760
    %v4490 = vsub.f32 %v2851, %v4489
    %4491 = vmatmul.mubr.f32.gmra.mrb[0].mxu0 %v4490
    %v4492 = vpop.f32.mrb[0].mxu0
    %v4493 = vadd.f32 %v3986, %v4492
    %v4494 = vpop.f32.mrb[0].mxu0
    %4495 = vmatprep.mubr.f32.mxu0 0.0
    %v4496 = vand.u32 %v2854, 4294901760
    %v4497 = vsub.f32 %v2854, %v4496
    %4498 = vmatmul.mubr.f32.gmra.mrb[0].mxu0 %v4497
    %v4499 = vpop.f32.mrb[0].mxu0
    %v4500 = vadd.f32 %v3992, %v4499
    %v4501 = vpop.f32.mrb[0].mxu0
    %4502 = vmatprep.mubr.f32.mxu0 0.0
    %v4503 = vand.u32 %v2857, 4294901760
    %v4504 = vsub.f32 %v2857, %v4503
    %4505 = vmatmul.mubr.f32.gmra.mrb[0].mxu0 %v4504
    %v4506 = vpop.f32.mrb[0].mxu0
    %v4507 = vadd.f32 %v3998, %v4506
    %v4508 = vpop.f32.mrb[0].mxu0
    %4509 = vmatprep.mubr.f32.mxu0 0.0
    %v4510 = vand.u32 %v2860, 4294901760
    %v4511 = vsub.f32 %v2860, %v4510
    %4512 = vmatmul.mubr.f32.gmra.mrb[0].mxu0 %v4511
    %v4513 = vpop.f32.mrb[0].mxu0
    %v4514 = vadd.f32 %v4004, %v4513
    %v4515 = vpop.f32.mrb[0].mxu0
    %4516 = vmatprep.mubr.f32.mxu0 0.0
    %v4517 = vand.u32 %v2863, 4294901760
    %v4518 = vsub.f32 %v2863, %v4517
    %4519 = vmatmul.mubr.f32.gmra.mrb[0].mxu0 %v4518
    %v4520 = vpop.f32.mrb[0].mxu0
    %v4521 = vadd.f32 %v4010, %v4520
    %v4522 = vpop.f32.mrb[0].mxu0
    %4523 = vmatprep.mubr.f32.mxu0 0.0
    %v4524 = vand.u32 %v2866, 4294901760
    %v4525 = vsub.f32 %v2866, %v4524
    %4526 = vmatmul.mubr.f32.gmra.mrb[0].mxu0 %v4525
    %v4527 = vpop.f32.mrb[0].mxu0
    %v4528 = vadd.f32 %v4016, %v4527
    %v4529 = vpop.f32.mrb[0].mxu0
    %4530 = vmatprep.mubr.f32.mxu0 0.0
    %v4531 = vand.u32 %v2869, 4294901760
    %v4532 = vsub.f32 %v2869, %v4531
    %4533 = vmatmul.mubr.f32.gmra.mrb[0].mxu0 %v4532
    %v4534 = vpop.f32.mrb[0].mxu0
    %v4535 = vadd.f32 %v4022, %v4534
    %v4536 = vpop.f32.mrb[0].mxu0
    %4537 = vmatprep.mubr.f32.mxu0 0.0
    %v4538 = vand.u32 %v2872, 4294901760
    %v4539 = vsub.f32 %v2872, %v4538
    %4540 = vmatmul.mubr.f32.gmra.mrb[0].mxu0 %v4539
    %v4541 = vpop.f32.mrb[0].mxu0
    %v4542 = vadd.f32 %v4028, %v4541
    %v4543 = vpop.f32.mrb[0].mxu0
    %4544 = vmatprep.mubr.f32.mxu0 0.0
    %v4545 = vand.u32 %v2875, 4294901760
    %v4546 = vsub.f32 %v2875, %v4545
    %4547 = vmatmul.mubr.f32.gmra.mrb[0].mxu0 %v4546
    %v4548 = vpop.f32.mrb[0].mxu0
    %v4549 = vadd.f32 %v4034, %v4548
    %v4550 = vpop.f32.mrb[0].mxu0
    %4551 = vmatprep.mubr.f32.mxu0 0.0
    %v4552 = vand.u32 %v2878, 4294901760
    %v4553 = vsub.f32 %v2878, %v4552
    %4554 = vmatmul.mubr.f32.gmra.mrb[0].mxu0 %v4553
    %v4555 = vpop.f32.mrb[0].mxu0
    %v4556 = vadd.f32 %v4040, %v4555
    %v4557 = vpop.f32.mrb[0].mxu0
    %4558 = vmatprep.mubr.f32.mxu0 0.0
    %v4559 = vand.u32 %v2881, 4294901760
    %v4560 = vsub.f32 %v2881, %v4559
    %4561 = vmatmul.mubr.f32.gmra.mrb[0].mxu0 %v4560
    %v4562 = vpop.f32.mrb[0].mxu0
    %v4563 = vadd.f32 %v4046, %v4562
    %v4564 = vpop.f32.mrb[0].mxu0
    %4565 = vmatprep.mubr.f32.mxu0 0.0
    %v4566 = vand.u32 %v2884, 4294901760
    %v4567 = vsub.f32 %v2884, %v4566
    %4568 = vmatmul.mubr.f32.gmra.mrb[0].mxu0 %v4567
    %v4569 = vpop.f32.mrb[0].mxu0
    %v4570 = vadd.f32 %v4052, %v4569
    %v4571 = vpop.f32.mrb[0].mxu0
    %4572 = vmatprep.mubr.f32.mxu0 0.0
    %v4573 = vand.u32 %v2887, 4294901760
    %v4574 = vsub.f32 %v2887, %v4573
    %4575 = vmatmul.mubr.f32.gmra.mrb[0].mxu0 %v4574
    %v4576 = vpop.f32.mrb[0].mxu0
    %v4577 = vadd.f32 %v4058, %v4576
    %v4578 = vpop.f32.mrb[0].mxu0
    %4579 = vmatprep.mubr.f32.mxu0 0.0
    %v4580 = vand.u32 %v2890, 4294901760
    %v4581 = vsub.f32 %v2890, %v4580
    %4582 = vmatmul.mubr.f32.gmra.mrb[0].mxu0 %v4581
    %v4583 = vpop.f32.mrb[0].mxu0
    %v4584 = vadd.f32 %v4064, %v4583
    %v4585 = vpop.f32.mrb[0].mxu0
    %4586 = vmatprep.mubr.f32.mxu0 0.0
    %v4587 = vand.u32 %v2893, 4294901760
    %v4588 = vsub.f32 %v2893, %v4587
    %4589 = vmatmul.mubr.f32.gmra.mrb[0].mxu0 %v4588
    %v4590 = vpop.f32.mrb[0].mxu0
    %v4591 = vadd.f32 %v4070, %v4590
    %v4592 = vpop.f32.mrb[0].mxu0
    %4593 = vmatprep.mubr.f32.mxu0 0.0
    %v4594 = vand.u32 %v2896, 4294901760
    %v4595 = vsub.f32 %v2896, %v4594
    %4596 = vmatmul.mubr.f32.gmra.mrb[0].mxu0 %v4595
    %v4597 = vpop.f32.mrb[0].mxu0
    %v4598 = vadd.f32 %v4076, %v4597
    %v4599 = vpop.f32.mrb[0].mxu0
    %4600 = vmatprep.mubr.f32.mxu0 0.0
    %v4601 = vand.u32 %v2899, 4294901760
    %v4602 = vsub.f32 %v2899, %v4601
    %4603 = vmatmul.mubr.f32.gmra.mrb[0].mxu0 %v4602
    %v4604 = vpop.f32.mrb[0].mxu0
    %v4605 = vadd.f32 %v4082, %v4604
    %v4606 = vpop.f32.mrb[0].mxu0
    %4607 = vmatprep.mubr.f32.mxu0 0.0
    %v4608 = vand.u32 %v2902, 4294901760
    %v4609 = vsub.f32 %v2902, %v4608
    %4610 = vmatmul.mubr.f32.gmra.mrb[0].mxu0 %v4609
    %v4611 = vpop.f32.mrb[0].mxu0
    %v4612 = vadd.f32 %v4088, %v4611
    %v4613 = vpop.f32.mrb[0].mxu0
    %4614 = vmatprep.mubr.f32.mxu0 0.0
    %v4615 = vand.u32 %v2905, 4294901760
    %v4616 = vsub.f32 %v2905, %v4615
    %4617 = vmatmul.mubr.f32.gmra.mrb[0].mxu0 %v4616
    %v4618 = vpop.f32.mrb[0].mxu0
    %v4619 = vadd.f32 %v4094, %v4618
    %v4620 = vpop.f32.mrb[0].mxu0
    %4621 = vmatprep.mubr.f32.mxu0 0.0
    %v4622 = vand.u32 %v2908, 4294901760
    %v4623 = vsub.f32 %v2908, %v4622
    %4624 = vmatmul.mubr.f32.gmra.mrb[0].mxu0 %v4623
    %v4625 = vpop.f32.mrb[0].mxu0
    %v4626 = vadd.f32 %v4100, %v4625
    %v4627 = vpop.f32.mrb[0].mxu0
    %4628 = vmatprep.mubr.f32.mxu0 0.0
    %v4629 = vand.u32 %v2911, 4294901760
    %v4630 = vsub.f32 %v2911, %v4629
    %4631 = vmatmul.mubr.f32.gmra.mrb[0].mxu0 %v4630
    %v4632 = vpop.f32.mrb[0].mxu0
    %v4633 = vadd.f32 %v4106, %v4632
    %v4634 = vpop.f32.mrb[0].mxu0
    %4635 = vmatprep.mubr.f32.mxu0 0.0
    %v4636 = vand.u32 %v2914, 4294901760
    %v4637 = vsub.f32 %v2914, %v4636
    %4638 = vmatmul.mubr.f32.gmra.mrb[0].mxu0 %v4637
    %v4639 = vpop.f32.mrb[0].mxu0
    %v4640 = vadd.f32 %v4112, %v4639
    %v4641 = vpop.f32.mrb[0].mxu0
    %4642 = vmatprep.mubr.f32.mxu0 0.0
    %v4643 = vand.u32 %v2917, 4294901760
    %v4644 = vsub.f32 %v2917, %v4643
    %4645 = vmatmul.mubr.f32.gmra.mrb[0].mxu0 %v4644
    %v4646 = vpop.f32.mrb[0].mxu0
    %v4647 = vadd.f32 %v4118, %v4646
    %v4648 = vpop.f32.mrb[0].mxu0
    %4649 = vmatprep.mubr.f32.mxu0 0.0
    %v4650 = vand.u32 %v2920, 4294901760
    %v4651 = vsub.f32 %v2920, %v4650
    %4652 = vmatmul.mubr.f32.gmra.mrb[0].mxu0 %v4651
    %v4653 = vpop.f32.mrb[0].mxu0
    %v4654 = vadd.f32 %v4124, %v4653
    %v4655 = vpop.f32.mrb[0].mxu0
    %4656 = vmatprep.mubr.f32.mxu0 0.0
    %v4657 = vand.u32 %v2923, 4294901760
    %v4658 = vsub.f32 %v2923, %v4657
    %4659 = vmatmul.mubr.f32.gmra.mrb[0].mxu0 %v4658
    %v4660 = vpop.f32.mrb[0].mxu0
    %v4661 = vadd.f32 %v4130, %v4660
    %v4662 = vpop.f32.mrb[0].mxu0
    %4663 = vdwg.mxu0
    %4664 = vmatprep.subr.mxu0 0.0
    %v4665 = vand.u32 %v2716, 4294901760
    %4666 = vmatpush1.msra.mxu0 %v4665
    %4667 = vmatprep.subr.mxu0 0.0
    %v4668 = vand.u32 %v2717, 4294901760
    %4669 = vmatpush1.msra.mxu0 %v4668
    %4670 = vmatprep.subr.mxu0 0.0
    %v4671 = vand.u32 %v2718, 4294901760
    %4672 = vmatpush1.msra.mxu0 %v4671
    %4673 = vmatprep.subr.mxu0 0.0
    %v4674 = vand.u32 %v2719, 4294901760
    %4675 = vmatpush1.msra.mxu0 %v4674
    %4676 = vmatprep.subr.mxu0 0.0
    %v4677 = vand.u32 %v2720, 4294901760
    %4678 = vmatpush1.msra.mxu0 %v4677
    %4679 = vmatprep.subr.mxu0 0.0
    %v4680 = vand.u32 %v2721, 4294901760
    %4681 = vmatpush1.msra.mxu0 %v4680
    %4682 = vmatprep.subr.mxu0 0.0
    %v4683 = vand.u32 %v2722, 4294901760
    %4684 = vmatpush1.msra.mxu0 %v4683
    %4685 = vmatprep.subr.mxu0 0.0
    %v4686 = vand.u32 %v2723, 4294901760
    %4687 = vmatpush1.msra.mxu0 %v4686
    %4688 = vmatprep.subr.mxu0 0.0
    %v4689 = vand.u32 %v2724, 4294901760
    %4690 = vmatpush1.msra.mxu0 %v4689
    %4691 = vmatprep.subr.mxu0 0.0
    %4692 = vmatpush1.msra.mxu0 0.0
    %4693 = vmatprep.subr.mxu0 0.0
    %4694 = vmatpush1.msra.mxu0 0.0
    %4695 = vmatprep.subr.mxu0 0.0
    %4696 = vmatpush1.msra.mxu0 0.0
    %4697 = vmatprep.subr.mxu0 0.0
    %4698 = vmatpush1.msra.mxu0 0.0
    %4699 = vmatprep.subr.mxu0 0.0
    %4700 = vmatpush1.msra.mxu0 0.0
    %4701 = vmatprep.subr.mxu0 0.0
    %4702 = vmatpush1.msra.mxu0 0.0
    %4703 = vmatprep.subr.mxu0 0.0
    %4704 = vmatpush1.msra.mxu0 0.0
    %4705 = vmatprep.subr.mxu0 0.0
    %4706 = vmatpush1.msra.mxu0 0.0
    %4707 = vmatprep.subr.mxu0 0.0
    %4708 = vmatpush1.msra.mxu0 0.0
    %4709 = vmatprep.subr.mxu0 0.0
    %4710 = vmatpush1.msra.mxu0 0.0
    %4711 = vmatprep.subr.mxu0 0.0
    %4712 = vmatpush1.msra.mxu0 0.0
    %4713 = vmatprep.subr.mxu0 0.0
    %4714 = vmatpush1.msra.mxu0 0.0
    %4715 = vmatprep.subr.mxu0 0.0
    %4716 = vmatpush1.msra.mxu0 0.0
    %4717 = vmatprep.subr.mxu0 0.0
    %4718 = vmatpush1.msra.mxu0 0.0
    %4719 = vmatprep.subr.mxu0 0.0
    %4720 = vmatpush1.msra.mxu0 0.0
    %4721 = vmatprep.subr.mxu0 0.0
    %4722 = vmatpush1.msra.mxu0 0.0
    %4723 = vmatprep.subr.mxu0 0.0
    %4724 = vmatpush1.msra.mxu0 0.0
    %4725 = vmatprep.subr.mxu0 0.0
    %4726 = vmatpush1.msra.mxu0 0.0
    %4727 = vmatprep.subr.mxu0 0.0
    %4728 = vmatpush1.msra.mxu0 0.0
    %4729 = vmatprep.subr.mxu0 0.0
    %4730 = vmatpush1.msra.mxu0 0.0
    %4731 = vmatprep.subr.mxu0 0.0
    %4732 = vmatpush1.msra.mxu0 0.0
    %4733 = vmatprep.subr.mxu0 0.0
    %4734 = vmatpush1.msra.mxu0 0.0
    %4735 = vmatprep.subr.mxu0 0.0
    %4736 = vmatpush1.msra.mxu0 0.0
    %4737 = vmatprep.mubr.f32.mxu0 0.0
    %v4738 = vand.u32 %v2734, 4294901760
    %v4739 = vsub.f32 %v2734, %v4738
    %v4740 = vand.u32 %v4739, 4294901760
    %4741 = vmatmul.mubr.f32.gmra.mrb[0].mxu0 %v4740
    %v4742 = vpop.f32.mrb[0].mxu0
    %v4743 = vadd.f32 %v4220, %v4742
    %v4744 = vpop.f32.mrb[0].mxu0
    %4745 = vmatprep.mubr.f32.mxu0 0.0
    %v4746 = vand.u32 %v2737, 4294901760
    %v4747 = vsub.f32 %v2737, %v4746
    %v4748 = vand.u32 %v4747, 4294901760
    %4749 = vmatmul.mubr.f32.gmra.mrb[0].mxu0 %v4748
    %v4750 = vpop.f32.mrb[0].mxu0
    %v4751 = vadd.f32 %v4227, %v4750
    %v4752 = vpop.f32.mrb[0].mxu0
    %4753 = vmatprep.mubr.f32.mxu0 0.0
    %v4754 = vand.u32 %v2740, 4294901760
    %v4755 = vsub.f32 %v2740, %v4754
    %v4756 = vand.u32 %v4755, 4294901760
    %4757 = vmatmul.mubr.f32.gmra.mrb[0].mxu0 %v4756
    %v4758 = vpop.f32.mrb[0].mxu0
    %v4759 = vadd.f32 %v4234, %v4758
    %v4760 = vpop.f32.mrb[0].mxu0
    %4761 = vmatprep.mubr.f32.mxu0 0.0
    %v4762 = vand.u32 %v2743, 4294901760
    %v4763 = vsub.f32 %v2743, %v4762
    %v4764 = vand.u32 %v4763, 4294901760
    %4765 = vmatmul.mubr.f32.gmra.mrb[0].mxu0 %v4764
    %v4766 = vpop.f32.mrb[0].mxu0
    %v4767 = vadd.f32 %v4241, %v4766
    %v4768 = vpop.f32.mrb[0].mxu0
    %4769 = vmatprep.mubr.f32.mxu0 0.0
    %v4770 = vand.u32 %v2746, 4294901760
    %v4771 = vsub.f32 %v2746, %v4770
    %v4772 = vand.u32 %v4771, 4294901760
    %4773 = vmatmul.mubr.f32.gmra.mrb[0].mxu0 %v4772
    %v4774 = vpop.f32.mrb[0].mxu0
    %v4775 = vadd.f32 %v4248, %v4774
    %v4776 = vpop.f32.mrb[0].mxu0
    %4777 = vmatprep.mubr.f32.mxu0 0.0
    %v4778 = vand.u32 %v2749, 4294901760
    %v4779 = vsub.f32 %v2749, %v4778
    %v4780 = vand.u32 %v4779, 4294901760
    %4781 = vmatmul.mubr.f32.gmra.mrb[0].mxu0 %v4780
    %v4782 = vpop.f32.mrb[0].mxu0
    %v4783 = vadd.f32 %v4255, %v4782
    %v4784 = vpop.f32.mrb[0].mxu0
    %4785 = vmatprep.mubr.f32.mxu0 0.0
    %v4786 = vand.u32 %v2752, 4294901760
    %v4787 = vsub.f32 %v2752, %v4786
    %v4788 = vand.u32 %v4787, 4294901760
    %4789 = vmatmul.mubr.f32.gmra.mrb[0].mxu0 %v4788
    %v4790 = vpop.f32.mrb[0].mxu0
    %v4791 = vadd.f32 %v4262, %v4790
    %v4792 = vpop.f32.mrb[0].mxu0
    %4793 = vmatprep.mubr.f32.mxu0 0.0
    %v4794 = vand.u32 %v2755, 4294901760
    %v4795 = vsub.f32 %v2755, %v4794
    %v4796 = vand.u32 %v4795, 4294901760
    %4797 = vmatmul.mubr.f32.gmra.mrb[0].mxu0 %v4796
    %v4798 = vpop.f32.mrb[0].mxu0
    %v4799 = vadd.f32 %v4269, %v4798
    %v4800 = vpop.f32.mrb[0].mxu0
    %4801 = vmatprep.mubr.f32.mxu0 0.0
    %v4802 = vand.u32 %v2758, 4294901760
    %v4803 = vsub.f32 %v2758, %v4802
    %v4804 = vand.u32 %v4803, 4294901760
    %4805 = vmatmul.mubr.f32.gmra.mrb[0].mxu0 %v4804
    %v4806 = vpop.f32.mrb[0].mxu0
    %v4807 = vadd.f32 %v4276, %v4806
    %v4808 = vpop.f32.mrb[0].mxu0
    %4809 = vmatprep.mubr.f32.mxu0 0.0
    %v4810 = vand.u32 %v2761, 4294901760
    %v4811 = vsub.f32 %v2761, %v4810
    %v4812 = vand.u32 %v4811, 4294901760
    %4813 = vmatmul.mubr.f32.gmra.mrb[0].mxu0 %v4812
    %v4814 = vpop.f32.mrb[0].mxu0
    %v4815 = vadd.f32 %v4283, %v4814
    %v4816 = vpop.f32.mrb[0].mxu0
    %4817 = vmatprep.mubr.f32.mxu0 0.0
    %v4818 = vand.u32 %v2764, 4294901760
    %v4819 = vsub.f32 %v2764, %v4818
    %v4820 = vand.u32 %v4819, 4294901760
    %4821 = vmatmul.mubr.f32.gmra.mrb[0].mxu0 %v4820
    %v4822 = vpop.f32.mrb[0].mxu0
    %v4823 = vadd.f32 %v4290, %v4822
    %v4824 = vpop.f32.mrb[0].mxu0
    %4825 = vmatprep.mubr.f32.mxu0 0.0
    %v4826 = vand.u32 %v2767, 4294901760
    %v4827 = vsub.f32 %v2767, %v4826
    %v4828 = vand.u32 %v4827, 4294901760
    %4829 = vmatmul.mubr.f32.gmra.mrb[0].mxu0 %v4828
    %v4830 = vpop.f32.mrb[0].mxu0
    %v4831 = vadd.f32 %v4297, %v4830
    %v4832 = vpop.f32.mrb[0].mxu0
    %4833 = vmatprep.mubr.f32.mxu0 0.0
    %v4834 = vand.u32 %v2770, 4294901760
    %v4835 = vsub.f32 %v2770, %v4834
    %v4836 = vand.u32 %v4835, 4294901760
    %4837 = vmatmul.mubr.f32.gmra.mrb[0].mxu0 %v4836
    %v4838 = vpop.f32.mrb[0].mxu0
    %v4839 = vadd.f32 %v4304, %v4838
    %v4840 = vpop.f32.mrb[0].mxu0
    %4841 = vmatprep.mubr.f32.mxu0 0.0
    %v4842 = vand.u32 %v2773, 4294901760
    %v4843 = vsub.f32 %v2773, %v4842
    %v4844 = vand.u32 %v4843, 4294901760
    %4845 = vmatmul.mubr.f32.gmra.mrb[0].mxu0 %v4844
    %v4846 = vpop.f32.mrb[0].mxu0
    %v4847 = vadd.f32 %v4311, %v4846
    %v4848 = vpop.f32.mrb[0].mxu0
    %4849 = vmatprep.mubr.f32.mxu0 0.0
    %v4850 = vand.u32 %v2776, 4294901760
    %v4851 = vsub.f32 %v2776, %v4850
    %v4852 = vand.u32 %v4851, 4294901760
    %4853 = vmatmul.mubr.f32.gmra.mrb[0].mxu0 %v4852
    %v4854 = vpop.f32.mrb[0].mxu0
    %v4855 = vadd.f32 %v4318, %v4854
    %v4856 = vpop.f32.mrb[0].mxu0
    %4857 = vmatprep.mubr.f32.mxu0 0.0
    %v4858 = vand.u32 %v2779, 4294901760
    %v4859 = vsub.f32 %v2779, %v4858
    %v4860 = vand.u32 %v4859, 4294901760
    %4861 = vmatmul.mubr.f32.gmra.mrb[0].mxu0 %v4860
    %v4862 = vpop.f32.mrb[0].mxu0
    %v4863 = vadd.f32 %v4325, %v4862
    %v4864 = vpop.f32.mrb[0].mxu0
    %4865 = vmatprep.mubr.f32.mxu0 0.0
    %v4866 = vand.u32 %v2782, 4294901760
    %v4867 = vsub.f32 %v2782, %v4866
    %v4868 = vand.u32 %v4867, 4294901760
    %4869 = vmatmul.mubr.f32.gmra.mrb[0].mxu0 %v4868
    %v4870 = vpop.f32.mrb[0].mxu0
    %v4871 = vadd.f32 %v4332, %v4870
    %v4872 = vpop.f32.mrb[0].mxu0
    %4873 = vmatprep.mubr.f32.mxu0 0.0
    %v4874 = vand.u32 %v2785, 4294901760
    %v4875 = vsub.f32 %v2785, %v4874
    %v4876 = vand.u32 %v4875, 4294901760
    %4877 = vmatmul.mubr.f32.gmra.mrb[0].mxu0 %v4876
    %v4878 = vpop.f32.mrb[0].mxu0
    %v4879 = vadd.f32 %v4339, %v4878
    %v4880 = vpop.f32.mrb[0].mxu0
    %4881 = vmatprep.mubr.f32.mxu0 0.0
    %v4882 = vand.u32 %v2788, 4294901760
    %v4883 = vsub.f32 %v2788, %v4882
    %v4884 = vand.u32 %v4883, 4294901760
    %4885 = vmatmul.mubr.f32.gmra.mrb[0].mxu0 %v4884
    %v4886 = vpop.f32.mrb[0].mxu0
    %v4887 = vadd.f32 %v4346, %v4886
    %v4888 = vpop.f32.mrb[0].mxu0
    %4889 = vmatprep.mubr.f32.mxu0 0.0
    %v4890 = vand.u32 %v2791, 4294901760
    %v4891 = vsub.f32 %v2791, %v4890
    %v4892 = vand.u32 %v4891, 4294901760
    %4893 = vmatmul.mubr.f32.gmra.mrb[0].mxu0 %v4892
    %v4894 = vpop.f32.mrb[0].mxu0
    %v4895 = vadd.f32 %v4353, %v4894
    %v4896 = vpop.f32.mrb[0].mxu0
    %4897 = vmatprep.mubr.f32.mxu0 0.0
    %v4898 = vand.u32 %v2794, 4294901760
    %v4899 = vsub.f32 %v2794, %v4898
    %v4900 = vand.u32 %v4899, 4294901760
    %4901 = vmatmul.mubr.f32.gmra.mrb[0].mxu0 %v4900
    %v4902 = vpop.f32.mrb[0].mxu0
    %v4903 = vadd.f32 %v4360, %v4902
    %v4904 = vpop.f32.mrb[0].mxu0
    %4905 = vmatprep.mubr.f32.mxu0 0.0
    %v4906 = vand.u32 %v2797, 4294901760
    %v4907 = vsub.f32 %v2797, %v4906
    %v4908 = vand.u32 %v4907, 4294901760
    %4909 = vmatmul.mubr.f32.gmra.mrb[0].mxu0 %v4908
    %v4910 = vpop.f32.mrb[0].mxu0
    %v4911 = vadd.f32 %v4367, %v4910
    %v4912 = vpop.f32.mrb[0].mxu0
    %4913 = vmatprep.mubr.f32.mxu0 0.0
    %v4914 = vand.u32 %v2800, 4294901760
    %v4915 = vsub.f32 %v2800, %v4914
    %v4916 = vand.u32 %v4915, 4294901760
    %4917 = vmatmul.mubr.f32.gmra.mrb[0].mxu0 %v4916
    %v4918 = vpop.f32.mrb[0].mxu0
    %v4919 = vadd.f32 %v4374, %v4918
    %v4920 = vpop.f32.mrb[0].mxu0
    %4921 = vmatprep.mubr.f32.mxu0 0.0
    %v4922 = vand.u32 %v2803, 4294901760
    %v4923 = vsub.f32 %v2803, %v4922
    %v4924 = vand.u32 %v4923, 4294901760
    %4925 = vmatmul.mubr.f32.gmra.mrb[0].mxu0 %v4924
    %v4926 = vpop.f32.mrb[0].mxu0
    %v4927 = vadd.f32 %v4381, %v4926
    %v4928 = vpop.f32.mrb[0].mxu0
    %4929 = vmatprep.mubr.f32.mxu0 0.0
    %v4930 = vand.u32 %v2806, 4294901760
    %v4931 = vsub.f32 %v2806, %v4930
    %v4932 = vand.u32 %v4931, 4294901760
    %4933 = vmatmul.mubr.f32.gmra.mrb[0].mxu0 %v4932
    %v4934 = vpop.f32.mrb[0].mxu0
    %v4935 = vadd.f32 %v4388, %v4934
    %v4936 = vpop.f32.mrb[0].mxu0
    %4937 = vmatprep.mubr.f32.mxu0 0.0
    %v4938 = vand.u32 %v2809, 4294901760
    %v4939 = vsub.f32 %v2809, %v4938
    %v4940 = vand.u32 %v4939, 4294901760
    %4941 = vmatmul.mubr.f32.gmra.mrb[0].mxu0 %v4940
    %v4942 = vpop.f32.mrb[0].mxu0
    %v4943 = vadd.f32 %v4395, %v4942
    %v4944 = vpop.f32.mrb[0].mxu0
    %4945 = vmatprep.mubr.f32.mxu0 0.0
    %v4946 = vand.u32 %v2812, 4294901760
    %v4947 = vsub.f32 %v2812, %v4946
    %v4948 = vand.u32 %v4947, 4294901760
    %4949 = vmatmul.mubr.f32.gmra.mrb[0].mxu0 %v4948
    %v4950 = vpop.f32.mrb[0].mxu0
    %v4951 = vadd.f32 %v4402, %v4950
    %v4952 = vpop.f32.mrb[0].mxu0
    %4953 = vmatprep.mubr.f32.mxu0 0.0
    %v4954 = vand.u32 %v2815, 4294901760
    %v4955 = vsub.f32 %v2815, %v4954
    %v4956 = vand.u32 %v4955, 4294901760
    %4957 = vmatmul.mubr.f32.gmra.mrb[0].mxu0 %v4956
    %v4958 = vpop.f32.mrb[0].mxu0
    %v4959 = vadd.f32 %v4409, %v4958
    %v4960 = vpop.f32.mrb[0].mxu0
    %4961 = vmatprep.mubr.f32.mxu0 0.0
    %v4962 = vand.u32 %v2818, 4294901760
    %v4963 = vsub.f32 %v2818, %v4962
    %v4964 = vand.u32 %v4963, 4294901760
    %4965 = vmatmul.mubr.f32.gmra.mrb[0].mxu0 %v4964
    %v4966 = vpop.f32.mrb[0].mxu0
    %v4967 = vadd.f32 %v4416, %v4966
    %v4968 = vpop.f32.mrb[0].mxu0
    %4969 = vmatprep.mubr.f32.mxu0 0.0
    %v4970 = vand.u32 %v2821, 4294901760
    %v4971 = vsub.f32 %v2821, %v4970
    %v4972 = vand.u32 %v4971, 4294901760
    %4973 = vmatmul.mubr.f32.gmra.mrb[0].mxu0 %v4972
    %v4974 = vpop.f32.mrb[0].mxu0
    %v4975 = vadd.f32 %v4423, %v4974
    %v4976 = vpop.f32.mrb[0].mxu0
    %4977 = vmatprep.mubr.f32.mxu0 0.0
    %v4978 = vand.u32 %v2824, 4294901760
    %v4979 = vsub.f32 %v2824, %v4978
    %v4980 = vand.u32 %v4979, 4294901760
    %4981 = vmatmul.mubr.f32.gmra.mrb[0].mxu0 %v4980
    %v4982 = vpop.f32.mrb[0].mxu0
    %v4983 = vadd.f32 %v4430, %v4982
    %v4984 = vpop.f32.mrb[0].mxu0
    %4985 = vmatprep.mubr.f32.mxu0 0.0
    %v4986 = vand.u32 %v2827, 4294901760
    %v4987 = vsub.f32 %v2827, %v4986
    %v4988 = vand.u32 %v4987, 4294901760
    %4989 = vmatmul.mubr.f32.gmra.mrb[0].mxu0 %v4988
    %v4990 = vpop.f32.mrb[0].mxu0
    %v4991 = vadd.f32 %v4437, %v4990
    %v4992 = vpop.f32.mrb[0].mxu0
    %4993 = vmatprep.mubr.f32.mxu0 0.0
    %v4994 = vand.u32 %v2830, 4294901760
    %v4995 = vsub.f32 %v2830, %v4994
    %v4996 = vand.u32 %v4995, 4294901760
    %4997 = vmatmul.mubr.f32.gmra.mrb[0].mxu0 %v4996
    %v4998 = vpop.f32.mrb[0].mxu0
    %v4999 = vadd.f32 %v4444, %v4998
    %v5000 = vpop.f32.mrb[0].mxu0
    %5001 = vmatprep.mubr.f32.mxu0 0.0
    %v5002 = vand.u32 %v2833, 4294901760
    %v5003 = vsub.f32 %v2833, %v5002
    %v5004 = vand.u32 %v5003, 4294901760
    %5005 = vmatmul.mubr.f32.gmra.mrb[0].mxu0 %v5004
    %v5006 = vpop.f32.mrb[0].mxu0
    %v5007 = vadd.f32 %v4451, %v5006
    %v5008 = vpop.f32.mrb[0].mxu0
    %5009 = vmatprep.mubr.f32.mxu0 0.0
    %v5010 = vand.u32 %v2836, 4294901760
    %v5011 = vsub.f32 %v2836, %v5010
    %v5012 = vand.u32 %v5011, 4294901760
    %5013 = vmatmul.mubr.f32.gmra.mrb[0].mxu0 %v5012
    %v5014 = vpop.f32.mrb[0].mxu0
    %v5015 = vadd.f32 %v4458, %v5014
    %v5016 = vpop.f32.mrb[0].mxu0
    %5017 = vmatprep.mubr.f32.mxu0 0.0
    %v5018 = vand.u32 %v2839, 4294901760
    %v5019 = vsub.f32 %v2839, %v5018
    %v5020 = vand.u32 %v5019, 4294901760
    %5021 = vmatmul.mubr.f32.gmra.mrb[0].mxu0 %v5020
    %v5022 = vpop.f32.mrb[0].mxu0
    %v5023 = vadd.f32 %v4465, %v5022
    %v5024 = vpop.f32.mrb[0].mxu0
    %5025 = vmatprep.mubr.f32.mxu0 0.0
    %v5026 = vand.u32 %v2842, 4294901760
    %v5027 = vsub.f32 %v2842, %v5026
    %v5028 = vand.u32 %v5027, 4294901760
    %5029 = vmatmul.mubr.f32.gmra.mrb[0].mxu0 %v5028
    %v5030 = vpop.f32.mrb[0].mxu0
    %v5031 = vadd.f32 %v4472, %v5030
    %v5032 = vpop.f32.mrb[0].mxu0
    %5033 = vmatprep.mubr.f32.mxu0 0.0
    %v5034 = vand.u32 %v2845, 4294901760
    %v5035 = vsub.f32 %v2845, %v5034
    %v5036 = vand.u32 %v5035, 4294901760
    %5037 = vmatmul.mubr.f32.gmra.mrb[0].mxu0 %v5036
    %v5038 = vpop.f32.mrb[0].mxu0
    %v5039 = vadd.f32 %v4479, %v5038
    %v5040 = vpop.f32.mrb[0].mxu0
    %5041 = vmatprep.mubr.f32.mxu0 0.0
    %v5042 = vand.u32 %v2848, 4294901760
    %v5043 = vsub.f32 %v2848, %v5042
    %v5044 = vand.u32 %v5043, 4294901760
    %5045 = vmatmul.mubr.f32.gmra.mrb[0].mxu0 %v5044
    %v5046 = vpop.f32.mrb[0].mxu0
    %v5047 = vadd.f32 %v4486, %v5046
    %v5048 = vpop.f32.mrb[0].mxu0
    %5049 = vmatprep.mubr.f32.mxu0 0.0
    %v5050 = vand.u32 %v2851, 4294901760
    %v5051 = vsub.f32 %v2851, %v5050
    %v5052 = vand.u32 %v5051, 4294901760
    %5053 = vmatmul.mubr.f32.gmra.mrb[0].mxu0 %v5052
    %v5054 = vpop.f32.mrb[0].mxu0
    %v5055 = vadd.f32 %v4493, %v5054
    %v5056 = vpop.f32.mrb[0].mxu0
    %5057 = vmatprep.mubr.f32.mxu0 0.0
    %v5058 = vand.u32 %v2854, 4294901760
    %v5059 = vsub.f32 %v2854, %v5058
    %v5060 = vand.u32 %v5059, 4294901760
    %5061 = vmatmul.mubr.f32.gmra.mrb[0].mxu0 %v5060
    %v5062 = vpop.f32.mrb[0].mxu0
    %v5063 = vadd.f32 %v4500, %v5062
    %v5064 = vpop.f32.mrb[0].mxu0
    %5065 = vmatprep.mubr.f32.mxu0 0.0
    %v5066 = vand.u32 %v2857, 4294901760
    %v5067 = vsub.f32 %v2857, %v5066
    %v5068 = vand.u32 %v5067, 4294901760
    %5069 = vmatmul.mubr.f32.gmra.mrb[0].mxu0 %v5068
    %v5070 = vpop.f32.mrb[0].mxu0
    %v5071 = vadd.f32 %v4507, %v5070
    %v5072 = vpop.f32.mrb[0].mxu0
    %5073 = vmatprep.mubr.f32.mxu0 0.0
    %v5074 = vand.u32 %v2860, 4294901760
    %v5075 = vsub.f32 %v2860, %v5074
    %v5076 = vand.u32 %v5075, 4294901760
    %5077 = vmatmul.mubr.f32.gmra.mrb[0].mxu0 %v5076
    %v5078 = vpop.f32.mrb[0].mxu0
    %v5079 = vadd.f32 %v4514, %v5078
    %v5080 = vpop.f32.mrb[0].mxu0
    %5081 = vmatprep.mubr.f32.mxu0 0.0
    %v5082 = vand.u32 %v2863, 4294901760
    %v5083 = vsub.f32 %v2863, %v5082
    %v5084 = vand.u32 %v5083, 4294901760
    %5085 = vmatmul.mubr.f32.gmra.mrb[0].mxu0 %v5084
    %v5086 = vpop.f32.mrb[0].mxu0
    %v5087 = vadd.f32 %v4521, %v5086
    %v5088 = vpop.f32.mrb[0].mxu0
    %5089 = vmatprep.mubr.f32.mxu0 0.0
    %v5090 = vand.u32 %v2866, 4294901760
    %v5091 = vsub.f32 %v2866, %v5090
    %v5092 = vand.u32 %v5091, 4294901760
    %5093 = vmatmul.mubr.f32.gmra.mrb[0].mxu0 %v5092
    %v5094 = vpop.f32.mrb[0].mxu0
    %v5095 = vadd.f32 %v4528, %v5094
    %v5096 = vpop.f32.mrb[0].mxu0
    %5097 = vmatprep.mubr.f32.mxu0 0.0
    %v5098 = vand.u32 %v2869, 4294901760
    %v5099 = vsub.f32 %v2869, %v5098
    %v5100 = vand.u32 %v5099, 4294901760
    %5101 = vmatmul.mubr.f32.gmra.mrb[0].mxu0 %v5100
    %v5102 = vpop.f32.mrb[0].mxu0
    %v5103 = vadd.f32 %v4535, %v5102
    %v5104 = vpop.f32.mrb[0].mxu0
    %5105 = vmatprep.mubr.f32.mxu0 0.0
    %v5106 = vand.u32 %v2872, 4294901760
    %v5107 = vsub.f32 %v2872, %v5106
    %v5108 = vand.u32 %v5107, 4294901760
    %5109 = vmatmul.mubr.f32.gmra.mrb[0].mxu0 %v5108
    %v5110 = vpop.f32.mrb[0].mxu0
    %v5111 = vadd.f32 %v4542, %v5110
    %v5112 = vpop.f32.mrb[0].mxu0
    %5113 = vmatprep.mubr.f32.mxu0 0.0
    %v5114 = vand.u32 %v2875, 4294901760
    %v5115 = vsub.f32 %v2875, %v5114
    %v5116 = vand.u32 %v5115, 4294901760
    %5117 = vmatmul.mubr.f32.gmra.mrb[0].mxu0 %v5116
    %v5118 = vpop.f32.mrb[0].mxu0
    %v5119 = vadd.f32 %v4549, %v5118
    %v5120 = vpop.f32.mrb[0].mxu0
    %5121 = vmatprep.mubr.f32.mxu0 0.0
    %v5122 = vand.u32 %v2878, 4294901760
    %v5123 = vsub.f32 %v2878, %v5122
    %v5124 = vand.u32 %v5123, 4294901760
    %5125 = vmatmul.mubr.f32.gmra.mrb[0].mxu0 %v5124
    %v5126 = vpop.f32.mrb[0].mxu0
    %v5127 = vadd.f32 %v4556, %v5126
    %v5128 = vpop.f32.mrb[0].mxu0
    %5129 = vmatprep.mubr.f32.mxu0 0.0
    %v5130 = vand.u32 %v2881, 4294901760
    %v5131 = vsub.f32 %v2881, %v5130
    %v5132 = vand.u32 %v5131, 4294901760
    %5133 = vmatmul.mubr.f32.gmra.mrb[0].mxu0 %v5132
    %v5134 = vpop.f32.mrb[0].mxu0
    %v5135 = vadd.f32 %v4563, %v5134
    %v5136 = vpop.f32.mrb[0].mxu0
    %5137 = vmatprep.mubr.f32.mxu0 0.0
    %v5138 = vand.u32 %v2884, 4294901760
    %v5139 = vsub.f32 %v2884, %v5138
    %v5140 = vand.u32 %v5139, 4294901760
    %5141 = vmatmul.mubr.f32.gmra.mrb[0].mxu0 %v5140
    %v5142 = vpop.f32.mrb[0].mxu0
    %v5143 = vadd.f32 %v4570, %v5142
    %v5144 = vpop.f32.mrb[0].mxu0
    %5145 = vmatprep.mubr.f32.mxu0 0.0
    %v5146 = vand.u32 %v2887, 4294901760
    %v5147 = vsub.f32 %v2887, %v5146
    %v5148 = vand.u32 %v5147, 4294901760
    %5149 = vmatmul.mubr.f32.gmra.mrb[0].mxu0 %v5148
    %v5150 = vpop.f32.mrb[0].mxu0
    %v5151 = vadd.f32 %v4577, %v5150
    %v5152 = vpop.f32.mrb[0].mxu0
    %5153 = vmatprep.mubr.f32.mxu0 0.0
    %v5154 = vand.u32 %v2890, 4294901760
    %v5155 = vsub.f32 %v2890, %v5154
    %v5156 = vand.u32 %v5155, 4294901760
    %5157 = vmatmul.mubr.f32.gmra.mrb[0].mxu0 %v5156
    %v5158 = vpop.f32.mrb[0].mxu0
    %v5159 = vadd.f32 %v4584, %v5158
    %v5160 = vpop.f32.mrb[0].mxu0
    %5161 = vmatprep.mubr.f32.mxu0 0.0
    %v5162 = vand.u32 %v2893, 4294901760
    %v5163 = vsub.f32 %v2893, %v5162
    %v5164 = vand.u32 %v5163, 4294901760
    %5165 = vmatmul.mubr.f32.gmra.mrb[0].mxu0 %v5164
    %v5166 = vpop.f32.mrb[0].mxu0
    %v5167 = vadd.f32 %v4591, %v5166
    %v5168 = vpop.f32.mrb[0].mxu0
    %5169 = vmatprep.mubr.f32.mxu0 0.0
    %v5170 = vand.u32 %v2896, 4294901760
    %v5171 = vsub.f32 %v2896, %v5170
    %v5172 = vand.u32 %v5171, 4294901760
    %5173 = vmatmul.mubr.f32.gmra.mrb[0].mxu0 %v5172
    %v5174 = vpop.f32.mrb[0].mxu0
    %v5175 = vadd.f32 %v4598, %v5174
    %v5176 = vpop.f32.mrb[0].mxu0
    %5177 = vmatprep.mubr.f32.mxu0 0.0
    %v5178 = vand.u32 %v2899, 4294901760
    %v5179 = vsub.f32 %v2899, %v5178
    %v5180 = vand.u32 %v5179, 4294901760
    %5181 = vmatmul.mubr.f32.gmra.mrb[0].mxu0 %v5180
    %v5182 = vpop.f32.mrb[0].mxu0
    %v5183 = vadd.f32 %v4605, %v5182
    %v5184 = vpop.f32.mrb[0].mxu0
    %5185 = vmatprep.mubr.f32.mxu0 0.0
    %v5186 = vand.u32 %v2902, 4294901760
    %v5187 = vsub.f32 %v2902, %v5186
    %v5188 = vand.u32 %v5187, 4294901760
    %5189 = vmatmul.mubr.f32.gmra.mrb[0].mxu0 %v5188
    %v5190 = vpop.f32.mrb[0].mxu0
    %v5191 = vadd.f32 %v4612, %v5190
    %v5192 = vpop.f32.mrb[0].mxu0
    %5193 = vmatprep.mubr.f32.mxu0 0.0
    %v5194 = vand.u32 %v2905, 4294901760
    %v5195 = vsub.f32 %v2905, %v5194
    %v5196 = vand.u32 %v5195, 4294901760
    %5197 = vmatmul.mubr.f32.gmra.mrb[0].mxu0 %v5196
    %v5198 = vpop.f32.mrb[0].mxu0
    %v5199 = vadd.f32 %v4619, %v5198
    %v5200 = vpop.f32.mrb[0].mxu0
    %5201 = vmatprep.mubr.f32.mxu0 0.0
    %v5202 = vand.u32 %v2908, 4294901760
    %v5203 = vsub.f32 %v2908, %v5202
    %v5204 = vand.u32 %v5203, 4294901760
    %5205 = vmatmul.mubr.f32.gmra.mrb[0].mxu0 %v5204
    %v5206 = vpop.f32.mrb[0].mxu0
    %v5207 = vadd.f32 %v4626, %v5206
    %v5208 = vpop.f32.mrb[0].mxu0
    %5209 = vmatprep.mubr.f32.mxu0 0.0
    %v5210 = vand.u32 %v2911, 4294901760
    %v5211 = vsub.f32 %v2911, %v5210
    %v5212 = vand.u32 %v5211, 4294901760
    %5213 = vmatmul.mubr.f32.gmra.mrb[0].mxu0 %v5212
    %v5214 = vpop.f32.mrb[0].mxu0
    %v5215 = vadd.f32 %v4633, %v5214
    %v5216 = vpop.f32.mrb[0].mxu0
    %5217 = vmatprep.mubr.f32.mxu0 0.0
    %v5218 = vand.u32 %v2914, 4294901760
    %v5219 = vsub.f32 %v2914, %v5218
    %v5220 = vand.u32 %v5219, 4294901760
    %5221 = vmatmul.mubr.f32.gmra.mrb[0].mxu0 %v5220
    %v5222 = vpop.f32.mrb[0].mxu0
    %v5223 = vadd.f32 %v4640, %v5222
    %v5224 = vpop.f32.mrb[0].mxu0
    %5225 = vmatprep.mubr.f32.mxu0 0.0
    %v5226 = vand.u32 %v2917, 4294901760
    %v5227 = vsub.f32 %v2917, %v5226
    %v5228 = vand.u32 %v5227, 4294901760
    %5229 = vmatmul.mubr.f32.gmra.mrb[0].mxu0 %v5228
    %v5230 = vpop.f32.mrb[0].mxu0
    %v5231 = vadd.f32 %v4647, %v5230
    %v5232 = vpop.f32.mrb[0].mxu0
    %5233 = vmatprep.mubr.f32.mxu0 0.0
    %v5234 = vand.u32 %v2920, 4294901760
    %v5235 = vsub.f32 %v2920, %v5234
    %v5236 = vand.u32 %v5235, 4294901760
    %5237 = vmatmul.mubr.f32.gmra.mrb[0].mxu0 %v5236
    %v5238 = vpop.f32.mrb[0].mxu0
    %v5239 = vadd.f32 %v4654, %v5238
    %v5240 = vpop.f32.mrb[0].mxu0
    %5241 = vmatprep.mubr.f32.mxu0 0.0
    %v5242 = vand.u32 %v2923, 4294901760
    %v5243 = vsub.f32 %v2923, %v5242
    %v5244 = vand.u32 %v5243, 4294901760
    %5245 = vmatmul.mubr.f32.gmra.mrb[0].mxu0 %v5244
    %v5246 = vpop.f32.mrb[0].mxu0
    %v5247 = vadd.f32 %v4661, %v5246
    %v5248 = vpop.f32.mrb[0].mxu0
    %5249 = vdwg.mxu0
    %5250 = vmatprep.subr.mxu0 0.0
    %v5251 = vand.u32 %v2716, 4294901760
    %v5252 = vsub.f32 %v2716, %v5251
    %v5253 = vand.u32 %v5252, 4294901760
    %5254 = vmatpush1.msra.mxu0 %v5253
    %5255 = vmatprep.subr.mxu0 0.0
    %v5256 = vand.u32 %v2717, 4294901760
    %v5257 = vsub.f32 %v2717, %v5256
    %v5258 = vand.u32 %v5257, 4294901760
    %5259 = vmatpush1.msra.mxu0 %v5258
    %5260 = vmatprep.subr.mxu0 0.0
    %v5261 = vand.u32 %v2718, 4294901760
    %v5262 = vsub.f32 %v2718, %v5261
    %v5263 = vand.u32 %v5262, 4294901760
    %5264 = vmatpush1.msra.mxu0 %v5263
    %5265 = vmatprep.subr.mxu0 0.0
    %v5266 = vand.u32 %v2719, 4294901760
    %v5267 = vsub.f32 %v2719, %v5266
    %v5268 = vand.u32 %v5267, 4294901760
    %5269 = vmatpush1.msra.mxu0 %v5268
    %5270 = vmatprep.subr.mxu0 0.0
    %v5271 = vand.u32 %v2720, 4294901760
    %v5272 = vsub.f32 %v2720, %v5271
    %v5273 = vand.u32 %v5272, 4294901760
    %5274 = vmatpush1.msra.mxu0 %v5273
    %5275 = vmatprep.subr.mxu0 0.0
    %v5276 = vand.u32 %v2721, 4294901760
    %v5277 = vsub.f32 %v2721, %v5276
    %v5278 = vand.u32 %v5277, 4294901760
    %5279 = vmatpush1.msra.mxu0 %v5278
    %5280 = vmatprep.subr.mxu0 0.0
    %v5281 = vand.u32 %v2722, 4294901760
    %v5282 = vsub.f32 %v2722, %v5281
    %v5283 = vand.u32 %v5282, 4294901760
    %5284 = vmatpush1.msra.mxu0 %v5283
    %5285 = vmatprep.subr.mxu0 0.0
    %v5286 = vand.u32 %v2723, 4294901760
    %v5287 = vsub.f32 %v2723, %v5286
    %v5288 = vand.u32 %v5287, 4294901760
    %5289 = vmatpush1.msra.mxu0 %v5288
    %5290 = vmatprep.subr.mxu0 0.0
    %v5291 = vand.u32 %v2724, 4294901760
    %v5292 = vsub.f32 %v2724, %v5291
    %v5293 = vand.u32 %v5292, 4294901760
    %5294 = vmatpush1.msra.mxu0 %v5293
    %5295 = vmatprep.subr.mxu0 0.0
    %5296 = vmatpush1.msra.mxu0 0.0
    %5297 = vmatprep.subr.mxu0 0.0
    %5298 = vmatpush1.msra.mxu0 0.0
    %5299 = vmatprep.subr.mxu0 0.0
    %5300 = vmatpush1.msra.mxu0 0.0
    %5301 = vmatprep.subr.mxu0 0.0
    %5302 = vmatpush1.msra.mxu0 0.0
    %5303 = vmatprep.subr.mxu0 0.0
    %5304 = vmatpush1.msra.mxu0 0.0
    %5305 = vmatprep.subr.mxu0 0.0
    %5306 = vmatpush1.msra.mxu0 0.0
    %5307 = vmatprep.subr.mxu0 0.0
    %5308 = vmatpush1.msra.mxu0 0.0
    %5309 = vmatprep.subr.mxu0 0.0
    %5310 = vmatpush1.msra.mxu0 0.0
    %5311 = vmatprep.subr.mxu0 0.0
    %5312 = vmatpush1.msra.mxu0 0.0
    %5313 = vmatprep.subr.mxu0 0.0
    %5314 = vmatpush1.msra.mxu0 0.0
    %5315 = vmatprep.subr.mxu0 0.0
    %5316 = vmatpush1.msra.mxu0 0.0
    %5317 = vmatprep.subr.mxu0 0.0
    %5318 = vmatpush1.msra.mxu0 0.0
    %5319 = vmatprep.subr.mxu0 0.0
    %5320 = vmatpush1.msra.mxu0 0.0
    %5321 = vmatprep.subr.mxu0 0.0
    %5322 = vmatpush1.msra.mxu0 0.0
    %5323 = vmatprep.subr.mxu0 0.0
    %5324 = vmatpush1.msra.mxu0 0.0
    %5325 = vmatprep.subr.mxu0 0.0
    %5326 = vmatpush1.msra.mxu0 0.0
    %5327 = vmatprep.subr.mxu0 0.0
    %5328 = vmatpush1.msra.mxu0 0.0
    %5329 = vmatprep.subr.mxu0 0.0
    %5330 = vmatpush1.msra.mxu0 0.0
    %5331 = vmatprep.subr.mxu0 0.0
    %5332 = vmatpush1.msra.mxu0 0.0
    %5333 = vmatprep.subr.mxu0 0.0
    %5334 = vmatpush1.msra.mxu0 0.0
    %5335 = vmatprep.subr.mxu0 0.0
    %5336 = vmatpush1.msra.mxu0 0.0
    %5337 = vmatprep.subr.mxu0 0.0
    %5338 = vmatpush1.msra.mxu0 0.0
    %5339 = vmatprep.subr.mxu0 0.0
    %5340 = vmatpush1.msra.mxu0 0.0
    %5341 = vmatprep.mubr.f32.mxu0 0.0
    %v5342 = vand.u32 %v2734, 4294901760
    %5343 = vmatmul.mubr.f32.gmra.mrb[0].mxu0 %v5342
    %v5344 = vpop.f32.mrb[0].mxu0
    %v5345 = vadd.f32 %v4743, %v5344
    %v5346 = vpop.f32.mrb[0].mxu0
    %5347 = vmatprep.mubr.f32.mxu0 0.0
    %v5348 = vand.u32 %v2737, 4294901760
    %5349 = vmatmul.mubr.f32.gmra.mrb[0].mxu0 %v5348
    %v5350 = vpop.f32.mrb[0].mxu0
    %v5351 = vadd.f32 %v4751, %v5350
    %v5352 = vpop.f32.mrb[0].mxu0
    %5353 = vmatprep.mubr.f32.mxu0 0.0
    %v5354 = vand.u32 %v2740, 4294901760
    %5355 = vmatmul.mubr.f32.gmra.mrb[0].mxu0 %v5354
    %v5356 = vpop.f32.mrb[0].mxu0
    %v5357 = vadd.f32 %v4759, %v5356
    %v5358 = vpop.f32.mrb[0].mxu0
    %5359 = vmatprep.mubr.f32.mxu0 0.0
    %v5360 = vand.u32 %v2743, 4294901760
    %5361 = vmatmul.mubr.f32.gmra.mrb[0].mxu0 %v5360
    %v5362 = vpop.f32.mrb[0].mxu0
    %v5363 = vadd.f32 %v4767, %v5362
    %v5364 = vpop.f32.mrb[0].mxu0
    %5365 = vmatprep.mubr.f32.mxu0 0.0
    %v5366 = vand.u32 %v2746, 4294901760
    %5367 = vmatmul.mubr.f32.gmra.mrb[0].mxu0 %v5366
    %v5368 = vpop.f32.mrb[0].mxu0
    %v5369 = vadd.f32 %v4775, %v5368
    %v5370 = vpop.f32.mrb[0].mxu0
    %5371 = vmatprep.mubr.f32.mxu0 0.0
    %v5372 = vand.u32 %v2749, 4294901760
    %5373 = vmatmul.mubr.f32.gmra.mrb[0].mxu0 %v5372
    %v5374 = vpop.f32.mrb[0].mxu0
    %v5375 = vadd.f32 %v4783, %v5374
    %v5376 = vpop.f32.mrb[0].mxu0
    %5377 = vmatprep.mubr.f32.mxu0 0.0
    %v5378 = vand.u32 %v2752, 4294901760
    %5379 = vmatmul.mubr.f32.gmra.mrb[0].mxu0 %v5378
    %v5380 = vpop.f32.mrb[0].mxu0
    %v5381 = vadd.f32 %v4791, %v5380
    %v5382 = vpop.f32.mrb[0].mxu0
    %5383 = vmatprep.mubr.f32.mxu0 0.0
    %v5384 = vand.u32 %v2755, 4294901760
    %5385 = vmatmul.mubr.f32.gmra.mrb[0].mxu0 %v5384
    %v5386 = vpop.f32.mrb[0].mxu0
    %v5387 = vadd.f32 %v4799, %v5386
    %v5388 = vpop.f32.mrb[0].mxu0
    %5389 = vmatprep.mubr.f32.mxu0 0.0
    %v5390 = vand.u32 %v2758, 4294901760
    %5391 = vmatmul.mubr.f32.gmra.mrb[0].mxu0 %v5390
    %v5392 = vpop.f32.mrb[0].mxu0
    %v5393 = vadd.f32 %v4807, %v5392
    %v5394 = vpop.f32.mrb[0].mxu0
    %5395 = vmatprep.mubr.f32.mxu0 0.0
    %v5396 = vand.u32 %v2761, 4294901760
    %5397 = vmatmul.mubr.f32.gmra.mrb[0].mxu0 %v5396
    %v5398 = vpop.f32.mrb[0].mxu0
    %v5399 = vadd.f32 %v4815, %v5398
    %v5400 = vpop.f32.mrb[0].mxu0
    %5401 = vmatprep.mubr.f32.mxu0 0.0
    %v5402 = vand.u32 %v2764, 4294901760
    %5403 = vmatmul.mubr.f32.gmra.mrb[0].mxu0 %v5402
    %v5404 = vpop.f32.mrb[0].mxu0
    %v5405 = vadd.f32 %v4823, %v5404
    %v5406 = vpop.f32.mrb[0].mxu0
    %5407 = vmatprep.mubr.f32.mxu0 0.0
    %v5408 = vand.u32 %v2767, 4294901760
    %5409 = vmatmul.mubr.f32.gmra.mrb[0].mxu0 %v5408
    %v5410 = vpop.f32.mrb[0].mxu0
    %v5411 = vadd.f32 %v4831, %v5410
    %v5412 = vpop.f32.mrb[0].mxu0
    %5413 = vmatprep.mubr.f32.mxu0 0.0
    %v5414 = vand.u32 %v2770, 4294901760
    %5415 = vmatmul.mubr.f32.gmra.mrb[0].mxu0 %v5414
    %v5416 = vpop.f32.mrb[0].mxu0
    %v5417 = vadd.f32 %v4839, %v5416
    %v5418 = vpop.f32.mrb[0].mxu0
    %5419 = vmatprep.mubr.f32.mxu0 0.0
    %v5420 = vand.u32 %v2773, 4294901760
    %5421 = vmatmul.mubr.f32.gmra.mrb[0].mxu0 %v5420
    %v5422 = vpop.f32.mrb[0].mxu0
    %v5423 = vadd.f32 %v4847, %v5422
    %v5424 = vpop.f32.mrb[0].mxu0
    %5425 = vmatprep.mubr.f32.mxu0 0.0
    %v5426 = vand.u32 %v2776, 4294901760
    %5427 = vmatmul.mubr.f32.gmra.mrb[0].mxu0 %v5426
    %v5428 = vpop.f32.mrb[0].mxu0
    %v5429 = vadd.f32 %v4855, %v5428
    %v5430 = vpop.f32.mrb[0].mxu0
    %5431 = vmatprep.mubr.f32.mxu0 0.0
    %v5432 = vand.u32 %v2779, 4294901760
    %5433 = vmatmul.mubr.f32.gmra.mrb[0].mxu0 %v5432
    %v5434 = vpop.f32.mrb[0].mxu0
    %v5435 = vadd.f32 %v4863, %v5434
    %v5436 = vpop.f32.mrb[0].mxu0
    %5437 = vmatprep.mubr.f32.mxu0 0.0
    %v5438 = vand.u32 %v2782, 4294901760
    %5439 = vmatmul.mubr.f32.gmra.mrb[0].mxu0 %v5438
    %v5440 = vpop.f32.mrb[0].mxu0
    %v5441 = vadd.f32 %v4871, %v5440
    %v5442 = vpop.f32.mrb[0].mxu0
    %5443 = vmatprep.mubr.f32.mxu0 0.0
    %v5444 = vand.u32 %v2785, 4294901760
    %5445 = vmatmul.mubr.f32.gmra.mrb[0].mxu0 %v5444
    %v5446 = vpop.f32.mrb[0].mxu0
    %v5447 = vadd.f32 %v4879, %v5446
    %v5448 = vpop.f32.mrb[0].mxu0
    %5449 = vmatprep.mubr.f32.mxu0 0.0
    %v5450 = vand.u32 %v2788, 4294901760
    %5451 = vmatmul.mubr.f32.gmra.mrb[0].mxu0 %v5450
    %v5452 = vpop.f32.mrb[0].mxu0
    %v5453 = vadd.f32 %v4887, %v5452
    %v5454 = vpop.f32.mrb[0].mxu0
    %5455 = vmatprep.mubr.f32.mxu0 0.0
    %v5456 = vand.u32 %v2791, 4294901760
    %5457 = vmatmul.mubr.f32.gmra.mrb[0].mxu0 %v5456
    %v5458 = vpop.f32.mrb[0].mxu0
    %v5459 = vadd.f32 %v4895, %v5458
    %v5460 = vpop.f32.mrb[0].mxu0
    %5461 = vmatprep.mubr.f32.mxu0 0.0
    %v5462 = vand.u32 %v2794, 4294901760
    %5463 = vmatmul.mubr.f32.gmra.mrb[0].mxu0 %v5462
    %v5464 = vpop.f32.mrb[0].mxu0
    %v5465 = vadd.f32 %v4903, %v5464
    %v5466 = vpop.f32.mrb[0].mxu0
    %5467 = vmatprep.mubr.f32.mxu0 0.0
    %v5468 = vand.u32 %v2797, 4294901760
    %5469 = vmatmul.mubr.f32.gmra.mrb[0].mxu0 %v5468
    %v5470 = vpop.f32.mrb[0].mxu0
    %v5471 = vadd.f32 %v4911, %v5470
    %v5472 = vpop.f32.mrb[0].mxu0
    %5473 = vmatprep.mubr.f32.mxu0 0.0
    %v5474 = vand.u32 %v2800, 4294901760
    %5475 = vmatmul.mubr.f32.gmra.mrb[0].mxu0 %v5474
    %v5476 = vpop.f32.mrb[0].mxu0
    %v5477 = vadd.f32 %v4919, %v5476
    %v5478 = vpop.f32.mrb[0].mxu0
    %5479 = vmatprep.mubr.f32.mxu0 0.0
    %v5480 = vand.u32 %v2803, 4294901760
    %5481 = vmatmul.mubr.f32.gmra.mrb[0].mxu0 %v5480
    %v5482 = vpop.f32.mrb[0].mxu0
    %v5483 = vadd.f32 %v4927, %v5482
    %v5484 = vpop.f32.mrb[0].mxu0
    %5485 = vmatprep.mubr.f32.mxu0 0.0
    %v5486 = vand.u32 %v2806, 4294901760
    %5487 = vmatmul.mubr.f32.gmra.mrb[0].mxu0 %v5486
    %v5488 = vpop.f32.mrb[0].mxu0
    %v5489 = vadd.f32 %v4935, %v5488
    %v5490 = vpop.f32.mrb[0].mxu0
    %5491 = vmatprep.mubr.f32.mxu0 0.0
    %v5492 = vand.u32 %v2809, 4294901760
    %5493 = vmatmul.mubr.f32.gmra.mrb[0].mxu0 %v5492
    %v5494 = vpop.f32.mrb[0].mxu0
    %v5495 = vadd.f32 %v4943, %v5494
    %v5496 = vpop.f32.mrb[0].mxu0
    %5497 = vmatprep.mubr.f32.mxu0 0.0
    %v5498 = vand.u32 %v2812, 4294901760
    %5499 = vmatmul.mubr.f32.gmra.mrb[0].mxu0 %v5498
    %v5500 = vpop.f32.mrb[0].mxu0
    %v5501 = vadd.f32 %v4951, %v5500
    %v5502 = vpop.f32.mrb[0].mxu0
    %5503 = vmatprep.mubr.f32.mxu0 0.0
    %v5504 = vand.u32 %v2815, 4294901760
    %5505 = vmatmul.mubr.f32.gmra.mrb[0].mxu0 %v5504
    %v5506 = vpop.f32.mrb[0].mxu0
    %v5507 = vadd.f32 %v4959, %v5506
    %v5508 = vpop.f32.mrb[0].mxu0
    %5509 = vmatprep.mubr.f32.mxu0 0.0
    %v5510 = vand.u32 %v2818, 4294901760
    %5511 = vmatmul.mubr.f32.gmra.mrb[0].mxu0 %v5510
    %v5512 = vpop.f32.mrb[0].mxu0
    %v5513 = vadd.f32 %v4967, %v5512
    %v5514 = vpop.f32.mrb[0].mxu0
    %5515 = vmatprep.mubr.f32.mxu0 0.0
    %v5516 = vand.u32 %v2821, 4294901760
    %5517 = vmatmul.mubr.f32.gmra.mrb[0].mxu0 %v5516
    %v5518 = vpop.f32.mrb[0].mxu0
    %v5519 = vadd.f32 %v4975, %v5518
    %v5520 = vpop.f32.mrb[0].mxu0
    %5521 = vmatprep.mubr.f32.mxu0 0.0
    %v5522 = vand.u32 %v2824, 4294901760
    %5523 = vmatmul.mubr.f32.gmra.mrb[0].mxu0 %v5522
    %v5524 = vpop.f32.mrb[0].mxu0
    %v5525 = vadd.f32 %v4983, %v5524
    %v5526 = vpop.f32.mrb[0].mxu0
    %5527 = vmatprep.mubr.f32.mxu0 0.0
    %v5528 = vand.u32 %v2827, 4294901760
    %5529 = vmatmul.mubr.f32.gmra.mrb[0].mxu0 %v5528
    %v5530 = vpop.f32.mrb[0].mxu0
    %v5531 = vadd.f32 %v4991, %v5530
    %v5532 = vpop.f32.mrb[0].mxu0
    %5533 = vmatprep.mubr.f32.mxu0 0.0
    %v5534 = vand.u32 %v2830, 4294901760
    %5535 = vmatmul.mubr.f32.gmra.mrb[0].mxu0 %v5534
    %v5536 = vpop.f32.mrb[0].mxu0
    %v5537 = vadd.f32 %v4999, %v5536
    %v5538 = vpop.f32.mrb[0].mxu0
    %5539 = vmatprep.mubr.f32.mxu0 0.0
    %v5540 = vand.u32 %v2833, 4294901760
    %5541 = vmatmul.mubr.f32.gmra.mrb[0].mxu0 %v5540
    %v5542 = vpop.f32.mrb[0].mxu0
    %v5543 = vadd.f32 %v5007, %v5542
    %v5544 = vpop.f32.mrb[0].mxu0
    %5545 = vmatprep.mubr.f32.mxu0 0.0
    %v5546 = vand.u32 %v2836, 4294901760
    %5547 = vmatmul.mubr.f32.gmra.mrb[0].mxu0 %v5546
    %v5548 = vpop.f32.mrb[0].mxu0
    %v5549 = vadd.f32 %v5015, %v5548
    %v5550 = vpop.f32.mrb[0].mxu0
    %5551 = vmatprep.mubr.f32.mxu0 0.0
    %v5552 = vand.u32 %v2839, 4294901760
    %5553 = vmatmul.mubr.f32.gmra.mrb[0].mxu0 %v5552
    %v5554 = vpop.f32.mrb[0].mxu0
    %v5555 = vadd.f32 %v5023, %v5554
    %v5556 = vpop.f32.mrb[0].mxu0
    %5557 = vmatprep.mubr.f32.mxu0 0.0
    %v5558 = vand.u32 %v2842, 4294901760
    %5559 = vmatmul.mubr.f32.gmra.mrb[0].mxu0 %v5558
    %v5560 = vpop.f32.mrb[0].mxu0
    %v5561 = vadd.f32 %v5031, %v5560
    %v5562 = vpop.f32.mrb[0].mxu0
    %5563 = vmatprep.mubr.f32.mxu0 0.0
    %v5564 = vand.u32 %v2845, 4294901760
    %5565 = vmatmul.mubr.f32.gmra.mrb[0].mxu0 %v5564
    %v5566 = vpop.f32.mrb[0].mxu0
    %v5567 = vadd.f32 %v5039, %v5566
    %v5568 = vpop.f32.mrb[0].mxu0
    %5569 = vmatprep.mubr.f32.mxu0 0.0
    %v5570 = vand.u32 %v2848, 4294901760
    %5571 = vmatmul.mubr.f32.gmra.mrb[0].mxu0 %v5570
    %v5572 = vpop.f32.mrb[0].mxu0
    %v5573 = vadd.f32 %v5047, %v5572
    %v5574 = vpop.f32.mrb[0].mxu0
    %5575 = vmatprep.mubr.f32.mxu0 0.0
    %v5576 = vand.u32 %v2851, 4294901760
    %5577 = vmatmul.mubr.f32.gmra.mrb[0].mxu0 %v5576
    %v5578 = vpop.f32.mrb[0].mxu0
    %v5579 = vadd.f32 %v5055, %v5578
    %v5580 = vpop.f32.mrb[0].mxu0
    %5581 = vmatprep.mubr.f32.mxu0 0.0
    %v5582 = vand.u32 %v2854, 4294901760
    %5583 = vmatmul.mubr.f32.gmra.mrb[0].mxu0 %v5582
    %v5584 = vpop.f32.mrb[0].mxu0
    %v5585 = vadd.f32 %v5063, %v5584
    %v5586 = vpop.f32.mrb[0].mxu0
    %5587 = vmatprep.mubr.f32.mxu0 0.0
    %v5588 = vand.u32 %v2857, 4294901760
    %5589 = vmatmul.mubr.f32.gmra.mrb[0].mxu0 %v5588
    %v5590 = vpop.f32.mrb[0].mxu0
    %v5591 = vadd.f32 %v5071, %v5590
    %v5592 = vpop.f32.mrb[0].mxu0
    %5593 = vmatprep.mubr.f32.mxu0 0.0
    %v5594 = vand.u32 %v2860, 4294901760
    %5595 = vmatmul.mubr.f32.gmra.mrb[0].mxu0 %v5594
    %v5596 = vpop.f32.mrb[0].mxu0
    %v5597 = vadd.f32 %v5079, %v5596
    %v5598 = vpop.f32.mrb[0].mxu0
    %5599 = vmatprep.mubr.f32.mxu0 0.0
    %v5600 = vand.u32 %v2863, 4294901760
    %5601 = vmatmul.mubr.f32.gmra.mrb[0].mxu0 %v5600
    %v5602 = vpop.f32.mrb[0].mxu0
    %v5603 = vadd.f32 %v5087, %v5602
    %v5604 = vpop.f32.mrb[0].mxu0
    %5605 = vmatprep.mubr.f32.mxu0 0.0
    %v5606 = vand.u32 %v2866, 4294901760
    %5607 = vmatmul.mubr.f32.gmra.mrb[0].mxu0 %v5606
    %v5608 = vpop.f32.mrb[0].mxu0
    %v5609 = vadd.f32 %v5095, %v5608
    %v5610 = vpop.f32.mrb[0].mxu0
    %5611 = vmatprep.mubr.f32.mxu0 0.0
    %v5612 = vand.u32 %v2869, 4294901760
    %5613 = vmatmul.mubr.f32.gmra.mrb[0].mxu0 %v5612
    %v5614 = vpop.f32.mrb[0].mxu0
    %v5615 = vadd.f32 %v5103, %v5614
    %v5616 = vpop.f32.mrb[0].mxu0
    %5617 = vmatprep.mubr.f32.mxu0 0.0
    %v5618 = vand.u32 %v2872, 4294901760
    %5619 = vmatmul.mubr.f32.gmra.mrb[0].mxu0 %v5618
    %v5620 = vpop.f32.mrb[0].mxu0
    %v5621 = vadd.f32 %v5111, %v5620
    %v5622 = vpop.f32.mrb[0].mxu0
    %5623 = vmatprep.mubr.f32.mxu0 0.0
    %v5624 = vand.u32 %v2875, 4294901760
    %5625 = vmatmul.mubr.f32.gmra.mrb[0].mxu0 %v5624
    %v5626 = vpop.f32.mrb[0].mxu0
    %v5627 = vadd.f32 %v5119, %v5626
    %v5628 = vpop.f32.mrb[0].mxu0
    %5629 = vmatprep.mubr.f32.mxu0 0.0
    %v5630 = vand.u32 %v2878, 4294901760
    %5631 = vmatmul.mubr.f32.gmra.mrb[0].mxu0 %v5630
    %v5632 = vpop.f32.mrb[0].mxu0
    %v5633 = vadd.f32 %v5127, %v5632
    %v5634 = vpop.f32.mrb[0].mxu0
    %5635 = vmatprep.mubr.f32.mxu0 0.0
    %v5636 = vand.u32 %v2881, 4294901760
    %5637 = vmatmul.mubr.f32.gmra.mrb[0].mxu0 %v5636
    %v5638 = vpop.f32.mrb[0].mxu0
    %v5639 = vadd.f32 %v5135, %v5638
    %v5640 = vpop.f32.mrb[0].mxu0
    %5641 = vmatprep.mubr.f32.mxu0 0.0
    %v5642 = vand.u32 %v2884, 4294901760
    %5643 = vmatmul.mubr.f32.gmra.mrb[0].mxu0 %v5642
    %v5644 = vpop.f32.mrb[0].mxu0
    %v5645 = vadd.f32 %v5143, %v5644
    %v5646 = vpop.f32.mrb[0].mxu0
    %5647 = vmatprep.mubr.f32.mxu0 0.0
    %v5648 = vand.u32 %v2887, 4294901760
    %5649 = vmatmul.mubr.f32.gmra.mrb[0].mxu0 %v5648
    %v5650 = vpop.f32.mrb[0].mxu0
    %v5651 = vadd.f32 %v5151, %v5650
    %v5652 = vpop.f32.mrb[0].mxu0
    %5653 = vmatprep.mubr.f32.mxu0 0.0
    %v5654 = vand.u32 %v2890, 4294901760
    %5655 = vmatmul.mubr.f32.gmra.mrb[0].mxu0 %v5654
    %v5656 = vpop.f32.mrb[0].mxu0
    %v5657 = vadd.f32 %v5159, %v5656
    %v5658 = vpop.f32.mrb[0].mxu0
    %5659 = vmatprep.mubr.f32.mxu0 0.0
    %v5660 = vand.u32 %v2893, 4294901760
    %5661 = vmatmul.mubr.f32.gmra.mrb[0].mxu0 %v5660
    %v5662 = vpop.f32.mrb[0].mxu0
    %v5663 = vadd.f32 %v5167, %v5662
    %v5664 = vpop.f32.mrb[0].mxu0
    %5665 = vmatprep.mubr.f32.mxu0 0.0
    %v5666 = vand.u32 %v2896, 4294901760
    %5667 = vmatmul.mubr.f32.gmra.mrb[0].mxu0 %v5666
    %v5668 = vpop.f32.mrb[0].mxu0
    %v5669 = vadd.f32 %v5175, %v5668
    %v5670 = vpop.f32.mrb[0].mxu0
    %5671 = vmatprep.mubr.f32.mxu0 0.0
    %v5672 = vand.u32 %v2899, 4294901760
    %5673 = vmatmul.mubr.f32.gmra.mrb[0].mxu0 %v5672
    %v5674 = vpop.f32.mrb[0].mxu0
    %v5675 = vadd.f32 %v5183, %v5674
    %v5676 = vpop.f32.mrb[0].mxu0
    %5677 = vmatprep.mubr.f32.mxu0 0.0
    %v5678 = vand.u32 %v2902, 4294901760
    %5679 = vmatmul.mubr.f32.gmra.mrb[0].mxu0 %v5678
    %v5680 = vpop.f32.mrb[0].mxu0
    %v5681 = vadd.f32 %v5191, %v5680
    %v5682 = vpop.f32.mrb[0].mxu0
    %5683 = vmatprep.mubr.f32.mxu0 0.0
    %v5684 = vand.u32 %v2905, 4294901760
    %5685 = vmatmul.mubr.f32.gmra.mrb[0].mxu0 %v5684
    %v5686 = vpop.f32.mrb[0].mxu0
    %v5687 = vadd.f32 %v5199, %v5686
    %v5688 = vpop.f32.mrb[0].mxu0
    %5689 = vmatprep.mubr.f32.mxu0 0.0
    %v5690 = vand.u32 %v2908, 4294901760
    %5691 = vmatmul.mubr.f32.gmra.mrb[0].mxu0 %v5690
    %v5692 = vpop.f32.mrb[0].mxu0
    %v5693 = vadd.f32 %v5207, %v5692
    %v5694 = vpop.f32.mrb[0].mxu0
    %5695 = vmatprep.mubr.f32.mxu0 0.0
    %v5696 = vand.u32 %v2911, 4294901760
    %5697 = vmatmul.mubr.f32.gmra.mrb[0].mxu0 %v5696
    %v5698 = vpop.f32.mrb[0].mxu0
    %v5699 = vadd.f32 %v5215, %v5698
    %v5700 = vpop.f32.mrb[0].mxu0
    %5701 = vmatprep.mubr.f32.mxu0 0.0
    %v5702 = vand.u32 %v2914, 4294901760
    %5703 = vmatmul.mubr.f32.gmra.mrb[0].mxu0 %v5702
    %v5704 = vpop.f32.mrb[0].mxu0
    %v5705 = vadd.f32 %v5223, %v5704
    %v5706 = vpop.f32.mrb[0].mxu0
    %5707 = vmatprep.mubr.f32.mxu0 0.0
    %v5708 = vand.u32 %v2917, 4294901760
    %5709 = vmatmul.mubr.f32.gmra.mrb[0].mxu0 %v5708
    %v5710 = vpop.f32.mrb[0].mxu0
    %v5711 = vadd.f32 %v5231, %v5710
    %v5712 = vpop.f32.mrb[0].mxu0
    %5713 = vmatprep.mubr.f32.mxu0 0.0
    %v5714 = vand.u32 %v2920, 4294901760
    %5715 = vmatmul.mubr.f32.gmra.mrb[0].mxu0 %v5714
    %v5716 = vpop.f32.mrb[0].mxu0
    %v5717 = vadd.f32 %v5239, %v5716
    %v5718 = vpop.f32.mrb[0].mxu0
    %5719 = vmatprep.mubr.f32.mxu0 0.0
    %v5720 = vand.u32 %v2923, 4294901760
    %5721 = vmatmul.mubr.f32.gmra.mrb[0].mxu0 %v5720
    %v5722 = vpop.f32.mrb[0].mxu0
    %v5723 = vadd.f32 %v5247, %v5722
    %v5724 = vpop.f32.mrb[0].mxu0
    %5725 = vdwg.mxu0
    %5726 = vmatprep.subr.mxu0 0.0
    %v5727 = vand.u32 %v2716, 4294901760
    %5728 = vmatpush1.msra.mxu0 %v5727
    %5729 = vmatprep.subr.mxu0 0.0
    %v5730 = vand.u32 %v2717, 4294901760
    %5731 = vmatpush1.msra.mxu0 %v5730
    %5732 = vmatprep.subr.mxu0 0.0
    %v5733 = vand.u32 %v2718, 4294901760
    %5734 = vmatpush1.msra.mxu0 %v5733
    %5735 = vmatprep.subr.mxu0 0.0
    %v5736 = vand.u32 %v2719, 4294901760
    %5737 = vmatpush1.msra.mxu0 %v5736
    %5738 = vmatprep.subr.mxu0 0.0
    %v5739 = vand.u32 %v2720, 4294901760
    %5740 = vmatpush1.msra.mxu0 %v5739
    %5741 = vmatprep.subr.mxu0 0.0
    %v5742 = vand.u32 %v2721, 4294901760
    %5743 = vmatpush1.msra.mxu0 %v5742
    %5744 = vmatprep.subr.mxu0 0.0
    %v5745 = vand.u32 %v2722, 4294901760
    %5746 = vmatpush1.msra.mxu0 %v5745
    %5747 = vmatprep.subr.mxu0 0.0
    %v5748 = vand.u32 %v2723, 4294901760
    %5749 = vmatpush1.msra.mxu0 %v5748
    %5750 = vmatprep.subr.mxu0 0.0
    %v5751 = vand.u32 %v2724, 4294901760
    %5752 = vmatpush1.msra.mxu0 %v5751
    %5753 = vmatprep.subr.mxu0 0.0
    %5754 = vmatpush1.msra.mxu0 0.0
    %5755 = vmatprep.subr.mxu0 0.0
    %5756 = vmatpush1.msra.mxu0 0.0
    %5757 = vmatprep.subr.mxu0 0.0
    %5758 = vmatpush1.msra.mxu0 0.0
    %5759 = vmatprep.subr.mxu0 0.0
    %5760 = vmatpush1.msra.mxu0 0.0
    %5761 = vmatprep.subr.mxu0 0.0
    %5762 = vmatpush1.msra.mxu0 0.0
    %5763 = vmatprep.subr.mxu0 0.0
    %5764 = vmatpush1.msra.mxu0 0.0
    %5765 = vmatprep.subr.mxu0 0.0
    %5766 = vmatpush1.msra.mxu0 0.0
    %5767 = vmatprep.subr.mxu0 0.0
    %5768 = vmatpush1.msra.mxu0 0.0
    %5769 = vmatprep.subr.mxu0 0.0
    %5770 = vmatpush1.msra.mxu0 0.0
    %5771 = vmatprep.subr.mxu0 0.0
    %5772 = vmatpush1.msra.mxu0 0.0
    %5773 = vmatprep.subr.mxu0 0.0
    %5774 = vmatpush1.msra.mxu0 0.0
    %5775 = vmatprep.subr.mxu0 0.0
    %5776 = vmatpush1.msra.mxu0 0.0
    %5777 = vmatprep.subr.mxu0 0.0
    %5778 = vmatpush1.msra.mxu0 0.0
    %5779 = vmatprep.subr.mxu0 0.0
    %5780 = vmatpush1.msra.mxu0 0.0
    %5781 = vmatprep.subr.mxu0 0.0
    %5782 = vmatpush1.msra.mxu0 0.0
    %5783 = vmatprep.subr.mxu0 0.0
    %5784 = vmatpush1.msra.mxu0 0.0
    %5785 = vmatprep.subr.mxu0 0.0
    %5786 = vmatpush1.msra.mxu0 0.0
    %5787 = vmatprep.subr.mxu0 0.0
    %5788 = vmatpush1.msra.mxu0 0.0
    %5789 = vmatprep.subr.mxu0 0.0
    %5790 = vmatpush1.msra.mxu0 0.0
    %5791 = vmatprep.subr.mxu0 0.0
    %5792 = vmatpush1.msra.mxu0 0.0
    %5793 = vmatprep.subr.mxu0 0.0
    %5794 = vmatpush1.msra.mxu0 0.0
    %5795 = vmatprep.subr.mxu0 0.0
    %5796 = vmatpush1.msra.mxu0 0.0
    %5797 = vmatprep.subr.mxu0 0.0
    %5798 = vmatpush1.msra.mxu0 0.0
    %5799 = vmatprep.mubr.f32.mxu0 0.0
    %v5800 = vand.u32 %v2734, 4294901760
    %5801 = vmatmul.mubr.f32.gmra.mrb[0].mxu0 %v5800
    %v5802 = vpop.f32.mrb[0].mxu0
    %v5803 = vadd.f32 %v5345, %v5802
    %v5804 = vpop.f32.mrb[0].mxu0
    %5805 = vmatprep.mubr.f32.mxu0 0.0
    %v5806 = vand.u32 %v2737, 4294901760
    %5807 = vmatmul.mubr.f32.gmra.mrb[0].mxu0 %v5806
    %v5808 = vpop.f32.mrb[0].mxu0
    %v5809 = vadd.f32 %v5351, %v5808
    %v5810 = vpop.f32.mrb[0].mxu0
    %5811 = vmatprep.mubr.f32.mxu0 0.0
    %v5812 = vand.u32 %v2740, 4294901760
    %5813 = vmatmul.mubr.f32.gmra.mrb[0].mxu0 %v5812
    %v5814 = vpop.f32.mrb[0].mxu0
    %v5815 = vadd.f32 %v5357, %v5814
    %v5816 = vpop.f32.mrb[0].mxu0
    %5817 = vmatprep.mubr.f32.mxu0 0.0
    %v5818 = vand.u32 %v2743, 4294901760
    %5819 = vmatmul.mubr.f32.gmra.mrb[0].mxu0 %v5818
    %v5820 = vpop.f32.mrb[0].mxu0
    %v5821 = vadd.f32 %v5363, %v5820
    %v5822 = vpop.f32.mrb[0].mxu0
    %5823 = vmatprep.mubr.f32.mxu0 0.0
    %v5824 = vand.u32 %v2746, 4294901760
    %5825 = vmatmul.mubr.f32.gmra.mrb[0].mxu0 %v5824
    %v5826 = vpop.f32.mrb[0].mxu0
    %v5827 = vadd.f32 %v5369, %v5826
    %v5828 = vpop.f32.mrb[0].mxu0
    %5829 = vmatprep.mubr.f32.mxu0 0.0
    %v5830 = vand.u32 %v2749, 4294901760
    %5831 = vmatmul.mubr.f32.gmra.mrb[0].mxu0 %v5830
    %v5832 = vpop.f32.mrb[0].mxu0
    %v5833 = vadd.f32 %v5375, %v5832
    %v5834 = vpop.f32.mrb[0].mxu0
    %5835 = vmatprep.mubr.f32.mxu0 0.0
    %v5836 = vand.u32 %v2752, 4294901760
    %5837 = vmatmul.mubr.f32.gmra.mrb[0].mxu0 %v5836
    %v5838 = vpop.f32.mrb[0].mxu0
    %v5839 = vadd.f32 %v5381, %v5838
    %v5840 = vpop.f32.mrb[0].mxu0
    %5841 = vmatprep.mubr.f32.mxu0 0.0
    %v5842 = vand.u32 %v2755, 4294901760
    %5843 = vmatmul.mubr.f32.gmra.mrb[0].mxu0 %v5842
    %v5844 = vpop.f32.mrb[0].mxu0
    %v5845 = vadd.f32 %v5387, %v5844
    %v5846 = vpop.f32.mrb[0].mxu0
    %5847 = vmatprep.mubr.f32.mxu0 0.0
    %v5848 = vand.u32 %v2758, 4294901760
    %5849 = vmatmul.mubr.f32.gmra.mrb[0].mxu0 %v5848
    %v5850 = vpop.f32.mrb[0].mxu0
    %v5851 = vadd.f32 %v5393, %v5850
    %v5852 = vpop.f32.mrb[0].mxu0
    %5853 = vmatprep.mubr.f32.mxu0 0.0
    %v5854 = vand.u32 %v2761, 4294901760
    %5855 = vmatmul.mubr.f32.gmra.mrb[0].mxu0 %v5854
    %v5856 = vpop.f32.mrb[0].mxu0
    %v5857 = vadd.f32 %v5399, %v5856
    %v5858 = vpop.f32.mrb[0].mxu0
    %5859 = vmatprep.mubr.f32.mxu0 0.0
    %v5860 = vand.u32 %v2764, 4294901760
    %5861 = vmatmul.mubr.f32.gmra.mrb[0].mxu0 %v5860
    %v5862 = vpop.f32.mrb[0].mxu0
    %v5863 = vadd.f32 %v5405, %v5862
    %v5864 = vpop.f32.mrb[0].mxu0
    %5865 = vmatprep.mubr.f32.mxu0 0.0
    %v5866 = vand.u32 %v2767, 4294901760
    %5867 = vmatmul.mubr.f32.gmra.mrb[0].mxu0 %v5866
    %v5868 = vpop.f32.mrb[0].mxu0
    %v5869 = vadd.f32 %v5411, %v5868
    %v5870 = vpop.f32.mrb[0].mxu0
    %5871 = vmatprep.mubr.f32.mxu0 0.0
    %v5872 = vand.u32 %v2770, 4294901760
    %5873 = vmatmul.mubr.f32.gmra.mrb[0].mxu0 %v5872
    %v5874 = vpop.f32.mrb[0].mxu0
    %v5875 = vadd.f32 %v5417, %v5874
    %v5876 = vpop.f32.mrb[0].mxu0
    %5877 = vmatprep.mubr.f32.mxu0 0.0
    %v5878 = vand.u32 %v2773, 4294901760
    %5879 = vmatmul.mubr.f32.gmra.mrb[0].mxu0 %v5878
    %v5880 = vpop.f32.mrb[0].mxu0
    %v5881 = vadd.f32 %v5423, %v5880
    %v5882 = vpop.f32.mrb[0].mxu0
    %5883 = vmatprep.mubr.f32.mxu0 0.0
    %v5884 = vand.u32 %v2776, 4294901760
    %5885 = vmatmul.mubr.f32.gmra.mrb[0].mxu0 %v5884
    %v5886 = vpop.f32.mrb[0].mxu0
    %v5887 = vadd.f32 %v5429, %v5886
    %v5888 = vpop.f32.mrb[0].mxu0
    %5889 = vmatprep.mubr.f32.mxu0 0.0
    %v5890 = vand.u32 %v2779, 4294901760
    %5891 = vmatmul.mubr.f32.gmra.mrb[0].mxu0 %v5890
    %v5892 = vpop.f32.mrb[0].mxu0
    %v5893 = vadd.f32 %v5435, %v5892
    %v5894 = vpop.f32.mrb[0].mxu0
    %5895 = vmatprep.mubr.f32.mxu0 0.0
    %v5896 = vand.u32 %v2782, 4294901760
    %5897 = vmatmul.mubr.f32.gmra.mrb[0].mxu0 %v5896
    %v5898 = vpop.f32.mrb[0].mxu0
    %v5899 = vadd.f32 %v5441, %v5898
    %v5900 = vpop.f32.mrb[0].mxu0
    %5901 = vmatprep.mubr.f32.mxu0 0.0
    %v5902 = vand.u32 %v2785, 4294901760
    %5903 = vmatmul.mubr.f32.gmra.mrb[0].mxu0 %v5902
    %v5904 = vpop.f32.mrb[0].mxu0
    %v5905 = vadd.f32 %v5447, %v5904
    %v5906 = vpop.f32.mrb[0].mxu0
    %5907 = vmatprep.mubr.f32.mxu0 0.0
    %v5908 = vand.u32 %v2788, 4294901760
    %5909 = vmatmul.mubr.f32.gmra.mrb[0].mxu0 %v5908
    %v5910 = vpop.f32.mrb[0].mxu0
    %v5911 = vadd.f32 %v5453, %v5910
    %v5912 = vpop.f32.mrb[0].mxu0
    %5913 = vmatprep.mubr.f32.mxu0 0.0
    %v5914 = vand.u32 %v2791, 4294901760
    %5915 = vmatmul.mubr.f32.gmra.mrb[0].mxu0 %v5914
    %v5916 = vpop.f32.mrb[0].mxu0
    %v5917 = vadd.f32 %v5459, %v5916
    %v5918 = vpop.f32.mrb[0].mxu0
    %5919 = vmatprep.mubr.f32.mxu0 0.0
    %v5920 = vand.u32 %v2794, 4294901760
    %5921 = vmatmul.mubr.f32.gmra.mrb[0].mxu0 %v5920
    %v5922 = vpop.f32.mrb[0].mxu0
    %v5923 = vadd.f32 %v5465, %v5922
    %v5924 = vpop.f32.mrb[0].mxu0
    %5925 = vmatprep.mubr.f32.mxu0 0.0
    %v5926 = vand.u32 %v2797, 4294901760
    %5927 = vmatmul.mubr.f32.gmra.mrb[0].mxu0 %v5926
    %v5928 = vpop.f32.mrb[0].mxu0
    %v5929 = vadd.f32 %v5471, %v5928
    %v5930 = vpop.f32.mrb[0].mxu0
    %5931 = vmatprep.mubr.f32.mxu0 0.0
    %v5932 = vand.u32 %v2800, 4294901760
    %5933 = vmatmul.mubr.f32.gmra.mrb[0].mxu0 %v5932
    %v5934 = vpop.f32.mrb[0].mxu0
    %v5935 = vadd.f32 %v5477, %v5934
    %v5936 = vpop.f32.mrb[0].mxu0
    %5937 = vmatprep.mubr.f32.mxu0 0.0
    %v5938 = vand.u32 %v2803, 4294901760
    %5939 = vmatmul.mubr.f32.gmra.mrb[0].mxu0 %v5938
    %v5940 = vpop.f32.mrb[0].mxu0
    %v5941 = vadd.f32 %v5483, %v5940
    %v5942 = vpop.f32.mrb[0].mxu0
    %5943 = vmatprep.mubr.f32.mxu0 0.0
    %v5944 = vand.u32 %v2806, 4294901760
    %5945 = vmatmul.mubr.f32.gmra.mrb[0].mxu0 %v5944
    %v5946 = vpop.f32.mrb[0].mxu0
    %v5947 = vadd.f32 %v5489, %v5946
    %v5948 = vpop.f32.mrb[0].mxu0
    %5949 = vmatprep.mubr.f32.mxu0 0.0
    %v5950 = vand.u32 %v2809, 4294901760
    %5951 = vmatmul.mubr.f32.gmra.mrb[0].mxu0 %v5950
    %v5952 = vpop.f32.mrb[0].mxu0
    %v5953 = vadd.f32 %v5495, %v5952
    %v5954 = vpop.f32.mrb[0].mxu0
    %5955 = vmatprep.mubr.f32.mxu0 0.0
    %v5956 = vand.u32 %v2812, 4294901760
    %5957 = vmatmul.mubr.f32.gmra.mrb[0].mxu0 %v5956
    %v5958 = vpop.f32.mrb[0].mxu0
    %v5959 = vadd.f32 %v5501, %v5958
    %v5960 = vpop.f32.mrb[0].mxu0
    %5961 = vmatprep.mubr.f32.mxu0 0.0
    %v5962 = vand.u32 %v2815, 4294901760
    %5963 = vmatmul.mubr.f32.gmra.mrb[0].mxu0 %v5962
    %v5964 = vpop.f32.mrb[0].mxu0
    %v5965 = vadd.f32 %v5507, %v5964
    %v5966 = vpop.f32.mrb[0].mxu0
    %5967 = vmatprep.mubr.f32.mxu0 0.0
    %v5968 = vand.u32 %v2818, 4294901760
    %5969 = vmatmul.mubr.f32.gmra.mrb[0].mxu0 %v5968
    %v5970 = vpop.f32.mrb[0].mxu0
    %v5971 = vadd.f32 %v5513, %v5970
    %v5972 = vpop.f32.mrb[0].mxu0
    %5973 = vmatprep.mubr.f32.mxu0 0.0
    %v5974 = vand.u32 %v2821, 4294901760
    %5975 = vmatmul.mubr.f32.gmra.mrb[0].mxu0 %v5974
    %v5976 = vpop.f32.mrb[0].mxu0
    %v5977 = vadd.f32 %v5519, %v5976
    %v5978 = vpop.f32.mrb[0].mxu0
    %5979 = vmatprep.mubr.f32.mxu0 0.0
    %v5980 = vand.u32 %v2824, 4294901760
    %5981 = vmatmul.mubr.f32.gmra.mrb[0].mxu0 %v5980
    %v5982 = vpop.f32.mrb[0].mxu0
    %v5983 = vadd.f32 %v5525, %v5982
    %v5984 = vpop.f32.mrb[0].mxu0
    %5985 = vmatprep.mubr.f32.mxu0 0.0
    %v5986 = vand.u32 %v2827, 4294901760
    %5987 = vmatmul.mubr.f32.gmra.mrb[0].mxu0 %v5986
    %v5988 = vpop.f32.mrb[0].mxu0
    %v5989 = vadd.f32 %v5531, %v5988
    %v5990 = vpop.f32.mrb[0].mxu0
    %5991 = vmatprep.mubr.f32.mxu0 0.0
    %v5992 = vand.u32 %v2830, 4294901760
    %5993 = vmatmul.mubr.f32.gmra.mrb[0].mxu0 %v5992
    %v5994 = vpop.f32.mrb[0].mxu0
    %v5995 = vadd.f32 %v5537, %v5994
    %v5996 = vpop.f32.mrb[0].mxu0
    %5997 = vmatprep.mubr.f32.mxu0 0.0
    %v5998 = vand.u32 %v2833, 4294901760
    %5999 = vmatmul.mubr.f32.gmra.mrb[0].mxu0 %v5998
    %v6000 = vpop.f32.mrb[0].mxu0
    %v6001 = vadd.f32 %v5543, %v6000
    %v6002 = vpop.f32.mrb[0].mxu0
    %6003 = vmatprep.mubr.f32.mxu0 0.0
    %v6004 = vand.u32 %v2836, 4294901760
    %6005 = vmatmul.mubr.f32.gmra.mrb[0].mxu0 %v6004
    %v6006 = vpop.f32.mrb[0].mxu0
    %v6007 = vadd.f32 %v5549, %v6006
    %v6008 = vpop.f32.mrb[0].mxu0
    %6009 = vmatprep.mubr.f32.mxu0 0.0
    %v6010 = vand.u32 %v2839, 4294901760
    %6011 = vmatmul.mubr.f32.gmra.mrb[0].mxu0 %v6010
    %v6012 = vpop.f32.mrb[0].mxu0
    %v6013 = vadd.f32 %v5555, %v6012
    %v6014 = vpop.f32.mrb[0].mxu0
    %6015 = vmatprep.mubr.f32.mxu0 0.0
    %v6016 = vand.u32 %v2842, 4294901760
    %6017 = vmatmul.mubr.f32.gmra.mrb[0].mxu0 %v6016
    %v6018 = vpop.f32.mrb[0].mxu0
    %v6019 = vadd.f32 %v5561, %v6018
    %v6020 = vpop.f32.mrb[0].mxu0
    %6021 = vmatprep.mubr.f32.mxu0 0.0
    %v6022 = vand.u32 %v2845, 4294901760
    %6023 = vmatmul.mubr.f32.gmra.mrb[0].mxu0 %v6022
    %v6024 = vpop.f32.mrb[0].mxu0
    %v6025 = vadd.f32 %v5567, %v6024
    %v6026 = vpop.f32.mrb[0].mxu0
    %6027 = vmatprep.mubr.f32.mxu0 0.0
    %v6028 = vand.u32 %v2848, 4294901760
    %6029 = vmatmul.mubr.f32.gmra.mrb[0].mxu0 %v6028
    %v6030 = vpop.f32.mrb[0].mxu0
    %v6031 = vadd.f32 %v5573, %v6030
    %v6032 = vpop.f32.mrb[0].mxu0
    %6033 = vmatprep.mubr.f32.mxu0 0.0
    %v6034 = vand.u32 %v2851, 4294901760
    %6035 = vmatmul.mubr.f32.gmra.mrb[0].mxu0 %v6034
    %v6036 = vpop.f32.mrb[0].mxu0
    %v6037 = vadd.f32 %v5579, %v6036
    %v6038 = vpop.f32.mrb[0].mxu0
    %6039 = vmatprep.mubr.f32.mxu0 0.0
    %v6040 = vand.u32 %v2854, 4294901760
    %6041 = vmatmul.mubr.f32.gmra.mrb[0].mxu0 %v6040
    %v6042 = vpop.f32.mrb[0].mxu0
    %v6043 = vadd.f32 %v5585, %v6042
    %v6044 = vpop.f32.mrb[0].mxu0
    %6045 = vmatprep.mubr.f32.mxu0 0.0
    %v6046 = vand.u32 %v2857, 4294901760
    %6047 = vmatmul.mubr.f32.gmra.mrb[0].mxu0 %v6046
    %v6048 = vpop.f32.mrb[0].mxu0
    %v6049 = vadd.f32 %v5591, %v6048
    %v6050 = vpop.f32.mrb[0].mxu0
    %6051 = vmatprep.mubr.f32.mxu0 0.0
    %v6052 = vand.u32 %v2860, 4294901760
    %6053 = vmatmul.mubr.f32.gmra.mrb[0].mxu0 %v6052
    %v6054 = vpop.f32.mrb[0].mxu0
    %v6055 = vadd.f32 %v5597, %v6054
    %v6056 = vpop.f32.mrb[0].mxu0
    %6057 = vmatprep.mubr.f32.mxu0 0.0
    %v6058 = vand.u32 %v2863, 4294901760
    %6059 = vmatmul.mubr.f32.gmra.mrb[0].mxu0 %v6058
    %v6060 = vpop.f32.mrb[0].mxu0
    %v6061 = vadd.f32 %v5603, %v6060
    %v6062 = vpop.f32.mrb[0].mxu0
    %6063 = vmatprep.mubr.f32.mxu0 0.0
    %v6064 = vand.u32 %v2866, 4294901760
    %6065 = vmatmul.mubr.f32.gmra.mrb[0].mxu0 %v6064
    %v6066 = vpop.f32.mrb[0].mxu0
    %v6067 = vadd.f32 %v5609, %v6066
    %v6068 = vpop.f32.mrb[0].mxu0
    %6069 = vmatprep.mubr.f32.mxu0 0.0
    %v6070 = vand.u32 %v2869, 4294901760
    %6071 = vmatmul.mubr.f32.gmra.mrb[0].mxu0 %v6070
    %v6072 = vpop.f32.mrb[0].mxu0
    %v6073 = vadd.f32 %v5615, %v6072
    %v6074 = vpop.f32.mrb[0].mxu0
    %6075 = vmatprep.mubr.f32.mxu0 0.0
    %v6076 = vand.u32 %v2872, 4294901760
    %6077 = vmatmul.mubr.f32.gmra.mrb[0].mxu0 %v6076
    %v6078 = vpop.f32.mrb[0].mxu0
    %v6079 = vadd.f32 %v5621, %v6078
    %v6080 = vpop.f32.mrb[0].mxu0
    %6081 = vmatprep.mubr.f32.mxu0 0.0
    %v6082 = vand.u32 %v2875, 4294901760
    %6083 = vmatmul.mubr.f32.gmra.mrb[0].mxu0 %v6082
    %v6084 = vpop.f32.mrb[0].mxu0
    %v6085 = vadd.f32 %v5627, %v6084
    %v6086 = vpop.f32.mrb[0].mxu0
    %6087 = vmatprep.mubr.f32.mxu0 0.0
    %v6088 = vand.u32 %v2878, 4294901760
    %6089 = vmatmul.mubr.f32.gmra.mrb[0].mxu0 %v6088
    %v6090 = vpop.f32.mrb[0].mxu0
    %v6091 = vadd.f32 %v5633, %v6090
    %v6092 = vpop.f32.mrb[0].mxu0
    %6093 = vmatprep.mubr.f32.mxu0 0.0
    %v6094 = vand.u32 %v2881, 4294901760
    %6095 = vmatmul.mubr.f32.gmra.mrb[0].mxu0 %v6094
    %v6096 = vpop.f32.mrb[0].mxu0
    %v6097 = vadd.f32 %v5639, %v6096
    %v6098 = vpop.f32.mrb[0].mxu0
    %6099 = vmatprep.mubr.f32.mxu0 0.0
    %v6100 = vand.u32 %v2884, 4294901760
    %6101 = vmatmul.mubr.f32.gmra.mrb[0].mxu0 %v6100
    %v6102 = vpop.f32.mrb[0].mxu0
    %v6103 = vadd.f32 %v5645, %v6102
    %v6104 = vpop.f32.mrb[0].mxu0
    %6105 = vmatprep.mubr.f32.mxu0 0.0
    %v6106 = vand.u32 %v2887, 4294901760
    %6107 = vmatmul.mubr.f32.gmra.mrb[0].mxu0 %v6106
    %v6108 = vpop.f32.mrb[0].mxu0
    %v6109 = vadd.f32 %v5651, %v6108
    %v6110 = vpop.f32.mrb[0].mxu0
    %6111 = vmatprep.mubr.f32.mxu0 0.0
    %v6112 = vand.u32 %v2890, 4294901760
    %6113 = vmatmul.mubr.f32.gmra.mrb[0].mxu0 %v6112
    %v6114 = vpop.f32.mrb[0].mxu0
    %v6115 = vadd.f32 %v5657, %v6114
    %v6116 = vpop.f32.mrb[0].mxu0
    %6117 = vmatprep.mubr.f32.mxu0 0.0
    %v6118 = vand.u32 %v2893, 4294901760
    %6119 = vmatmul.mubr.f32.gmra.mrb[0].mxu0 %v6118
    %v6120 = vpop.f32.mrb[0].mxu0
    %v6121 = vadd.f32 %v5663, %v6120
    %v6122 = vpop.f32.mrb[0].mxu0
    %6123 = vmatprep.mubr.f32.mxu0 0.0
    %v6124 = vand.u32 %v2896, 4294901760
    %6125 = vmatmul.mubr.f32.gmra.mrb[0].mxu0 %v6124
    %v6126 = vpop.f32.mrb[0].mxu0
    %v6127 = vadd.f32 %v5669, %v6126
    %v6128 = vpop.f32.mrb[0].mxu0
    %6129 = vmatprep.mubr.f32.mxu0 0.0
    %v6130 = vand.u32 %v2899, 4294901760
    %6131 = vmatmul.mubr.f32.gmra.mrb[0].mxu0 %v6130
    %v6132 = vpop.f32.mrb[0].mxu0
    %v6133 = vadd.f32 %v5675, %v6132
    %v6134 = vpop.f32.mrb[0].mxu0
    %6135 = vmatprep.mubr.f32.mxu0 0.0
    %v6136 = vand.u32 %v2902, 4294901760
    %6137 = vmatmul.mubr.f32.gmra.mrb[0].mxu0 %v6136
    %v6138 = vpop.f32.mrb[0].mxu0
    %v6139 = vadd.f32 %v5681, %v6138
    %v6140 = vpop.f32.mrb[0].mxu0
    %6141 = vmatprep.mubr.f32.mxu0 0.0
    %v6142 = vand.u32 %v2905, 4294901760
    %6143 = vmatmul.mubr.f32.gmra.mrb[0].mxu0 %v6142
    %v6144 = vpop.f32.mrb[0].mxu0
    %v6145 = vadd.f32 %v5687, %v6144
    %v6146 = vpop.f32.mrb[0].mxu0
    %6147 = vmatprep.mubr.f32.mxu0 0.0
    %v6148 = vand.u32 %v2908, 4294901760
    %6149 = vmatmul.mubr.f32.gmra.mrb[0].mxu0 %v6148
    %v6150 = vpop.f32.mrb[0].mxu0
    %v6151 = vadd.f32 %v5693, %v6150
    %v6152 = vpop.f32.mrb[0].mxu0
    %6153 = vmatprep.mubr.f32.mxu0 0.0
    %v6154 = vand.u32 %v2911, 4294901760
    %6155 = vmatmul.mubr.f32.gmra.mrb[0].mxu0 %v6154
    %v6156 = vpop.f32.mrb[0].mxu0
    %v6157 = vadd.f32 %v5699, %v6156
    %v6158 = vpop.f32.mrb[0].mxu0
    %6159 = vmatprep.mubr.f32.mxu0 0.0
    %v6160 = vand.u32 %v2914, 4294901760
    %6161 = vmatmul.mubr.f32.gmra.mrb[0].mxu0 %v6160
    %v6162 = vpop.f32.mrb[0].mxu0
    %v6163 = vadd.f32 %v5705, %v6162
    %v6164 = vpop.f32.mrb[0].mxu0
    %6165 = vmatprep.mubr.f32.mxu0 0.0
    %v6166 = vand.u32 %v2917, 4294901760
    %6167 = vmatmul.mubr.f32.gmra.mrb[0].mxu0 %v6166
    %v6168 = vpop.f32.mrb[0].mxu0
    %v6169 = vadd.f32 %v5711, %v6168
    %v6170 = vpop.f32.mrb[0].mxu0
    %6171 = vmatprep.mubr.f32.mxu0 0.0
    %v6172 = vand.u32 %v2920, 4294901760
    %6173 = vmatmul.mubr.f32.gmra.mrb[0].mxu0 %v6172
    %v6174 = vpop.f32.mrb[0].mxu0
    %v6175 = vadd.f32 %v5717, %v6174
    %v6176 = vpop.f32.mrb[0].mxu0
    %6177 = vmatprep.mubr.f32.mxu0 0.0
    %v6178 = vand.u32 %v2923, 4294901760
    %6179 = vmatmul.mubr.f32.gmra.mrb[0].mxu0 %v6178
    %v6180 = vpop.f32.mrb[0].mxu0
    %v6181 = vadd.f32 %v5723, %v6180
    %v6182 = vpop.f32.mrb[0].mxu0
    %6183 = vdwg.mxu0
    %v6184 = vmax.f32 %v5803, 0.0
    %v6185 = vmax.f32 %v5809, 0.0
    %v6186 = vmax.f32 %v5815, 0.0
    %v6187 = vmax.f32 %v5821, 0.0
    %v6188 = vmax.f32 %v5827, 0.0
    %v6189 = vmax.f32 %v5833, 0.0
    %v6190 = vmax.f32 %v5839, 0.0
    %v6191 = vmax.f32 %v5845, 0.0
    %v6192 = vmax.f32 %v5851, 0.0
    %v6193 = vmax.f32 %v5857, 0.0
    %v6194 = vmax.f32 %v5863, 0.0
    %v6195 = vmax.f32 %v5869, 0.0
    %v6196 = vmax.f32 %v5875, 0.0
    %v6197 = vmax.f32 %v5881, 0.0
    %v6198 = vmax.f32 %v5887, 0.0
    %v6199 = vmax.f32 %v5893, 0.0
    %v6200 = vmax.f32 %v5899, 0.0
    %v6201 = vmax.f32 %v5905, 0.0
    %v6202 = vmax.f32 %v5911, 0.0
    %v6203 = vmax.f32 %v5917, 0.0
    %v6204 = vmax.f32 %v5923, 0.0
    %v6205 = vmax.f32 %v5929, 0.0
    %v6206 = vmax.f32 %v5935, 0.0
    %v6207 = vmax.f32 %v5941, 0.0
    %v6208 = vmax.f32 %v5947, 0.0
    %v6209 = vmax.f32 %v5953, 0.0
    %v6210 = vmax.f32 %v5959, 0.0
    %v6211 = vmax.f32 %v5965, 0.0
    %v6212 = vmax.f32 %v5971, 0.0
    %v6213 = vmax.f32 %v5977, 0.0
    %v6214 = vmax.f32 %v5983, 0.0
    %v6215 = vmax.f32 %v5989, 0.0
    %v6216 = vmax.f32 %v5995, 0.0
    %v6217 = vmax.f32 %v6001, 0.0
    %v6218 = vmax.f32 %v6007, 0.0
    %v6219 = vmax.f32 %v6013, 0.0
    %v6220 = vmax.f32 %v6019, 0.0
    %v6221 = vmax.f32 %v6025, 0.0
    %v6222 = vmax.f32 %v6031, 0.0
    %v6223 = vmax.f32 %v6037, 0.0
    %v6224 = vmax.f32 %v6043, 0.0
    %v6225 = vmax.f32 %v6049, 0.0
    %v6226 = vmax.f32 %v6055, 0.0
    %v6227 = vmax.f32 %v6061, 0.0
    %v6228 = vmax.f32 %v6067, 0.0
    %v6229 = vmax.f32 %v6073, 0.0
    %v6230 = vmax.f32 %v6079, 0.0
    %v6231 = vmax.f32 %v6085, 0.0
    %v6232 = vmax.f32 %v6091, 0.0
    %v6233 = vmax.f32 %v6097, 0.0
    %v6234 = vmax.f32 %v6103, 0.0
    %v6235 = vmax.f32 %v6109, 0.0
    %v6236 = vmax.f32 %v6115, 0.0
    %v6237 = vmax.f32 %v6121, 0.0
    %v6238 = vmax.f32 %v6127, 0.0
    %v6239 = vmax.f32 %v6133, 0.0
    %v6240 = vmax.f32 %v6139, 0.0
    %v6241 = vmax.f32 %v6145, 0.0
    %v6242 = vmax.f32 %v6151, 0.0
    %v6243 = vmax.f32 %v6157, 0.0
    %v6244 = vmax.f32 %v6163, 0.0
    %v6245 = vmax.f32 %v6169, 0.0
    %v6246 = vmax.f32 %v6175, 0.0
    %v6247 = vmax.f32 %v6181, 0.0
    %6248 = vst.msk [vmem:[%s40 + $0x8] sm:$0xff] %vm21, %v6184
    %6249 = vst.msk [vmem:[%s40 + $0x10] sm:$0xff] %vm21, %v6185
    %6250 = vst.msk [vmem:[%s40 + $0x28] sm:$0xff] %vm21, %v6186
    %6251 = vst.msk [vmem:[%s40 + $0x30] sm:$0xff] %vm21, %v6187
    %6252 = vst.msk [vmem:[%s40 + $0x48] sm:$0xff] %vm21, %v6188
    %6253 = vst.msk [vmem:[%s40 + $0x50] sm:$0xff] %vm21, %v6189
    %6254 = vst.msk [vmem:[%s40 + $0x68] sm:$0xff] %vm21, %v6190
    %6255 = vst.msk [vmem:[%s40 + $0x70] sm:$0xff] %vm21, %v6191
    %6256 = vst.msk [vmem:[%s40 + $0x88] sm:$0xff] %vm21, %v6192
    %6257 = vst.msk [vmem:[%s40 + $0x90] sm:$0xff] %vm21, %v6193
    %6258 = vst.msk [vmem:[%s40 + $0xa8] sm:$0xff] %vm21, %v6194
    %6259 = vst.msk [vmem:[%s40 + $0xb0] sm:$0xff] %vm21, %v6195
    %6260 = vst.msk [vmem:[%s40 + $0xc8] sm:$0xff] %vm21, %v6196
    %6261 = vst.msk [vmem:[%s40 + $0xd0] sm:$0xff] %vm21, %v6197
    %6262 = vst.msk [vmem:[%s40 + $0xe8] sm:$0xff] %vm21, %v6198
    %6263 = vst.msk [vmem:[%s40 + $0xf0] sm:$0xff] %vm21, %v6199
    %6264 = vst.msk [vmem:[%s40 + $0x108] sm:$0xff] %vm21, %v6200
    %6265 = vst.msk [vmem:[%s40 + $0x110] sm:$0xff] %vm21, %v6201
    %6266 = vst.msk [vmem:[%s40 + $0x128] sm:$0xff] %vm21, %v6202
    %6267 = vst.msk [vmem:[%s40 + $0x130] sm:$0xff] %vm21, %v6203
    %6268 = vst.msk [vmem:[%s40 + $0x148] sm:$0xff] %vm21, %v6204
    %6269 = vst.msk [vmem:[%s40 + $0x150] sm:$0xff] %vm21, %v6205
    %6270 = vst.msk [vmem:[%s40 + $0x168] sm:$0xff] %vm21, %v6206
    %6271 = vst.msk [vmem:[%s40 + $0x170] sm:$0xff] %vm21, %v6207
    %6272 = vst.msk [vmem:[%s40 + $0x188] sm:$0xff] %vm21, %v6208
    %6273 = vst.msk [vmem:[%s40 + $0x190] sm:$0xff] %vm21, %v6209
    %6274 = vst.msk [vmem:[%s40 + $0x1a8] sm:$0xff] %vm21, %v6210
    %6275 = vst.msk [vmem:[%s40 + $0x1b0] sm:$0xff] %vm21, %v6211
    %6276 = vst.msk [vmem:[%s40 + $0x1c8] sm:$0xff] %vm21, %v6212
    %6277 = vst.msk [vmem:[%s40 + $0x1d0] sm:$0xff] %vm21, %v6213
    %6278 = vst.msk [vmem:[%s40 + $0x1e8] sm:$0xff] %vm21, %v6214
    %6279 = vst.msk [vmem:[%s40 + $0x1f0] sm:$0xff] %vm21, %v6215
    %6280 = vst.msk [vmem:[%s40 + $0x248] sm:$0xff] %vm21, %v6216
    %6281 = vst.msk [vmem:[%s40 + $0x250] sm:$0xff] %vm21, %v6217
    %6282 = vst.msk [vmem:[%s40 + $0x268] sm:$0xff] %vm21, %v6218
    %6283 = vst.msk [vmem:[%s40 + $0x270] sm:$0xff] %vm21, %v6219
    %6284 = vst.msk [vmem:[%s40 + $0x288] sm:$0xff] %vm21, %v6220
    %6285 = vst.msk [vmem:[%s40 + $0x290] sm:$0xff] %vm21, %v6221
    %6286 = vst.msk [vmem:[%s40 + $0x2a8] sm:$0xff] %vm21, %v6222
    %6287 = vst.msk [vmem:[%s40 + $0x2b0] sm:$0xff] %vm21, %v6223
    %6288 = vst.msk [vmem:[%s40 + $0x2c8] sm:$0xff] %vm21, %v6224
    %6289 = vst.msk [vmem:[%s40 + $0x2d0] sm:$0xff] %vm21, %v6225
    %6290 = vst.msk [vmem:[%s40 + $0x2e8] sm:$0xff] %vm21, %v6226
    %6291 = vst.msk [vmem:[%s40 + $0x2f0] sm:$0xff] %vm21, %v6227
    %6292 = vst.msk [vmem:[%s40 + $0x308] sm:$0xff] %vm21, %v6228
    %6293 = vst.msk [vmem:[%s40 + $0x310] sm:$0xff] %vm21, %v6229
    %6294 = vst.msk [vmem:[%s40 + $0x328] sm:$0xff] %vm21, %v6230
    %6295 = vst.msk [vmem:[%s40 + $0x330] sm:$0xff] %vm21, %v6231
    %6296 = vst.msk [vmem:[%s40 + $0x348] sm:$0xff] %vm21, %v6232
    %6297 = vst.msk [vmem:[%s40 + $0x350] sm:$0xff] %vm21, %v6233
    %6298 = vst.msk [vmem:[%s40 + $0x368] sm:$0xff] %vm21, %v6234
    %6299 = vst.msk [vmem:[%s40 + $0x370] sm:$0xff] %vm21, %v6235
    %6300 = vst.msk [vmem:[%s40 + $0x388] sm:$0xff] %vm21, %v6236
    %6301 = vst.msk [vmem:[%s40 + $0x390] sm:$0xff] %vm21, %v6237
    %6302 = vst.msk [vmem:[%s40 + $0x3a8] sm:$0xff] %vm21, %v6238
    %6303 = vst.msk [vmem:[%s40 + $0x3b0] sm:$0xff] %vm21, %v6239
    %6304 = vst.msk [vmem:[%s40 + $0x3c8] sm:$0xff] %vm21, %v6240
    %6305 = vst.msk [vmem:[%s40 + $0x3d0] sm:$0xff] %vm21, %v6241
    %6306 = vst.msk [vmem:[%s40 + $0x3e8] sm:$0xff] %vm21, %v6242
    %6307 = vst.msk [vmem:[%s40 + $0x3f0] sm:$0xff] %vm21, %v6243
    %6308 = vst.msk [vmem:[%s40 + $0x408] sm:$0xff] %vm21, %v6244
    %6309 = vst.msk [vmem:[%s40 + $0x410] sm:$0xff] %vm21, %v6245
    %6310 = vst.msk [vmem:[%s40 + $0x428] sm:$0xff] %vm21, %v6246
    %6311 = vst.msk [vmem:[%s40 + $0x430] sm:$0xff] %vm21, %v6247
    %v6312 = vld [vmem:[#allocation2 + $0x7] sm:$0xff]
    %v6313 = vld [vmem:[#allocation2 + $0xf] sm:$0xff]
    %v6314 = vld [vmem:[#allocation2 + $0x27] sm:$0xff]
    %v6315 = vld [vmem:[#allocation2 + $0x2f] sm:$0xff]
    %v6316 = vld [vmem:[#allocation2 + $0x47] sm:$0xff]
    %v6317 = vld [vmem:[#allocation2 + $0x4f] sm:$0xff]
    %v6318 = vld [vmem:[#allocation2 + $0x67] sm:$0xff]
    %v6319 = vld [vmem:[#allocation2 + $0x6f] sm:$0xff]
    %v6320 = vld [vmem:[#allocation2 + $0x87] sm:$0xff]
    %v6321 = vld [vmem:[#allocation2 + $0x8f] sm:$0xff]
    %v6322 = vld [vmem:[#allocation2 + $0xa7] sm:$0xff]
    %v6323 = vld [vmem:[#allocation2 + $0xaf] sm:$0xff]
    %v6324 = vld [vmem:[#allocation2 + $0xc7] sm:$0xff]
    %v6325 = vld [vmem:[#allocation2 + $0xcf] sm:$0xff]
    %v6326 = vld [vmem:[#allocation2 + $0xe7] sm:$0xff]
    %v6327 = vld [vmem:[#allocation2 + $0xef] sm:$0xff]
    %v6328 = vld [vmem:[#allocation2 + $0x107] sm:$0xff]
    %v6329 = vld [vmem:[#allocation2 + $0x10f] sm:$0xff]
    %v6330 = vld [vmem:[#allocation2 + $0x127] sm:$0xff]
    %v6331 = vld [vmem:[#allocation2 + $0x12f] sm:$0xff]
    %v6332 = vld [vmem:[#allocation2 + $0x147] sm:$0xff]
    %v6333 = vld [vmem:[#allocation2 + $0x14f] sm:$0xff]
    %v6334 = vld [vmem:[#allocation2 + $0x167] sm:$0xff]
    %v6335 = vld [vmem:[#allocation2 + $0x16f] sm:$0xff]
    %v6336 = vld [vmem:[#allocation2 + $0x187] sm:$0xff]
    %v6337 = vld [vmem:[#allocation2 + $0x18f] sm:$0xff]
    %v6338 = vld [vmem:[#allocation2 + $0x1a7] sm:$0xff]
    %v6339 = vld [vmem:[#allocation2 + $0x1af] sm:$0xff]
    %v6340 = vld [vmem:[#allocation2 + $0x1c7] sm:$0xff]
    %v6341 = vld [vmem:[#allocation2 + $0x1cf] sm:$0xff]
    %v6342 = vld [vmem:[#allocation2 + $0x1e7] sm:$0xff]
    %v6343 = vld [vmem:[#allocation2 + $0x1ef] sm:$0xff]
    %v6344 = vld [vmem:[#allocation2 + $0x207] sm:$0xff]
    %v6345 = vld [vmem:[#allocation2 + $0x20f] sm:$0xff]
    %v6346 = vld [vmem:[#allocation2 + $0x227] sm:$0xff]
    %v6347 = vld [vmem:[#allocation2 + $0x22f] sm:$0xff]
    %v6348 = vld [vmem:[#allocation2 + $0x247] sm:$0xff]
    %v6349 = vld [vmem:[#allocation2 + $0x24f] sm:$0xff]
    %v6350 = vld [vmem:[#allocation2 + $0x267] sm:$0xff]
    %v6351 = vld [vmem:[#allocation2 + $0x26f] sm:$0xff]
    %v6352 = vld [vmem:[#allocation2 + $0x287] sm:$0xff]
    %v6353 = vld [vmem:[#allocation2 + $0x28f] sm:$0xff]
    %v6354 = vld [vmem:[#allocation2 + $0x2a7] sm:$0xff]
    %v6355 = vld [vmem:[#allocation2 + $0x2af] sm:$0xff]
    %v6356 = vld [vmem:[#allocation2 + $0x2c7] sm:$0xff]
    %v6357 = vld [vmem:[#allocation2 + $0x2cf] sm:$0xff]
    %v6358 = vld [vmem:[#allocation2 + $0x2e7] sm:$0xff]
    %v6359 = vld [vmem:[#allocation2 + $0x2ef] sm:$0xff]
    %v6360 = vld [vmem:[#allocation2 + $0x307] sm:$0xff]
    %v6361 = vld [vmem:[#allocation2 + $0x30f] sm:$0xff]
    %v6362 = vld [vmem:[#allocation2 + $0x327] sm:$0xff]
    %v6363 = vld [vmem:[#allocation2 + $0x32f] sm:$0xff]
    %v6364 = vld [vmem:[#allocation2 + $0x347] sm:$0xff]
    %v6365 = vld [vmem:[#allocation2 + $0x34f] sm:$0xff]
    %v6366 = vld [vmem:[#allocation2 + $0x367] sm:$0xff]
    %v6367 = vld [vmem:[#allocation2 + $0x36f] sm:$0xff]
    %v6368 = vld [vmem:[#allocation2 + $0x387] sm:$0xff]
    %v6369 = vld [vmem:[#allocation2 + $0x38f] sm:$0xff]
    %v6370 = vld [vmem:[#allocation2 + $0x3a7] sm:$0xff]
    %v6371 = vld [vmem:[#allocation2 + $0x3af] sm:$0xff]
    %v6372 = vld [vmem:[#allocation2 + $0x3c7] sm:$0xff]
    %v6373 = vld [vmem:[#allocation2 + $0x3cf] sm:$0xff]
    %v6374 = vld [vmem:[#allocation2 + $0x3e7] sm:$0xff]
    %v6375 = vld [vmem:[#allocation2 + $0x3ef] sm:$0xff]
    %v6376 = vld [vmem:[#allocation2 + $0x407] sm:$0xff]
    %v6377 = vld [vmem:[#allocation2 + $0x40f] sm:$0xff]
    %v6378 = vld [vmem:[#allocation2 + $0x427] sm:$0xff]
    %v6379 = vld [vmem:[#allocation2 + $0x42f] sm:$0xff]
    %v6380 = vld [vmem:[#allocation2 + $0x447] sm:$0xff]
    %v6381 = vld [vmem:[#allocation2 + $0x44f] sm:$0xff]
    %v6382 = vld [vmem:[#allocation2 + $0x467] sm:$0xff]
    %v6383 = vld [vmem:[#allocation2 + $0x46f] sm:$0xff]
    %v6384 = vld [vmem:[#allocation2 + $0x8] sm:$0xff]
    %v6385 = vld [vmem:[#allocation2 + $0x10] sm:$0xff]
    %v6386 = vld [vmem:[#allocation2 + $0x28] sm:$0xff]
    %v6387 = vld [vmem:[#allocation2 + $0x30] sm:$0xff]
    %v6388 = vld [vmem:[#allocation2 + $0x48] sm:$0xff]
    %v6389 = vld [vmem:[#allocation2 + $0x50] sm:$0xff]
    %v6390 = vld [vmem:[#allocation2 + $0x68] sm:$0xff]
    %v6391 = vld [vmem:[#allocation2 + $0x70] sm:$0xff]
    %v6392 = vld [vmem:[#allocation2 + $0x88] sm:$0xff]
    %v6393 = vld [vmem:[#allocation2 + $0x90] sm:$0xff]
    %v6394 = vld [vmem:[#allocation2 + $0xa8] sm:$0xff]
    %v6395 = vld [vmem:[#allocation2 + $0xb0] sm:$0xff]
    %v6396 = vld [vmem:[#allocation2 + $0xc8] sm:$0xff]
    %v6397 = vld [vmem:[#allocation2 + $0xd0] sm:$0xff]
    %v6398 = vld [vmem:[#allocation2 + $0xe8] sm:$0xff]
    %v6399 = vld [vmem:[#allocation2 + $0xf0] sm:$0xff]
    %v6400 = vld [vmem:[#allocation2 + $0x108] sm:$0xff]
    %v6401 = vld [vmem:[#allocation2 + $0x110] sm:$0xff]
    %v6402 = vld [vmem:[#allocation2 + $0x128] sm:$0xff]
    %v6403 = vld [vmem:[#allocation2 + $0x130] sm:$0xff]
    %v6404 = vld [vmem:[#allocation2 + $0x148] sm:$0xff]
    %v6405 = vld [vmem:[#allocation2 + $0x150] sm:$0xff]
    %v6406 = vld [vmem:[#allocation2 + $0x168] sm:$0xff]
    %v6407 = vld [vmem:[#allocation2 + $0x170] sm:$0xff]
    %v6408 = vld [vmem:[#allocation2 + $0x188] sm:$0xff]
    %v6409 = vld [vmem:[#allocation2 + $0x190] sm:$0xff]
    %v6410 = vld [vmem:[#allocation2 + $0x1a8] sm:$0xff]
    %v6411 = vld [vmem:[#allocation2 + $0x1b0] sm:$0xff]
    %v6412 = vld [vmem:[#allocation2 + $0x1c8] sm:$0xff]
    %v6413 = vld [vmem:[#allocation2 + $0x1d0] sm:$0xff]
    %v6414 = vld [vmem:[#allocation2 + $0x1e8] sm:$0xff]
    %v6415 = vld [vmem:[#allocation2 + $0x1f0] sm:$0xff]
    %v6416 = vld [vmem:[#allocation2 + $0x208] sm:$0xff]
    %v6417 = vld [vmem:[#allocation2 + $0x210] sm:$0xff]
    %v6418 = vld [vmem:[#allocation2 + $0x228] sm:$0xff]
    %v6419 = vld [vmem:[#allocation2 + $0x230] sm:$0xff]
    %v6420 = vld [vmem:[#allocation2 + $0x248] sm:$0xff]
    %v6421 = vld [vmem:[#allocation2 + $0x250] sm:$0xff]
    %v6422 = vld [vmem:[#allocation2 + $0x268] sm:$0xff]
    %v6423 = vld [vmem:[#allocation2 + $0x270] sm:$0xff]
    %v6424 = vld [vmem:[#allocation2 + $0x288] sm:$0xff]
    %v6425 = vld [vmem:[#allocation2 + $0x290] sm:$0xff]
    %v6426 = vld [vmem:[#allocation2 + $0x2a8] sm:$0xff]
    %v6427 = vld [vmem:[#allocation2 + $0x2b0] sm:$0xff]
    %v6428 = vld [vmem:[#allocation2 + $0x2c8] sm:$0xff]
    %v6429 = vld [vmem:[#allocation2 + $0x2d0] sm:$0xff]
    %v6430 = vld [vmem:[#allocation2 + $0x2e8] sm:$0xff]
    %v6431 = vld [vmem:[#allocation2 + $0x2f0] sm:$0xff]
    %v6432 = vld [vmem:[#allocation2 + $0x308] sm:$0xff]
    %v6433 = vld [vmem:[#allocation2 + $0x310] sm:$0xff]
    %v6434 = vld [vmem:[#allocation2 + $0x328] sm:$0xff]
    %v6435 = vld [vmem:[#allocation2 + $0x330] sm:$0xff]
    %v6436 = vld [vmem:[#allocation2 + $0x348] sm:$0xff]
    %v6437 = vld [vmem:[#allocation2 + $0x350] sm:$0xff]
    %v6438 = vld [vmem:[#allocation2 + $0x368] sm:$0xff]
    %v6439 = vld [vmem:[#allocation2 + $0x370] sm:$0xff]
    %v6440 = vld [vmem:[#allocation2 + $0x388] sm:$0xff]
    %v6441 = vld [vmem:[#allocation2 + $0x390] sm:$0xff]
    %v6442 = vld [vmem:[#allocation2 + $0x3a8] sm:$0xff]
    %v6443 = vld [vmem:[#allocation2 + $0x3b0] sm:$0xff]
    %v6444 = vld [vmem:[#allocation2 + $0x3c8] sm:$0xff]
    %v6445 = vld [vmem:[#allocation2 + $0x3d0] sm:$0xff]
    %v6446 = vld [vmem:[#allocation2 + $0x3e8] sm:$0xff]
    %v6447 = vld [vmem:[#allocation2 + $0x3f0] sm:$0xff]
    %v6448 = vld [vmem:[#allocation2 + $0x408] sm:$0xff]
    %v6449 = vld [vmem:[#allocation2 + $0x410] sm:$0xff]
    %v6450 = vld [vmem:[#allocation2 + $0x428] sm:$0xff]
    %v6451 = vld [vmem:[#allocation2 + $0x430] sm:$0xff]
    %v6452 = vld [vmem:[#allocation2 + $0x448] sm:$0xff]
    %v6453 = vld [vmem:[#allocation2 + $0x450] sm:$0xff]
    %v6454 = vld [vmem:[#allocation2 + $0x468] sm:$0xff]
    %v6455 = vld [vmem:[#allocation2 + $0x470] sm:$0xff]
    %v6456 = vld [vmem:[#allocation2 + $0x9] sm:$0xff]
    %v6457 = vld [vmem:[#allocation2 + $0x11] sm:$0xff]
    %v6458 = vld [vmem:[#allocation2 + $0x29] sm:$0xff]
    %v6459 = vld [vmem:[#allocation2 + $0x31] sm:$0xff]
    %v6460 = vld [vmem:[#allocation2 + $0x49] sm:$0xff]
    %v6461 = vld [vmem:[#allocation2 + $0x51] sm:$0xff]
    %v6462 = vld [vmem:[#allocation2 + $0x69] sm:$0xff]
    %v6463 = vld [vmem:[#allocation2 + $0x71] sm:$0xff]
    %v6464 = vld [vmem:[#allocation2 + $0x89] sm:$0xff]
    %v6465 = vld [vmem:[#allocation2 + $0x91] sm:$0xff]
    %v6466 = vld [vmem:[#allocation2 + $0xa9] sm:$0xff]
    %v6467 = vld [vmem:[#allocation2 + $0xb1] sm:$0xff]
    %v6468 = vld [vmem:[#allocation2 + $0xc9] sm:$0xff]
    %v6469 = vld [vmem:[#allocation2 + $0xd1] sm:$0xff]
    %v6470 = vld [vmem:[#allocation2 + $0xe9] sm:$0xff]
    %v6471 = vld [vmem:[#allocation2 + $0xf1] sm:$0xff]
    %v6472 = vld [vmem:[#allocation2 + $0x109] sm:$0xff]
    %v6473 = vld [vmem:[#allocation2 + $0x111] sm:$0xff]
    %v6474 = vld [vmem:[#allocation2 + $0x129] sm:$0xff]
    %v6475 = vld [vmem:[#allocation2 + $0x131] sm:$0xff]
    %v6476 = vld [vmem:[#allocation2 + $0x149] sm:$0xff]
    %v6477 = vld [vmem:[#allocation2 + $0x151] sm:$0xff]
    %v6478 = vld [vmem:[#allocation2 + $0x169] sm:$0xff]
    %v6479 = vld [vmem:[#allocation2 + $0x171] sm:$0xff]
    %v6480 = vld [vmem:[#allocation2 + $0x189] sm:$0xff]
    %v6481 = vld [vmem:[#allocation2 + $0x191] sm:$0xff]
    %v6482 = vld [vmem:[#allocation2 + $0x1a9] sm:$0xff]
    %v6483 = vld [vmem:[#allocation2 + $0x1b1] sm:$0xff]
    %v6484 = vld [vmem:[#allocation2 + $0x1c9] sm:$0xff]
    %v6485 = vld [vmem:[#allocation2 + $0x1d1] sm:$0xff]
    %v6486 = vld [vmem:[#allocation2 + $0x1e9] sm:$0xff]
    %v6487 = vld [vmem:[#allocation2 + $0x1f1] sm:$0xff]
    %v6488 = vld [vmem:[#allocation2 + $0x209] sm:$0xff]
    %v6489 = vld [vmem:[#allocation2 + $0x211] sm:$0xff]
    %v6490 = vld [vmem:[#allocation2 + $0x229] sm:$0xff]
    %v6491 = vld [vmem:[#allocation2 + $0x231] sm:$0xff]
    %v6492 = vld [vmem:[#allocation2 + $0x249] sm:$0xff]
    %v6493 = vld [vmem:[#allocation2 + $0x251] sm:$0xff]
    %v6494 = vld [vmem:[#allocation2 + $0x269] sm:$0xff]
    %v6495 = vld [vmem:[#allocation2 + $0x271] sm:$0xff]
    %v6496 = vld [vmem:[#allocation2 + $0x289] sm:$0xff]
    %v6497 = vld [vmem:[#allocation2 + $0x291] sm:$0xff]
    %v6498 = vld [vmem:[#allocation2 + $0x2a9] sm:$0xff]
    %v6499 = vld [vmem:[#allocation2 + $0x2b1] sm:$0xff]
    %v6500 = vld [vmem:[#allocation2 + $0x2c9] sm:$0xff]
    %v6501 = vld [vmem:[#allocation2 + $0x2d1] sm:$0xff]
    %v6502 = vld [vmem:[#allocation2 + $0x2e9] sm:$0xff]
    %v6503 = vld [vmem:[#allocation2 + $0x2f1] sm:$0xff]
    %v6504 = vld [vmem:[#allocation2 + $0x309] sm:$0xff]
    %v6505 = vld [vmem:[#allocation2 + $0x311] sm:$0xff]
    %v6506 = vld [vmem:[#allocation2 + $0x329] sm:$0xff]
    %v6507 = vld [vmem:[#allocation2 + $0x331] sm:$0xff]
    %v6508 = vld [vmem:[#allocation2 + $0x349] sm:$0xff]
    %v6509 = vld [vmem:[#allocation2 + $0x351] sm:$0xff]
    %v6510 = vld [vmem:[#allocation2 + $0x369] sm:$0xff]
    %v6511 = vld [vmem:[#allocation2 + $0x371] sm:$0xff]
    %v6512 = vld [vmem:[#allocation2 + $0x389] sm:$0xff]
    %v6513 = vld [vmem:[#allocation2 + $0x391] sm:$0xff]
    %v6514 = vld [vmem:[#allocation2 + $0x3a9] sm:$0xff]
    %v6515 = vld [vmem:[#allocation2 + $0x3b1] sm:$0xff]
    %v6516 = vld [vmem:[#allocation2 + $0x3c9] sm:$0xff]
    %v6517 = vld [vmem:[#allocation2 + $0x3d1] sm:$0xff]
    %v6518 = vld [vmem:[#allocation2 + $0x3e9] sm:$0xff]
    %v6519 = vld [vmem:[#allocation2 + $0x3f1] sm:$0xff]
    %v6520 = vld [vmem:[#allocation2 + $0x409] sm:$0xff]
    %v6521 = vld [vmem:[#allocation2 + $0x411] sm:$0xff]
    %v6522 = vld [vmem:[#allocation2 + $0x429] sm:$0xff]
    %v6523 = vld [vmem:[#allocation2 + $0x431] sm:$0xff]
    %v6524 = vld [vmem:[#allocation2 + $0x449] sm:$0xff]
    %v6525 = vld [vmem:[#allocation2 + $0x451] sm:$0xff]
    %v6526 = vld [vmem:[#allocation2 + $0x469] sm:$0xff]
    %v6527 = vld [vmem:[#allocation2 + $0x471] sm:$0xff]
    %6592 = vrot.lane.b32.xlu0 %v6384, 8
    %v6593 = vpop.permute.xlu0 %6592
    %6594 = vrot.lane.b32.xlu0 %v6385, 8
    %v6595 = vpop.permute.xlu0 %6594
    %6596 = vrot.lane.b32.xlu0 %v6386, 8
    %v6597 = vpop.permute.xlu0 %6596
    %6598 = vrot.lane.b32.xlu0 %v6387, 8
    %v6599 = vpop.permute.xlu0 %6598
    %6600 = vrot.lane.b32.xlu0 %v6388, 8
    %v6601 = vpop.permute.xlu0 %6600
    %6602 = vrot.lane.b32.xlu0 %v6389, 8
    %v6603 = vpop.permute.xlu0 %6602
    %6604 = vrot.lane.b32.xlu0 %v6390, 8
    %v6605 = vpop.permute.xlu0 %6604
    %6606 = vrot.lane.b32.xlu0 %v6391, 8
    %v6607 = vpop.permute.xlu0 %6606
    %6608 = vrot.lane.b32.xlu0 %v6392, 8
    %v6609 = vpop.permute.xlu0 %6608
    %6610 = vrot.lane.b32.xlu0 %v6393, 8
    %v6611 = vpop.permute.xlu0 %6610
    %6612 = vrot.lane.b32.xlu0 %v6394, 8
    %v6613 = vpop.permute.xlu0 %6612
    %6614 = vrot.lane.b32.xlu0 %v6395, 8
    %v6615 = vpop.permute.xlu0 %6614
    %6616 = vrot.lane.b32.xlu0 %v6396, 8
    %v6617 = vpop.permute.xlu0 %6616
    %6618 = vrot.lane.b32.xlu0 %v6397, 8
    %v6619 = vpop.permute.xlu0 %6618
    %6620 = vrot.lane.b32.xlu0 %v6398, 8
    %v6621 = vpop.permute.xlu0 %6620
    %6622 = vrot.lane.b32.xlu0 %v6399, 8
    %v6623 = vpop.permute.xlu0 %6622
    %6624 = vrot.lane.b32.xlu0 %v6400, 8
    %v6625 = vpop.permute.xlu0 %6624
    %6626 = vrot.lane.b32.xlu0 %v6401, 8
    %v6627 = vpop.permute.xlu0 %6626
    %6628 = vrot.lane.b32.xlu0 %v6402, 8
    %v6629 = vpop.permute.xlu0 %6628
    %6630 = vrot.lane.b32.xlu0 %v6403, 8
    %v6631 = vpop.permute.xlu0 %6630
    %6632 = vrot.lane.b32.xlu0 %v6404, 8
    %v6633 = vpop.permute.xlu0 %6632
    %6634 = vrot.lane.b32.xlu0 %v6405, 8
    %v6635 = vpop.permute.xlu0 %6634
    %6636 = vrot.lane.b32.xlu0 %v6406, 8
    %v6637 = vpop.permute.xlu0 %6636
    %6638 = vrot.lane.b32.xlu0 %v6407, 8
    %v6639 = vpop.permute.xlu0 %6638
    %6640 = vrot.lane.b32.xlu0 %v6408, 8
    %v6641 = vpop.permute.xlu0 %6640
    %6642 = vrot.lane.b32.xlu0 %v6409, 8
    %v6643 = vpop.permute.xlu0 %6642
    %6644 = vrot.lane.b32.xlu0 %v6410, 8
    %v6645 = vpop.permute.xlu0 %6644
    %6646 = vrot.lane.b32.xlu0 %v6411, 8
    %v6647 = vpop.permute.xlu0 %6646
    %6648 = vrot.lane.b32.xlu0 %v6412, 8
    %v6649 = vpop.permute.xlu0 %6648
    %6650 = vrot.lane.b32.xlu0 %v6413, 8
    %v6651 = vpop.permute.xlu0 %6650
    %6652 = vrot.lane.b32.xlu0 %v6414, 8
    %v6653 = vpop.permute.xlu0 %6652
    %6654 = vrot.lane.b32.xlu0 %v6415, 8
    %v6655 = vpop.permute.xlu0 %6654
    %6656 = vrot.lane.b32.xlu0 %v6420, 8
    %v6657 = vpop.permute.xlu0 %6656
    %6658 = vrot.lane.b32.xlu0 %v6421, 8
    %v6659 = vpop.permute.xlu0 %6658
    %6660 = vrot.lane.b32.xlu0 %v6422, 8
    %v6661 = vpop.permute.xlu0 %6660
    %6662 = vrot.lane.b32.xlu0 %v6423, 8
    %v6663 = vpop.permute.xlu0 %6662
    %6664 = vrot.lane.b32.xlu0 %v6424, 8
    %v6665 = vpop.permute.xlu0 %6664
    %6666 = vrot.lane.b32.xlu0 %v6425, 8
    %v6667 = vpop.permute.xlu0 %6666
    %6668 = vrot.lane.b32.xlu0 %v6426, 8
    %v6669 = vpop.permute.xlu0 %6668
    %6670 = vrot.lane.b32.xlu0 %v6427, 8
    %v6671 = vpop.permute.xlu0 %6670
    %6672 = vrot.lane.b32.xlu0 %v6428, 8
    %v6673 = vpop.permute.xlu0 %6672
    %6674 = vrot.lane.b32.xlu0 %v6429, 8
    %v6675 = vpop.permute.xlu0 %6674
    %6676 = vrot.lane.b32.xlu0 %v6430, 8
    %v6677 = vpop.permute.xlu0 %6676
    %6678 = vrot.lane.b32.xlu0 %v6431, 8
    %v6679 = vpop.permute.xlu0 %6678
    %6680 = vrot.lane.b32.xlu0 %v6432, 8
    %v6681 = vpop.permute.xlu0 %6680
    %6682 = vrot.lane.b32.xlu0 %v6433, 8
    %v6683 = vpop.permute.xlu0 %6682
    %6684 = vrot.lane.b32.xlu0 %v6434, 8
    %v6685 = vpop.permute.xlu0 %6684
    %6686 = vrot.lane.b32.xlu0 %v6435, 8
    %v6687 = vpop.permute.xlu0 %6686
    %6688 = vrot.lane.b32.xlu0 %v6436, 8
    %v6689 = vpop.permute.xlu0 %6688
    %6690 = vrot.lane.b32.xlu0 %v6437, 8
    %v6691 = vpop.permute.xlu0 %6690
    %6692 = vrot.lane.b32.xlu0 %v6438, 8
    %v6693 = vpop.permute.xlu0 %6692
    %6694 = vrot.lane.b32.xlu0 %v6439, 8
    %v6695 = vpop.permute.xlu0 %6694
    %6696 = vrot.lane.b32.xlu0 %v6440, 8
    %v6697 = vpop.permute.xlu0 %6696
    %6698 = vrot.lane.b32.xlu0 %v6441, 8
    %v6699 = vpop.permute.xlu0 %6698
    %6700 = vrot.lane.b32.xlu0 %v6442, 8
    %v6701 = vpop.permute.xlu0 %6700
    %6702 = vrot.lane.b32.xlu0 %v6443, 8
    %v6703 = vpop.permute.xlu0 %6702
    %6704 = vrot.lane.b32.xlu0 %v6444, 8
    %v6705 = vpop.permute.xlu0 %6704
    %6706 = vrot.lane.b32.xlu0 %v6445, 8
    %v6707 = vpop.permute.xlu0 %6706
    %6708 = vrot.lane.b32.xlu0 %v6446, 8
    %v6709 = vpop.permute.xlu0 %6708
    %6710 = vrot.lane.b32.xlu0 %v6447, 8
    %v6711 = vpop.permute.xlu0 %6710
    %6712 = vrot.lane.b32.xlu0 %v6448, 8
    %v6713 = vpop.permute.xlu0 %6712
    %6714 = vrot.lane.b32.xlu0 %v6449, 8
    %v6715 = vpop.permute.xlu0 %6714
    %6716 = vrot.lane.b32.xlu0 %v6450, 8
    %v6717 = vpop.permute.xlu0 %6716
    %6718 = vrot.lane.b32.xlu0 %v6451, 8
    %v6719 = vpop.permute.xlu0 %6718
    %6848 = vrot.lane.b32.xlu0 %v6456, 16
    %v6849 = vpop.permute.xlu0 %6848
    %6850 = vrot.lane.b32.xlu0 %v6457, 16
    %v6851 = vpop.permute.xlu0 %6850
    %6852 = vrot.lane.b32.xlu0 %v6458, 16
    %v6853 = vpop.permute.xlu0 %6852
    %6854 = vrot.lane.b32.xlu0 %v6459, 16
    %v6855 = vpop.permute.xlu0 %6854
    %6856 = vrot.lane.b32.xlu0 %v6460, 16
    %v6857 = vpop.permute.xlu0 %6856
    %6858 = vrot.lane.b32.xlu0 %v6461, 16
    %v6859 = vpop.permute.xlu0 %6858
    %6860 = vrot.lane.b32.xlu0 %v6462, 16
    %v6861 = vpop.permute.xlu0 %6860
    %6862 = vrot.lane.b32.xlu0 %v6463, 16
    %v6863 = vpop.permute.xlu0 %6862
    %6864 = vrot.lane.b32.xlu0 %v6464, 16
    %v6865 = vpop.permute.xlu0 %6864
    %6866 = vrot.lane.b32.xlu0 %v6465, 16
    %v6867 = vpop.permute.xlu0 %6866
    %6868 = vrot.lane.b32.xlu0 %v6466, 16
    %v6869 = vpop.permute.xlu0 %6868
    %6870 = vrot.lane.b32.xlu0 %v6467, 16
    %v6871 = vpop.permute.xlu0 %6870
    %6872 = vrot.lane.b32.xlu0 %v6468, 16
    %v6873 = vpop.permute.xlu0 %6872
    %6874 = vrot.lane.b32.xlu0 %v6469, 16
    %v6875 = vpop.permute.xlu0 %6874
    %6876 = vrot.lane.b32.xlu0 %v6470, 16
    %v6877 = vpop.permute.xlu0 %6876
    %6878 = vrot.lane.b32.xlu0 %v6471, 16
    %v6879 = vpop.permute.xlu0 %6878
    %6880 = vrot.lane.b32.xlu0 %v6472, 16
    %v6881 = vpop.permute.xlu0 %6880
    %6882 = vrot.lane.b32.xlu0 %v6473, 16
    %v6883 = vpop.permute.xlu0 %6882
    %6884 = vrot.lane.b32.xlu0 %v6474, 16
    %v6885 = vpop.permute.xlu0 %6884
    %6886 = vrot.lane.b32.xlu0 %v6475, 16
    %v6887 = vpop.permute.xlu0 %6886
    %6888 = vrot.lane.b32.xlu0 %v6476, 16
    %v6889 = vpop.permute.xlu0 %6888
    %6890 = vrot.lane.b32.xlu0 %v6477, 16
    %v6891 = vpop.permute.xlu0 %6890
    %6892 = vrot.lane.b32.xlu0 %v6478, 16
    %v6893 = vpop.permute.xlu0 %6892
    %6894 = vrot.lane.b32.xlu0 %v6479, 16
    %v6895 = vpop.permute.xlu0 %6894
    %6896 = vrot.lane.b32.xlu0 %v6480, 16
    %v6897 = vpop.permute.xlu0 %6896
    %6898 = vrot.lane.b32.xlu0 %v6481, 16
    %v6899 = vpop.permute.xlu0 %6898
    %6900 = vrot.lane.b32.xlu0 %v6482, 16
    %v6901 = vpop.permute.xlu0 %6900
    %6902 = vrot.lane.b32.xlu0 %v6483, 16
    %v6903 = vpop.permute.xlu0 %6902
    %6904 = vrot.lane.b32.xlu0 %v6484, 16
    %v6905 = vpop.permute.xlu0 %6904
    %6906 = vrot.lane.b32.xlu0 %v6485, 16
    %v6907 = vpop.permute.xlu0 %6906
    %6908 = vrot.lane.b32.xlu0 %v6486, 16
    %v6909 = vpop.permute.xlu0 %6908
    %6910 = vrot.lane.b32.xlu0 %v6487, 16
    %v6911 = vpop.permute.xlu0 %6910
    %6912 = vrot.lane.b32.xlu0 %v6492, 16
    %v6913 = vpop.permute.xlu0 %6912
    %6914 = vrot.lane.b32.xlu0 %v6493, 16
    %v6915 = vpop.permute.xlu0 %6914
    %6916 = vrot.lane.b32.xlu0 %v6494, 16
    %v6917 = vpop.permute.xlu0 %6916
    %6918 = vrot.lane.b32.xlu0 %v6495, 16
    %v6919 = vpop.permute.xlu0 %6918
    %6920 = vrot.lane.b32.xlu0 %v6496, 16
    %v6921 = vpop.permute.xlu0 %6920
    %6922 = vrot.lane.b32.xlu0 %v6497, 16
    %v6923 = vpop.permute.xlu0 %6922
    %6924 = vrot.lane.b32.xlu0 %v6498, 16
    %v6925 = vpop.permute.xlu0 %6924
    %6926 = vrot.lane.b32.xlu0 %v6499, 16
    %v6927 = vpop.permute.xlu0 %6926
    %6928 = vrot.lane.b32.xlu0 %v6500, 16
    %v6929 = vpop.permute.xlu0 %6928
    %6930 = vrot.lane.b32.xlu0 %v6501, 16
    %v6931 = vpop.permute.xlu0 %6930
    %6932 = vrot.lane.b32.xlu0 %v6502, 16
    %v6933 = vpop.permute.xlu0 %6932
    %6934 = vrot.lane.b32.xlu0 %v6503, 16
    %v6935 = vpop.permute.xlu0 %6934
    %6936 = vrot.lane.b32.xlu0 %v6504, 16
    %v6937 = vpop.permute.xlu0 %6936
    %6938 = vrot.lane.b32.xlu0 %v6505, 16
    %v6939 = vpop.permute.xlu0 %6938
    %6940 = vrot.lane.b32.xlu0 %v6506, 16
    %v6941 = vpop.permute.xlu0 %6940
    %6942 = vrot.lane.b32.xlu0 %v6507, 16
    %v6943 = vpop.permute.xlu0 %6942
    %6944 = vrot.lane.b32.xlu0 %v6508, 16
    %v6945 = vpop.permute.xlu0 %6944
    %6946 = vrot.lane.b32.xlu0 %v6509, 16
    %v6947 = vpop.permute.xlu0 %6946
    %6948 = vrot.lane.b32.xlu0 %v6510, 16
    %v6949 = vpop.permute.xlu0 %6948
    %6950 = vrot.lane.b32.xlu0 %v6511, 16
    %v6951 = vpop.permute.xlu0 %6950
    %6952 = vrot.lane.b32.xlu0 %v6512, 16
    %v6953 = vpop.permute.xlu0 %6952
    %6954 = vrot.lane.b32.xlu0 %v6513, 16
    %v6955 = vpop.permute.xlu0 %6954
    %6956 = vrot.lane.b32.xlu0 %v6514, 16
    %v6957 = vpop.permute.xlu0 %6956
    %6958 = vrot.lane.b32.xlu0 %v6515, 16
    %v6959 = vpop.permute.xlu0 %6958
    %6960 = vrot.lane.b32.xlu0 %v6516, 16
    %v6961 = vpop.permute.xlu0 %6960
    %6962 = vrot.lane.b32.xlu0 %v6517, 16
    %v6963 = vpop.permute.xlu0 %6962
    %6964 = vrot.lane.b32.xlu0 %v6518, 16
    %v6965 = vpop.permute.xlu0 %6964
    %6966 = vrot.lane.b32.xlu0 %v6519, 16
    %v6967 = vpop.permute.xlu0 %6966
    %6968 = vrot.lane.b32.xlu0 %v6520, 16
    %v6969 = vpop.permute.xlu0 %6968
    %6970 = vrot.lane.b32.xlu0 %v6521, 16
    %v6971 = vpop.permute.xlu0 %6970
    %6972 = vrot.lane.b32.xlu0 %v6522, 16
    %v6973 = vpop.permute.xlu0 %6972
    %6974 = vrot.lane.b32.xlu0 %v6523, 16
    %v6975 = vpop.permute.xlu0 %6974
    %7104 = vrot.lane.b32.xlu0 %v6314, 24
    %v7105 = vpop.permute.xlu0 %7104
    %7106 = vrot.lane.b32.xlu0 %v6315, 24
    %v7107 = vpop.permute.xlu0 %7106
    %7108 = vrot.lane.b32.xlu0 %v6316, 24
    %v7109 = vpop.permute.xlu0 %7108
    %7110 = vrot.lane.b32.xlu0 %v6317, 24
    %v7111 = vpop.permute.xlu0 %7110
    %7112 = vrot.lane.b32.xlu0 %v6318, 24
    %v7113 = vpop.permute.xlu0 %7112
    %7114 = vrot.lane.b32.xlu0 %v6319, 24
    %v7115 = vpop.permute.xlu0 %7114
    %7116 = vrot.lane.b32.xlu0 %v6320, 24
    %v7117 = vpop.permute.xlu0 %7116
    %7118 = vrot.lane.b32.xlu0 %v6321, 24
    %v7119 = vpop.permute.xlu0 %7118
    %7120 = vrot.lane.b32.xlu0 %v6322, 24
    %v7121 = vpop.permute.xlu0 %7120
    %7122 = vrot.lane.b32.xlu0 %v6323, 24
    %v7123 = vpop.permute.xlu0 %7122
    %7124 = vrot.lane.b32.xlu0 %v6324, 24
    %v7125 = vpop.permute.xlu0 %7124
    %7126 = vrot.lane.b32.xlu0 %v6325, 24
    %v7127 = vpop.permute.xlu0 %7126
    %7128 = vrot.lane.b32.xlu0 %v6326, 24
    %v7129 = vpop.permute.xlu0 %7128
    %7130 = vrot.lane.b32.xlu0 %v6327, 24
    %v7131 = vpop.permute.xlu0 %7130
    %7132 = vrot.lane.b32.xlu0 %v6328, 24
    %v7133 = vpop.permute.xlu0 %7132
    %7134 = vrot.lane.b32.xlu0 %v6329, 24
    %v7135 = vpop.permute.xlu0 %7134
    %7136 = vrot.lane.b32.xlu0 %v6330, 24
    %v7137 = vpop.permute.xlu0 %7136
    %7138 = vrot.lane.b32.xlu0 %v6331, 24
    %v7139 = vpop.permute.xlu0 %7138
    %7140 = vrot.lane.b32.xlu0 %v6332, 24
    %v7141 = vpop.permute.xlu0 %7140
    %7142 = vrot.lane.b32.xlu0 %v6333, 24
    %v7143 = vpop.permute.xlu0 %7142
    %7144 = vrot.lane.b32.xlu0 %v6334, 24
    %v7145 = vpop.permute.xlu0 %7144
    %7146 = vrot.lane.b32.xlu0 %v6335, 24
    %v7147 = vpop.permute.xlu0 %7146
    %7148 = vrot.lane.b32.xlu0 %v6336, 24
    %v7149 = vpop.permute.xlu0 %7148
    %7150 = vrot.lane.b32.xlu0 %v6337, 24
    %v7151 = vpop.permute.xlu0 %7150
    %7152 = vrot.lane.b32.xlu0 %v6338, 24
    %v7153 = vpop.permute.xlu0 %7152
    %7154 = vrot.lane.b32.xlu0 %v6339, 24
    %v7155 = vpop.permute.xlu0 %7154
    %7156 = vrot.lane.b32.xlu0 %v6340, 24
    %v7157 = vpop.permute.xlu0 %7156
    %7158 = vrot.lane.b32.xlu0 %v6341, 24
    %v7159 = vpop.permute.xlu0 %7158
    %7160 = vrot.lane.b32.xlu0 %v6342, 24
    %v7161 = vpop.permute.xlu0 %7160
    %7162 = vrot.lane.b32.xlu0 %v6343, 24
    %v7163 = vpop.permute.xlu0 %7162
    %7164 = vrot.lane.b32.xlu0 %v6344, 24
    %v7165 = vpop.permute.xlu0 %7164
    %7166 = vrot.lane.b32.xlu0 %v6345, 24
    %v7167 = vpop.permute.xlu0 %7166
    %7168 = vrot.lane.b32.xlu0 %v6350, 24
    %v7169 = vpop.permute.xlu0 %7168
    %7170 = vrot.lane.b32.xlu0 %v6351, 24
    %v7171 = vpop.permute.xlu0 %7170
    %7172 = vrot.lane.b32.xlu0 %v6352, 24
    %v7173 = vpop.permute.xlu0 %7172
    %7174 = vrot.lane.b32.xlu0 %v6353, 24
    %v7175 = vpop.permute.xlu0 %7174
    %7176 = vrot.lane.b32.xlu0 %v6354, 24
    %v7177 = vpop.permute.xlu0 %7176
    %7178 = vrot.lane.b32.xlu0 %v6355, 24
    %v7179 = vpop.permute.xlu0 %7178
    %7180 = vrot.lane.b32.xlu0 %v6356, 24
    %v7181 = vpop.permute.xlu0 %7180
    %7182 = vrot.lane.b32.xlu0 %v6357, 24
    %v7183 = vpop.permute.xlu0 %7182
    %7184 = vrot.lane.b32.xlu0 %v6358, 24
    %v7185 = vpop.permute.xlu0 %7184
    %7186 = vrot.lane.b32.xlu0 %v6359, 24
    %v7187 = vpop.permute.xlu0 %7186
    %7188 = vrot.lane.b32.xlu0 %v6360, 24
    %v7189 = vpop.permute.xlu0 %7188
    %7190 = vrot.lane.b32.xlu0 %v6361, 24
    %v7191 = vpop.permute.xlu0 %7190
    %7192 = vrot.lane.b32.xlu0 %v6362, 24
    %v7193 = vpop.permute.xlu0 %7192
    %7194 = vrot.lane.b32.xlu0 %v6363, 24
    %v7195 = vpop.permute.xlu0 %7194
    %7196 = vrot.lane.b32.xlu0 %v6364, 24
    %v7197 = vpop.permute.xlu0 %7196
    %7198 = vrot.lane.b32.xlu0 %v6365, 24
    %v7199 = vpop.permute.xlu0 %7198
    %7200 = vrot.lane.b32.xlu0 %v6366, 24
    %v7201 = vpop.permute.xlu0 %7200
    %7202 = vrot.lane.b32.xlu0 %v6367, 24
    %v7203 = vpop.permute.xlu0 %7202
    %7204 = vrot.lane.b32.xlu0 %v6368, 24
    %v7205 = vpop.permute.xlu0 %7204
    %7206 = vrot.lane.b32.xlu0 %v6369, 24
    %v7207 = vpop.permute.xlu0 %7206
    %7208 = vrot.lane.b32.xlu0 %v6370, 24
    %v7209 = vpop.permute.xlu0 %7208
    %7210 = vrot.lane.b32.xlu0 %v6371, 24
    %v7211 = vpop.permute.xlu0 %7210
    %7212 = vrot.lane.b32.xlu0 %v6372, 24
    %v7213 = vpop.permute.xlu0 %7212
    %7214 = vrot.lane.b32.xlu0 %v6373, 24
    %v7215 = vpop.permute.xlu0 %7214
    %7216 = vrot.lane.b32.xlu0 %v6374, 24
    %v7217 = vpop.permute.xlu0 %7216
    %7218 = vrot.lane.b32.xlu0 %v6375, 24
    %v7219 = vpop.permute.xlu0 %7218
    %7220 = vrot.lane.b32.xlu0 %v6376, 24
    %v7221 = vpop.permute.xlu0 %7220
    %7222 = vrot.lane.b32.xlu0 %v6377, 24
    %v7223 = vpop.permute.xlu0 %7222
    %7224 = vrot.lane.b32.xlu0 %v6378, 24
    %v7225 = vpop.permute.xlu0 %7224
    %7226 = vrot.lane.b32.xlu0 %v6379, 24
    %v7227 = vpop.permute.xlu0 %7226
    %7228 = vrot.lane.b32.xlu0 %v6380, 24
    %v7229 = vpop.permute.xlu0 %7228
    %7230 = vrot.lane.b32.xlu0 %v6381, 24
    %v7231 = vpop.permute.xlu0 %7230
    %7300 = vrot.lane.b32.xlu0 %v6386, 32
    %v7301 = vpop.permute.xlu0 %7300
    %7302 = vrot.lane.b32.xlu0 %v6387, 32
    %v7303 = vpop.permute.xlu0 %7302
    %7304 = vrot.lane.b32.xlu0 %v6388, 32
    %v7305 = vpop.permute.xlu0 %7304
    %7306 = vrot.lane.b32.xlu0 %v6389, 32
    %v7307 = vpop.permute.xlu0 %7306
    %7308 = vrot.lane.b32.xlu0 %v6390, 32
    %v7309 = vpop.permute.xlu0 %7308
    %7310 = vrot.lane.b32.xlu0 %v6391, 32
    %v7311 = vpop.permute.xlu0 %7310
    %7312 = vrot.lane.b32.xlu0 %v6392, 32
    %v7313 = vpop.permute.xlu0 %7312
    %7314 = vrot.lane.b32.xlu0 %v6393, 32
    %v7315 = vpop.permute.xlu0 %7314
    %7316 = vrot.lane.b32.xlu0 %v6394, 32
    %v7317 = vpop.permute.xlu0 %7316
    %7318 = vrot.lane.b32.xlu0 %v6395, 32
    %v7319 = vpop.permute.xlu0 %7318
    %7320 = vrot.lane.b32.xlu0 %v6396, 32
    %v7321 = vpop.permute.xlu0 %7320
    %7322 = vrot.lane.b32.xlu0 %v6397, 32
    %v7323 = vpop.permute.xlu0 %7322
    %7324 = vrot.lane.b32.xlu0 %v6398, 32
    %v7325 = vpop.permute.xlu0 %7324
    %7326 = vrot.lane.b32.xlu0 %v6399, 32
    %v7327 = vpop.permute.xlu0 %7326
    %7328 = vrot.lane.b32.xlu0 %v6400, 32
    %v7329 = vpop.permute.xlu0 %7328
    %7330 = vrot.lane.b32.xlu0 %v6401, 32
    %v7331 = vpop.permute.xlu0 %7330
    %7332 = vrot.lane.b32.xlu0 %v6402, 32
    %v7333 = vpop.permute.xlu0 %7332
    %7334 = vrot.lane.b32.xlu0 %v6403, 32
    %v7335 = vpop.permute.xlu0 %7334
    %7336 = vrot.lane.b32.xlu0 %v6404, 32
    %v7337 = vpop.permute.xlu0 %7336
    %7338 = vrot.lane.b32.xlu0 %v6405, 32
    %v7339 = vpop.permute.xlu0 %7338
    %7340 = vrot.lane.b32.xlu0 %v6406, 32
    %v7341 = vpop.permute.xlu0 %7340
    %7342 = vrot.lane.b32.xlu0 %v6407, 32
    %v7343 = vpop.permute.xlu0 %7342
    %7344 = vrot.lane.b32.xlu0 %v6408, 32
    %v7345 = vpop.permute.xlu0 %7344
    %7346 = vrot.lane.b32.xlu0 %v6409, 32
    %v7347 = vpop.permute.xlu0 %7346
    %7348 = vrot.lane.b32.xlu0 %v6410, 32
    %v7349 = vpop.permute.xlu0 %7348
    %7350 = vrot.lane.b32.xlu0 %v6411, 32
    %v7351 = vpop.permute.xlu0 %7350
    %7352 = vrot.lane.b32.xlu0 %v6412, 32
    %v7353 = vpop.permute.xlu0 %7352
    %7354 = vrot.lane.b32.xlu0 %v6413, 32
    %v7355 = vpop.permute.xlu0 %7354
    %7356 = vrot.lane.b32.xlu0 %v6414, 32
    %v7357 = vpop.permute.xlu0 %7356
    %7358 = vrot.lane.b32.xlu0 %v6415, 32
    %v7359 = vpop.permute.xlu0 %7358
    %7360 = vrot.lane.b32.xlu0 %v6416, 32
    %v7361 = vpop.permute.xlu0 %7360
    %7362 = vrot.lane.b32.xlu0 %v6417, 32
    %v7363 = vpop.permute.xlu0 %7362
    %7364 = vrot.lane.b32.xlu0 %v6422, 32
    %v7365 = vpop.permute.xlu0 %7364
    %7366 = vrot.lane.b32.xlu0 %v6423, 32
    %v7367 = vpop.permute.xlu0 %7366
    %7368 = vrot.lane.b32.xlu0 %v6424, 32
    %v7369 = vpop.permute.xlu0 %7368
    %7370 = vrot.lane.b32.xlu0 %v6425, 32
    %v7371 = vpop.permute.xlu0 %7370
    %7372 = vrot.lane.b32.xlu0 %v6426, 32
    %v7373 = vpop.permute.xlu0 %7372
    %7374 = vrot.lane.b32.xlu0 %v6427, 32
    %v7375 = vpop.permute.xlu0 %7374
    %7376 = vrot.lane.b32.xlu0 %v6428, 32
    %v7377 = vpop.permute.xlu0 %7376
    %7378 = vrot.lane.b32.xlu0 %v6429, 32
    %v7379 = vpop.permute.xlu0 %7378
    %7380 = vrot.lane.b32.xlu0 %v6430, 32
    %v7381 = vpop.permute.xlu0 %7380
    %7382 = vrot.lane.b32.xlu0 %v6431, 32
    %v7383 = vpop.permute.xlu0 %7382
    %7384 = vrot.lane.b32.xlu0 %v6432, 32
    %v7385 = vpop.permute.xlu0 %7384
    %7386 = vrot.lane.b32.xlu0 %v6433, 32
    %v7387 = vpop.permute.xlu0 %7386
    %7388 = vrot.lane.b32.xlu0 %v6434, 32
    %v7389 = vpop.permute.xlu0 %7388
    %7390 = vrot.lane.b32.xlu0 %v6435, 32
    %v7391 = vpop.permute.xlu0 %7390
    %7392 = vrot.lane.b32.xlu0 %v6436, 32
    %v7393 = vpop.permute.xlu0 %7392
    %7394 = vrot.lane.b32.xlu0 %v6437, 32
    %v7395 = vpop.permute.xlu0 %7394
    %7396 = vrot.lane.b32.xlu0 %v6438, 32
    %v7397 = vpop.permute.xlu0 %7396
    %7398 = vrot.lane.b32.xlu0 %v6439, 32
    %v7399 = vpop.permute.xlu0 %7398
    %7400 = vrot.lane.b32.xlu0 %v6440, 32
    %v7401 = vpop.permute.xlu0 %7400
    %7402 = vrot.lane.b32.xlu0 %v6441, 32
    %v7403 = vpop.permute.xlu0 %7402
    %7404 = vrot.lane.b32.xlu0 %v6442, 32
    %v7405 = vpop.permute.xlu0 %7404
    %7406 = vrot.lane.b32.xlu0 %v6443, 32
    %v7407 = vpop.permute.xlu0 %7406
    %7408 = vrot.lane.b32.xlu0 %v6444, 32
    %v7409 = vpop.permute.xlu0 %7408
    %7410 = vrot.lane.b32.xlu0 %v6445, 32
    %v7411 = vpop.permute.xlu0 %7410
    %7412 = vrot.lane.b32.xlu0 %v6446, 32
    %v7413 = vpop.permute.xlu0 %7412
    %7414 = vrot.lane.b32.xlu0 %v6447, 32
    %v7415 = vpop.permute.xlu0 %7414
    %7416 = vrot.lane.b32.xlu0 %v6448, 32
    %v7417 = vpop.permute.xlu0 %7416
    %7418 = vrot.lane.b32.xlu0 %v6449, 32
    %v7419 = vpop.permute.xlu0 %7418
    %7420 = vrot.lane.b32.xlu0 %v6450, 32
    %v7421 = vpop.permute.xlu0 %7420
    %7422 = vrot.lane.b32.xlu0 %v6451, 32
    %v7423 = vpop.permute.xlu0 %7422
    %7424 = vrot.lane.b32.xlu0 %v6452, 32
    %v7425 = vpop.permute.xlu0 %7424
    %7426 = vrot.lane.b32.xlu0 %v6453, 32
    %v7427 = vpop.permute.xlu0 %7426
    %7496 = vrot.lane.b32.xlu0 %v6458, 40
    %v7497 = vpop.permute.xlu0 %7496
    %7498 = vrot.lane.b32.xlu0 %v6459, 40
    %v7499 = vpop.permute.xlu0 %7498
    %7500 = vrot.lane.b32.xlu0 %v6460, 40
    %v7501 = vpop.permute.xlu0 %7500
    %7502 = vrot.lane.b32.xlu0 %v6461, 40
    %v7503 = vpop.permute.xlu0 %7502
    %7504 = vrot.lane.b32.xlu0 %v6462, 40
    %v7505 = vpop.permute.xlu0 %7504
    %7506 = vrot.lane.b32.xlu0 %v6463, 40
    %v7507 = vpop.permute.xlu0 %7506
    %7508 = vrot.lane.b32.xlu0 %v6464, 40
    %v7509 = vpop.permute.xlu0 %7508
    %7510 = vrot.lane.b32.xlu0 %v6465, 40
    %v7511 = vpop.permute.xlu0 %7510
    %7512 = vrot.lane.b32.xlu0 %v6466, 40
    %v7513 = vpop.permute.xlu0 %7512
    %7514 = vrot.lane.b32.xlu0 %v6467, 40
    %v7515 = vpop.permute.xlu0 %7514
    %7516 = vrot.lane.b32.xlu0 %v6468, 40
    %v7517 = vpop.permute.xlu0 %7516
    %7518 = vrot.lane.b32.xlu0 %v6469, 40
    %v7519 = vpop.permute.xlu0 %7518
    %7520 = vrot.lane.b32.xlu0 %v6470, 40
    %v7521 = vpop.permute.xlu0 %7520
    %7522 = vrot.lane.b32.xlu0 %v6471, 40
    %v7523 = vpop.permute.xlu0 %7522
    %7524 = vrot.lane.b32.xlu0 %v6472, 40
    %v7525 = vpop.permute.xlu0 %7524
    %7526 = vrot.lane.b32.xlu0 %v6473, 40
    %v7527 = vpop.permute.xlu0 %7526
    %7528 = vrot.lane.b32.xlu0 %v6474, 40
    %v7529 = vpop.permute.xlu0 %7528
    %7530 = vrot.lane.b32.xlu0 %v6475, 40
    %v7531 = vpop.permute.xlu0 %7530
    %7532 = vrot.lane.b32.xlu0 %v6476, 40
    %v7533 = vpop.permute.xlu0 %7532
    %7534 = vrot.lane.b32.xlu0 %v6477, 40
    %v7535 = vpop.permute.xlu0 %7534
    %7536 = vrot.lane.b32.xlu0 %v6478, 40
    %v7537 = vpop.permute.xlu0 %7536
    %7538 = vrot.lane.b32.xlu0 %v6479, 40
    %v7539 = vpop.permute.xlu0 %7538
    %7540 = vrot.lane.b32.xlu0 %v6480, 40
    %v7541 = vpop.permute.xlu0 %7540
    %7542 = vrot.lane.b32.xlu0 %v6481, 40
    %v7543 = vpop.permute.xlu0 %7542
    %7544 = vrot.lane.b32.xlu0 %v6482, 40
    %v7545 = vpop.permute.xlu0 %7544
    %7546 = vrot.lane.b32.xlu0 %v6483, 40
    %v7547 = vpop.permute.xlu0 %7546
    %7548 = vrot.lane.b32.xlu0 %v6484, 40
    %v7549 = vpop.permute.xlu0 %7548
    %7550 = vrot.lane.b32.xlu0 %v6485, 40
    %v7551 = vpop.permute.xlu0 %7550
    %7552 = vrot.lane.b32.xlu0 %v6486, 40
    %v7553 = vpop.permute.xlu0 %7552
    %7554 = vrot.lane.b32.xlu0 %v6487, 40
    %v7555 = vpop.permute.xlu0 %7554
    %7556 = vrot.lane.b32.xlu0 %v6488, 40
    %v7557 = vpop.permute.xlu0 %7556
    %7558 = vrot.lane.b32.xlu0 %v6489, 40
    %v7559 = vpop.permute.xlu0 %7558
    %7560 = vrot.lane.b32.xlu0 %v6494, 40
    %v7561 = vpop.permute.xlu0 %7560
    %7562 = vrot.lane.b32.xlu0 %v6495, 40
    %v7563 = vpop.permute.xlu0 %7562
    %7564 = vrot.lane.b32.xlu0 %v6496, 40
    %v7565 = vpop.permute.xlu0 %7564
    %7566 = vrot.lane.b32.xlu0 %v6497, 40
    %v7567 = vpop.permute.xlu0 %7566
    %7568 = vrot.lane.b32.xlu0 %v6498, 40
    %v7569 = vpop.permute.xlu0 %7568
    %7570 = vrot.lane.b32.xlu0 %v6499, 40
    %v7571 = vpop.permute.xlu0 %7570
    %7572 = vrot.lane.b32.xlu0 %v6500, 40
    %v7573 = vpop.permute.xlu0 %7572
    %7574 = vrot.lane.b32.xlu0 %v6501, 40
    %v7575 = vpop.permute.xlu0 %7574
    %7576 = vrot.lane.b32.xlu0 %v6502, 40
    %v7577 = vpop.permute.xlu0 %7576
    %7578 = vrot.lane.b32.xlu0 %v6503, 40
    %v7579 = vpop.permute.xlu0 %7578
    %7580 = vrot.lane.b32.xlu0 %v6504, 40
    %v7581 = vpop.permute.xlu0 %7580
    %7582 = vrot.lane.b32.xlu0 %v6505, 40
    %v7583 = vpop.permute.xlu0 %7582
    %7584 = vrot.lane.b32.xlu0 %v6506, 40
    %v7585 = vpop.permute.xlu0 %7584
    %7586 = vrot.lane.b32.xlu0 %v6507, 40
    %v7587 = vpop.permute.xlu0 %7586
    %7588 = vrot.lane.b32.xlu0 %v6508, 40
    %v7589 = vpop.permute.xlu0 %7588
    %7590 = vrot.lane.b32.xlu0 %v6509, 40
    %v7591 = vpop.permute.xlu0 %7590
    %7592 = vrot.lane.b32.xlu0 %v6510, 40
    %v7593 = vpop.permute.xlu0 %7592
    %7594 = vrot.lane.b32.xlu0 %v6511, 40
    %v7595 = vpop.permute.xlu0 %7594
    %7596 = vrot.lane.b32.xlu0 %v6512, 40
    %v7597 = vpop.permute.xlu0 %7596
    %7598 = vrot.lane.b32.xlu0 %v6513, 40
    %v7599 = vpop.permute.xlu0 %7598
    %7600 = vrot.lane.b32.xlu0 %v6514, 40
    %v7601 = vpop.permute.xlu0 %7600
    %7602 = vrot.lane.b32.xlu0 %v6515, 40
    %v7603 = vpop.permute.xlu0 %7602
    %7604 = vrot.lane.b32.xlu0 %v6516, 40
    %v7605 = vpop.permute.xlu0 %7604
    %7606 = vrot.lane.b32.xlu0 %v6517, 40
    %v7607 = vpop.permute.xlu0 %7606
    %7608 = vrot.lane.b32.xlu0 %v6518, 40
    %v7609 = vpop.permute.xlu0 %7608
    %7610 = vrot.lane.b32.xlu0 %v6519, 40
    %v7611 = vpop.permute.xlu0 %7610
    %7612 = vrot.lane.b32.xlu0 %v6520, 40
    %v7613 = vpop.permute.xlu0 %7612
    %7614 = vrot.lane.b32.xlu0 %v6521, 40
    %v7615 = vpop.permute.xlu0 %7614
    %7616 = vrot.lane.b32.xlu0 %v6522, 40
    %v7617 = vpop.permute.xlu0 %7616
    %7618 = vrot.lane.b32.xlu0 %v6523, 40
    %v7619 = vpop.permute.xlu0 %7618
    %7620 = vrot.lane.b32.xlu0 %v6524, 40
    %v7621 = vpop.permute.xlu0 %7620
    %7622 = vrot.lane.b32.xlu0 %v6525, 40
    %v7623 = vpop.permute.xlu0 %7622
    %7692 = vrot.lane.b32.xlu0 %v6316, 48
    %v7693 = vpop.permute.xlu0 %7692
    %7694 = vrot.lane.b32.xlu0 %v6317, 48
    %v7695 = vpop.permute.xlu0 %7694
    %7696 = vrot.lane.b32.xlu0 %v6318, 48
    %v7697 = vpop.permute.xlu0 %7696
    %7698 = vrot.lane.b32.xlu0 %v6319, 48
    %v7699 = vpop.permute.xlu0 %7698
    %7700 = vrot.lane.b32.xlu0 %v6320, 48
    %v7701 = vpop.permute.xlu0 %7700
    %7702 = vrot.lane.b32.xlu0 %v6321, 48
    %v7703 = vpop.permute.xlu0 %7702
    %7704 = vrot.lane.b32.xlu0 %v6322, 48
    %v7705 = vpop.permute.xlu0 %7704
    %7706 = vrot.lane.b32.xlu0 %v6323, 48
    %v7707 = vpop.permute.xlu0 %7706
    %7708 = vrot.lane.b32.xlu0 %v6324, 48
    %v7709 = vpop.permute.xlu0 %7708
    %7710 = vrot.lane.b32.xlu0 %v6325, 48
    %v7711 = vpop.permute.xlu0 %7710
    %7712 = vrot.lane.b32.xlu0 %v6326, 48
    %v7713 = vpop.permute.xlu0 %7712
    %7714 = vrot.lane.b32.xlu0 %v6327, 48
    %v7715 = vpop.permute.xlu0 %7714
    %7716 = vrot.lane.b32.xlu0 %v6328, 48
    %v7717 = vpop.permute.xlu0 %7716
    %7718 = vrot.lane.b32.xlu0 %v6329, 48
    %v7719 = vpop.permute.xlu0 %7718
    %7720 = vrot.lane.b32.xlu0 %v6330, 48
    %v7721 = vpop.permute.xlu0 %7720
    %7722 = vrot.lane.b32.xlu0 %v6331, 48
    %v7723 = vpop.permute.xlu0 %7722
    %7724 = vrot.lane.b32.xlu0 %v6332, 48
    %v7725 = vpop.permute.xlu0 %7724
    %7726 = vrot.lane.b32.xlu0 %v6333, 48
    %v7727 = vpop.permute.xlu0 %7726
    %7728 = vrot.lane.b32.xlu0 %v6334, 48
    %v7729 = vpop.permute.xlu0 %7728
    %7730 = vrot.lane.b32.xlu0 %v6335, 48
    %v7731 = vpop.permute.xlu0 %7730
    %7732 = vrot.lane.b32.xlu0 %v6336, 48
    %v7733 = vpop.permute.xlu0 %7732
    %7734 = vrot.lane.b32.xlu0 %v6337, 48
    %v7735 = vpop.permute.xlu0 %7734
    %7736 = vrot.lane.b32.xlu0 %v6338, 48
    %v7737 = vpop.permute.xlu0 %7736
    %7738 = vrot.lane.b32.xlu0 %v6339, 48
    %v7739 = vpop.permute.xlu0 %7738
    %7740 = vrot.lane.b32.xlu0 %v6340, 48
    %v7741 = vpop.permute.xlu0 %7740
    %7742 = vrot.lane.b32.xlu0 %v6341, 48
    %v7743 = vpop.permute.xlu0 %7742
    %7744 = vrot.lane.b32.xlu0 %v6342, 48
    %v7745 = vpop.permute.xlu0 %7744
    %7746 = vrot.lane.b32.xlu0 %v6343, 48
    %v7747 = vpop.permute.xlu0 %7746
    %7748 = vrot.lane.b32.xlu0 %v6344, 48
    %v7749 = vpop.permute.xlu0 %7748
    %7750 = vrot.lane.b32.xlu0 %v6345, 48
    %v7751 = vpop.permute.xlu0 %7750
    %7752 = vrot.lane.b32.xlu0 %v6346, 48
    %v7753 = vpop.permute.xlu0 %7752
    %7754 = vrot.lane.b32.xlu0 %v6347, 48
    %v7755 = vpop.permute.xlu0 %7754
    %7756 = vrot.lane.b32.xlu0 %v6352, 48
    %v7757 = vpop.permute.xlu0 %7756
    %7758 = vrot.lane.b32.xlu0 %v6353, 48
    %v7759 = vpop.permute.xlu0 %7758
    %7760 = vrot.lane.b32.xlu0 %v6354, 48
    %v7761 = vpop.permute.xlu0 %7760
    %7762 = vrot.lane.b32.xlu0 %v6355, 48
    %v7763 = vpop.permute.xlu0 %7762
    %7764 = vrot.lane.b32.xlu0 %v6356, 48
    %v7765 = vpop.permute.xlu0 %7764
    %7766 = vrot.lane.b32.xlu0 %v6357, 48
    %v7767 = vpop.permute.xlu0 %7766
    %7768 = vrot.lane.b32.xlu0 %v6358, 48
    %v7769 = vpop.permute.xlu0 %7768
    %7770 = vrot.lane.b32.xlu0 %v6359, 48
    %v7771 = vpop.permute.xlu0 %7770
    %7772 = vrot.lane.b32.xlu0 %v6360, 48
    %v7773 = vpop.permute.xlu0 %7772
    %7774 = vrot.lane.b32.xlu0 %v6361, 48
    %v7775 = vpop.permute.xlu0 %7774
    %7776 = vrot.lane.b32.xlu0 %v6362, 48
    %v7777 = vpop.permute.xlu0 %7776
    %7778 = vrot.lane.b32.xlu0 %v6363, 48
    %v7779 = vpop.permute.xlu0 %7778
    %7780 = vrot.lane.b32.xlu0 %v6364, 48
    %v7781 = vpop.permute.xlu0 %7780
    %7782 = vrot.lane.b32.xlu0 %v6365, 48
    %v7783 = vpop.permute.xlu0 %7782
    %7784 = vrot.lane.b32.xlu0 %v6366, 48
    %v7785 = vpop.permute.xlu0 %7784
    %7786 = vrot.lane.b32.xlu0 %v6367, 48
    %v7787 = vpop.permute.xlu0 %7786
    %7788 = vrot.lane.b32.xlu0 %v6368, 48
    %v7789 = vpop.permute.xlu0 %7788
    %7790 = vrot.lane.b32.xlu0 %v6369, 48
    %v7791 = vpop.permute.xlu0 %7790
    %7792 = vrot.lane.b32.xlu0 %v6370, 48
    %v7793 = vpop.permute.xlu0 %7792
    %7794 = vrot.lane.b32.xlu0 %v6371, 48
    %v7795 = vpop.permute.xlu0 %7794
    %7796 = vrot.lane.b32.xlu0 %v6372, 48
    %v7797 = vpop.permute.xlu0 %7796
    %7798 = vrot.lane.b32.xlu0 %v6373, 48
    %v7799 = vpop.permute.xlu0 %7798
    %7800 = vrot.lane.b32.xlu0 %v6374, 48
    %v7801 = vpop.permute.xlu0 %7800
    %7802 = vrot.lane.b32.xlu0 %v6375, 48
    %v7803 = vpop.permute.xlu0 %7802
    %7804 = vrot.lane.b32.xlu0 %v6376, 48
    %v7805 = vpop.permute.xlu0 %7804
    %7806 = vrot.lane.b32.xlu0 %v6377, 48
    %v7807 = vpop.permute.xlu0 %7806
    %7808 = vrot.lane.b32.xlu0 %v6378, 48
    %v7809 = vpop.permute.xlu0 %7808
    %7810 = vrot.lane.b32.xlu0 %v6379, 48
    %v7811 = vpop.permute.xlu0 %7810
    %7812 = vrot.lane.b32.xlu0 %v6380, 48
    %v7813 = vpop.permute.xlu0 %7812
    %7814 = vrot.lane.b32.xlu0 %v6381, 48
    %v7815 = vpop.permute.xlu0 %7814
    %7816 = vrot.lane.b32.xlu0 %v6382, 48
    %v7817 = vpop.permute.xlu0 %7816
    %7818 = vrot.lane.b32.xlu0 %v6383, 48
    %v7819 = vpop.permute.xlu0 %7818
    %7888 = vrot.lane.b32.xlu0 %v6388, 56
    %v7889 = vpop.permute.xlu0 %7888
    %7890 = vrot.lane.b32.xlu0 %v6389, 56
    %v7891 = vpop.permute.xlu0 %7890
    %7892 = vrot.lane.b32.xlu0 %v6390, 56
    %v7893 = vpop.permute.xlu0 %7892
    %7894 = vrot.lane.b32.xlu0 %v6391, 56
    %v7895 = vpop.permute.xlu0 %7894
    %7896 = vrot.lane.b32.xlu0 %v6392, 56
    %v7897 = vpop.permute.xlu0 %7896
    %7898 = vrot.lane.b32.xlu0 %v6393, 56
    %v7899 = vpop.permute.xlu0 %7898
    %7900 = vrot.lane.b32.xlu0 %v6394, 56
    %v7901 = vpop.permute.xlu0 %7900
    %7902 = vrot.lane.b32.xlu0 %v6395, 56
    %v7903 = vpop.permute.xlu0 %7902
    %7904 = vrot.lane.b32.xlu0 %v6396, 56
    %v7905 = vpop.permute.xlu0 %7904
    %7906 = vrot.lane.b32.xlu0 %v6397, 56
    %v7907 = vpop.permute.xlu0 %7906
    %7908 = vrot.lane.b32.xlu0 %v6398, 56
    %v7909 = vpop.permute.xlu0 %7908
    %7910 = vrot.lane.b32.xlu0 %v6399, 56
    %v7911 = vpop.permute.xlu0 %7910
    %7912 = vrot.lane.b32.xlu0 %v6400, 56
    %v7913 = vpop.permute.xlu0 %7912
    %7914 = vrot.lane.b32.xlu0 %v6401, 56
    %v7915 = vpop.permute.xlu0 %7914
    %7916 = vrot.lane.b32.xlu0 %v6402, 56
    %v7917 = vpop.permute.xlu0 %7916
    %7918 = vrot.lane.b32.xlu0 %v6403, 56
    %v7919 = vpop.permute.xlu0 %7918
    %7920 = vrot.lane.b32.xlu0 %v6404, 56
    %v7921 = vpop.permute.xlu0 %7920
    %7922 = vrot.lane.b32.xlu0 %v6405, 56
    %v7923 = vpop.permute.xlu0 %7922
    %7924 = vrot.lane.b32.xlu0 %v6406, 56
    %v7925 = vpop.permute.xlu0 %7924
    %7926 = vrot.lane.b32.xlu0 %v6407, 56
    %v7927 = vpop.permute.xlu0 %7926
    %7928 = vrot.lane.b32.xlu0 %v6408, 56
    %v7929 = vpop.permute.xlu0 %7928
    %7930 = vrot.lane.b32.xlu0 %v6409, 56
    %v7931 = vpop.permute.xlu0 %7930
    %7932 = vrot.lane.b32.xlu0 %v6410, 56
    %v7933 = vpop.permute.xlu0 %7932
    %7934 = vrot.lane.b32.xlu0 %v6411, 56
    %v7935 = vpop.permute.xlu0 %7934
    %7936 = vrot.lane.b32.xlu0 %v6412, 56
    %v7937 = vpop.permute.xlu0 %7936
    %7938 = vrot.lane.b32.xlu0 %v6413, 56
    %v7939 = vpop.permute.xlu0 %7938
    %7940 = vrot.lane.b32.xlu0 %v6414, 56
    %v7941 = vpop.permute.xlu0 %7940
    %7942 = vrot.lane.b32.xlu0 %v6415, 56
    %v7943 = vpop.permute.xlu0 %7942
    %7944 = vrot.lane.b32.xlu0 %v6416, 56
    %v7945 = vpop.permute.xlu0 %7944
    %7946 = vrot.lane.b32.xlu0 %v6417, 56
    %v7947 = vpop.permute.xlu0 %7946
    %7948 = vrot.lane.b32.xlu0 %v6418, 56
    %v7949 = vpop.permute.xlu0 %7948
    %7950 = vrot.lane.b32.xlu0 %v6419, 56
    %v7951 = vpop.permute.xlu0 %7950
    %7952 = vrot.lane.b32.xlu0 %v6424, 56
    %v7953 = vpop.permute.xlu0 %7952
    %7954 = vrot.lane.b32.xlu0 %v6425, 56
    %v7955 = vpop.permute.xlu0 %7954
    %7956 = vrot.lane.b32.xlu0 %v6426, 56
    %v7957 = vpop.permute.xlu0 %7956
    %7958 = vrot.lane.b32.xlu0 %v6427, 56
    %v7959 = vpop.permute.xlu0 %7958
    %7960 = vrot.lane.b32.xlu0 %v6428, 56
    %v7961 = vpop.permute.xlu0 %7960
    %7962 = vrot.lane.b32.xlu0 %v6429, 56
    %v7963 = vpop.permute.xlu0 %7962
    %7964 = vrot.lane.b32.xlu0 %v6430, 56
    %v7965 = vpop.permute.xlu0 %7964
    %7966 = vrot.lane.b32.xlu0 %v6431, 56
    %v7967 = vpop.permute.xlu0 %7966
    %7968 = vrot.lane.b32.xlu0 %v6432, 56
    %v7969 = vpop.permute.xlu0 %7968
    %7970 = vrot.lane.b32.xlu0 %v6433, 56
    %v7971 = vpop.permute.xlu0 %7970
    %7972 = vrot.lane.b32.xlu0 %v6434, 56
    %v7973 = vpop.permute.xlu0 %7972
    %7974 = vrot.lane.b32.xlu0 %v6435, 56
    %v7975 = vpop.permute.xlu0 %7974
    %7976 = vrot.lane.b32.xlu0 %v6436, 56
    %v7977 = vpop.permute.xlu0 %7976
    %7978 = vrot.lane.b32.xlu0 %v6437, 56
    %v7979 = vpop.permute.xlu0 %7978
    %7980 = vrot.lane.b32.xlu0 %v6438, 56
    %v7981 = vpop.permute.xlu0 %7980
    %7982 = vrot.lane.b32.xlu0 %v6439, 56
    %v7983 = vpop.permute.xlu0 %7982
    %7984 = vrot.lane.b32.xlu0 %v6440, 56
    %v7985 = vpop.permute.xlu0 %7984
    %7986 = vrot.lane.b32.xlu0 %v6441, 56
    %v7987 = vpop.permute.xlu0 %7986
    %7988 = vrot.lane.b32.xlu0 %v6442, 56
    %v7989 = vpop.permute.xlu0 %7988
    %7990 = vrot.lane.b32.xlu0 %v6443, 56
    %v7991 = vpop.permute.xlu0 %7990
    %7992 = vrot.lane.b32.xlu0 %v6444, 56
    %v7993 = vpop.permute.xlu0 %7992
    %7994 = vrot.lane.b32.xlu0 %v6445, 56
    %v7995 = vpop.permute.xlu0 %7994
    %7996 = vrot.lane.b32.xlu0 %v6446, 56
    %v7997 = vpop.permute.xlu0 %7996
    %7998 = vrot.lane.b32.xlu0 %v6447, 56
    %v7999 = vpop.permute.xlu0 %7998
    %8000 = vrot.lane.b32.xlu0 %v6448, 56
    %v8001 = vpop.permute.xlu0 %8000
    %8002 = vrot.lane.b32.xlu0 %v6449, 56
    %v8003 = vpop.permute.xlu0 %8002
    %8004 = vrot.lane.b32.xlu0 %v6450, 56
    %v8005 = vpop.permute.xlu0 %8004
    %8006 = vrot.lane.b32.xlu0 %v6451, 56
    %v8007 = vpop.permute.xlu0 %8006
    %8008 = vrot.lane.b32.xlu0 %v6452, 56
    %v8009 = vpop.permute.xlu0 %8008
    %8010 = vrot.lane.b32.xlu0 %v6453, 56
    %v8011 = vpop.permute.xlu0 %8010
    %8012 = vrot.lane.b32.xlu0 %v6454, 56
    %v8013 = vpop.permute.xlu0 %8012
    %8014 = vrot.lane.b32.xlu0 %v6455, 56
    %v8015 = vpop.permute.xlu0 %8014
    %8084 = vrot.lane.b32.xlu0 %v6460, 64
    %v8085 = vpop.permute.xlu0 %8084
    %8086 = vrot.lane.b32.xlu0 %v6461, 64
    %v8087 = vpop.permute.xlu0 %8086
    %8088 = vrot.lane.b32.xlu0 %v6462, 64
    %v8089 = vpop.permute.xlu0 %8088
    %8090 = vrot.lane.b32.xlu0 %v6463, 64
    %v8091 = vpop.permute.xlu0 %8090
    %8092 = vrot.lane.b32.xlu0 %v6464, 64
    %v8093 = vpop.permute.xlu0 %8092
    %8094 = vrot.lane.b32.xlu0 %v6465, 64
    %v8095 = vpop.permute.xlu0 %8094
    %8096 = vrot.lane.b32.xlu0 %v6466, 64
    %v8097 = vpop.permute.xlu0 %8096
    %8098 = vrot.lane.b32.xlu0 %v6467, 64
    %v8099 = vpop.permute.xlu0 %8098
    %8100 = vrot.lane.b32.xlu0 %v6468, 64
    %v8101 = vpop.permute.xlu0 %8100
    %8102 = vrot.lane.b32.xlu0 %v6469, 64
    %v8103 = vpop.permute.xlu0 %8102
    %8104 = vrot.lane.b32.xlu0 %v6470, 64
    %v8105 = vpop.permute.xlu0 %8104
    %8106 = vrot.lane.b32.xlu0 %v6471, 64
    %v8107 = vpop.permute.xlu0 %8106
    %8108 = vrot.lane.b32.xlu0 %v6472, 64
    %v8109 = vpop.permute.xlu0 %8108
    %8110 = vrot.lane.b32.xlu0 %v6473, 64
    %v8111 = vpop.permute.xlu0 %8110
    %8112 = vrot.lane.b32.xlu0 %v6474, 64
    %v8113 = vpop.permute.xlu0 %8112
    %8114 = vrot.lane.b32.xlu0 %v6475, 64
    %v8115 = vpop.permute.xlu0 %8114
    %8116 = vrot.lane.b32.xlu0 %v6476, 64
    %v8117 = vpop.permute.xlu0 %8116
    %8118 = vrot.lane.b32.xlu0 %v6477, 64
    %v8119 = vpop.permute.xlu0 %8118
    %8120 = vrot.lane.b32.xlu0 %v6478, 64
    %v8121 = vpop.permute.xlu0 %8120
    %8122 = vrot.lane.b32.xlu0 %v6479, 64
    %v8123 = vpop.permute.xlu0 %8122
    %8124 = vrot.lane.b32.xlu0 %v6480, 64
    %v8125 = vpop.permute.xlu0 %8124
    %8126 = vrot.lane.b32.xlu0 %v6481, 64
    %v8127 = vpop.permute.xlu0 %8126
    %8128 = vrot.lane.b32.xlu0 %v6482, 64
    %v8129 = vpop.permute.xlu0 %8128
    %8130 = vrot.lane.b32.xlu0 %v6483, 64
    %v8131 = vpop.permute.xlu0 %8130
    %8132 = vrot.lane.b32.xlu0 %v6484, 64
    %v8133 = vpop.permute.xlu0 %8132
    %8134 = vrot.lane.b32.xlu0 %v6485, 64
    %v8135 = vpop.permute.xlu0 %8134
    %8136 = vrot.lane.b32.xlu0 %v6486, 64
    %v8137 = vpop.permute.xlu0 %8136
    %8138 = vrot.lane.b32.xlu0 %v6487, 64
    %v8139 = vpop.permute.xlu0 %8138
    %8140 = vrot.lane.b32.xlu0 %v6488, 64
    %v8141 = vpop.permute.xlu0 %8140
    %8142 = vrot.lane.b32.xlu0 %v6489, 64
    %v8143 = vpop.permute.xlu0 %8142
    %8144 = vrot.lane.b32.xlu0 %v6490, 64
    %v8145 = vpop.permute.xlu0 %8144
    %8146 = vrot.lane.b32.xlu0 %v6491, 64
    %v8147 = vpop.permute.xlu0 %8146
    %8148 = vrot.lane.b32.xlu0 %v6496, 64
    %v8149 = vpop.permute.xlu0 %8148
    %8150 = vrot.lane.b32.xlu0 %v6497, 64
    %v8151 = vpop.permute.xlu0 %8150
    %8152 = vrot.lane.b32.xlu0 %v6498, 64
    %v8153 = vpop.permute.xlu0 %8152
    %8154 = vrot.lane.b32.xlu0 %v6499, 64
    %v8155 = vpop.permute.xlu0 %8154
    %8156 = vrot.lane.b32.xlu0 %v6500, 64
    %v8157 = vpop.permute.xlu0 %8156
    %8158 = vrot.lane.b32.xlu0 %v6501, 64
    %v8159 = vpop.permute.xlu0 %8158
    %8160 = vrot.lane.b32.xlu0 %v6502, 64
    %v8161 = vpop.permute.xlu0 %8160
    %8162 = vrot.lane.b32.xlu0 %v6503, 64
    %v8163 = vpop.permute.xlu0 %8162
    %8164 = vrot.lane.b32.xlu0 %v6504, 64
    %v8165 = vpop.permute.xlu0 %8164
    %8166 = vrot.lane.b32.xlu0 %v6505, 64
    %v8167 = vpop.permute.xlu0 %8166
    %8168 = vrot.lane.b32.xlu0 %v6506, 64
    %v8169 = vpop.permute.xlu0 %8168
    %8170 = vrot.lane.b32.xlu0 %v6507, 64
    %v8171 = vpop.permute.xlu0 %8170
    %8172 = vrot.lane.b32.xlu0 %v6508, 64
    %v8173 = vpop.permute.xlu0 %8172
    %8174 = vrot.lane.b32.xlu0 %v6509, 64
    %v8175 = vpop.permute.xlu0 %8174
    %8176 = vrot.lane.b32.xlu0 %v6510, 64
    %v8177 = vpop.permute.xlu0 %8176
    %8178 = vrot.lane.b32.xlu0 %v6511, 64
    %v8179 = vpop.permute.xlu0 %8178
    %8180 = vrot.lane.b32.xlu0 %v6512, 64
    %v8181 = vpop.permute.xlu0 %8180
    %8182 = vrot.lane.b32.xlu0 %v6513, 64
    %v8183 = vpop.permute.xlu0 %8182
    %8184 = vrot.lane.b32.xlu0 %v6514, 64
    %v8185 = vpop.permute.xlu0 %8184
    %8186 = vrot.lane.b32.xlu0 %v6515, 64
    %v8187 = vpop.permute.xlu0 %8186
    %8188 = vrot.lane.b32.xlu0 %v6516, 64
    %v8189 = vpop.permute.xlu0 %8188
    %8190 = vrot.lane.b32.xlu0 %v6517, 64
    %v8191 = vpop.permute.xlu0 %8190
    %8192 = vrot.lane.b32.xlu0 %v6518, 64
    %v8193 = vpop.permute.xlu0 %8192
    %8194 = vrot.lane.b32.xlu0 %v6519, 64
    %v8195 = vpop.permute.xlu0 %8194
    %8196 = vrot.lane.b32.xlu0 %v6520, 64
    %v8197 = vpop.permute.xlu0 %8196
    %8198 = vrot.lane.b32.xlu0 %v6521, 64
    %v8199 = vpop.permute.xlu0 %8198
    %8200 = vrot.lane.b32.xlu0 %v6522, 64
    %v8201 = vpop.permute.xlu0 %8200
    %8202 = vrot.lane.b32.xlu0 %v6523, 64
    %v8203 = vpop.permute.xlu0 %8202
    %8204 = vrot.lane.b32.xlu0 %v6524, 64
    %v8205 = vpop.permute.xlu0 %8204
    %8206 = vrot.lane.b32.xlu0 %v6525, 64
    %v8207 = vpop.permute.xlu0 %8206
    %8208 = vrot.lane.b32.xlu0 %v6526, 64
    %v8209 = vpop.permute.xlu0 %8208
    %8210 = vrot.lane.b32.xlu0 %v6527, 64
    %v8211 = vpop.permute.xlu0 %8210
    %v8276 = vsel %vm21, %v6312, %v6593
    %v8277 = vsel %vm21, %v6313, %v6595
    %v8278 = vsel %vm21, %v6314, %v6597
    %v8279 = vsel %vm21, %v6315, %v6599
    %v8280 = vsel %vm21, %v6316, %v6601
    %v8281 = vsel %vm21, %v6317, %v6603
    %v8282 = vsel %vm21, %v6318, %v6605
    %v8283 = vsel %vm21, %v6319, %v6607
    %v8284 = vsel %vm21, %v6320, %v6609
    %v8285 = vsel %vm21, %v6321, %v6611
    %v8286 = vsel %vm21, %v6322, %v6613
    %v8287 = vsel %vm21, %v6323, %v6615
    %v8288 = vsel %vm21, %v6324, %v6617
    %v8289 = vsel %vm21, %v6325, %v6619
    %v8290 = vsel %vm21, %v6326, %v6621
    %v8291 = vsel %vm21, %v6327, %v6623
    %v8292 = vsel %vm21, %v6328, %v6625
    %v8293 = vsel %vm21, %v6329, %v6627
    %v8294 = vsel %vm21, %v6330, %v6629
    %v8295 = vsel %vm21, %v6331, %v6631
    %v8296 = vsel %vm21, %v6332, %v6633
    %v8297 = vsel %vm21, %v6333, %v6635
    %v8298 = vsel %vm21, %v6334, %v6637
    %v8299 = vsel %vm21, %v6335, %v6639
    %v8300 = vsel %vm21, %v6336, %v6641
    %v8301 = vsel %vm21, %v6337, %v6643
    %v8302 = vsel %vm21, %v6338, %v6645
    %v8303 = vsel %vm21, %v6339, %v6647
    %v8304 = vsel %vm21, %v6340, %v6649
    %v8305 = vsel %vm21, %v6341, %v6651
    %v8306 = vsel %vm21, %v6342, %v6653
    %v8307 = vsel %vm21, %v6343, %v6655
    %v8308 = vsel %vm21, %v6348, %v6657
    %v8309 = vsel %vm21, %v6349, %v6659
    %v8310 = vsel %vm21, %v6350, %v6661
    %v8311 = vsel %vm21, %v6351, %v6663
    %v8312 = vsel %vm21, %v6352, %v6665
    %v8313 = vsel %vm21, %v6353, %v6667
    %v8314 = vsel %vm21, %v6354, %v6669
    %v8315 = vsel %vm21, %v6355, %v6671
    %v8316 = vsel %vm21, %v6356, %v6673
    %v8317 = vsel %vm21, %v6357, %v6675
    %v8318 = vsel %vm21, %v6358, %v6677
    %v8319 = vsel %vm21, %v6359, %v6679
    %v8320 = vsel %vm21, %v6360, %v6681
    %v8321 = vsel %vm21, %v6361, %v6683
    %v8322 = vsel %vm21, %v6362, %v6685
    %v8323 = vsel %vm21, %v6363, %v6687
    %v8324 = vsel %vm21, %v6364, %v6689
    %v8325 = vsel %vm21, %v6365, %v6691
    %v8326 = vsel %vm21, %v6366, %v6693
    %v8327 = vsel %vm21, %v6367, %v6695
    %v8328 = vsel %vm21, %v6368, %v6697
    %v8329 = vsel %vm21, %v6369, %v6699
    %v8330 = vsel %vm21, %v6370, %v6701
    %v8331 = vsel %vm21, %v6371, %v6703
    %v8332 = vsel %vm21, %v6372, %v6705
    %v8333 = vsel %vm21, %v6373, %v6707
    %v8334 = vsel %vm21, %v6374, %v6709
    %v8335 = vsel %vm21, %v6375, %v6711
    %v8336 = vsel %vm21, %v6376, %v6713
    %v8337 = vsel %vm21, %v6377, %v6715
    %v8338 = vsel %vm21, %v6378, %v6717
    %v8339 = vsel %vm21, %v6379, %v6719
    %v8340 = vsel %vm2261, %v8276, %v6849
    %v8341 = vsel %vm2261, %v8277, %v6851
    %v8342 = vsel %vm2261, %v8278, %v6853
    %v8343 = vsel %vm2261, %v8279, %v6855
    %v8344 = vsel %vm2261, %v8280, %v6857
    %v8345 = vsel %vm2261, %v8281, %v6859
    %v8346 = vsel %vm2261, %v8282, %v6861
    %v8347 = vsel %vm2261, %v8283, %v6863
    %v8348 = vsel %vm2261, %v8284, %v6865
    %v8349 = vsel %vm2261, %v8285, %v6867
    %v8350 = vsel %vm2261, %v8286, %v6869
    %v8351 = vsel %vm2261, %v8287, %v6871
    %v8352 = vsel %vm2261, %v8288, %v6873
    %v8353 = vsel %vm2261, %v8289, %v6875
    %v8354 = vsel %vm2261, %v8290, %v6877
    %v8355 = vsel %vm2261, %v8291, %v6879
    %v8356 = vsel %vm2261, %v8292, %v6881
    %v8357 = vsel %vm2261, %v8293, %v6883
    %v8358 = vsel %vm2261, %v8294, %v6885
    %v8359 = vsel %vm2261, %v8295, %v6887
    %v8360 = vsel %vm2261, %v8296, %v6889
    %v8361 = vsel %vm2261, %v8297, %v6891
    %v8362 = vsel %vm2261, %v8298, %v6893
    %v8363 = vsel %vm2261, %v8299, %v6895
    %v8364 = vsel %vm2261, %v8300, %v6897
    %v8365 = vsel %vm2261, %v8301, %v6899
    %v8366 = vsel %vm2261, %v8302, %v6901
    %v8367 = vsel %vm2261, %v8303, %v6903
    %v8368 = vsel %vm2261, %v8304, %v6905
    %v8369 = vsel %vm2261, %v8305, %v6907
    %v8370 = vsel %vm2261, %v8306, %v6909
    %v8371 = vsel %vm2261, %v8307, %v6911
    %v8372 = vsel %vm2261, %v8308, %v6913
    %v8373 = vsel %vm2261, %v8309, %v6915
    %v8374 = vsel %vm2261, %v8310, %v6917
    %v8375 = vsel %vm2261, %v8311, %v6919
    %v8376 = vsel %vm2261, %v8312, %v6921
    %v8377 = vsel %vm2261, %v8313, %v6923
    %v8378 = vsel %vm2261, %v8314, %v6925
    %v8379 = vsel %vm2261, %v8315, %v6927
    %v8380 = vsel %vm2261, %v8316, %v6929
    %v8381 = vsel %vm2261, %v8317, %v6931
    %v8382 = vsel %vm2261, %v8318, %v6933
    %v8383 = vsel %vm2261, %v8319, %v6935
    %v8384 = vsel %vm2261, %v8320, %v6937
    %v8385 = vsel %vm2261, %v8321, %v6939
    %v8386 = vsel %vm2261, %v8322, %v6941
    %v8387 = vsel %vm2261, %v8323, %v6943
    %v8388 = vsel %vm2261, %v8324, %v6945
    %v8389 = vsel %vm2261, %v8325, %v6947
    %v8390 = vsel %vm2261, %v8326, %v6949
    %v8391 = vsel %vm2261, %v8327, %v6951
    %v8392 = vsel %vm2261, %v8328, %v6953
    %v8393 = vsel %vm2261, %v8329, %v6955
    %v8394 = vsel %vm2261, %v8330, %v6957
    %v8395 = vsel %vm2261, %v8331, %v6959
    %v8396 = vsel %vm2261, %v8332, %v6961
    %v8397 = vsel %vm2261, %v8333, %v6963
    %v8398 = vsel %vm2261, %v8334, %v6965
    %v8399 = vsel %vm2261, %v8335, %v6967
    %v8400 = vsel %vm2261, %v8336, %v6969
    %v8401 = vsel %vm2261, %v8337, %v6971
    %v8402 = vsel %vm2261, %v8338, %v6973
    %v8403 = vsel %vm2261, %v8339, %v6975
    %v8404 = vsel %vm2326, %v8340, %v7105
    %v8405 = vsel %vm2326, %v8341, %v7107
    %v8406 = vsel %vm2326, %v8342, %v7109
    %v8407 = vsel %vm2326, %v8343, %v7111
    %v8408 = vsel %vm2326, %v8344, %v7113
    %v8409 = vsel %vm2326, %v8345, %v7115
    %v8410 = vsel %vm2326, %v8346, %v7117
    %v8411 = vsel %vm2326, %v8347, %v7119
    %v8412 = vsel %vm2326, %v8348, %v7121
    %v8413 = vsel %vm2326, %v8349, %v7123
    %v8414 = vsel %vm2326, %v8350, %v7125
    %v8415 = vsel %vm2326, %v8351, %v7127
    %v8416 = vsel %vm2326, %v8352, %v7129
    %v8417 = vsel %vm2326, %v8353, %v7131
    %v8418 = vsel %vm2326, %v8354, %v7133
    %v8419 = vsel %vm2326, %v8355, %v7135
    %v8420 = vsel %vm2326, %v8356, %v7137
    %v8421 = vsel %vm2326, %v8357, %v7139
    %v8422 = vsel %vm2326, %v8358, %v7141
    %v8423 = vsel %vm2326, %v8359, %v7143
    %v8424 = vsel %vm2326, %v8360, %v7145
    %v8425 = vsel %vm2326, %v8361, %v7147
    %v8426 = vsel %vm2326, %v8362, %v7149
    %v8427 = vsel %vm2326, %v8363, %v7151
    %v8428 = vsel %vm2326, %v8364, %v7153
    %v8429 = vsel %vm2326, %v8365, %v7155
    %v8430 = vsel %vm2326, %v8366, %v7157
    %v8431 = vsel %vm2326, %v8367, %v7159
    %v8432 = vsel %vm2326, %v8368, %v7161
    %v8433 = vsel %vm2326, %v8369, %v7163
    %v8434 = vsel %vm2326, %v8370, %v7165
    %v8435 = vsel %vm2326, %v8371, %v7167
    %v8436 = vsel %vm2326, %v8372, %v7169
    %v8437 = vsel %vm2326, %v8373, %v7171
    %v8438 = vsel %vm2326, %v8374, %v7173
    %v8439 = vsel %vm2326, %v8375, %v7175
    %v8440 = vsel %vm2326, %v8376, %v7177
    %v8441 = vsel %vm2326, %v8377, %v7179
    %v8442 = vsel %vm2326, %v8378, %v7181
    %v8443 = vsel %vm2326, %v8379, %v7183
    %v8444 = vsel %vm2326, %v8380, %v7185
    %v8445 = vsel %vm2326, %v8381, %v7187
    %v8446 = vsel %vm2326, %v8382, %v7189
    %v8447 = vsel %vm2326, %v8383, %v7191
    %v8448 = vsel %vm2326, %v8384, %v7193
    %v8449 = vsel %vm2326, %v8385, %v7195
    %v8450 = vsel %vm2326, %v8386, %v7197
    %v8451 = vsel %vm2326, %v8387, %v7199
    %v8452 = vsel %vm2326, %v8388, %v7201
    %v8453 = vsel %vm2326, %v8389, %v7203
    %v8454 = vsel %vm2326, %v8390, %v7205
    %v8455 = vsel %vm2326, %v8391, %v7207
    %v8456 = vsel %vm2326, %v8392, %v7209
    %v8457 = vsel %vm2326, %v8393, %v7211
    %v8458 = vsel %vm2326, %v8394, %v7213
    %v8459 = vsel %vm2326, %v8395, %v7215
    %v8460 = vsel %vm2326, %v8396, %v7217
    %v8461 = vsel %vm2326, %v8397, %v7219
    %v8462 = vsel %vm2326, %v8398, %v7221
    %v8463 = vsel %vm2326, %v8399, %v7223
    %v8464 = vsel %vm2326, %v8400, %v7225
    %v8465 = vsel %vm2326, %v8401, %v7227
    %v8466 = vsel %vm2326, %v8402, %v7229
    %v8467 = vsel %vm2326, %v8403, %v7231
    %v8468 = vsel %vm2391, %v8404, %v7301
    %v8469 = vsel %vm2391, %v8405, %v7303
    %v8470 = vsel %vm2391, %v8406, %v7305
    %v8471 = vsel %vm2391, %v8407, %v7307
    %v8472 = vsel %vm2391, %v8408, %v7309
    %v8473 = vsel %vm2391, %v8409, %v7311
    %v8474 = vsel %vm2391, %v8410, %v7313
    %v8475 = vsel %vm2391, %v8411, %v7315
    %v8476 = vsel %vm2391, %v8412, %v7317
    %v8477 = vsel %vm2391, %v8413, %v7319
    %v8478 = vsel %vm2391, %v8414, %v7321
    %v8479 = vsel %vm2391, %v8415, %v7323
    %v8480 = vsel %vm2391, %v8416, %v7325
    %v8481 = vsel %vm2391, %v8417, %v7327
    %v8482 = vsel %vm2391, %v8418, %v7329
    %v8483 = vsel %vm2391, %v8419, %v7331
    %v8484 = vsel %vm2391, %v8420, %v7333
    %v8485 = vsel %vm2391, %v8421, %v7335
    %v8486 = vsel %vm2391, %v8422, %v7337
    %v8487 = vsel %vm2391, %v8423, %v7339
    %v8488 = vsel %vm2391, %v8424, %v7341
    %v8489 = vsel %vm2391, %v8425, %v7343
    %v8490 = vsel %vm2391, %v8426, %v7345
    %v8491 = vsel %vm2391, %v8427, %v7347
    %v8492 = vsel %vm2391, %v8428, %v7349
    %v8493 = vsel %vm2391, %v8429, %v7351
    %v8494 = vsel %vm2391, %v8430, %v7353
    %v8495 = vsel %vm2391, %v8431, %v7355
    %v8496 = vsel %vm2391, %v8432, %v7357
    %v8497 = vsel %vm2391, %v8433, %v7359
    %v8498 = vsel %vm2391, %v8434, %v7361
    %v8499 = vsel %vm2391, %v8435, %v7363
    %v8500 = vsel %vm2391, %v8436, %v7365
    %v8501 = vsel %vm2391, %v8437, %v7367
    %v8502 = vsel %vm2391, %v8438, %v7369
    %v8503 = vsel %vm2391, %v8439, %v7371
    %v8504 = vsel %vm2391, %v8440, %v7373
    %v8505 = vsel %vm2391, %v8441, %v7375
    %v8506 = vsel %vm2391, %v8442, %v7377
    %v8507 = vsel %vm2391, %v8443, %v7379
    %v8508 = vsel %vm2391, %v8444, %v7381
    %v8509 = vsel %vm2391, %v8445, %v7383
    %v8510 = vsel %vm2391, %v8446, %v7385
    %v8511 = vsel %vm2391, %v8447, %v7387
    %v8512 = vsel %vm2391, %v8448, %v7389
    %v8513 = vsel %vm2391, %v8449, %v7391
    %v8514 = vsel %vm2391, %v8450, %v7393
    %v8515 = vsel %vm2391, %v8451, %v7395
    %v8516 = vsel %vm2391, %v8452, %v7397
    %v8517 = vsel %vm2391, %v8453, %v7399
    %v8518 = vsel %vm2391, %v8454, %v7401
    %v8519 = vsel %vm2391, %v8455, %v7403
    %v8520 = vsel %vm2391, %v8456, %v7405
    %v8521 = vsel %vm2391, %v8457, %v7407
    %v8522 = vsel %vm2391, %v8458, %v7409
    %v8523 = vsel %vm2391, %v8459, %v7411
    %v8524 = vsel %vm2391, %v8460, %v7413
    %v8525 = vsel %vm2391, %v8461, %v7415
    %v8526 = vsel %vm2391, %v8462, %v7417
    %v8527 = vsel %vm2391, %v8463, %v7419
    %v8528 = vsel %vm2391, %v8464, %v7421
    %v8529 = vsel %vm2391, %v8465, %v7423
    %v8530 = vsel %vm2391, %v8466, %v7425
    %v8531 = vsel %vm2391, %v8467, %v7427
    %v8532 = vsel %vm2456, %v8468, %v7497
    %v8533 = vsel %vm2456, %v8469, %v7499
    %v8534 = vsel %vm2456, %v8470, %v7501
    %v8535 = vsel %vm2456, %v8471, %v7503
    %v8536 = vsel %vm2456, %v8472, %v7505
    %v8537 = vsel %vm2456, %v8473, %v7507
    %v8538 = vsel %vm2456, %v8474, %v7509
    %v8539 = vsel %vm2456, %v8475, %v7511
    %v8540 = vsel %vm2456, %v8476, %v7513
    %v8541 = vsel %vm2456, %v8477, %v7515
    %v8542 = vsel %vm2456, %v8478, %v7517
    %v8543 = vsel %vm2456, %v8479, %v7519
    %v8544 = vsel %vm2456, %v8480, %v7521
    %v8545 = vsel %vm2456, %v8481, %v7523
    %v8546 = vsel %vm2456, %v8482, %v7525
    %v8547 = vsel %vm2456, %v8483, %v7527
    %v8548 = vsel %vm2456, %v8484, %v7529
    %v8549 = vsel %vm2456, %v8485, %v7531
    %v8550 = vsel %vm2456, %v8486, %v7533
    %v8551 = vsel %vm2456, %v8487, %v7535
    %v8552 = vsel %vm2456, %v8488, %v7537
    %v8553 = vsel %vm2456, %v8489, %v7539
    %v8554 = vsel %vm2456, %v8490, %v7541
    %v8555 = vsel %vm2456, %v8491, %v7543
    %v8556 = vsel %vm2456, %v8492, %v7545
    %v8557 = vsel %vm2456, %v8493, %v7547
    %v8558 = vsel %vm2456, %v8494, %v7549
    %v8559 = vsel %vm2456, %v8495, %v7551
    %v8560 = vsel %vm2456, %v8496, %v7553
    %v8561 = vsel %vm2456, %v8497, %v7555
    %v8562 = vsel %vm2456, %v8498, %v7557
    %v8563 = vsel %vm2456, %v8499, %v7559
    %v8564 = vsel %vm2456, %v8500, %v7561
    %v8565 = vsel %vm2456, %v8501, %v7563
    %v8566 = vsel %vm2456, %v8502, %v7565
    %v8567 = vsel %vm2456, %v8503, %v7567
    %v8568 = vsel %vm2456, %v8504, %v7569
    %v8569 = vsel %vm2456, %v8505, %v7571
    %v8570 = vsel %vm2456, %v8506, %v7573
    %v8571 = vsel %vm2456, %v8507, %v7575
    %v8572 = vsel %vm2456, %v8508, %v7577
    %v8573 = vsel %vm2456, %v8509, %v7579
    %v8574 = vsel %vm2456, %v8510, %v7581
    %v8575 = vsel %vm2456, %v8511, %v7583
    %v8576 = vsel %vm2456, %v8512, %v7585
    %v8577 = vsel %vm2456, %v8513, %v7587
    %v8578 = vsel %vm2456, %v8514, %v7589
    %v8579 = vsel %vm2456, %v8515, %v7591
    %v8580 = vsel %vm2456, %v8516, %v7593
    %v8581 = vsel %vm2456, %v8517, %v7595
    %v8582 = vsel %vm2456, %v8518, %v7597
    %v8583 = vsel %vm2456, %v8519, %v7599
    %v8584 = vsel %vm2456, %v8520, %v7601
    %v8585 = vsel %vm2456, %v8521, %v7603
    %v8586 = vsel %vm2456, %v8522, %v7605
    %v8587 = vsel %vm2456, %v8523, %v7607
    %v8588 = vsel %vm2456, %v8524, %v7609
    %v8589 = vsel %vm2456, %v8525, %v7611
    %v8590 = vsel %vm2456, %v8526, %v7613
    %v8591 = vsel %vm2456, %v8527, %v7615
    %v8592 = vsel %vm2456, %v8528, %v7617
    %v8593 = vsel %vm2456, %v8529, %v7619
    %v8594 = vsel %vm2456, %v8530, %v7621
    %v8595 = vsel %vm2456, %v8531, %v7623
    %v8596 = vsel %vm2521, %v8532, %v7693
    %v8597 = vsel %vm2521, %v8533, %v7695
    %v8598 = vsel %vm2521, %v8534, %v7697
    %v8599 = vsel %vm2521, %v8535, %v7699
    %v8600 = vsel %vm2521, %v8536, %v7701
    %v8601 = vsel %vm2521, %v8537, %v7703
    %v8602 = vsel %vm2521, %v8538, %v7705
    %v8603 = vsel %vm2521, %v8539, %v7707
    %v8604 = vsel %vm2521, %v8540, %v7709
    %v8605 = vsel %vm2521, %v8541, %v7711
    %v8606 = vsel %vm2521, %v8542, %v7713
    %v8607 = vsel %vm2521, %v8543, %v7715
    %v8608 = vsel %vm2521, %v8544, %v7717
    %v8609 = vsel %vm2521, %v8545, %v7719
    %v8610 = vsel %vm2521, %v8546, %v7721
    %v8611 = vsel %vm2521, %v8547, %v7723
    %v8612 = vsel %vm2521, %v8548, %v7725
    %v8613 = vsel %vm2521, %v8549, %v7727
    %v8614 = vsel %vm2521, %v8550, %v7729
    %v8615 = vsel %vm2521, %v8551, %v7731
    %v8616 = vsel %vm2521, %v8552, %v7733
    %v8617 = vsel %vm2521, %v8553, %v7735
    %v8618 = vsel %vm2521, %v8554, %v7737
    %v8619 = vsel %vm2521, %v8555, %v7739
    %v8620 = vsel %vm2521, %v8556, %v7741
    %v8621 = vsel %vm2521, %v8557, %v7743
    %v8622 = vsel %vm2521, %v8558, %v7745
    %v8623 = vsel %vm2521, %v8559, %v7747
    %v8624 = vsel %vm2521, %v8560, %v7749
    %v8625 = vsel %vm2521, %v8561, %v7751
    %v8626 = vsel %vm2521, %v8562, %v7753
    %v8627 = vsel %vm2521, %v8563, %v7755
    %v8628 = vsel %vm2521, %v8564, %v7757
    %v8629 = vsel %vm2521, %v8565, %v7759
    %v8630 = vsel %vm2521, %v8566, %v7761
    %v8631 = vsel %vm2521, %v8567, %v7763
    %v8632 = vsel %vm2521, %v8568, %v7765
    %v8633 = vsel %vm2521, %v8569, %v7767
    %v8634 = vsel %vm2521, %v8570, %v7769
    %v8635 = vsel %vm2521, %v8571, %v7771
    %v8636 = vsel %vm2521, %v8572, %v7773
    %v8637 = vsel %vm2521, %v8573, %v7775
    %v8638 = vsel %vm2521, %v8574, %v7777
    %v8639 = vsel %vm2521, %v8575, %v7779
    %v8640 = vsel %vm2521, %v8576, %v7781
    %v8641 = vsel %vm2521, %v8577, %v7783
    %v8642 = vsel %vm2521, %v8578, %v7785
    %v8643 = vsel %vm2521, %v8579, %v7787
    %v8644 = vsel %vm2521, %v8580, %v7789
    %v8645 = vsel %vm2521, %v8581, %v7791
    %v8646 = vsel %vm2521, %v8582, %v7793
    %v8647 = vsel %vm2521, %v8583, %v7795
    %v8648 = vsel %vm2521, %v8584, %v7797
    %v8649 = vsel %vm2521, %v8585, %v7799
    %v8650 = vsel %vm2521, %v8586, %v7801
    %v8651 = vsel %vm2521, %v8587, %v7803
    %v8652 = vsel %vm2521, %v8588, %v7805
    %v8653 = vsel %vm2521, %v8589, %v7807
    %v8654 = vsel %vm2521, %v8590, %v7809
    %v8655 = vsel %vm2521, %v8591, %v7811
    %v8656 = vsel %vm2521, %v8592, %v7813
    %v8657 = vsel %vm2521, %v8593, %v7815
    %v8658 = vsel %vm2521, %v8594, %v7817
    %v8659 = vsel %vm2521, %v8595, %v7819
    %v8660 = vsel %vm2586, %v8596, %v7889
    %v8661 = vsel %vm2586, %v8597, %v7891
    %v8662 = vsel %vm2586, %v8598, %v7893
    %v8663 = vsel %vm2586, %v8599, %v7895
    %v8664 = vsel %vm2586, %v8600, %v7897
    %v8665 = vsel %vm2586, %v8601, %v7899
    %v8666 = vsel %vm2586, %v8602, %v7901
    %v8667 = vsel %vm2586, %v8603, %v7903
    %v8668 = vsel %vm2586, %v8604, %v7905
    %v8669 = vsel %vm2586, %v8605, %v7907
    %v8670 = vsel %vm2586, %v8606, %v7909
    %v8671 = vsel %vm2586, %v8607, %v7911
    %v8672 = vsel %vm2586, %v8608, %v7913
    %v8673 = vsel %vm2586, %v8609, %v7915
    %v8674 = vsel %vm2586, %v8610, %v7917
    %v8675 = vsel %vm2586, %v8611, %v7919
    %v8676 = vsel %vm2586, %v8612, %v7921
    %v8677 = vsel %vm2586, %v8613, %v7923
    %v8678 = vsel %vm2586, %v8614, %v7925
    %v8679 = vsel %vm2586, %v8615, %v7927
    %v8680 = vsel %vm2586, %v8616, %v7929
    %v8681 = vsel %vm2586, %v8617, %v7931
    %v8682 = vsel %vm2586, %v8618, %v7933
    %v8683 = vsel %vm2586, %v8619, %v7935
    %v8684 = vsel %vm2586, %v8620, %v7937
    %v8685 = vsel %vm2586, %v8621, %v7939
    %v8686 = vsel %vm2586, %v8622, %v7941
    %v8687 = vsel %vm2586, %v8623, %v7943
    %v8688 = vsel %vm2586, %v8624, %v7945
    %v8689 = vsel %vm2586, %v8625, %v7947
    %v8690 = vsel %vm2586, %v8626, %v7949
    %v8691 = vsel %vm2586, %v8627, %v7951
    %v8692 = vsel %vm2586, %v8628, %v7953
    %v8693 = vsel %vm2586, %v8629, %v7955
    %v8694 = vsel %vm2586, %v8630, %v7957
    %v8695 = vsel %vm2586, %v8631, %v7959
    %v8696 = vsel %vm2586, %v8632, %v7961
    %v8697 = vsel %vm2586, %v8633, %v7963
    %v8698 = vsel %vm2586, %v8634, %v7965
    %v8699 = vsel %vm2586, %v8635, %v7967
    %v8700 = vsel %vm2586, %v8636, %v7969
    %v8701 = vsel %vm2586, %v8637, %v7971
    %v8702 = vsel %vm2586, %v8638, %v7973
    %v8703 = vsel %vm2586, %v8639, %v7975
    %v8704 = vsel %vm2586, %v8640, %v7977
    %v8705 = vsel %vm2586, %v8641, %v7979
    %v8706 = vsel %vm2586, %v8642, %v7981
    %v8707 = vsel %vm2586, %v8643, %v7983
    %v8708 = vsel %vm2586, %v8644, %v7985
    %v8709 = vsel %vm2586, %v8645, %v7987
    %v8710 = vsel %vm2586, %v8646, %v7989
    %v8711 = vsel %vm2586, %v8647, %v7991
    %v8712 = vsel %vm2586, %v8648, %v7993
    %v8713 = vsel %vm2586, %v8649, %v7995
    %v8714 = vsel %vm2586, %v8650, %v7997
    %v8715 = vsel %vm2586, %v8651, %v7999
    %v8716 = vsel %vm2586, %v8652, %v8001
    %v8717 = vsel %vm2586, %v8653, %v8003
    %v8718 = vsel %vm2586, %v8654, %v8005
    %v8719 = vsel %vm2586, %v8655, %v8007
    %v8720 = vsel %vm2586, %v8656, %v8009
    %v8721 = vsel %vm2586, %v8657, %v8011
    %v8722 = vsel %vm2586, %v8658, %v8013
    %v8723 = vsel %vm2586, %v8659, %v8015
    %v8724 = vsel %vm2651, %v8660, %v8085
    %v8725 = vsel %vm2651, %v8661, %v8087
    %v8726 = vsel %vm2651, %v8662, %v8089
    %v8727 = vsel %vm2651, %v8663, %v8091
    %v8728 = vsel %vm2651, %v8664, %v8093
    %v8729 = vsel %vm2651, %v8665, %v8095
    %v8730 = vsel %vm2651, %v8666, %v8097
    %v8731 = vsel %vm2651, %v8667, %v8099
    %v8732 = vsel %vm2651, %v8668, %v8101
    %v8733 = vsel %vm2651, %v8669, %v8103
    %v8734 = vsel %vm2651, %v8670, %v8105
    %v8735 = vsel %vm2651, %v8671, %v8107
    %v8736 = vsel %vm2651, %v8672, %v8109
    %v8737 = vsel %vm2651, %v8673, %v8111
    %v8738 = vsel %vm2651, %v8674, %v8113
    %v8739 = vsel %vm2651, %v8675, %v8115
    %v8740 = vsel %vm2651, %v8676, %v8117
    %v8741 = vsel %vm2651, %v8677, %v8119
    %v8742 = vsel %vm2651, %v8678, %v8121
    %v8743 = vsel %vm2651, %v8679, %v8123
    %v8744 = vsel %vm2651, %v8680, %v8125
    %v8745 = vsel %vm2651, %v8681, %v8127
    %v8746 = vsel %vm2651, %v8682, %v8129
    %v8747 = vsel %vm2651, %v8683, %v8131
    %v8748 = vsel %vm2651, %v8684, %v8133
    %v8749 = vsel %vm2651, %v8685, %v8135
    %v8750 = vsel %vm2651, %v8686, %v8137
    %v8751 = vsel %vm2651, %v8687, %v8139
    %v8752 = vsel %vm2651, %v8688, %v8141
    %v8753 = vsel %vm2651, %v8689, %v8143
    %v8754 = vsel %vm2651, %v8690, %v8145
    %v8755 = vsel %vm2651, %v8691, %v8147
    %v8756 = vsel %vm2651, %v8692, %v8149
    %v8757 = vsel %vm2651, %v8693, %v8151
    %v8758 = vsel %vm2651, %v8694, %v8153
    %v8759 = vsel %vm2651, %v8695, %v8155
    %v8760 = vsel %vm2651, %v8696, %v8157
    %v8761 = vsel %vm2651, %v8697, %v8159
    %v8762 = vsel %vm2651, %v8698, %v8161
    %v8763 = vsel %vm2651, %v8699, %v8163
    %v8764 = vsel %vm2651, %v8700, %v8165
    %v8765 = vsel %vm2651, %v8701, %v8167
    %v8766 = vsel %vm2651, %v8702, %v8169
    %v8767 = vsel %vm2651, %v8703, %v8171
    %v8768 = vsel %vm2651, %v8704, %v8173
    %v8769 = vsel %vm2651, %v8705, %v8175
    %v8770 = vsel %vm2651, %v8706, %v8177
    %v8771 = vsel %vm2651, %v8707, %v8179
    %v8772 = vsel %vm2651, %v8708, %v8181
    %v8773 = vsel %vm2651, %v8709, %v8183
    %v8774 = vsel %vm2651, %v8710, %v8185
    %v8775 = vsel %vm2651, %v8711, %v8187
    %v8776 = vsel %vm2651, %v8712, %v8189
    %v8777 = vsel %vm2651, %v8713, %v8191
    %v8778 = vsel %vm2651, %v8714, %v8193
    %v8779 = vsel %vm2651, %v8715, %v8195
    %v8780 = vsel %vm2651, %v8716, %v8197
    %v8781 = vsel %vm2651, %v8717, %v8199
    %v8782 = vsel %vm2651, %v8718, %v8201
    %v8783 = vsel %vm2651, %v8719, %v8203
    %v8784 = vsel %vm2651, %v8720, %v8205
    %v8785 = vsel %vm2651, %v8721, %v8207
    %v8786 = vsel %vm2651, %v8722, %v8209
    %v8787 = vsel %vm2651, %v8723, %v8211
    %v8788 = vld [vmem:[%s3] sm:$0xff]
    %v8789 = vld [vmem:[%s3 + $0x8] sm:$0xff]
    %v8790 = vld [vmem:[%s3 + $0x10] sm:$0xff]
    %v8791 = vld [vmem:[%s3 + $0x18] sm:$0xff]
    %v8792 = vld [vmem:[%s3 + $0x20] sm:$0xff]
    %v8793 = vld [vmem:[%s3 + $0x28] sm:$0xff]
    %v8794 = vld [vmem:[%s3 + $0x30] sm:$0xff]
    %v8795 = vld [vmem:[%s3 + $0x38] sm:$0xff]
    %v8796 = vld [vmem:[%s3 + $0x40] sm:$0xff]
    %v8797 = vld [vmem:[%s4] sm:$0x1]
    %v8799 = vlaneseq
    %v8800 = vshrl.u32 %v8799, 7
    %v8801 = vsub.s32 0, %v8800
    %v8802 = vrot.slane %v8797, %v8801
    %v8805 = vsel %vm2732, %v8724, 0
    %v8808 = vsel %vm2732, %v8725, 0
    %v8811 = vsel %vm2732, %v8726, 0
    %v8814 = vsel %vm2732, %v8727, 0
    %v8817 = vsel %vm2732, %v8728, 0
    %v8820 = vsel %vm2732, %v8729, 0
    %v8823 = vsel %vm2732, %v8730, 0
    %v8826 = vsel %vm2732, %v8731, 0
    %v8829 = vsel %vm2732, %v8732, 0
    %v8832 = vsel %vm2732, %v8733, 0
    %v8835 = vsel %vm2732, %v8734, 0
    %v8838 = vsel %vm2732, %v8735, 0
    %v8841 = vsel %vm2732, %v8736, 0
    %v8844 = vsel %vm2732, %v8737, 0
    %v8847 = vsel %vm2732, %v8738, 0
    %v8850 = vsel %vm2732, %v8739, 0
    %v8853 = vsel %vm2732, %v8740, 0
    %v8856 = vsel %vm2732, %v8741, 0
    %v8859 = vsel %vm2732, %v8742, 0
    %v8862 = vsel %vm2732, %v8743, 0
    %v8865 = vsel %vm2732, %v8744, 0
    %v8868 = vsel %vm2732, %v8745, 0
    %v8871 = vsel %vm2732, %v8746, 0
    %v8874 = vsel %vm2732, %v8747, 0
    %v8877 = vsel %vm2732, %v8748, 0
    %v8880 = vsel %vm2732, %v8749, 0
    %v8883 = vsel %vm2732, %v8750, 0
    %v8886 = vsel %vm2732, %v8751, 0
    %v8889 = vsel %vm2732, %v8752, 0
    %v8892 = vsel %vm2732, %v8753, 0
    %v8895 = vsel %vm2732, %v8754, 0
    %v8898 = vsel %vm2732, %v8755, 0
    %v8901 = vsel %vm2732, %v8756, 0
    %v8904 = vsel %vm2732, %v8757, 0
    %v8907 = vsel %vm2732, %v8758, 0
    %v8910 = vsel %vm2732, %v8759, 0
    %v8913 = vsel %vm2732, %v8760, 0
    %v8916 = vsel %vm2732, %v8761, 0
    %v8919 = vsel %vm2732, %v8762, 0
    %v8922 = vsel %vm2732, %v8763, 0
    %v8925 = vsel %vm2732, %v8764, 0
    %v8928 = vsel %vm2732, %v8765, 0
    %v8931 = vsel %vm2732, %v8766, 0
    %v8934 = vsel %vm2732, %v8767, 0
    %v8937 = vsel %vm2732, %v8768, 0
    %v8940 = vsel %vm2732, %v8769, 0
    %v8943 = vsel %vm2732, %v8770, 0
    %v8946 = vsel %vm2732, %v8771, 0
    %v8949 = vsel %vm2732, %v8772, 0
    %v8952 = vsel %vm2732, %v8773, 0
    %v8955 = vsel %vm2732, %v8774, 0
    %v8958 = vsel %vm2732, %v8775, 0
    %v8961 = vsel %vm2732, %v8776, 0
    %v8964 = vsel %vm2732, %v8777, 0
    %v8967 = vsel %vm2732, %v8778, 0
    %v8970 = vsel %vm2732, %v8779, 0
    %v8973 = vsel %vm2732, %v8780, 0
    %v8976 = vsel %vm2732, %v8781, 0
    %v8979 = vsel %vm2732, %v8782, 0
    %v8982 = vsel %vm2732, %v8783, 0
    %v8985 = vsel %vm2732, %v8784, 0
    %v8988 = vsel %vm2732, %v8785, 0
    %v8991 = vsel %vm2732, %v8786, 0
    %v8994 = vsel %vm2732, %v8787, 0
    %8996 = vmatprep.subr.mxu0 0.0
    %v8997 = vand.u32 %v8788, 4294901760
    %8998 = vmatpush1.msra.mxu0 %v8997
    %8999 = vmatprep.subr.mxu0 0.0
    %v9000 = vand.u32 %v8789, 4294901760
    %9001 = vmatpush1.msra.mxu0 %v9000
    %9002 = vmatprep.subr.mxu0 0.0
    %v9003 = vand.u32 %v8790, 4294901760
    %9004 = vmatpush1.msra.mxu0 %v9003
    %9005 = vmatprep.subr.mxu0 0.0
    %v9006 = vand.u32 %v8791, 4294901760
    %9007 = vmatpush1.msra.mxu0 %v9006
    %9008 = vmatprep.subr.mxu0 0.0
    %v9009 = vand.u32 %v8792, 4294901760
    %9010 = vmatpush1.msra.mxu0 %v9009
    %9011 = vmatprep.subr.mxu0 0.0
    %v9012 = vand.u32 %v8793, 4294901760
    %9013 = vmatpush1.msra.mxu0 %v9012
    %9014 = vmatprep.subr.mxu0 0.0
    %v9015 = vand.u32 %v8794, 4294901760
    %9016 = vmatpush1.msra.mxu0 %v9015
    %9017 = vmatprep.subr.mxu0 0.0
    %v9018 = vand.u32 %v8795, 4294901760
    %9019 = vmatpush1.msra.mxu0 %v9018
    %9020 = vmatprep.subr.mxu0 0.0
    %v9021 = vand.u32 %v8796, 4294901760
    %9022 = vmatpush1.msra.mxu0 %v9021
    %9023 = vmatprep.subr.mxu0 0.0
    %9024 = vmatpush1.msra.mxu0 0.0
    %9025 = vmatprep.subr.mxu0 0.0
    %9026 = vmatpush1.msra.mxu0 0.0
    %9027 = vmatprep.subr.mxu0 0.0
    %9028 = vmatpush1.msra.mxu0 0.0
    %9029 = vmatprep.subr.mxu0 0.0
    %9030 = vmatpush1.msra.mxu0 0.0
    %9031 = vmatprep.subr.mxu0 0.0
    %9032 = vmatpush1.msra.mxu0 0.0
    %9033 = vmatprep.subr.mxu0 0.0
    %9034 = vmatpush1.msra.mxu0 0.0
    %9035 = vmatprep.subr.mxu0 0.0
    %9036 = vmatpush1.msra.mxu0 0.0
    %9037 = vmatprep.subr.mxu0 0.0
    %9038 = vmatpush1.msra.mxu0 0.0
    %9039 = vmatprep.subr.mxu0 0.0
    %9040 = vmatpush1.msra.mxu0 0.0
    %9041 = vmatprep.subr.mxu0 0.0
    %9042 = vmatpush1.msra.mxu0 0.0
    %9043 = vmatprep.subr.mxu0 0.0
    %9044 = vmatpush1.msra.mxu0 0.0
    %9045 = vmatprep.subr.mxu0 0.0
    %9046 = vmatpush1.msra.mxu0 0.0
    %9047 = vmatprep.subr.mxu0 0.0
    %9048 = vmatpush1.msra.mxu0 0.0
    %9049 = vmatprep.subr.mxu0 0.0
    %9050 = vmatpush1.msra.mxu0 0.0
    %9051 = vmatprep.subr.mxu0 0.0
    %9052 = vmatpush1.msra.mxu0 0.0
    %9053 = vmatprep.subr.mxu0 0.0
    %9054 = vmatpush1.msra.mxu0 0.0
    %9055 = vmatprep.subr.mxu0 0.0
    %9056 = vmatpush1.msra.mxu0 0.0
    %9057 = vmatprep.subr.mxu0 0.0
    %9058 = vmatpush1.msra.mxu0 0.0
    %9059 = vmatprep.subr.mxu0 0.0
    %9060 = vmatpush1.msra.mxu0 0.0
    %9061 = vmatprep.subr.mxu0 0.0
    %9062 = vmatpush1.msra.mxu0 0.0
    %9063 = vmatprep.subr.mxu0 0.0
    %9064 = vmatpush1.msra.mxu0 0.0
    %9065 = vmatprep.subr.mxu0 0.0
    %9066 = vmatpush1.msra.mxu0 0.0
    %9067 = vmatprep.subr.mxu0 0.0
    %9068 = vmatpush1.msra.mxu0 0.0
    %9069 = vmatprep.mubr.f32.mxu0 0.0
    %v9070 = vand.u32 %v8805, 4294901760
    %v9071 = vsub.f32 %v8805, %v9070
    %v9072 = vand.u32 %v9071, 4294901760
    %v9073 = vsub.f32 %v9071, %v9072
    %v9074 = vand.u32 %v9073, 4294901760
    %9075 = vmatmul.mubr.f32.gmra.mrb[0].mxu0 %v9074
    %v9076 = vpop.f32.mrb[0].mxu0
    %v9077 = vadd.f32 %v8802, %v9076
    %v9078 = vpop.f32.mrb[0].mxu0
    %9079 = vmatprep.mubr.f32.mxu0 0.0
    %v9080 = vand.u32 %v8808, 4294901760
    %v9081 = vsub.f32 %v8808, %v9080
    %v9082 = vand.u32 %v9081, 4294901760
    %v9083 = vsub.f32 %v9081, %v9082
    %v9084 = vand.u32 %v9083, 4294901760
    %9085 = vmatmul.mubr.f32.gmra.mrb[0].mxu0 %v9084
    %v9086 = vpop.f32.mrb[0].mxu0
    %v9087 = vadd.f32 %v8802, %v9086
    %v9088 = vpop.f32.mrb[0].mxu0
    %9089 = vmatprep.mubr.f32.mxu0 0.0
    %v9090 = vand.u32 %v8811, 4294901760
    %v9091 = vsub.f32 %v8811, %v9090
    %v9092 = vand.u32 %v9091, 4294901760
    %v9093 = vsub.f32 %v9091, %v9092
    %v9094 = vand.u32 %v9093, 4294901760
    %9095 = vmatmul.mubr.f32.gmra.mrb[0].mxu0 %v9094
    %v9096 = vpop.f32.mrb[0].mxu0
    %v9097 = vadd.f32 %v8802, %v9096
    %v9098 = vpop.f32.mrb[0].mxu0
    %9099 = vmatprep.mubr.f32.mxu0 0.0
    %v9100 = vand.u32 %v8814, 4294901760
    %v9101 = vsub.f32 %v8814, %v9100
    %v9102 = vand.u32 %v9101, 4294901760
    %v9103 = vsub.f32 %v9101, %v9102
    %v9104 = vand.u32 %v9103, 4294901760
    %9105 = vmatmul.mubr.f32.gmra.mrb[0].mxu0 %v9104
    %v9106 = vpop.f32.mrb[0].mxu0
    %v9107 = vadd.f32 %v8802, %v9106
    %v9108 = vpop.f32.mrb[0].mxu0
    %9109 = vmatprep.mubr.f32.mxu0 0.0
    %v9110 = vand.u32 %v8817, 4294901760
    %v9111 = vsub.f32 %v8817, %v9110
    %v9112 = vand.u32 %v9111, 4294901760
    %v9113 = vsub.f32 %v9111, %v9112
    %v9114 = vand.u32 %v9113, 4294901760
    %9115 = vmatmul.mubr.f32.gmra.mrb[0].mxu0 %v9114
    %v9116 = vpop.f32.mrb[0].mxu0
    %v9117 = vadd.f32 %v8802, %v9116
    %v9118 = vpop.f32.mrb[0].mxu0
    %9119 = vmatprep.mubr.f32.mxu0 0.0
    %v9120 = vand.u32 %v8820, 4294901760
    %v9121 = vsub.f32 %v8820, %v9120
    %v9122 = vand.u32 %v9121, 4294901760
    %v9123 = vsub.f32 %v9121, %v9122
    %v9124 = vand.u32 %v9123, 4294901760
    %9125 = vmatmul.mubr.f32.gmra.mrb[0].mxu0 %v9124
    %v9126 = vpop.f32.mrb[0].mxu0
    %v9127 = vadd.f32 %v8802, %v9126
    %v9128 = vpop.f32.mrb[0].mxu0
    %9129 = vmatprep.mubr.f32.mxu0 0.0
    %v9130 = vand.u32 %v8823, 4294901760
    %v9131 = vsub.f32 %v8823, %v9130
    %v9132 = vand.u32 %v9131, 4294901760
    %v9133 = vsub.f32 %v9131, %v9132
    %v9134 = vand.u32 %v9133, 4294901760
    %9135 = vmatmul.mubr.f32.gmra.mrb[0].mxu0 %v9134
    %v9136 = vpop.f32.mrb[0].mxu0
    %v9137 = vadd.f32 %v8802, %v9136
    %v9138 = vpop.f32.mrb[0].mxu0
    %9139 = vmatprep.mubr.f32.mxu0 0.0
    %v9140 = vand.u32 %v8826, 4294901760
    %v9141 = vsub.f32 %v8826, %v9140
    %v9142 = vand.u32 %v9141, 4294901760
    %v9143 = vsub.f32 %v9141, %v9142
    %v9144 = vand.u32 %v9143, 4294901760
    %9145 = vmatmul.mubr.f32.gmra.mrb[0].mxu0 %v9144
    %v9146 = vpop.f32.mrb[0].mxu0
    %v9147 = vadd.f32 %v8802, %v9146
    %v9148 = vpop.f32.mrb[0].mxu0
    %9149 = vmatprep.mubr.f32.mxu0 0.0
    %v9150 = vand.u32 %v8829, 4294901760
    %v9151 = vsub.f32 %v8829, %v9150
    %v9152 = vand.u32 %v9151, 4294901760
    %v9153 = vsub.f32 %v9151, %v9152
    %v9154 = vand.u32 %v9153, 4294901760
    %9155 = vmatmul.mubr.f32.gmra.mrb[0].mxu0 %v9154
    %v9156 = vpop.f32.mrb[0].mxu0
    %v9157 = vadd.f32 %v8802, %v9156
    %v9158 = vpop.f32.mrb[0].mxu0
    %9159 = vmatprep.mubr.f32.mxu0 0.0
    %v9160 = vand.u32 %v8832, 4294901760
    %v9161 = vsub.f32 %v8832, %v9160
    %v9162 = vand.u32 %v9161, 4294901760
    %v9163 = vsub.f32 %v9161, %v9162
    %v9164 = vand.u32 %v9163, 4294901760
    %9165 = vmatmul.mubr.f32.gmra.mrb[0].mxu0 %v9164
    %v9166 = vpop.f32.mrb[0].mxu0
    %v9167 = vadd.f32 %v8802, %v9166
    %v9168 = vpop.f32.mrb[0].mxu0
    %9169 = vmatprep.mubr.f32.mxu0 0.0
    %v9170 = vand.u32 %v8835, 4294901760
    %v9171 = vsub.f32 %v8835, %v9170
    %v9172 = vand.u32 %v9171, 4294901760
    %v9173 = vsub.f32 %v9171, %v9172
    %v9174 = vand.u32 %v9173, 4294901760
    %9175 = vmatmul.mubr.f32.gmra.mrb[0].mxu0 %v9174
    %v9176 = vpop.f32.mrb[0].mxu0
    %v9177 = vadd.f32 %v8802, %v9176
    %v9178 = vpop.f32.mrb[0].mxu0
    %9179 = vmatprep.mubr.f32.mxu0 0.0
    %v9180 = vand.u32 %v8838, 4294901760
    %v9181 = vsub.f32 %v8838, %v9180
    %v9182 = vand.u32 %v9181, 4294901760
    %v9183 = vsub.f32 %v9181, %v9182
    %v9184 = vand.u32 %v9183, 4294901760
    %9185 = vmatmul.mubr.f32.gmra.mrb[0].mxu0 %v9184
    %v9186 = vpop.f32.mrb[0].mxu0
    %v9187 = vadd.f32 %v8802, %v9186
    %v9188 = vpop.f32.mrb[0].mxu0
    %9189 = vmatprep.mubr.f32.mxu0 0.0
    %v9190 = vand.u32 %v8841, 4294901760
    %v9191 = vsub.f32 %v8841, %v9190
    %v9192 = vand.u32 %v9191, 4294901760
    %v9193 = vsub.f32 %v9191, %v9192
    %v9194 = vand.u32 %v9193, 4294901760
    %9195 = vmatmul.mubr.f32.gmra.mrb[0].mxu0 %v9194
    %v9196 = vpop.f32.mrb[0].mxu0
    %v9197 = vadd.f32 %v8802, %v9196
    %v9198 = vpop.f32.mrb[0].mxu0
    %9199 = vmatprep.mubr.f32.mxu0 0.0
    %v9200 = vand.u32 %v8844, 4294901760
    %v9201 = vsub.f32 %v8844, %v9200
    %v9202 = vand.u32 %v9201, 4294901760
    %v9203 = vsub.f32 %v9201, %v9202
    %v9204 = vand.u32 %v9203, 4294901760
    %9205 = vmatmul.mubr.f32.gmra.mrb[0].mxu0 %v9204
    %v9206 = vpop.f32.mrb[0].mxu0
    %v9207 = vadd.f32 %v8802, %v9206
    %v9208 = vpop.f32.mrb[0].mxu0
    %9209 = vmatprep.mubr.f32.mxu0 0.0
    %v9210 = vand.u32 %v8847, 4294901760
    %v9211 = vsub.f32 %v8847, %v9210
    %v9212 = vand.u32 %v9211, 4294901760
    %v9213 = vsub.f32 %v9211, %v9212
    %v9214 = vand.u32 %v9213, 4294901760
    %9215 = vmatmul.mubr.f32.gmra.mrb[0].mxu0 %v9214
    %v9216 = vpop.f32.mrb[0].mxu0
    %v9217 = vadd.f32 %v8802, %v9216
    %v9218 = vpop.f32.mrb[0].mxu0
    %9219 = vmatprep.mubr.f32.mxu0 0.0
    %v9220 = vand.u32 %v8850, 4294901760
    %v9221 = vsub.f32 %v8850, %v9220
    %v9222 = vand.u32 %v9221, 4294901760
    %v9223 = vsub.f32 %v9221, %v9222
    %v9224 = vand.u32 %v9223, 4294901760
    %9225 = vmatmul.mubr.f32.gmra.mrb[0].mxu0 %v9224
    %v9226 = vpop.f32.mrb[0].mxu0
    %v9227 = vadd.f32 %v8802, %v9226
    %v9228 = vpop.f32.mrb[0].mxu0
    %9229 = vmatprep.mubr.f32.mxu0 0.0
    %v9230 = vand.u32 %v8853, 4294901760
    %v9231 = vsub.f32 %v8853, %v9230
    %v9232 = vand.u32 %v9231, 4294901760
    %v9233 = vsub.f32 %v9231, %v9232
    %v9234 = vand.u32 %v9233, 4294901760
    %9235 = vmatmul.mubr.f32.gmra.mrb[0].mxu0 %v9234
    %v9236 = vpop.f32.mrb[0].mxu0
    %v9237 = vadd.f32 %v8802, %v9236
    %v9238 = vpop.f32.mrb[0].mxu0
    %9239 = vmatprep.mubr.f32.mxu0 0.0
    %v9240 = vand.u32 %v8856, 4294901760
    %v9241 = vsub.f32 %v8856, %v9240
    %v9242 = vand.u32 %v9241, 4294901760
    %v9243 = vsub.f32 %v9241, %v9242
    %v9244 = vand.u32 %v9243, 4294901760
    %9245 = vmatmul.mubr.f32.gmra.mrb[0].mxu0 %v9244
    %v9246 = vpop.f32.mrb[0].mxu0
    %v9247 = vadd.f32 %v8802, %v9246
    %v9248 = vpop.f32.mrb[0].mxu0
    %9249 = vmatprep.mubr.f32.mxu0 0.0
    %v9250 = vand.u32 %v8859, 4294901760
    %v9251 = vsub.f32 %v8859, %v9250
    %v9252 = vand.u32 %v9251, 4294901760
    %v9253 = vsub.f32 %v9251, %v9252
    %v9254 = vand.u32 %v9253, 4294901760
    %9255 = vmatmul.mubr.f32.gmra.mrb[0].mxu0 %v9254
    %v9256 = vpop.f32.mrb[0].mxu0
    %v9257 = vadd.f32 %v8802, %v9256
    %v9258 = vpop.f32.mrb[0].mxu0
    %9259 = vmatprep.mubr.f32.mxu0 0.0
    %v9260 = vand.u32 %v8862, 4294901760
    %v9261 = vsub.f32 %v8862, %v9260
    %v9262 = vand.u32 %v9261, 4294901760
    %v9263 = vsub.f32 %v9261, %v9262
    %v9264 = vand.u32 %v9263, 4294901760
    %9265 = vmatmul.mubr.f32.gmra.mrb[0].mxu0 %v9264
    %v9266 = vpop.f32.mrb[0].mxu0
    %v9267 = vadd.f32 %v8802, %v9266
    %v9268 = vpop.f32.mrb[0].mxu0
    %9269 = vmatprep.mubr.f32.mxu0 0.0
    %v9270 = vand.u32 %v8865, 4294901760
    %v9271 = vsub.f32 %v8865, %v9270
    %v9272 = vand.u32 %v9271, 4294901760
    %v9273 = vsub.f32 %v9271, %v9272
    %v9274 = vand.u32 %v9273, 4294901760
    %9275 = vmatmul.mubr.f32.gmra.mrb[0].mxu0 %v9274
    %v9276 = vpop.f32.mrb[0].mxu0
    %v9277 = vadd.f32 %v8802, %v9276
    %v9278 = vpop.f32.mrb[0].mxu0
    %9279 = vmatprep.mubr.f32.mxu0 0.0
    %v9280 = vand.u32 %v8868, 4294901760
    %v9281 = vsub.f32 %v8868, %v9280
    %v9282 = vand.u32 %v9281, 4294901760
    %v9283 = vsub.f32 %v9281, %v9282
    %v9284 = vand.u32 %v9283, 4294901760
    %9285 = vmatmul.mubr.f32.gmra.mrb[0].mxu0 %v9284
    %v9286 = vpop.f32.mrb[0].mxu0
    %v9287 = vadd.f32 %v8802, %v9286
    %v9288 = vpop.f32.mrb[0].mxu0
    %9289 = vmatprep.mubr.f32.mxu0 0.0
    %v9290 = vand.u32 %v8871, 4294901760
    %v9291 = vsub.f32 %v8871, %v9290
    %v9292 = vand.u32 %v9291, 4294901760
    %v9293 = vsub.f32 %v9291, %v9292
    %v9294 = vand.u32 %v9293, 4294901760
    %9295 = vmatmul.mubr.f32.gmra.mrb[0].mxu0 %v9294
    %v9296 = vpop.f32.mrb[0].mxu0
    %v9297 = vadd.f32 %v8802, %v9296
    %v9298 = vpop.f32.mrb[0].mxu0
    %9299 = vmatprep.mubr.f32.mxu0 0.0
    %v9300 = vand.u32 %v8874, 4294901760
    %v9301 = vsub.f32 %v8874, %v9300
    %v9302 = vand.u32 %v9301, 4294901760
    %v9303 = vsub.f32 %v9301, %v9302
    %v9304 = vand.u32 %v9303, 4294901760
    %9305 = vmatmul.mubr.f32.gmra.mrb[0].mxu0 %v9304
    %v9306 = vpop.f32.mrb[0].mxu0
    %v9307 = vadd.f32 %v8802, %v9306
    %v9308 = vpop.f32.mrb[0].mxu0
    %9309 = vmatprep.mubr.f32.mxu0 0.0
    %v9310 = vand.u32 %v8877, 4294901760
    %v9311 = vsub.f32 %v8877, %v9310
    %v9312 = vand.u32 %v9311, 4294901760
    %v9313 = vsub.f32 %v9311, %v9312
    %v9314 = vand.u32 %v9313, 4294901760
    %9315 = vmatmul.mubr.f32.gmra.mrb[0].mxu0 %v9314
    %v9316 = vpop.f32.mrb[0].mxu0
    %v9317 = vadd.f32 %v8802, %v9316
    %v9318 = vpop.f32.mrb[0].mxu0
    %9319 = vmatprep.mubr.f32.mxu0 0.0
    %v9320 = vand.u32 %v8880, 4294901760
    %v9321 = vsub.f32 %v8880, %v9320
    %v9322 = vand.u32 %v9321, 4294901760
    %v9323 = vsub.f32 %v9321, %v9322
    %v9324 = vand.u32 %v9323, 4294901760
    %9325 = vmatmul.mubr.f32.gmra.mrb[0].mxu0 %v9324
    %v9326 = vpop.f32.mrb[0].mxu0
    %v9327 = vadd.f32 %v8802, %v9326
    %v9328 = vpop.f32.mrb[0].mxu0
    %9329 = vmatprep.mubr.f32.mxu0 0.0
    %v9330 = vand.u32 %v8883, 4294901760
    %v9331 = vsub.f32 %v8883, %v9330
    %v9332 = vand.u32 %v9331, 4294901760
    %v9333 = vsub.f32 %v9331, %v9332
    %v9334 = vand.u32 %v9333, 4294901760
    %9335 = vmatmul.mubr.f32.gmra.mrb[0].mxu0 %v9334
    %v9336 = vpop.f32.mrb[0].mxu0
    %v9337 = vadd.f32 %v8802, %v9336
    %v9338 = vpop.f32.mrb[0].mxu0
    %9339 = vmatprep.mubr.f32.mxu0 0.0
    %v9340 = vand.u32 %v8886, 4294901760
    %v9341 = vsub.f32 %v8886, %v9340
    %v9342 = vand.u32 %v9341, 4294901760
    %v9343 = vsub.f32 %v9341, %v9342
    %v9344 = vand.u32 %v9343, 4294901760
    %9345 = vmatmul.mubr.f32.gmra.mrb[0].mxu0 %v9344
    %v9346 = vpop.f32.mrb[0].mxu0
    %v9347 = vadd.f32 %v8802, %v9346
    %v9348 = vpop.f32.mrb[0].mxu0
    %9349 = vmatprep.mubr.f32.mxu0 0.0
    %v9350 = vand.u32 %v8889, 4294901760
    %v9351 = vsub.f32 %v8889, %v9350
    %v9352 = vand.u32 %v9351, 4294901760
    %v9353 = vsub.f32 %v9351, %v9352
    %v9354 = vand.u32 %v9353, 4294901760
    %9355 = vmatmul.mubr.f32.gmra.mrb[0].mxu0 %v9354
    %v9356 = vpop.f32.mrb[0].mxu0
    %v9357 = vadd.f32 %v8802, %v9356
    %v9358 = vpop.f32.mrb[0].mxu0
    %9359 = vmatprep.mubr.f32.mxu0 0.0
    %v9360 = vand.u32 %v8892, 4294901760
    %v9361 = vsub.f32 %v8892, %v9360
    %v9362 = vand.u32 %v9361, 4294901760
    %v9363 = vsub.f32 %v9361, %v9362
    %v9364 = vand.u32 %v9363, 4294901760
    %9365 = vmatmul.mubr.f32.gmra.mrb[0].mxu0 %v9364
    %v9366 = vpop.f32.mrb[0].mxu0
    %v9367 = vadd.f32 %v8802, %v9366
    %v9368 = vpop.f32.mrb[0].mxu0
    %9369 = vmatprep.mubr.f32.mxu0 0.0
    %v9370 = vand.u32 %v8895, 4294901760
    %v9371 = vsub.f32 %v8895, %v9370
    %v9372 = vand.u32 %v9371, 4294901760
    %v9373 = vsub.f32 %v9371, %v9372
    %v9374 = vand.u32 %v9373, 4294901760
    %9375 = vmatmul.mubr.f32.gmra.mrb[0].mxu0 %v9374
    %v9376 = vpop.f32.mrb[0].mxu0
    %v9377 = vadd.f32 %v8802, %v9376
    %v9378 = vpop.f32.mrb[0].mxu0
    %9379 = vmatprep.mubr.f32.mxu0 0.0
    %v9380 = vand.u32 %v8898, 4294901760
    %v9381 = vsub.f32 %v8898, %v9380
    %v9382 = vand.u32 %v9381, 4294901760
    %v9383 = vsub.f32 %v9381, %v9382
    %v9384 = vand.u32 %v9383, 4294901760
    %9385 = vmatmul.mubr.f32.gmra.mrb[0].mxu0 %v9384
    %v9386 = vpop.f32.mrb[0].mxu0
    %v9387 = vadd.f32 %v8802, %v9386
    %v9388 = vpop.f32.mrb[0].mxu0
    %9389 = vmatprep.mubr.f32.mxu0 0.0
    %v9390 = vand.u32 %v8901, 4294901760
    %v9391 = vsub.f32 %v8901, %v9390
    %v9392 = vand.u32 %v9391, 4294901760
    %v9393 = vsub.f32 %v9391, %v9392
    %v9394 = vand.u32 %v9393, 4294901760
    %9395 = vmatmul.mubr.f32.gmra.mrb[0].mxu0 %v9394
    %v9396 = vpop.f32.mrb[0].mxu0
    %v9397 = vadd.f32 %v8802, %v9396
    %v9398 = vpop.f32.mrb[0].mxu0
    %9399 = vmatprep.mubr.f32.mxu0 0.0
    %v9400 = vand.u32 %v8904, 4294901760
    %v9401 = vsub.f32 %v8904, %v9400
    %v9402 = vand.u32 %v9401, 4294901760
    %v9403 = vsub.f32 %v9401, %v9402
    %v9404 = vand.u32 %v9403, 4294901760
    %9405 = vmatmul.mubr.f32.gmra.mrb[0].mxu0 %v9404
    %v9406 = vpop.f32.mrb[0].mxu0
    %v9407 = vadd.f32 %v8802, %v9406
    %v9408 = vpop.f32.mrb[0].mxu0
    %9409 = vmatprep.mubr.f32.mxu0 0.0
    %v9410 = vand.u32 %v8907, 4294901760
    %v9411 = vsub.f32 %v8907, %v9410
    %v9412 = vand.u32 %v9411, 4294901760
    %v9413 = vsub.f32 %v9411, %v9412
    %v9414 = vand.u32 %v9413, 4294901760
    %9415 = vmatmul.mubr.f32.gmra.mrb[0].mxu0 %v9414
    %v9416 = vpop.f32.mrb[0].mxu0
    %v9417 = vadd.f32 %v8802, %v9416
    %v9418 = vpop.f32.mrb[0].mxu0
    %9419 = vmatprep.mubr.f32.mxu0 0.0
    %v9420 = vand.u32 %v8910, 4294901760
    %v9421 = vsub.f32 %v8910, %v9420
    %v9422 = vand.u32 %v9421, 4294901760
    %v9423 = vsub.f32 %v9421, %v9422
    %v9424 = vand.u32 %v9423, 4294901760
    %9425 = vmatmul.mubr.f32.gmra.mrb[0].mxu0 %v9424
    %v9426 = vpop.f32.mrb[0].mxu0
    %v9427 = vadd.f32 %v8802, %v9426
    %v9428 = vpop.f32.mrb[0].mxu0
    %9429 = vmatprep.mubr.f32.mxu0 0.0
    %v9430 = vand.u32 %v8913, 4294901760
    %v9431 = vsub.f32 %v8913, %v9430
    %v9432 = vand.u32 %v9431, 4294901760
    %v9433 = vsub.f32 %v9431, %v9432
    %v9434 = vand.u32 %v9433, 4294901760
    %9435 = vmatmul.mubr.f32.gmra.mrb[0].mxu0 %v9434
    %v9436 = vpop.f32.mrb[0].mxu0
    %v9437 = vadd.f32 %v8802, %v9436
    %v9438 = vpop.f32.mrb[0].mxu0
    %9439 = vmatprep.mubr.f32.mxu0 0.0
    %v9440 = vand.u32 %v8916, 4294901760
    %v9441 = vsub.f32 %v8916, %v9440
    %v9442 = vand.u32 %v9441, 4294901760
    %v9443 = vsub.f32 %v9441, %v9442
    %v9444 = vand.u32 %v9443, 4294901760
    %9445 = vmatmul.mubr.f32.gmra.mrb[0].mxu0 %v9444
    %v9446 = vpop.f32.mrb[0].mxu0
    %v9447 = vadd.f32 %v8802, %v9446
    %v9448 = vpop.f32.mrb[0].mxu0
    %9449 = vmatprep.mubr.f32.mxu0 0.0
    %v9450 = vand.u32 %v8919, 4294901760
    %v9451 = vsub.f32 %v8919, %v9450
    %v9452 = vand.u32 %v9451, 4294901760
    %v9453 = vsub.f32 %v9451, %v9452
    %v9454 = vand.u32 %v9453, 4294901760
    %9455 = vmatmul.mubr.f32.gmra.mrb[0].mxu0 %v9454
    %v9456 = vpop.f32.mrb[0].mxu0
    %v9457 = vadd.f32 %v8802, %v9456
    %v9458 = vpop.f32.mrb[0].mxu0
    %9459 = vmatprep.mubr.f32.mxu0 0.0
    %v9460 = vand.u32 %v8922, 4294901760
    %v9461 = vsub.f32 %v8922, %v9460
    %v9462 = vand.u32 %v9461, 4294901760
    %v9463 = vsub.f32 %v9461, %v9462
    %v9464 = vand.u32 %v9463, 4294901760
    %9465 = vmatmul.mubr.f32.gmra.mrb[0].mxu0 %v9464
    %v9466 = vpop.f32.mrb[0].mxu0
    %v9467 = vadd.f32 %v8802, %v9466
    %v9468 = vpop.f32.mrb[0].mxu0
    %9469 = vmatprep.mubr.f32.mxu0 0.0
    %v9470 = vand.u32 %v8925, 4294901760
    %v9471 = vsub.f32 %v8925, %v9470
    %v9472 = vand.u32 %v9471, 4294901760
    %v9473 = vsub.f32 %v9471, %v9472
    %v9474 = vand.u32 %v9473, 4294901760
    %9475 = vmatmul.mubr.f32.gmra.mrb[0].mxu0 %v9474
    %v9476 = vpop.f32.mrb[0].mxu0
    %v9477 = vadd.f32 %v8802, %v9476
    %v9478 = vpop.f32.mrb[0].mxu0
    %9479 = vmatprep.mubr.f32.mxu0 0.0
    %v9480 = vand.u32 %v8928, 4294901760
    %v9481 = vsub.f32 %v8928, %v9480
    %v9482 = vand.u32 %v9481, 4294901760
    %v9483 = vsub.f32 %v9481, %v9482
    %v9484 = vand.u32 %v9483, 4294901760
    %9485 = vmatmul.mubr.f32.gmra.mrb[0].mxu0 %v9484
    %v9486 = vpop.f32.mrb[0].mxu0
    %v9487 = vadd.f32 %v8802, %v9486
    %v9488 = vpop.f32.mrb[0].mxu0
    %9489 = vmatprep.mubr.f32.mxu0 0.0
    %v9490 = vand.u32 %v8931, 4294901760
    %v9491 = vsub.f32 %v8931, %v9490
    %v9492 = vand.u32 %v9491, 4294901760
    %v9493 = vsub.f32 %v9491, %v9492
    %v9494 = vand.u32 %v9493, 4294901760
    %9495 = vmatmul.mubr.f32.gmra.mrb[0].mxu0 %v9494
    %v9496 = vpop.f32.mrb[0].mxu0
    %v9497 = vadd.f32 %v8802, %v9496
    %v9498 = vpop.f32.mrb[0].mxu0
    %9499 = vmatprep.mubr.f32.mxu0 0.0
    %v9500 = vand.u32 %v8934, 4294901760
    %v9501 = vsub.f32 %v8934, %v9500
    %v9502 = vand.u32 %v9501, 4294901760
    %v9503 = vsub.f32 %v9501, %v9502
    %v9504 = vand.u32 %v9503, 4294901760
    %9505 = vmatmul.mubr.f32.gmra.mrb[0].mxu0 %v9504
    %v9506 = vpop.f32.mrb[0].mxu0
    %v9507 = vadd.f32 %v8802, %v9506
    %v9508 = vpop.f32.mrb[0].mxu0
    %9509 = vmatprep.mubr.f32.mxu0 0.0
    %v9510 = vand.u32 %v8937, 4294901760
    %v9511 = vsub.f32 %v8937, %v9510
    %v9512 = vand.u32 %v9511, 4294901760
    %v9513 = vsub.f32 %v9511, %v9512
    %v9514 = vand.u32 %v9513, 4294901760
    %9515 = vmatmul.mubr.f32.gmra.mrb[0].mxu0 %v9514
    %v9516 = vpop.f32.mrb[0].mxu0
    %v9517 = vadd.f32 %v8802, %v9516
    %v9518 = vpop.f32.mrb[0].mxu0
    %9519 = vmatprep.mubr.f32.mxu0 0.0
    %v9520 = vand.u32 %v8940, 4294901760
    %v9521 = vsub.f32 %v8940, %v9520
    %v9522 = vand.u32 %v9521, 4294901760
    %v9523 = vsub.f32 %v9521, %v9522
    %v9524 = vand.u32 %v9523, 4294901760
    %9525 = vmatmul.mubr.f32.gmra.mrb[0].mxu0 %v9524
    %v9526 = vpop.f32.mrb[0].mxu0
    %v9527 = vadd.f32 %v8802, %v9526
    %v9528 = vpop.f32.mrb[0].mxu0
    %9529 = vmatprep.mubr.f32.mxu0 0.0
    %v9530 = vand.u32 %v8943, 4294901760
    %v9531 = vsub.f32 %v8943, %v9530
    %v9532 = vand.u32 %v9531, 4294901760
    %v9533 = vsub.f32 %v9531, %v9532
    %v9534 = vand.u32 %v9533, 4294901760
    %9535 = vmatmul.mubr.f32.gmra.mrb[0].mxu0 %v9534
    %v9536 = vpop.f32.mrb[0].mxu0
    %v9537 = vadd.f32 %v8802, %v9536
    %v9538 = vpop.f32.mrb[0].mxu0
    %9539 = vmatprep.mubr.f32.mxu0 0.0
    %v9540 = vand.u32 %v8946, 4294901760
    %v9541 = vsub.f32 %v8946, %v9540
    %v9542 = vand.u32 %v9541, 4294901760
    %v9543 = vsub.f32 %v9541, %v9542
    %v9544 = vand.u32 %v9543, 4294901760
    %9545 = vmatmul.mubr.f32.gmra.mrb[0].mxu0 %v9544
    %v9546 = vpop.f32.mrb[0].mxu0
    %v9547 = vadd.f32 %v8802, %v9546
    %v9548 = vpop.f32.mrb[0].mxu0
    %9549 = vmatprep.mubr.f32.mxu0 0.0
    %v9550 = vand.u32 %v8949, 4294901760
    %v9551 = vsub.f32 %v8949, %v9550
    %v9552 = vand.u32 %v9551, 4294901760
    %v9553 = vsub.f32 %v9551, %v9552
    %v9554 = vand.u32 %v9553, 4294901760
    %9555 = vmatmul.mubr.f32.gmra.mrb[0].mxu0 %v9554
    %v9556 = vpop.f32.mrb[0].mxu0
    %v9557 = vadd.f32 %v8802, %v9556
    %v9558 = vpop.f32.mrb[0].mxu0
    %9559 = vmatprep.mubr.f32.mxu0 0.0
    %v9560 = vand.u32 %v8952, 4294901760
    %v9561 = vsub.f32 %v8952, %v9560
    %v9562 = vand.u32 %v9561, 4294901760
    %v9563 = vsub.f32 %v9561, %v9562
    %v9564 = vand.u32 %v9563, 4294901760
    %9565 = vmatmul.mubr.f32.gmra.mrb[0].mxu0 %v9564
    %v9566 = vpop.f32.mrb[0].mxu0
    %v9567 = vadd.f32 %v8802, %v9566
    %v9568 = vpop.f32.mrb[0].mxu0
    %9569 = vmatprep.mubr.f32.mxu0 0.0
    %v9570 = vand.u32 %v8955, 4294901760
    %v9571 = vsub.f32 %v8955, %v9570
    %v9572 = vand.u32 %v9571, 4294901760
    %v9573 = vsub.f32 %v9571, %v9572
    %v9574 = vand.u32 %v9573, 4294901760
    %9575 = vmatmul.mubr.f32.gmra.mrb[0].mxu0 %v9574
    %v9576 = vpop.f32.mrb[0].mxu0
    %v9577 = vadd.f32 %v8802, %v9576
    %v9578 = vpop.f32.mrb[0].mxu0
    %9579 = vmatprep.mubr.f32.mxu0 0.0
    %v9580 = vand.u32 %v8958, 4294901760
    %v9581 = vsub.f32 %v8958, %v9580
    %v9582 = vand.u32 %v9581, 4294901760
    %v9583 = vsub.f32 %v9581, %v9582
    %v9584 = vand.u32 %v9583, 4294901760
    %9585 = vmatmul.mubr.f32.gmra.mrb[0].mxu0 %v9584
    %v9586 = vpop.f32.mrb[0].mxu0
    %v9587 = vadd.f32 %v8802, %v9586
    %v9588 = vpop.f32.mrb[0].mxu0
    %9589 = vmatprep.mubr.f32.mxu0 0.0
    %v9590 = vand.u32 %v8961, 4294901760
    %v9591 = vsub.f32 %v8961, %v9590
    %v9592 = vand.u32 %v9591, 4294901760
    %v9593 = vsub.f32 %v9591, %v9592
    %v9594 = vand.u32 %v9593, 4294901760
    %9595 = vmatmul.mubr.f32.gmra.mrb[0].mxu0 %v9594
    %v9596 = vpop.f32.mrb[0].mxu0
    %v9597 = vadd.f32 %v8802, %v9596
    %v9598 = vpop.f32.mrb[0].mxu0
    %9599 = vmatprep.mubr.f32.mxu0 0.0
    %v9600 = vand.u32 %v8964, 4294901760
    %v9601 = vsub.f32 %v8964, %v9600
    %v9602 = vand.u32 %v9601, 4294901760
    %v9603 = vsub.f32 %v9601, %v9602
    %v9604 = vand.u32 %v9603, 4294901760
    %9605 = vmatmul.mubr.f32.gmra.mrb[0].mxu0 %v9604
    %v9606 = vpop.f32.mrb[0].mxu0
    %v9607 = vadd.f32 %v8802, %v9606
    %v9608 = vpop.f32.mrb[0].mxu0
    %9609 = vmatprep.mubr.f32.mxu0 0.0
    %v9610 = vand.u32 %v8967, 4294901760
    %v9611 = vsub.f32 %v8967, %v9610
    %v9612 = vand.u32 %v9611, 4294901760
    %v9613 = vsub.f32 %v9611, %v9612
    %v9614 = vand.u32 %v9613, 4294901760
    %9615 = vmatmul.mubr.f32.gmra.mrb[0].mxu0 %v9614
    %v9616 = vpop.f32.mrb[0].mxu0
    %v9617 = vadd.f32 %v8802, %v9616
    %v9618 = vpop.f32.mrb[0].mxu0
    %9619 = vmatprep.mubr.f32.mxu0 0.0
    %v9620 = vand.u32 %v8970, 4294901760
    %v9621 = vsub.f32 %v8970, %v9620
    %v9622 = vand.u32 %v9621, 4294901760
    %v9623 = vsub.f32 %v9621, %v9622
    %v9624 = vand.u32 %v9623, 4294901760
    %9625 = vmatmul.mubr.f32.gmra.mrb[0].mxu0 %v9624
    %v9626 = vpop.f32.mrb[0].mxu0
    %v9627 = vadd.f32 %v8802, %v9626
    %v9628 = vpop.f32.mrb[0].mxu0
    %9629 = vmatprep.mubr.f32.mxu0 0.0
    %v9630 = vand.u32 %v8973, 4294901760
    %v9631 = vsub.f32 %v8973, %v9630
    %v9632 = vand.u32 %v9631, 4294901760
    %v9633 = vsub.f32 %v9631, %v9632
    %v9634 = vand.u32 %v9633, 4294901760
    %9635 = vmatmul.mubr.f32.gmra.mrb[0].mxu0 %v9634
    %v9636 = vpop.f32.mrb[0].mxu0
    %v9637 = vadd.f32 %v8802, %v9636
    %v9638 = vpop.f32.mrb[0].mxu0
    %9639 = vmatprep.mubr.f32.mxu0 0.0
    %v9640 = vand.u32 %v8976, 4294901760
    %v9641 = vsub.f32 %v8976, %v9640
    %v9642 = vand.u32 %v9641, 4294901760
    %v9643 = vsub.f32 %v9641, %v9642
    %v9644 = vand.u32 %v9643, 4294901760
    %9645 = vmatmul.mubr.f32.gmra.mrb[0].mxu0 %v9644
    %v9646 = vpop.f32.mrb[0].mxu0
    %v9647 = vadd.f32 %v8802, %v9646
    %v9648 = vpop.f32.mrb[0].mxu0
    %9649 = vmatprep.mubr.f32.mxu0 0.0
    %v9650 = vand.u32 %v8979, 4294901760
    %v9651 = vsub.f32 %v8979, %v9650
    %v9652 = vand.u32 %v9651, 4294901760
    %v9653 = vsub.f32 %v9651, %v9652
    %v9654 = vand.u32 %v9653, 4294901760
    %9655 = vmatmul.mubr.f32.gmra.mrb[0].mxu0 %v9654
    %v9656 = vpop.f32.mrb[0].mxu0
    %v9657 = vadd.f32 %v8802, %v9656
    %v9658 = vpop.f32.mrb[0].mxu0
    %9659 = vmatprep.mubr.f32.mxu0 0.0
    %v9660 = vand.u32 %v8982, 4294901760
    %v9661 = vsub.f32 %v8982, %v9660
    %v9662 = vand.u32 %v9661, 4294901760
    %v9663 = vsub.f32 %v9661, %v9662
    %v9664 = vand.u32 %v9663, 4294901760
    %9665 = vmatmul.mubr.f32.gmra.mrb[0].mxu0 %v9664
    %v9666 = vpop.f32.mrb[0].mxu0
    %v9667 = vadd.f32 %v8802, %v9666
    %v9668 = vpop.f32.mrb[0].mxu0
    %9669 = vmatprep.mubr.f32.mxu0 0.0
    %v9670 = vand.u32 %v8985, 4294901760
    %v9671 = vsub.f32 %v8985, %v9670
    %v9672 = vand.u32 %v9671, 4294901760
    %v9673 = vsub.f32 %v9671, %v9672
    %v9674 = vand.u32 %v9673, 4294901760
    %9675 = vmatmul.mubr.f32.gmra.mrb[0].mxu0 %v9674
    %v9676 = vpop.f32.mrb[0].mxu0
    %v9677 = vadd.f32 %v8802, %v9676
    %v9678 = vpop.f32.mrb[0].mxu0
    %9679 = vmatprep.mubr.f32.mxu0 0.0
    %v9680 = vand.u32 %v8988, 4294901760
    %v9681 = vsub.f32 %v8988, %v9680
    %v9682 = vand.u32 %v9681, 4294901760
    %v9683 = vsub.f32 %v9681, %v9682
    %v9684 = vand.u32 %v9683, 4294901760
    %9685 = vmatmul.mubr.f32.gmra.mrb[0].mxu0 %v9684
    %v9686 = vpop.f32.mrb[0].mxu0
    %v9687 = vadd.f32 %v8802, %v9686
    %v9688 = vpop.f32.mrb[0].mxu0
    %9689 = vmatprep.mubr.f32.mxu0 0.0
    %v9690 = vand.u32 %v8991, 4294901760
    %v9691 = vsub.f32 %v8991, %v9690
    %v9692 = vand.u32 %v9691, 4294901760
    %v9693 = vsub.f32 %v9691, %v9692
    %v9694 = vand.u32 %v9693, 4294901760
    %9695 = vmatmul.mubr.f32.gmra.mrb[0].mxu0 %v9694
    %v9696 = vpop.f32.mrb[0].mxu0
    %v9697 = vadd.f32 %v8802, %v9696
    %v9698 = vpop.f32.mrb[0].mxu0
    %9699 = vmatprep.mubr.f32.mxu0 0.0
    %v9700 = vand.u32 %v8994, 4294901760
    %v9701 = vsub.f32 %v8994, %v9700
    %v9702 = vand.u32 %v9701, 4294901760
    %v9703 = vsub.f32 %v9701, %v9702
    %v9704 = vand.u32 %v9703, 4294901760
    %9705 = vmatmul.mubr.f32.gmra.mrb[0].mxu0 %v9704
    %v9706 = vpop.f32.mrb[0].mxu0
    %v9707 = vadd.f32 %v8802, %v9706
    %v9708 = vpop.f32.mrb[0].mxu0
    %9709 = vdwg.mxu0
    %9710 = vmatprep.subr.mxu0 0.0
    %v9711 = vand.u32 %v8788, 4294901760
    %v9712 = vsub.f32 %v8788, %v9711
    %v9713 = vand.u32 %v9712, 4294901760
    %v9714 = vsub.f32 %v9712, %v9713
    %v9715 = vand.u32 %v9714, 4294901760
    %9716 = vmatpush1.msra.mxu0 %v9715
    %9717 = vmatprep.subr.mxu0 0.0
    %v9718 = vand.u32 %v8789, 4294901760
    %v9719 = vsub.f32 %v8789, %v9718
    %v9720 = vand.u32 %v9719, 4294901760
    %v9721 = vsub.f32 %v9719, %v9720
    %v9722 = vand.u32 %v9721, 4294901760
    %9723 = vmatpush1.msra.mxu0 %v9722
    %9724 = vmatprep.subr.mxu0 0.0
    %v9725 = vand.u32 %v8790, 4294901760
    %v9726 = vsub.f32 %v8790, %v9725
    %v9727 = vand.u32 %v9726, 4294901760
    %v9728 = vsub.f32 %v9726, %v9727
    %v9729 = vand.u32 %v9728, 4294901760
    %9730 = vmatpush1.msra.mxu0 %v9729
    %9731 = vmatprep.subr.mxu0 0.0
    %v9732 = vand.u32 %v8791, 4294901760
    %v9733 = vsub.f32 %v8791, %v9732
    %v9734 = vand.u32 %v9733, 4294901760
    %v9735 = vsub.f32 %v9733, %v9734
    %v9736 = vand.u32 %v9735, 4294901760
    %9737 = vmatpush1.msra.mxu0 %v9736
    %9738 = vmatprep.subr.mxu0 0.0
    %v9739 = vand.u32 %v8792, 4294901760
    %v9740 = vsub.f32 %v8792, %v9739
    %v9741 = vand.u32 %v9740, 4294901760
    %v9742 = vsub.f32 %v9740, %v9741
    %v9743 = vand.u32 %v9742, 4294901760
    %9744 = vmatpush1.msra.mxu0 %v9743
    %9745 = vmatprep.subr.mxu0 0.0
    %v9746 = vand.u32 %v8793, 4294901760
    %v9747 = vsub.f32 %v8793, %v9746
    %v9748 = vand.u32 %v9747, 4294901760
    %v9749 = vsub.f32 %v9747, %v9748
    %v9750 = vand.u32 %v9749, 4294901760
    %9751 = vmatpush1.msra.mxu0 %v9750
    %9752 = vmatprep.subr.mxu0 0.0
    %v9753 = vand.u32 %v8794, 4294901760
    %v9754 = vsub.f32 %v8794, %v9753
    %v9755 = vand.u32 %v9754, 4294901760
    %v9756 = vsub.f32 %v9754, %v9755
    %v9757 = vand.u32 %v9756, 4294901760
    %9758 = vmatpush1.msra.mxu0 %v9757
    %9759 = vmatprep.subr.mxu0 0.0
    %v9760 = vand.u32 %v8795, 4294901760
    %v9761 = vsub.f32 %v8795, %v9760
    %v9762 = vand.u32 %v9761, 4294901760
    %v9763 = vsub.f32 %v9761, %v9762
    %v9764 = vand.u32 %v9763, 4294901760
    %9765 = vmatpush1.msra.mxu0 %v9764
    %9766 = vmatprep.subr.mxu0 0.0
    %v9767 = vand.u32 %v8796, 4294901760
    %v9768 = vsub.f32 %v8796, %v9767
    %v9769 = vand.u32 %v9768, 4294901760
    %v9770 = vsub.f32 %v9768, %v9769
    %v9771 = vand.u32 %v9770, 4294901760
    %9772 = vmatpush1.msra.mxu0 %v9771
    %9773 = vmatprep.subr.mxu0 0.0
    %9774 = vmatpush1.msra.mxu0 0.0
    %9775 = vmatprep.subr.mxu0 0.0
    %9776 = vmatpush1.msra.mxu0 0.0
    %9777 = vmatprep.subr.mxu0 0.0
    %9778 = vmatpush1.msra.mxu0 0.0
    %9779 = vmatprep.subr.mxu0 0.0
    %9780 = vmatpush1.msra.mxu0 0.0
    %9781 = vmatprep.subr.mxu0 0.0
    %9782 = vmatpush1.msra.mxu0 0.0
    %9783 = vmatprep.subr.mxu0 0.0
    %9784 = vmatpush1.msra.mxu0 0.0
    %9785 = vmatprep.subr.mxu0 0.0
    %9786 = vmatpush1.msra.mxu0 0.0
    %9787 = vmatprep.subr.mxu0 0.0
    %9788 = vmatpush1.msra.mxu0 0.0
    %9789 = vmatprep.subr.mxu0 0.0
    %9790 = vmatpush1.msra.mxu0 0.0
    %9791 = vmatprep.subr.mxu0 0.0
    %9792 = vmatpush1.msra.mxu0 0.0
    %9793 = vmatprep.subr.mxu0 0.0
    %9794 = vmatpush1.msra.mxu0 0.0
    %9795 = vmatprep.subr.mxu0 0.0
    %9796 = vmatpush1.msra.mxu0 0.0
    %9797 = vmatprep.subr.mxu0 0.0
    %9798 = vmatpush1.msra.mxu0 0.0
    %9799 = vmatprep.subr.mxu0 0.0
    %9800 = vmatpush1.msra.mxu0 0.0
    %9801 = vmatprep.subr.mxu0 0.0
    %9802 = vmatpush1.msra.mxu0 0.0
    %9803 = vmatprep.subr.mxu0 0.0
    %9804 = vmatpush1.msra.mxu0 0.0
    %9805 = vmatprep.subr.mxu0 0.0
    %9806 = vmatpush1.msra.mxu0 0.0
    %9807 = vmatprep.subr.mxu0 0.0
    %9808 = vmatpush1.msra.mxu0 0.0
    %9809 = vmatprep.subr.mxu0 0.0
    %9810 = vmatpush1.msra.mxu0 0.0
    %9811 = vmatprep.subr.mxu0 0.0
    %9812 = vmatpush1.msra.mxu0 0.0
    %9813 = vmatprep.subr.mxu0 0.0
    %9814 = vmatpush1.msra.mxu0 0.0
    %9815 = vmatprep.subr.mxu0 0.0
    %9816 = vmatpush1.msra.mxu0 0.0
    %9817 = vmatprep.subr.mxu0 0.0
    %9818 = vmatpush1.msra.mxu0 0.0
    %9819 = vmatprep.mubr.f32.mxu0 0.0
    %v9820 = vand.u32 %v8805, 4294901760
    %9821 = vmatmul.mubr.f32.gmra.mrb[0].mxu0 %v9820
    %v9822 = vpop.f32.mrb[0].mxu0
    %v9823 = vadd.f32 %v9077, %v9822
    %v9824 = vpop.f32.mrb[0].mxu0
    %9825 = vmatprep.mubr.f32.mxu0 0.0
    %v9826 = vand.u32 %v8808, 4294901760
    %9827 = vmatmul.mubr.f32.gmra.mrb[0].mxu0 %v9826
    %v9828 = vpop.f32.mrb[0].mxu0
    %v9829 = vadd.f32 %v9087, %v9828
    %v9830 = vpop.f32.mrb[0].mxu0
    %9831 = vmatprep.mubr.f32.mxu0 0.0
    %v9832 = vand.u32 %v8811, 4294901760
    %9833 = vmatmul.mubr.f32.gmra.mrb[0].mxu0 %v9832
    %v9834 = vpop.f32.mrb[0].mxu0
    %v9835 = vadd.f32 %v9097, %v9834
    %v9836 = vpop.f32.mrb[0].mxu0
    %9837 = vmatprep.mubr.f32.mxu0 0.0
    %v9838 = vand.u32 %v8814, 4294901760
    %9839 = vmatmul.mubr.f32.gmra.mrb[0].mxu0 %v9838
    %v9840 = vpop.f32.mrb[0].mxu0
    %v9841 = vadd.f32 %v9107, %v9840
    %v9842 = vpop.f32.mrb[0].mxu0
    %9843 = vmatprep.mubr.f32.mxu0 0.0
    %v9844 = vand.u32 %v8817, 4294901760
    %9845 = vmatmul.mubr.f32.gmra.mrb[0].mxu0 %v9844
    %v9846 = vpop.f32.mrb[0].mxu0
    %v9847 = vadd.f32 %v9117, %v9846
    %v9848 = vpop.f32.mrb[0].mxu0
    %9849 = vmatprep.mubr.f32.mxu0 0.0
    %v9850 = vand.u32 %v8820, 4294901760
    %9851 = vmatmul.mubr.f32.gmra.mrb[0].mxu0 %v9850
    %v9852 = vpop.f32.mrb[0].mxu0
    %v9853 = vadd.f32 %v9127, %v9852
    %v9854 = vpop.f32.mrb[0].mxu0
    %9855 = vmatprep.mubr.f32.mxu0 0.0
    %v9856 = vand.u32 %v8823, 4294901760
    %9857 = vmatmul.mubr.f32.gmra.mrb[0].mxu0 %v9856
    %v9858 = vpop.f32.mrb[0].mxu0
    %v9859 = vadd.f32 %v9137, %v9858
    %v9860 = vpop.f32.mrb[0].mxu0
    %9861 = vmatprep.mubr.f32.mxu0 0.0
    %v9862 = vand.u32 %v8826, 4294901760
    %9863 = vmatmul.mubr.f32.gmra.mrb[0].mxu0 %v9862
    %v9864 = vpop.f32.mrb[0].mxu0
    %v9865 = vadd.f32 %v9147, %v9864
    %v9866 = vpop.f32.mrb[0].mxu0
    %9867 = vmatprep.mubr.f32.mxu0 0.0
    %v9868 = vand.u32 %v8829, 4294901760
    %9869 = vmatmul.mubr.f32.gmra.mrb[0].mxu0 %v9868
    %v9870 = vpop.f32.mrb[0].mxu0
    %v9871 = vadd.f32 %v9157, %v9870
    %v9872 = vpop.f32.mrb[0].mxu0
    %9873 = vmatprep.mubr.f32.mxu0 0.0
    %v9874 = vand.u32 %v8832, 4294901760
    %9875 = vmatmul.mubr.f32.gmra.mrb[0].mxu0 %v9874
    %v9876 = vpop.f32.mrb[0].mxu0
    %v9877 = vadd.f32 %v9167, %v9876
    %v9878 = vpop.f32.mrb[0].mxu0
    %9879 = vmatprep.mubr.f32.mxu0 0.0
    %v9880 = vand.u32 %v8835, 4294901760
    %9881 = vmatmul.mubr.f32.gmra.mrb[0].mxu0 %v9880
    %v9882 = vpop.f32.mrb[0].mxu0
    %v9883 = vadd.f32 %v9177, %v9882
    %v9884 = vpop.f32.mrb[0].mxu0
    %9885 = vmatprep.mubr.f32.mxu0 0.0
    %v9886 = vand.u32 %v8838, 4294901760
    %9887 = vmatmul.mubr.f32.gmra.mrb[0].mxu0 %v9886
    %v9888 = vpop.f32.mrb[0].mxu0
    %v9889 = vadd.f32 %v9187, %v9888
    %v9890 = vpop.f32.mrb[0].mxu0
    %9891 = vmatprep.mubr.f32.mxu0 0.0
    %v9892 = vand.u32 %v8841, 4294901760
    %9893 = vmatmul.mubr.f32.gmra.mrb[0].mxu0 %v9892
    %v9894 = vpop.f32.mrb[0].mxu0
    %v9895 = vadd.f32 %v9197, %v9894
    %v9896 = vpop.f32.mrb[0].mxu0
    %9897 = vmatprep.mubr.f32.mxu0 0.0
    %v9898 = vand.u32 %v8844, 4294901760
    %9899 = vmatmul.mubr.f32.gmra.mrb[0].mxu0 %v9898
    %v9900 = vpop.f32.mrb[0].mxu0
    %v9901 = vadd.f32 %v9207, %v9900
    %v9902 = vpop.f32.mrb[0].mxu0
    %9903 = vmatprep.mubr.f32.mxu0 0.0
    %v9904 = vand.u32 %v8847, 4294901760
    %9905 = vmatmul.mubr.f32.gmra.mrb[0].mxu0 %v9904
    %v9906 = vpop.f32.mrb[0].mxu0
    %v9907 = vadd.f32 %v9217, %v9906
    %v9908 = vpop.f32.mrb[0].mxu0
    %9909 = vmatprep.mubr.f32.mxu0 0.0
    %v9910 = vand.u32 %v8850, 4294901760
    %9911 = vmatmul.mubr.f32.gmra.mrb[0].mxu0 %v9910
    %v9912 = vpop.f32.mrb[0].mxu0
    %v9913 = vadd.f32 %v9227, %v9912
    %v9914 = vpop.f32.mrb[0].mxu0
    %9915 = vmatprep.mubr.f32.mxu0 0.0
    %v9916 = vand.u32 %v8853, 4294901760
    %9917 = vmatmul.mubr.f32.gmra.mrb[0].mxu0 %v9916
    %v9918 = vpop.f32.mrb[0].mxu0
    %v9919 = vadd.f32 %v9237, %v9918
    %v9920 = vpop.f32.mrb[0].mxu0
    %9921 = vmatprep.mubr.f32.mxu0 0.0
    %v9922 = vand.u32 %v8856, 4294901760
    %9923 = vmatmul.mubr.f32.gmra.mrb[0].mxu0 %v9922
    %v9924 = vpop.f32.mrb[0].mxu0
    %v9925 = vadd.f32 %v9247, %v9924
    %v9926 = vpop.f32.mrb[0].mxu0
    %9927 = vmatprep.mubr.f32.mxu0 0.0
    %v9928 = vand.u32 %v8859, 4294901760
    %9929 = vmatmul.mubr.f32.gmra.mrb[0].mxu0 %v9928
    %v9930 = vpop.f32.mrb[0].mxu0
    %v9931 = vadd.f32 %v9257, %v9930
    %v9932 = vpop.f32.mrb[0].mxu0
    %9933 = vmatprep.mubr.f32.mxu0 0.0
    %v9934 = vand.u32 %v8862, 4294901760
    %9935 = vmatmul.mubr.f32.gmra.mrb[0].mxu0 %v9934
    %v9936 = vpop.f32.mrb[0].mxu0
    %v9937 = vadd.f32 %v9267, %v9936
    %v9938 = vpop.f32.mrb[0].mxu0
    %9939 = vmatprep.mubr.f32.mxu0 0.0
    %v9940 = vand.u32 %v8865, 4294901760
    %9941 = vmatmul.mubr.f32.gmra.mrb[0].mxu0 %v9940
    %v9942 = vpop.f32.mrb[0].mxu0
    %v9943 = vadd.f32 %v9277, %v9942
    %v9944 = vpop.f32.mrb[0].mxu0
    %9945 = vmatprep.mubr.f32.mxu0 0.0
    %v9946 = vand.u32 %v8868, 4294901760
    %9947 = vmatmul.mubr.f32.gmra.mrb[0].mxu0 %v9946
    %v9948 = vpop.f32.mrb[0].mxu0
    %v9949 = vadd.f32 %v9287, %v9948
    %v9950 = vpop.f32.mrb[0].mxu0
    %9951 = vmatprep.mubr.f32.mxu0 0.0
    %v9952 = vand.u32 %v8871, 4294901760
    %9953 = vmatmul.mubr.f32.gmra.mrb[0].mxu0 %v9952
    %v9954 = vpop.f32.mrb[0].mxu0
    %v9955 = vadd.f32 %v9297, %v9954
    %v9956 = vpop.f32.mrb[0].mxu0
    %9957 = vmatprep.mubr.f32.mxu0 0.0
    %v9958 = vand.u32 %v8874, 4294901760
    %9959 = vmatmul.mubr.f32.gmra.mrb[0].mxu0 %v9958
    %v9960 = vpop.f32.mrb[0].mxu0
    %v9961 = vadd.f32 %v9307, %v9960
    %v9962 = vpop.f32.mrb[0].mxu0
    %9963 = vmatprep.mubr.f32.mxu0 0.0
    %v9964 = vand.u32 %v8877, 4294901760
    %9965 = vmatmul.mubr.f32.gmra.mrb[0].mxu0 %v9964
    %v9966 = vpop.f32.mrb[0].mxu0
    %v9967 = vadd.f32 %v9317, %v9966
    %v9968 = vpop.f32.mrb[0].mxu0
    %9969 = vmatprep.mubr.f32.mxu0 0.0
    %v9970 = vand.u32 %v8880, 4294901760
    %9971 = vmatmul.mubr.f32.gmra.mrb[0].mxu0 %v9970
    %v9972 = vpop.f32.mrb[0].mxu0
    %v9973 = vadd.f32 %v9327, %v9972
    %v9974 = vpop.f32.mrb[0].mxu0
    %9975 = vmatprep.mubr.f32.mxu0 0.0
    %v9976 = vand.u32 %v8883, 4294901760
    %9977 = vmatmul.mubr.f32.gmra.mrb[0].mxu0 %v9976
    %v9978 = vpop.f32.mrb[0].mxu0
    %v9979 = vadd.f32 %v9337, %v9978
    %v9980 = vpop.f32.mrb[0].mxu0
    %9981 = vmatprep.mubr.f32.mxu0 0.0
    %v9982 = vand.u32 %v8886, 4294901760
    %9983 = vmatmul.mubr.f32.gmra.mrb[0].mxu0 %v9982
    %v9984 = vpop.f32.mrb[0].mxu0
    %v9985 = vadd.f32 %v9347, %v9984
    %v9986 = vpop.f32.mrb[0].mxu0
    %9987 = vmatprep.mubr.f32.mxu0 0.0
    %v9988 = vand.u32 %v8889, 4294901760
    %9989 = vmatmul.mubr.f32.gmra.mrb[0].mxu0 %v9988
    %v9990 = vpop.f32.mrb[0].mxu0
    %v9991 = vadd.f32 %v9357, %v9990
    %v9992 = vpop.f32.mrb[0].mxu0
    %9993 = vmatprep.mubr.f32.mxu0 0.0
    %v9994 = vand.u32 %v8892, 4294901760
    %9995 = vmatmul.mubr.f32.gmra.mrb[0].mxu0 %v9994
    %v9996 = vpop.f32.mrb[0].mxu0
    %v9997 = vadd.f32 %v9367, %v9996
    %v9998 = vpop.f32.mrb[0].mxu0
    %9999 = vmatprep.mubr.f32.mxu0 0.0
    %v10000 = vand.u32 %v8895, 4294901760
    %10001 = vmatmul.mubr.f32.gmra.mrb[0].mxu0 %v10000
    %v10002 = vpop.f32.mrb[0].mxu0
    %v10003 = vadd.f32 %v9377, %v10002
    %v10004 = vpop.f32.mrb[0].mxu0
    %10005 = vmatprep.mubr.f32.mxu0 0.0
    %v10006 = vand.u32 %v8898, 4294901760
    %10007 = vmatmul.mubr.f32.gmra.mrb[0].mxu0 %v10006
    %v10008 = vpop.f32.mrb[0].mxu0
    %v10009 = vadd.f32 %v9387, %v10008
    %v10010 = vpop.f32.mrb[0].mxu0
    %10011 = vmatprep.mubr.f32.mxu0 0.0
    %v10012 = vand.u32 %v8901, 4294901760
    %10013 = vmatmul.mubr.f32.gmra.mrb[0].mxu0 %v10012
    %v10014 = vpop.f32.mrb[0].mxu0
    %v10015 = vadd.f32 %v9397, %v10014
    %v10016 = vpop.f32.mrb[0].mxu0
    %10017 = vmatprep.mubr.f32.mxu0 0.0
    %v10018 = vand.u32 %v8904, 4294901760
    %10019 = vmatmul.mubr.f32.gmra.mrb[0].mxu0 %v10018
    %v10020 = vpop.f32.mrb[0].mxu0
    %v10021 = vadd.f32 %v9407, %v10020
    %v10022 = vpop.f32.mrb[0].mxu0
    %10023 = vmatprep.mubr.f32.mxu0 0.0
    %v10024 = vand.u32 %v8907, 4294901760
    %10025 = vmatmul.mubr.f32.gmra.mrb[0].mxu0 %v10024
    %v10026 = vpop.f32.mrb[0].mxu0
    %v10027 = vadd.f32 %v9417, %v10026
    %v10028 = vpop.f32.mrb[0].mxu0
    %10029 = vmatprep.mubr.f32.mxu0 0.0
    %v10030 = vand.u32 %v8910, 4294901760
    %10031 = vmatmul.mubr.f32.gmra.mrb[0].mxu0 %v10030
    %v10032 = vpop.f32.mrb[0].mxu0
    %v10033 = vadd.f32 %v9427, %v10032
    %v10034 = vpop.f32.mrb[0].mxu0
    %10035 = vmatprep.mubr.f32.mxu0 0.0
    %v10036 = vand.u32 %v8913, 4294901760
    %10037 = vmatmul.mubr.f32.gmra.mrb[0].mxu0 %v10036
    %v10038 = vpop.f32.mrb[0].mxu0
    %v10039 = vadd.f32 %v9437, %v10038
    %v10040 = vpop.f32.mrb[0].mxu0
    %10041 = vmatprep.mubr.f32.mxu0 0.0
    %v10042 = vand.u32 %v8916, 4294901760
    %10043 = vmatmul.mubr.f32.gmra.mrb[0].mxu0 %v10042
    %v10044 = vpop.f32.mrb[0].mxu0
    %v10045 = vadd.f32 %v9447, %v10044
    %v10046 = vpop.f32.mrb[0].mxu0
    %10047 = vmatprep.mubr.f32.mxu0 0.0
    %v10048 = vand.u32 %v8919, 4294901760
    %10049 = vmatmul.mubr.f32.gmra.mrb[0].mxu0 %v10048
    %v10050 = vpop.f32.mrb[0].mxu0
    %v10051 = vadd.f32 %v9457, %v10050
    %v10052 = vpop.f32.mrb[0].mxu0
    %10053 = vmatprep.mubr.f32.mxu0 0.0
    %v10054 = vand.u32 %v8922, 4294901760
    %10055 = vmatmul.mubr.f32.gmra.mrb[0].mxu0 %v10054
    %v10056 = vpop.f32.mrb[0].mxu0
    %v10057 = vadd.f32 %v9467, %v10056
    %v10058 = vpop.f32.mrb[0].mxu0
    %10059 = vmatprep.mubr.f32.mxu0 0.0
    %v10060 = vand.u32 %v8925, 4294901760
    %10061 = vmatmul.mubr.f32.gmra.mrb[0].mxu0 %v10060
    %v10062 = vpop.f32.mrb[0].mxu0
    %v10063 = vadd.f32 %v9477, %v10062
    %v10064 = vpop.f32.mrb[0].mxu0
    %10065 = vmatprep.mubr.f32.mxu0 0.0
    %v10066 = vand.u32 %v8928, 4294901760
    %10067 = vmatmul.mubr.f32.gmra.mrb[0].mxu0 %v10066
    %v10068 = vpop.f32.mrb[0].mxu0
    %v10069 = vadd.f32 %v9487, %v10068
    %v10070 = vpop.f32.mrb[0].mxu0
    %10071 = vmatprep.mubr.f32.mxu0 0.0
    %v10072 = vand.u32 %v8931, 4294901760
    %10073 = vmatmul.mubr.f32.gmra.mrb[0].mxu0 %v10072
    %v10074 = vpop.f32.mrb[0].mxu0
    %v10075 = vadd.f32 %v9497, %v10074
    %v10076 = vpop.f32.mrb[0].mxu0
    %10077 = vmatprep.mubr.f32.mxu0 0.0
    %v10078 = vand.u32 %v8934, 4294901760
    %10079 = vmatmul.mubr.f32.gmra.mrb[0].mxu0 %v10078
    %v10080 = vpop.f32.mrb[0].mxu0
    %v10081 = vadd.f32 %v9507, %v10080
    %v10082 = vpop.f32.mrb[0].mxu0
    %10083 = vmatprep.mubr.f32.mxu0 0.0
    %v10084 = vand.u32 %v8937, 4294901760
    %10085 = vmatmul.mubr.f32.gmra.mrb[0].mxu0 %v10084
    %v10086 = vpop.f32.mrb[0].mxu0
    %v10087 = vadd.f32 %v9517, %v10086
    %v10088 = vpop.f32.mrb[0].mxu0
    %10089 = vmatprep.mubr.f32.mxu0 0.0
    %v10090 = vand.u32 %v8940, 4294901760
    %10091 = vmatmul.mubr.f32.gmra.mrb[0].mxu0 %v10090
    %v10092 = vpop.f32.mrb[0].mxu0
    %v10093 = vadd.f32 %v9527, %v10092
    %v10094 = vpop.f32.mrb[0].mxu0
    %10095 = vmatprep.mubr.f32.mxu0 0.0
    %v10096 = vand.u32 %v8943, 4294901760
    %10097 = vmatmul.mubr.f32.gmra.mrb[0].mxu0 %v10096
    %v10098 = vpop.f32.mrb[0].mxu0
    %v10099 = vadd.f32 %v9537, %v10098
    %v10100 = vpop.f32.mrb[0].mxu0
    %10101 = vmatprep.mubr.f32.mxu0 0.0
    %v10102 = vand.u32 %v8946, 4294901760
    %10103 = vmatmul.mubr.f32.gmra.mrb[0].mxu0 %v10102
    %v10104 = vpop.f32.mrb[0].mxu0
    %v10105 = vadd.f32 %v9547, %v10104
    %v10106 = vpop.f32.mrb[0].mxu0
    %10107 = vmatprep.mubr.f32.mxu0 0.0
    %v10108 = vand.u32 %v8949, 4294901760
    %10109 = vmatmul.mubr.f32.gmra.mrb[0].mxu0 %v10108
    %v10110 = vpop.f32.mrb[0].mxu0
    %v10111 = vadd.f32 %v9557, %v10110
    %v10112 = vpop.f32.mrb[0].mxu0
    %10113 = vmatprep.mubr.f32.mxu0 0.0
    %v10114 = vand.u32 %v8952, 4294901760
    %10115 = vmatmul.mubr.f32.gmra.mrb[0].mxu0 %v10114
    %v10116 = vpop.f32.mrb[0].mxu0
    %v10117 = vadd.f32 %v9567, %v10116
    %v10118 = vpop.f32.mrb[0].mxu0
    %10119 = vmatprep.mubr.f32.mxu0 0.0
    %v10120 = vand.u32 %v8955, 4294901760
    %10121 = vmatmul.mubr.f32.gmra.mrb[0].mxu0 %v10120
    %v10122 = vpop.f32.mrb[0].mxu0
    %v10123 = vadd.f32 %v9577, %v10122
    %v10124 = vpop.f32.mrb[0].mxu0
    %10125 = vmatprep.mubr.f32.mxu0 0.0
    %v10126 = vand.u32 %v8958, 4294901760
    %10127 = vmatmul.mubr.f32.gmra.mrb[0].mxu0 %v10126
    %v10128 = vpop.f32.mrb[0].mxu0
    %v10129 = vadd.f32 %v9587, %v10128
    %v10130 = vpop.f32.mrb[0].mxu0
    %10131 = vmatprep.mubr.f32.mxu0 0.0
    %v10132 = vand.u32 %v8961, 4294901760
    %10133 = vmatmul.mubr.f32.gmra.mrb[0].mxu0 %v10132
    %v10134 = vpop.f32.mrb[0].mxu0
    %v10135 = vadd.f32 %v9597, %v10134
    %v10136 = vpop.f32.mrb[0].mxu0
    %10137 = vmatprep.mubr.f32.mxu0 0.0
    %v10138 = vand.u32 %v8964, 4294901760
    %10139 = vmatmul.mubr.f32.gmra.mrb[0].mxu0 %v10138
    %v10140 = vpop.f32.mrb[0].mxu0
    %v10141 = vadd.f32 %v9607, %v10140
    %v10142 = vpop.f32.mrb[0].mxu0
    %10143 = vmatprep.mubr.f32.mxu0 0.0
    %v10144 = vand.u32 %v8967, 4294901760
    %10145 = vmatmul.mubr.f32.gmra.mrb[0].mxu0 %v10144
    %v10146 = vpop.f32.mrb[0].mxu0
    %v10147 = vadd.f32 %v9617, %v10146
    %v10148 = vpop.f32.mrb[0].mxu0
    %10149 = vmatprep.mubr.f32.mxu0 0.0
    %v10150 = vand.u32 %v8970, 4294901760
    %10151 = vmatmul.mubr.f32.gmra.mrb[0].mxu0 %v10150
    %v10152 = vpop.f32.mrb[0].mxu0
    %v10153 = vadd.f32 %v9627, %v10152
    %v10154 = vpop.f32.mrb[0].mxu0
    %10155 = vmatprep.mubr.f32.mxu0 0.0
    %v10156 = vand.u32 %v8973, 4294901760
    %10157 = vmatmul.mubr.f32.gmra.mrb[0].mxu0 %v10156
    %v10158 = vpop.f32.mrb[0].mxu0
    %v10159 = vadd.f32 %v9637, %v10158
    %v10160 = vpop.f32.mrb[0].mxu0
    %10161 = vmatprep.mubr.f32.mxu0 0.0
    %v10162 = vand.u32 %v8976, 4294901760
    %10163 = vmatmul.mubr.f32.gmra.mrb[0].mxu0 %v10162
    %v10164 = vpop.f32.mrb[0].mxu0
    %v10165 = vadd.f32 %v9647, %v10164
    %v10166 = vpop.f32.mrb[0].mxu0
    %10167 = vmatprep.mubr.f32.mxu0 0.0
    %v10168 = vand.u32 %v8979, 4294901760
    %10169 = vmatmul.mubr.f32.gmra.mrb[0].mxu0 %v10168
    %v10170 = vpop.f32.mrb[0].mxu0
    %v10171 = vadd.f32 %v9657, %v10170
    %v10172 = vpop.f32.mrb[0].mxu0
    %10173 = vmatprep.mubr.f32.mxu0 0.0
    %v10174 = vand.u32 %v8982, 4294901760
    %10175 = vmatmul.mubr.f32.gmra.mrb[0].mxu0 %v10174
    %v10176 = vpop.f32.mrb[0].mxu0
    %v10177 = vadd.f32 %v9667, %v10176
    %v10178 = vpop.f32.mrb[0].mxu0
    %10179 = vmatprep.mubr.f32.mxu0 0.0
    %v10180 = vand.u32 %v8985, 4294901760
    %10181 = vmatmul.mubr.f32.gmra.mrb[0].mxu0 %v10180
    %v10182 = vpop.f32.mrb[0].mxu0
    %v10183 = vadd.f32 %v9677, %v10182
    %v10184 = vpop.f32.mrb[0].mxu0
    %10185 = vmatprep.mubr.f32.mxu0 0.0
    %v10186 = vand.u32 %v8988, 4294901760
    %10187 = vmatmul.mubr.f32.gmra.mrb[0].mxu0 %v10186
    %v10188 = vpop.f32.mrb[0].mxu0
    %v10189 = vadd.f32 %v9687, %v10188
    %v10190 = vpop.f32.mrb[0].mxu0
    %10191 = vmatprep.mubr.f32.mxu0 0.0
    %v10192 = vand.u32 %v8991, 4294901760
    %10193 = vmatmul.mubr.f32.gmra.mrb[0].mxu0 %v10192
    %v10194 = vpop.f32.mrb[0].mxu0
    %v10195 = vadd.f32 %v9697, %v10194
    %v10196 = vpop.f32.mrb[0].mxu0
    %10197 = vmatprep.mubr.f32.mxu0 0.0
    %v10198 = vand.u32 %v8994, 4294901760
    %10199 = vmatmul.mubr.f32.gmra.mrb[0].mxu0 %v10198
    %v10200 = vpop.f32.mrb[0].mxu0
    %v10201 = vadd.f32 %v9707, %v10200
    %v10202 = vpop.f32.mrb[0].mxu0
    %10203 = vdwg.mxu0
    %10204 = vmatprep.subr.mxu0 0.0
    %v10205 = vand.u32 %v8788, 4294901760
    %v10206 = vsub.f32 %v8788, %v10205
    %10207 = vmatpush1.msra.mxu0 %v10206
    %10208 = vmatprep.subr.mxu0 0.0
    %v10209 = vand.u32 %v8789, 4294901760
    %v10210 = vsub.f32 %v8789, %v10209
    %10211 = vmatpush1.msra.mxu0 %v10210
    %10212 = vmatprep.subr.mxu0 0.0
    %v10213 = vand.u32 %v8790, 4294901760
    %v10214 = vsub.f32 %v8790, %v10213
    %10215 = vmatpush1.msra.mxu0 %v10214
    %10216 = vmatprep.subr.mxu0 0.0
    %v10217 = vand.u32 %v8791, 4294901760
    %v10218 = vsub.f32 %v8791, %v10217
    %10219 = vmatpush1.msra.mxu0 %v10218
    %10220 = vmatprep.subr.mxu0 0.0
    %v10221 = vand.u32 %v8792, 4294901760
    %v10222 = vsub.f32 %v8792, %v10221
    %10223 = vmatpush1.msra.mxu0 %v10222
    %10224 = vmatprep.subr.mxu0 0.0
    %v10225 = vand.u32 %v8793, 4294901760
    %v10226 = vsub.f32 %v8793, %v10225
    %10227 = vmatpush1.msra.mxu0 %v10226
    %10228 = vmatprep.subr.mxu0 0.0
    %v10229 = vand.u32 %v8794, 4294901760
    %v10230 = vsub.f32 %v8794, %v10229
    %10231 = vmatpush1.msra.mxu0 %v10230
    %10232 = vmatprep.subr.mxu0 0.0
    %v10233 = vand.u32 %v8795, 4294901760
    %v10234 = vsub.f32 %v8795, %v10233
    %10235 = vmatpush1.msra.mxu0 %v10234
    %10236 = vmatprep.subr.mxu0 0.0
    %v10237 = vand.u32 %v8796, 4294901760
    %v10238 = vsub.f32 %v8796, %v10237
    %10239 = vmatpush1.msra.mxu0 %v10238
    %10240 = vmatprep.subr.mxu0 0.0
    %10241 = vmatpush1.msra.mxu0 0.0
    %10242 = vmatprep.subr.mxu0 0.0
    %10243 = vmatpush1.msra.mxu0 0.0
    %10244 = vmatprep.subr.mxu0 0.0
    %10245 = vmatpush1.msra.mxu0 0.0
    %10246 = vmatprep.subr.mxu0 0.0
    %10247 = vmatpush1.msra.mxu0 0.0
    %10248 = vmatprep.subr.mxu0 0.0
    %10249 = vmatpush1.msra.mxu0 0.0
    %10250 = vmatprep.subr.mxu0 0.0
    %10251 = vmatpush1.msra.mxu0 0.0
    %10252 = vmatprep.subr.mxu0 0.0
    %10253 = vmatpush1.msra.mxu0 0.0
    %10254 = vmatprep.subr.mxu0 0.0
    %10255 = vmatpush1.msra.mxu0 0.0
    %10256 = vmatprep.subr.mxu0 0.0
    %10257 = vmatpush1.msra.mxu0 0.0
    %10258 = vmatprep.subr.mxu0 0.0
    %10259 = vmatpush1.msra.mxu0 0.0
    %10260 = vmatprep.subr.mxu0 0.0
    %10261 = vmatpush1.msra.mxu0 0.0
    %10262 = vmatprep.subr.mxu0 0.0
    %10263 = vmatpush1.msra.mxu0 0.0
    %10264 = vmatprep.subr.mxu0 0.0
    %10265 = vmatpush1.msra.mxu0 0.0
    %10266 = vmatprep.subr.mxu0 0.0
    %10267 = vmatpush1.msra.mxu0 0.0
    %10268 = vmatprep.subr.mxu0 0.0
    %10269 = vmatpush1.msra.mxu0 0.0
    %10270 = vmatprep.subr.mxu0 0.0
    %10271 = vmatpush1.msra.mxu0 0.0
    %10272 = vmatprep.subr.mxu0 0.0
    %10273 = vmatpush1.msra.mxu0 0.0
    %10274 = vmatprep.subr.mxu0 0.0
    %10275 = vmatpush1.msra.mxu0 0.0
    %10276 = vmatprep.subr.mxu0 0.0
    %10277 = vmatpush1.msra.mxu0 0.0
    %10278 = vmatprep.subr.mxu0 0.0
    %10279 = vmatpush1.msra.mxu0 0.0
    %10280 = vmatprep.subr.mxu0 0.0
    %10281 = vmatpush1.msra.mxu0 0.0
    %10282 = vmatprep.subr.mxu0 0.0
    %10283 = vmatpush1.msra.mxu0 0.0
    %10284 = vmatprep.subr.mxu0 0.0
    %10285 = vmatpush1.msra.mxu0 0.0
    %10286 = vmatprep.mubr.f32.mxu0 0.0
    %v10287 = vand.u32 %v8805, 4294901760
    %v10288 = vsub.f32 %v8805, %v10287
    %10289 = vmatmul.mubr.f32.gmra.mrb[0].mxu0 %v10288
    %v10290 = vpop.f32.mrb[0].mxu0
    %v10291 = vadd.f32 %v9823, %v10290
    %v10292 = vpop.f32.mrb[0].mxu0
    %10293 = vmatprep.mubr.f32.mxu0 0.0
    %v10294 = vand.u32 %v8808, 4294901760
    %v10295 = vsub.f32 %v8808, %v10294
    %10296 = vmatmul.mubr.f32.gmra.mrb[0].mxu0 %v10295
    %v10297 = vpop.f32.mrb[0].mxu0
    %v10298 = vadd.f32 %v9829, %v10297
    %v10299 = vpop.f32.mrb[0].mxu0
    %10300 = vmatprep.mubr.f32.mxu0 0.0
    %v10301 = vand.u32 %v8811, 4294901760
    %v10302 = vsub.f32 %v8811, %v10301
    %10303 = vmatmul.mubr.f32.gmra.mrb[0].mxu0 %v10302
    %v10304 = vpop.f32.mrb[0].mxu0
    %v10305 = vadd.f32 %v9835, %v10304
    %v10306 = vpop.f32.mrb[0].mxu0
    %10307 = vmatprep.mubr.f32.mxu0 0.0
    %v10308 = vand.u32 %v8814, 4294901760
    %v10309 = vsub.f32 %v8814, %v10308
    %10310 = vmatmul.mubr.f32.gmra.mrb[0].mxu0 %v10309
    %v10311 = vpop.f32.mrb[0].mxu0
    %v10312 = vadd.f32 %v9841, %v10311
    %v10313 = vpop.f32.mrb[0].mxu0
    %10314 = vmatprep.mubr.f32.mxu0 0.0
    %v10315 = vand.u32 %v8817, 4294901760
    %v10316 = vsub.f32 %v8817, %v10315
    %10317 = vmatmul.mubr.f32.gmra.mrb[0].mxu0 %v10316
    %v10318 = vpop.f32.mrb[0].mxu0
    %v10319 = vadd.f32 %v9847, %v10318
    %v10320 = vpop.f32.mrb[0].mxu0
    %10321 = vmatprep.mubr.f32.mxu0 0.0
    %v10322 = vand.u32 %v8820, 4294901760
    %v10323 = vsub.f32 %v8820, %v10322
    %10324 = vmatmul.mubr.f32.gmra.mrb[0].mxu0 %v10323
    %v10325 = vpop.f32.mrb[0].mxu0
    %v10326 = vadd.f32 %v9853, %v10325
    %v10327 = vpop.f32.mrb[0].mxu0
    %10328 = vmatprep.mubr.f32.mxu0 0.0
    %v10329 = vand.u32 %v8823, 4294901760
    %v10330 = vsub.f32 %v8823, %v10329
    %10331 = vmatmul.mubr.f32.gmra.mrb[0].mxu0 %v10330
    %v10332 = vpop.f32.mrb[0].mxu0
    %v10333 = vadd.f32 %v9859, %v10332
    %v10334 = vpop.f32.mrb[0].mxu0
    %10335 = vmatprep.mubr.f32.mxu0 0.0
    %v10336 = vand.u32 %v8826, 4294901760
    %v10337 = vsub.f32 %v8826, %v10336
    %10338 = vmatmul.mubr.f32.gmra.mrb[0].mxu0 %v10337
    %v10339 = vpop.f32.mrb[0].mxu0
    %v10340 = vadd.f32 %v9865, %v10339
    %v10341 = vpop.f32.mrb[0].mxu0
    %10342 = vmatprep.mubr.f32.mxu0 0.0
    %v10343 = vand.u32 %v8829, 4294901760
    %v10344 = vsub.f32 %v8829, %v10343
    %10345 = vmatmul.mubr.f32.gmra.mrb[0].mxu0 %v10344
    %v10346 = vpop.f32.mrb[0].mxu0
    %v10347 = vadd.f32 %v9871, %v10346
    %v10348 = vpop.f32.mrb[0].mxu0
    %10349 = vmatprep.mubr.f32.mxu0 0.0
    %v10350 = vand.u32 %v8832, 4294901760
    %v10351 = vsub.f32 %v8832, %v10350
    %10352 = vmatmul.mubr.f32.gmra.mrb[0].mxu0 %v10351
    %v10353 = vpop.f32.mrb[0].mxu0
    %v10354 = vadd.f32 %v9877, %v10353
    %v10355 = vpop.f32.mrb[0].mxu0
    %10356 = vmatprep.mubr.f32.mxu0 0.0
    %v10357 = vand.u32 %v8835, 4294901760
    %v10358 = vsub.f32 %v8835, %v10357
    %10359 = vmatmul.mubr.f32.gmra.mrb[0].mxu0 %v10358
    %v10360 = vpop.f32.mrb[0].mxu0
    %v10361 = vadd.f32 %v9883, %v10360
    %v10362 = vpop.f32.mrb[0].mxu0
    %10363 = vmatprep.mubr.f32.mxu0 0.0
    %v10364 = vand.u32 %v8838, 4294901760
    %v10365 = vsub.f32 %v8838, %v10364
    %10366 = vmatmul.mubr.f32.gmra.mrb[0].mxu0 %v10365
    %v10367 = vpop.f32.mrb[0].mxu0
    %v10368 = vadd.f32 %v9889, %v10367
    %v10369 = vpop.f32.mrb[0].mxu0
    %10370 = vmatprep.mubr.f32.mxu0 0.0
    %v10371 = vand.u32 %v8841, 4294901760
    %v10372 = vsub.f32 %v8841, %v10371
    %10373 = vmatmul.mubr.f32.gmra.mrb[0].mxu0 %v10372
    %v10374 = vpop.f32.mrb[0].mxu0
    %v10375 = vadd.f32 %v9895, %v10374
    %v10376 = vpop.f32.mrb[0].mxu0
    %10377 = vmatprep.mubr.f32.mxu0 0.0
    %v10378 = vand.u32 %v8844, 4294901760
    %v10379 = vsub.f32 %v8844, %v10378
    %10380 = vmatmul.mubr.f32.gmra.mrb[0].mxu0 %v10379
    %v10381 = vpop.f32.mrb[0].mxu0
    %v10382 = vadd.f32 %v9901, %v10381
    %v10383 = vpop.f32.mrb[0].mxu0
    %10384 = vmatprep.mubr.f32.mxu0 0.0
    %v10385 = vand.u32 %v8847, 4294901760
    %v10386 = vsub.f32 %v8847, %v10385
    %10387 = vmatmul.mubr.f32.gmra.mrb[0].mxu0 %v10386
    %v10388 = vpop.f32.mrb[0].mxu0
    %v10389 = vadd.f32 %v9907, %v10388
    %v10390 = vpop.f32.mrb[0].mxu0
    %10391 = vmatprep.mubr.f32.mxu0 0.0
    %v10392 = vand.u32 %v8850, 4294901760
    %v10393 = vsub.f32 %v8850, %v10392
    %10394 = vmatmul.mubr.f32.gmra.mrb[0].mxu0 %v10393
    %v10395 = vpop.f32.mrb[0].mxu0
    %v10396 = vadd.f32 %v9913, %v10395
    %v10397 = vpop.f32.mrb[0].mxu0
    %10398 = vmatprep.mubr.f32.mxu0 0.0
    %v10399 = vand.u32 %v8853, 4294901760
    %v10400 = vsub.f32 %v8853, %v10399
    %10401 = vmatmul.mubr.f32.gmra.mrb[0].mxu0 %v10400
    %v10402 = vpop.f32.mrb[0].mxu0
    %v10403 = vadd.f32 %v9919, %v10402
    %v10404 = vpop.f32.mrb[0].mxu0
    %10405 = vmatprep.mubr.f32.mxu0 0.0
    %v10406 = vand.u32 %v8856, 4294901760
    %v10407 = vsub.f32 %v8856, %v10406
    %10408 = vmatmul.mubr.f32.gmra.mrb[0].mxu0 %v10407
    %v10409 = vpop.f32.mrb[0].mxu0
    %v10410 = vadd.f32 %v9925, %v10409
    %v10411 = vpop.f32.mrb[0].mxu0
    %10412 = vmatprep.mubr.f32.mxu0 0.0
    %v10413 = vand.u32 %v8859, 4294901760
    %v10414 = vsub.f32 %v8859, %v10413
    %10415 = vmatmul.mubr.f32.gmra.mrb[0].mxu0 %v10414
    %v10416 = vpop.f32.mrb[0].mxu0
    %v10417 = vadd.f32 %v9931, %v10416
    %v10418 = vpop.f32.mrb[0].mxu0
    %10419 = vmatprep.mubr.f32.mxu0 0.0
    %v10420 = vand.u32 %v8862, 4294901760
    %v10421 = vsub.f32 %v8862, %v10420
    %10422 = vmatmul.mubr.f32.gmra.mrb[0].mxu0 %v10421
    %v10423 = vpop.f32.mrb[0].mxu0
    %v10424 = vadd.f32 %v9937, %v10423
    %v10425 = vpop.f32.mrb[0].mxu0
    %10426 = vmatprep.mubr.f32.mxu0 0.0
    %v10427 = vand.u32 %v8865, 4294901760
    %v10428 = vsub.f32 %v8865, %v10427
    %10429 = vmatmul.mubr.f32.gmra.mrb[0].mxu0 %v10428
    %v10430 = vpop.f32.mrb[0].mxu0
    %v10431 = vadd.f32 %v9943, %v10430
    %v10432 = vpop.f32.mrb[0].mxu0
    %10433 = vmatprep.mubr.f32.mxu0 0.0
    %v10434 = vand.u32 %v8868, 4294901760
    %v10435 = vsub.f32 %v8868, %v10434
    %10436 = vmatmul.mubr.f32.gmra.mrb[0].mxu0 %v10435
    %v10437 = vpop.f32.mrb[0].mxu0
    %v10438 = vadd.f32 %v9949, %v10437
    %v10439 = vpop.f32.mrb[0].mxu0
    %10440 = vmatprep.mubr.f32.mxu0 0.0
    %v10441 = vand.u32 %v8871, 4294901760
    %v10442 = vsub.f32 %v8871, %v10441
    %10443 = vmatmul.mubr.f32.gmra.mrb[0].mxu0 %v10442
    %v10444 = vpop.f32.mrb[0].mxu0
    %v10445 = vadd.f32 %v9955, %v10444
    %v10446 = vpop.f32.mrb[0].mxu0
    %10447 = vmatprep.mubr.f32.mxu0 0.0
    %v10448 = vand.u32 %v8874, 4294901760
    %v10449 = vsub.f32 %v8874, %v10448
    %10450 = vmatmul.mubr.f32.gmra.mrb[0].mxu0 %v10449
    %v10451 = vpop.f32.mrb[0].mxu0
    %v10452 = vadd.f32 %v9961, %v10451
    %v10453 = vpop.f32.mrb[0].mxu0
    %10454 = vmatprep.mubr.f32.mxu0 0.0
    %v10455 = vand.u32 %v8877, 4294901760
    %v10456 = vsub.f32 %v8877, %v10455
    %10457 = vmatmul.mubr.f32.gmra.mrb[0].mxu0 %v10456
    %v10458 = vpop.f32.mrb[0].mxu0
    %v10459 = vadd.f32 %v9967, %v10458
    %v10460 = vpop.f32.mrb[0].mxu0
    %10461 = vmatprep.mubr.f32.mxu0 0.0
    %v10462 = vand.u32 %v8880, 4294901760
    %v10463 = vsub.f32 %v8880, %v10462
    %10464 = vmatmul.mubr.f32.gmra.mrb[0].mxu0 %v10463
    %v10465 = vpop.f32.mrb[0].mxu0
    %v10466 = vadd.f32 %v9973, %v10465
    %v10467 = vpop.f32.mrb[0].mxu0
    %10468 = vmatprep.mubr.f32.mxu0 0.0
    %v10469 = vand.u32 %v8883, 4294901760
    %v10470 = vsub.f32 %v8883, %v10469
    %10471 = vmatmul.mubr.f32.gmra.mrb[0].mxu0 %v10470
    %v10472 = vpop.f32.mrb[0].mxu0
    %v10473 = vadd.f32 %v9979, %v10472
    %v10474 = vpop.f32.mrb[0].mxu0
    %10475 = vmatprep.mubr.f32.mxu0 0.0
    %v10476 = vand.u32 %v8886, 4294901760
    %v10477 = vsub.f32 %v8886, %v10476
    %10478 = vmatmul.mubr.f32.gmra.mrb[0].mxu0 %v10477
    %v10479 = vpop.f32.mrb[0].mxu0
    %v10480 = vadd.f32 %v9985, %v10479
    %v10481 = vpop.f32.mrb[0].mxu0
    %10482 = vmatprep.mubr.f32.mxu0 0.0
    %v10483 = vand.u32 %v8889, 4294901760
    %v10484 = vsub.f32 %v8889, %v10483
    %10485 = vmatmul.mubr.f32.gmra.mrb[0].mxu0 %v10484
    %v10486 = vpop.f32.mrb[0].mxu0
    %v10487 = vadd.f32 %v9991, %v10486
    %v10488 = vpop.f32.mrb[0].mxu0
    %10489 = vmatprep.mubr.f32.mxu0 0.0
    %v10490 = vand.u32 %v8892, 4294901760
    %v10491 = vsub.f32 %v8892, %v10490
    %10492 = vmatmul.mubr.f32.gmra.mrb[0].mxu0 %v10491
    %v10493 = vpop.f32.mrb[0].mxu0
    %v10494 = vadd.f32 %v9997, %v10493
    %v10495 = vpop.f32.mrb[0].mxu0
    %10496 = vmatprep.mubr.f32.mxu0 0.0
    %v10497 = vand.u32 %v8895, 4294901760
    %v10498 = vsub.f32 %v8895, %v10497
    %10499 = vmatmul.mubr.f32.gmra.mrb[0].mxu0 %v10498
    %v10500 = vpop.f32.mrb[0].mxu0
    %v10501 = vadd.f32 %v10003, %v10500
    %v10502 = vpop.f32.mrb[0].mxu0
    %10503 = vmatprep.mubr.f32.mxu0 0.0
    %v10504 = vand.u32 %v8898, 4294901760
    %v10505 = vsub.f32 %v8898, %v10504
    %10506 = vmatmul.mubr.f32.gmra.mrb[0].mxu0 %v10505
    %v10507 = vpop.f32.mrb[0].mxu0
    %v10508 = vadd.f32 %v10009, %v10507
    %v10509 = vpop.f32.mrb[0].mxu0
    %10510 = vmatprep.mubr.f32.mxu0 0.0
    %v10511 = vand.u32 %v8901, 4294901760
    %v10512 = vsub.f32 %v8901, %v10511
    %10513 = vmatmul.mubr.f32.gmra.mrb[0].mxu0 %v10512
    %v10514 = vpop.f32.mrb[0].mxu0
    %v10515 = vadd.f32 %v10015, %v10514
    %v10516 = vpop.f32.mrb[0].mxu0
    %10517 = vmatprep.mubr.f32.mxu0 0.0
    %v10518 = vand.u32 %v8904, 4294901760
    %v10519 = vsub.f32 %v8904, %v10518
    %10520 = vmatmul.mubr.f32.gmra.mrb[0].mxu0 %v10519
    %v10521 = vpop.f32.mrb[0].mxu0
    %v10522 = vadd.f32 %v10021, %v10521
    %v10523 = vpop.f32.mrb[0].mxu0
    %10524 = vmatprep.mubr.f32.mxu0 0.0
    %v10525 = vand.u32 %v8907, 4294901760
    %v10526 = vsub.f32 %v8907, %v10525
    %10527 = vmatmul.mubr.f32.gmra.mrb[0].mxu0 %v10526
    %v10528 = vpop.f32.mrb[0].mxu0
    %v10529 = vadd.f32 %v10027, %v10528
    %v10530 = vpop.f32.mrb[0].mxu0
    %10531 = vmatprep.mubr.f32.mxu0 0.0
    %v10532 = vand.u32 %v8910, 4294901760
    %v10533 = vsub.f32 %v8910, %v10532
    %10534 = vmatmul.mubr.f32.gmra.mrb[0].mxu0 %v10533
    %v10535 = vpop.f32.mrb[0].mxu0
    %v10536 = vadd.f32 %v10033, %v10535
    %v10537 = vpop.f32.mrb[0].mxu0
    %10538 = vmatprep.mubr.f32.mxu0 0.0
    %v10539 = vand.u32 %v8913, 4294901760
    %v10540 = vsub.f32 %v8913, %v10539
    %10541 = vmatmul.mubr.f32.gmra.mrb[0].mxu0 %v10540
    %v10542 = vpop.f32.mrb[0].mxu0
    %v10543 = vadd.f32 %v10039, %v10542
    %v10544 = vpop.f32.mrb[0].mxu0
    %10545 = vmatprep.mubr.f32.mxu0 0.0
    %v10546 = vand.u32 %v8916, 4294901760
    %v10547 = vsub.f32 %v8916, %v10546
    %10548 = vmatmul.mubr.f32.gmra.mrb[0].mxu0 %v10547
    %v10549 = vpop.f32.mrb[0].mxu0
    %v10550 = vadd.f32 %v10045, %v10549
    %v10551 = vpop.f32.mrb[0].mxu0
    %10552 = vmatprep.mubr.f32.mxu0 0.0
    %v10553 = vand.u32 %v8919, 4294901760
    %v10554 = vsub.f32 %v8919, %v10553
    %10555 = vmatmul.mubr.f32.gmra.mrb[0].mxu0 %v10554
    %v10556 = vpop.f32.mrb[0].mxu0
    %v10557 = vadd.f32 %v10051, %v10556
    %v10558 = vpop.f32.mrb[0].mxu0
    %10559 = vmatprep.mubr.f32.mxu0 0.0
    %v10560 = vand.u32 %v8922, 4294901760
    %v10561 = vsub.f32 %v8922, %v10560
    %10562 = vmatmul.mubr.f32.gmra.mrb[0].mxu0 %v10561
    %v10563 = vpop.f32.mrb[0].mxu0
    %v10564 = vadd.f32 %v10057, %v10563
    %v10565 = vpop.f32.mrb[0].mxu0
    %10566 = vmatprep.mubr.f32.mxu0 0.0
    %v10567 = vand.u32 %v8925, 4294901760
    %v10568 = vsub.f32 %v8925, %v10567
    %10569 = vmatmul.mubr.f32.gmra.mrb[0].mxu0 %v10568
    %v10570 = vpop.f32.mrb[0].mxu0
    %v10571 = vadd.f32 %v10063, %v10570
    %v10572 = vpop.f32.mrb[0].mxu0
    %10573 = vmatprep.mubr.f32.mxu0 0.0
    %v10574 = vand.u32 %v8928, 4294901760
    %v10575 = vsub.f32 %v8928, %v10574
    %10576 = vmatmul.mubr.f32.gmra.mrb[0].mxu0 %v10575
    %v10577 = vpop.f32.mrb[0].mxu0
    %v10578 = vadd.f32 %v10069, %v10577
    %v10579 = vpop.f32.mrb[0].mxu0
    %10580 = vmatprep.mubr.f32.mxu0 0.0
    %v10581 = vand.u32 %v8931, 4294901760
    %v10582 = vsub.f32 %v8931, %v10581
    %10583 = vmatmul.mubr.f32.gmra.mrb[0].mxu0 %v10582
    %v10584 = vpop.f32.mrb[0].mxu0
    %v10585 = vadd.f32 %v10075, %v10584
    %v10586 = vpop.f32.mrb[0].mxu0
    %10587 = vmatprep.mubr.f32.mxu0 0.0
    %v10588 = vand.u32 %v8934, 4294901760
    %v10589 = vsub.f32 %v8934, %v10588
    %10590 = vmatmul.mubr.f32.gmra.mrb[0].mxu0 %v10589
    %v10591 = vpop.f32.mrb[0].mxu0
    %v10592 = vadd.f32 %v10081, %v10591
    %v10593 = vpop.f32.mrb[0].mxu0
    %10594 = vmatprep.mubr.f32.mxu0 0.0
    %v10595 = vand.u32 %v8937, 4294901760
    %v10596 = vsub.f32 %v8937, %v10595
    %10597 = vmatmul.mubr.f32.gmra.mrb[0].mxu0 %v10596
    %v10598 = vpop.f32.mrb[0].mxu0
    %v10599 = vadd.f32 %v10087, %v10598
    %v10600 = vpop.f32.mrb[0].mxu0
    %10601 = vmatprep.mubr.f32.mxu0 0.0
    %v10602 = vand.u32 %v8940, 4294901760
    %v10603 = vsub.f32 %v8940, %v10602
    %10604 = vmatmul.mubr.f32.gmra.mrb[0].mxu0 %v10603
    %v10605 = vpop.f32.mrb[0].mxu0
    %v10606 = vadd.f32 %v10093, %v10605
    %v10607 = vpop.f32.mrb[0].mxu0
    %10608 = vmatprep.mubr.f32.mxu0 0.0
    %v10609 = vand.u32 %v8943, 4294901760
    %v10610 = vsub.f32 %v8943, %v10609
    %10611 = vmatmul.mubr.f32.gmra.mrb[0].mxu0 %v10610
    %v10612 = vpop.f32.mrb[0].mxu0
    %v10613 = vadd.f32 %v10099, %v10612
    %v10614 = vpop.f32.mrb[0].mxu0
    %10615 = vmatprep.mubr.f32.mxu0 0.0
    %v10616 = vand.u32 %v8946, 4294901760
    %v10617 = vsub.f32 %v8946, %v10616
    %10618 = vmatmul.mubr.f32.gmra.mrb[0].mxu0 %v10617
    %v10619 = vpop.f32.mrb[0].mxu0
    %v10620 = vadd.f32 %v10105, %v10619
    %v10621 = vpop.f32.mrb[0].mxu0
    %10622 = vmatprep.mubr.f32.mxu0 0.0
    %v10623 = vand.u32 %v8949, 4294901760
    %v10624 = vsub.f32 %v8949, %v10623
    %10625 = vmatmul.mubr.f32.gmra.mrb[0].mxu0 %v10624
    %v10626 = vpop.f32.mrb[0].mxu0
    %v10627 = vadd.f32 %v10111, %v10626
    %v10628 = vpop.f32.mrb[0].mxu0
    %10629 = vmatprep.mubr.f32.mxu0 0.0
    %v10630 = vand.u32 %v8952, 4294901760
    %v10631 = vsub.f32 %v8952, %v10630
    %10632 = vmatmul.mubr.f32.gmra.mrb[0].mxu0 %v10631
    %v10633 = vpop.f32.mrb[0].mxu0
    %v10634 = vadd.f32 %v10117, %v10633
    %v10635 = vpop.f32.mrb[0].mxu0
    %10636 = vmatprep.mubr.f32.mxu0 0.0
    %v10637 = vand.u32 %v8955, 4294901760
    %v10638 = vsub.f32 %v8955, %v10637
    %10639 = vmatmul.mubr.f32.gmra.mrb[0].mxu0 %v10638
    %v10640 = vpop.f32.mrb[0].mxu0
    %v10641 = vadd.f32 %v10123, %v10640
    %v10642 = vpop.f32.mrb[0].mxu0
    %10643 = vmatprep.mubr.f32.mxu0 0.0
    %v10644 = vand.u32 %v8958, 4294901760
    %v10645 = vsub.f32 %v8958, %v10644
    %10646 = vmatmul.mubr.f32.gmra.mrb[0].mxu0 %v10645
    %v10647 = vpop.f32.mrb[0].mxu0
    %v10648 = vadd.f32 %v10129, %v10647
    %v10649 = vpop.f32.mrb[0].mxu0
    %10650 = vmatprep.mubr.f32.mxu0 0.0
    %v10651 = vand.u32 %v8961, 4294901760
    %v10652 = vsub.f32 %v8961, %v10651
    %10653 = vmatmul.mubr.f32.gmra.mrb[0].mxu0 %v10652
    %v10654 = vpop.f32.mrb[0].mxu0
    %v10655 = vadd.f32 %v10135, %v10654
    %v10656 = vpop.f32.mrb[0].mxu0
    %10657 = vmatprep.mubr.f32.mxu0 0.0
    %v10658 = vand.u32 %v8964, 4294901760
    %v10659 = vsub.f32 %v8964, %v10658
    %10660 = vmatmul.mubr.f32.gmra.mrb[0].mxu0 %v10659
    %v10661 = vpop.f32.mrb[0].mxu0
    %v10662 = vadd.f32 %v10141, %v10661
    %v10663 = vpop.f32.mrb[0].mxu0
    %10664 = vmatprep.mubr.f32.mxu0 0.0
    %v10665 = vand.u32 %v8967, 4294901760
    %v10666 = vsub.f32 %v8967, %v10665
    %10667 = vmatmul.mubr.f32.gmra.mrb[0].mxu0 %v10666
    %v10668 = vpop.f32.mrb[0].mxu0
    %v10669 = vadd.f32 %v10147, %v10668
    %v10670 = vpop.f32.mrb[0].mxu0
    %10671 = vmatprep.mubr.f32.mxu0 0.0
    %v10672 = vand.u32 %v8970, 4294901760
    %v10673 = vsub.f32 %v8970, %v10672
    %10674 = vmatmul.mubr.f32.gmra.mrb[0].mxu0 %v10673
    %v10675 = vpop.f32.mrb[0].mxu0
    %v10676 = vadd.f32 %v10153, %v10675
    %v10677 = vpop.f32.mrb[0].mxu0
    %10678 = vmatprep.mubr.f32.mxu0 0.0
    %v10679 = vand.u32 %v8973, 4294901760
    %v10680 = vsub.f32 %v8973, %v10679
    %10681 = vmatmul.mubr.f32.gmra.mrb[0].mxu0 %v10680
    %v10682 = vpop.f32.mrb[0].mxu0
    %v10683 = vadd.f32 %v10159, %v10682
    %v10684 = vpop.f32.mrb[0].mxu0
    %10685 = vmatprep.mubr.f32.mxu0 0.0
    %v10686 = vand.u32 %v8976, 4294901760
    %v10687 = vsub.f32 %v8976, %v10686
    %10688 = vmatmul.mubr.f32.gmra.mrb[0].mxu0 %v10687
    %v10689 = vpop.f32.mrb[0].mxu0
    %v10690 = vadd.f32 %v10165, %v10689
    %v10691 = vpop.f32.mrb[0].mxu0
    %10692 = vmatprep.mubr.f32.mxu0 0.0
    %v10693 = vand.u32 %v8979, 4294901760
    %v10694 = vsub.f32 %v8979, %v10693
    %10695 = vmatmul.mubr.f32.gmra.mrb[0].mxu0 %v10694
    %v10696 = vpop.f32.mrb[0].mxu0
    %v10697 = vadd.f32 %v10171, %v10696
    %v10698 = vpop.f32.mrb[0].mxu0
    %10699 = vmatprep.mubr.f32.mxu0 0.0
    %v10700 = vand.u32 %v8982, 4294901760
    %v10701 = vsub.f32 %v8982, %v10700
    %10702 = vmatmul.mubr.f32.gmra.mrb[0].mxu0 %v10701
    %v10703 = vpop.f32.mrb[0].mxu0
    %v10704 = vadd.f32 %v10177, %v10703
    %v10705 = vpop.f32.mrb[0].mxu0
    %10706 = vmatprep.mubr.f32.mxu0 0.0
    %v10707 = vand.u32 %v8985, 4294901760
    %v10708 = vsub.f32 %v8985, %v10707
    %10709 = vmatmul.mubr.f32.gmra.mrb[0].mxu0 %v10708
    %v10710 = vpop.f32.mrb[0].mxu0
    %v10711 = vadd.f32 %v10183, %v10710
    %v10712 = vpop.f32.mrb[0].mxu0
    %10713 = vmatprep.mubr.f32.mxu0 0.0
    %v10714 = vand.u32 %v8988, 4294901760
    %v10715 = vsub.f32 %v8988, %v10714
    %10716 = vmatmul.mubr.f32.gmra.mrb[0].mxu0 %v10715
    %v10717 = vpop.f32.mrb[0].mxu0
    %v10718 = vadd.f32 %v10189, %v10717
    %v10719 = vpop.f32.mrb[0].mxu0
    %10720 = vmatprep.mubr.f32.mxu0 0.0
    %v10721 = vand.u32 %v8991, 4294901760
    %v10722 = vsub.f32 %v8991, %v10721
    %10723 = vmatmul.mubr.f32.gmra.mrb[0].mxu0 %v10722
    %v10724 = vpop.f32.mrb[0].mxu0
    %v10725 = vadd.f32 %v10195, %v10724
    %v10726 = vpop.f32.mrb[0].mxu0
    %10727 = vmatprep.mubr.f32.mxu0 0.0
    %v10728 = vand.u32 %v8994, 4294901760
    %v10729 = vsub.f32 %v8994, %v10728
    %10730 = vmatmul.mubr.f32.gmra.mrb[0].mxu0 %v10729
    %v10731 = vpop.f32.mrb[0].mxu0
    %v10732 = vadd.f32 %v10201, %v10731
    %v10733 = vpop.f32.mrb[0].mxu0
    %10734 = vdwg.mxu0
    %10735 = vmatprep.subr.mxu0 0.0
    %v10736 = vand.u32 %v8788, 4294901760
    %10737 = vmatpush1.msra.mxu0 %v10736
    %10738 = vmatprep.subr.mxu0 0.0
    %v10739 = vand.u32 %v8789, 4294901760
    %10740 = vmatpush1.msra.mxu0 %v10739
    %10741 = vmatprep.subr.mxu0 0.0
    %v10742 = vand.u32 %v8790, 4294901760
    %10743 = vmatpush1.msra.mxu0 %v10742
    %10744 = vmatprep.subr.mxu0 0.0
    %v10745 = vand.u32 %v8791, 4294901760
    %10746 = vmatpush1.msra.mxu0 %v10745
    %10747 = vmatprep.subr.mxu0 0.0
    %v10748 = vand.u32 %v8792, 4294901760
    %10749 = vmatpush1.msra.mxu0 %v10748
    %10750 = vmatprep.subr.mxu0 0.0
    %v10751 = vand.u32 %v8793, 4294901760
    %10752 = vmatpush1.msra.mxu0 %v10751
    %10753 = vmatprep.subr.mxu0 0.0
    %v10754 = vand.u32 %v8794, 4294901760
    %10755 = vmatpush1.msra.mxu0 %v10754
    %10756 = vmatprep.subr.mxu0 0.0
    %v10757 = vand.u32 %v8795, 4294901760
    %10758 = vmatpush1.msra.mxu0 %v10757
    %10759 = vmatprep.subr.mxu0 0.0
    %v10760 = vand.u32 %v8796, 4294901760
    %10761 = vmatpush1.msra.mxu0 %v10760
    %10762 = vmatprep.subr.mxu0 0.0
    %10763 = vmatpush1.msra.mxu0 0.0
    %10764 = vmatprep.subr.mxu0 0.0
    %10765 = vmatpush1.msra.mxu0 0.0
    %10766 = vmatprep.subr.mxu0 0.0
    %10767 = vmatpush1.msra.mxu0 0.0
    %10768 = vmatprep.subr.mxu0 0.0
    %10769 = vmatpush1.msra.mxu0 0.0
    %10770 = vmatprep.subr.mxu0 0.0
    %10771 = vmatpush1.msra.mxu0 0.0
    %10772 = vmatprep.subr.mxu0 0.0
    %10773 = vmatpush1.msra.mxu0 0.0
    %10774 = vmatprep.subr.mxu0 0.0
    %10775 = vmatpush1.msra.mxu0 0.0
    %10776 = vmatprep.subr.mxu0 0.0
    %10777 = vmatpush1.msra.mxu0 0.0
    %10778 = vmatprep.subr.mxu0 0.0
    %10779 = vmatpush1.msra.mxu0 0.0
    %10780 = vmatprep.subr.mxu0 0.0
    %10781 = vmatpush1.msra.mxu0 0.0
    %10782 = vmatprep.subr.mxu0 0.0
    %10783 = vmatpush1.msra.mxu0 0.0
    %10784 = vmatprep.subr.mxu0 0.0
    %10785 = vmatpush1.msra.mxu0 0.0
    %10786 = vmatprep.subr.mxu0 0.0
    %10787 = vmatpush1.msra.mxu0 0.0
    %10788 = vmatprep.subr.mxu0 0.0
    %10789 = vmatpush1.msra.mxu0 0.0
    %10790 = vmatprep.subr.mxu0 0.0
    %10791 = vmatpush1.msra.mxu0 0.0
    %10792 = vmatprep.subr.mxu0 0.0
    %10793 = vmatpush1.msra.mxu0 0.0
    %10794 = vmatprep.subr.mxu0 0.0
    %10795 = vmatpush1.msra.mxu0 0.0
    %10796 = vmatprep.subr.mxu0 0.0
    %10797 = vmatpush1.msra.mxu0 0.0
    %10798 = vmatprep.subr.mxu0 0.0
    %10799 = vmatpush1.msra.mxu0 0.0
    %10800 = vmatprep.subr.mxu0 0.0
    %10801 = vmatpush1.msra.mxu0 0.0
    %10802 = vmatprep.subr.mxu0 0.0
    %10803 = vmatpush1.msra.mxu0 0.0
    %10804 = vmatprep.subr.mxu0 0.0
    %10805 = vmatpush1.msra.mxu0 0.0
    %10806 = vmatprep.subr.mxu0 0.0
    %10807 = vmatpush1.msra.mxu0 0.0
    %10808 = vmatprep.mubr.f32.mxu0 0.0
    %v10809 = vand.u32 %v8805, 4294901760
    %v10810 = vsub.f32 %v8805, %v10809
    %v10811 = vand.u32 %v10810, 4294901760
    %10812 = vmatmul.mubr.f32.gmra.mrb[0].mxu0 %v10811
    %v10813 = vpop.f32.mrb[0].mxu0
    %v10814 = vadd.f32 %v10291, %v10813
    %v10815 = vpop.f32.mrb[0].mxu0
    %10816 = vmatprep.mubr.f32.mxu0 0.0
    %v10817 = vand.u32 %v8808, 4294901760
    %v10818 = vsub.f32 %v8808, %v10817
    %v10819 = vand.u32 %v10818, 4294901760
    %10820 = vmatmul.mubr.f32.gmra.mrb[0].mxu0 %v10819
    %v10821 = vpop.f32.mrb[0].mxu0
    %v10822 = vadd.f32 %v10298, %v10821
    %v10823 = vpop.f32.mrb[0].mxu0
    %10824 = vmatprep.mubr.f32.mxu0 0.0
    %v10825 = vand.u32 %v8811, 4294901760
    %v10826 = vsub.f32 %v8811, %v10825
    %v10827 = vand.u32 %v10826, 4294901760
    %10828 = vmatmul.mubr.f32.gmra.mrb[0].mxu0 %v10827
    %v10829 = vpop.f32.mrb[0].mxu0
    %v10830 = vadd.f32 %v10305, %v10829
    %v10831 = vpop.f32.mrb[0].mxu0
    %10832 = vmatprep.mubr.f32.mxu0 0.0
    %v10833 = vand.u32 %v8814, 4294901760
    %v10834 = vsub.f32 %v8814, %v10833
    %v10835 = vand.u32 %v10834, 4294901760
    %10836 = vmatmul.mubr.f32.gmra.mrb[0].mxu0 %v10835
    %v10837 = vpop.f32.mrb[0].mxu0
    %v10838 = vadd.f32 %v10312, %v10837
    %v10839 = vpop.f32.mrb[0].mxu0
    %10840 = vmatprep.mubr.f32.mxu0 0.0
    %v10841 = vand.u32 %v8817, 4294901760
    %v10842 = vsub.f32 %v8817, %v10841
    %v10843 = vand.u32 %v10842, 4294901760
    %10844 = vmatmul.mubr.f32.gmra.mrb[0].mxu0 %v10843
    %v10845 = vpop.f32.mrb[0].mxu0
    %v10846 = vadd.f32 %v10319, %v10845
    %v10847 = vpop.f32.mrb[0].mxu0
    %10848 = vmatprep.mubr.f32.mxu0 0.0
    %v10849 = vand.u32 %v8820, 4294901760
    %v10850 = vsub.f32 %v8820, %v10849
    %v10851 = vand.u32 %v10850, 4294901760
    %10852 = vmatmul.mubr.f32.gmra.mrb[0].mxu0 %v10851
    %v10853 = vpop.f32.mrb[0].mxu0
    %v10854 = vadd.f32 %v10326, %v10853
    %v10855 = vpop.f32.mrb[0].mxu0
    %10856 = vmatprep.mubr.f32.mxu0 0.0
    %v10857 = vand.u32 %v8823, 4294901760
    %v10858 = vsub.f32 %v8823, %v10857
    %v10859 = vand.u32 %v10858, 4294901760
    %10860 = vmatmul.mubr.f32.gmra.mrb[0].mxu0 %v10859
    %v10861 = vpop.f32.mrb[0].mxu0
    %v10862 = vadd.f32 %v10333, %v10861
    %v10863 = vpop.f32.mrb[0].mxu0
    %10864 = vmatprep.mubr.f32.mxu0 0.0
    %v10865 = vand.u32 %v8826, 4294901760
    %v10866 = vsub.f32 %v8826, %v10865
    %v10867 = vand.u32 %v10866, 4294901760
    %10868 = vmatmul.mubr.f32.gmra.mrb[0].mxu0 %v10867
    %v10869 = vpop.f32.mrb[0].mxu0
    %v10870 = vadd.f32 %v10340, %v10869
    %v10871 = vpop.f32.mrb[0].mxu0
    %10872 = vmatprep.mubr.f32.mxu0 0.0
    %v10873 = vand.u32 %v8829, 4294901760
    %v10874 = vsub.f32 %v8829, %v10873
    %v10875 = vand.u32 %v10874, 4294901760
    %10876 = vmatmul.mubr.f32.gmra.mrb[0].mxu0 %v10875
    %v10877 = vpop.f32.mrb[0].mxu0
    %v10878 = vadd.f32 %v10347, %v10877
    %v10879 = vpop.f32.mrb[0].mxu0
    %10880 = vmatprep.mubr.f32.mxu0 0.0
    %v10881 = vand.u32 %v8832, 4294901760
    %v10882 = vsub.f32 %v8832, %v10881
    %v10883 = vand.u32 %v10882, 4294901760
    %10884 = vmatmul.mubr.f32.gmra.mrb[0].mxu0 %v10883
    %v10885 = vpop.f32.mrb[0].mxu0
    %v10886 = vadd.f32 %v10354, %v10885
    %v10887 = vpop.f32.mrb[0].mxu0
    %10888 = vmatprep.mubr.f32.mxu0 0.0
    %v10889 = vand.u32 %v8835, 4294901760
    %v10890 = vsub.f32 %v8835, %v10889
    %v10891 = vand.u32 %v10890, 4294901760
    %10892 = vmatmul.mubr.f32.gmra.mrb[0].mxu0 %v10891
    %v10893 = vpop.f32.mrb[0].mxu0
    %v10894 = vadd.f32 %v10361, %v10893
    %v10895 = vpop.f32.mrb[0].mxu0
    %10896 = vmatprep.mubr.f32.mxu0 0.0
    %v10897 = vand.u32 %v8838, 4294901760
    %v10898 = vsub.f32 %v8838, %v10897
    %v10899 = vand.u32 %v10898, 4294901760
    %10900 = vmatmul.mubr.f32.gmra.mrb[0].mxu0 %v10899
    %v10901 = vpop.f32.mrb[0].mxu0
    %v10902 = vadd.f32 %v10368, %v10901
    %v10903 = vpop.f32.mrb[0].mxu0
    %10904 = vmatprep.mubr.f32.mxu0 0.0
    %v10905 = vand.u32 %v8841, 4294901760
    %v10906 = vsub.f32 %v8841, %v10905
    %v10907 = vand.u32 %v10906, 4294901760
    %10908 = vmatmul.mubr.f32.gmra.mrb[0].mxu0 %v10907
    %v10909 = vpop.f32.mrb[0].mxu0
    %v10910 = vadd.f32 %v10375, %v10909
    %v10911 = vpop.f32.mrb[0].mxu0
    %10912 = vmatprep.mubr.f32.mxu0 0.0
    %v10913 = vand.u32 %v8844, 4294901760
    %v10914 = vsub.f32 %v8844, %v10913
    %v10915 = vand.u32 %v10914, 4294901760
    %10916 = vmatmul.mubr.f32.gmra.mrb[0].mxu0 %v10915
    %v10917 = vpop.f32.mrb[0].mxu0
    %v10918 = vadd.f32 %v10382, %v10917
    %v10919 = vpop.f32.mrb[0].mxu0
    %10920 = vmatprep.mubr.f32.mxu0 0.0
    %v10921 = vand.u32 %v8847, 4294901760
    %v10922 = vsub.f32 %v8847, %v10921
    %v10923 = vand.u32 %v10922, 4294901760
    %10924 = vmatmul.mubr.f32.gmra.mrb[0].mxu0 %v10923
    %v10925 = vpop.f32.mrb[0].mxu0
    %v10926 = vadd.f32 %v10389, %v10925
    %v10927 = vpop.f32.mrb[0].mxu0
    %10928 = vmatprep.mubr.f32.mxu0 0.0
    %v10929 = vand.u32 %v8850, 4294901760
    %v10930 = vsub.f32 %v8850, %v10929
    %v10931 = vand.u32 %v10930, 4294901760
    %10932 = vmatmul.mubr.f32.gmra.mrb[0].mxu0 %v10931
    %v10933 = vpop.f32.mrb[0].mxu0
    %v10934 = vadd.f32 %v10396, %v10933
    %v10935 = vpop.f32.mrb[0].mxu0
    %10936 = vmatprep.mubr.f32.mxu0 0.0
    %v10937 = vand.u32 %v8853, 4294901760
    %v10938 = vsub.f32 %v8853, %v10937
    %v10939 = vand.u32 %v10938, 4294901760
    %10940 = vmatmul.mubr.f32.gmra.mrb[0].mxu0 %v10939
    %v10941 = vpop.f32.mrb[0].mxu0
    %v10942 = vadd.f32 %v10403, %v10941
    %v10943 = vpop.f32.mrb[0].mxu0
    %10944 = vmatprep.mubr.f32.mxu0 0.0
    %v10945 = vand.u32 %v8856, 4294901760
    %v10946 = vsub.f32 %v8856, %v10945
    %v10947 = vand.u32 %v10946, 4294901760
    %10948 = vmatmul.mubr.f32.gmra.mrb[0].mxu0 %v10947
    %v10949 = vpop.f32.mrb[0].mxu0
    %v10950 = vadd.f32 %v10410, %v10949
    %v10951 = vpop.f32.mrb[0].mxu0
    %10952 = vmatprep.mubr.f32.mxu0 0.0
    %v10953 = vand.u32 %v8859, 4294901760
    %v10954 = vsub.f32 %v8859, %v10953
    %v10955 = vand.u32 %v10954, 4294901760
    %10956 = vmatmul.mubr.f32.gmra.mrb[0].mxu0 %v10955
    %v10957 = vpop.f32.mrb[0].mxu0
    %v10958 = vadd.f32 %v10417, %v10957
    %v10959 = vpop.f32.mrb[0].mxu0
    %10960 = vmatprep.mubr.f32.mxu0 0.0
    %v10961 = vand.u32 %v8862, 4294901760
    %v10962 = vsub.f32 %v8862, %v10961
    %v10963 = vand.u32 %v10962, 4294901760
    %10964 = vmatmul.mubr.f32.gmra.mrb[0].mxu0 %v10963
    %v10965 = vpop.f32.mrb[0].mxu0
    %v10966 = vadd.f32 %v10424, %v10965
    %v10967 = vpop.f32.mrb[0].mxu0
    %10968 = vmatprep.mubr.f32.mxu0 0.0
    %v10969 = vand.u32 %v8865, 4294901760
    %v10970 = vsub.f32 %v8865, %v10969
    %v10971 = vand.u32 %v10970, 4294901760
    %10972 = vmatmul.mubr.f32.gmra.mrb[0].mxu0 %v10971
    %v10973 = vpop.f32.mrb[0].mxu0
    %v10974 = vadd.f32 %v10431, %v10973
    %v10975 = vpop.f32.mrb[0].mxu0
    %10976 = vmatprep.mubr.f32.mxu0 0.0
    %v10977 = vand.u32 %v8868, 4294901760
    %v10978 = vsub.f32 %v8868, %v10977
    %v10979 = vand.u32 %v10978, 4294901760
    %10980 = vmatmul.mubr.f32.gmra.mrb[0].mxu0 %v10979
    %v10981 = vpop.f32.mrb[0].mxu0
    %v10982 = vadd.f32 %v10438, %v10981
    %v10983 = vpop.f32.mrb[0].mxu0
    %10984 = vmatprep.mubr.f32.mxu0 0.0
    %v10985 = vand.u32 %v8871, 4294901760
    %v10986 = vsub.f32 %v8871, %v10985
    %v10987 = vand.u32 %v10986, 4294901760
    %10988 = vmatmul.mubr.f32.gmra.mrb[0].mxu0 %v10987
    %v10989 = vpop.f32.mrb[0].mxu0
    %v10990 = vadd.f32 %v10445, %v10989
    %v10991 = vpop.f32.mrb[0].mxu0
    %10992 = vmatprep.mubr.f32.mxu0 0.0
    %v10993 = vand.u32 %v8874, 4294901760
    %v10994 = vsub.f32 %v8874, %v10993
    %v10995 = vand.u32 %v10994, 4294901760
    %10996 = vmatmul.mubr.f32.gmra.mrb[0].mxu0 %v10995
    %v10997 = vpop.f32.mrb[0].mxu0
    %v10998 = vadd.f32 %v10452, %v10997
    %v10999 = vpop.f32.mrb[0].mxu0
    %11000 = vmatprep.mubr.f32.mxu0 0.0
    %v11001 = vand.u32 %v8877, 4294901760
    %v11002 = vsub.f32 %v8877, %v11001
    %v11003 = vand.u32 %v11002, 4294901760
    %11004 = vmatmul.mubr.f32.gmra.mrb[0].mxu0 %v11003
    %v11005 = vpop.f32.mrb[0].mxu0
    %v11006 = vadd.f32 %v10459, %v11005
    %v11007 = vpop.f32.mrb[0].mxu0
    %11008 = vmatprep.mubr.f32.mxu0 0.0
    %v11009 = vand.u32 %v8880, 4294901760
    %v11010 = vsub.f32 %v8880, %v11009
    %v11011 = vand.u32 %v11010, 4294901760
    %11012 = vmatmul.mubr.f32.gmra.mrb[0].mxu0 %v11011
    %v11013 = vpop.f32.mrb[0].mxu0
    %v11014 = vadd.f32 %v10466, %v11013
    %v11015 = vpop.f32.mrb[0].mxu0
    %11016 = vmatprep.mubr.f32.mxu0 0.0
    %v11017 = vand.u32 %v8883, 4294901760
    %v11018 = vsub.f32 %v8883, %v11017
    %v11019 = vand.u32 %v11018, 4294901760
    %11020 = vmatmul.mubr.f32.gmra.mrb[0].mxu0 %v11019
    %v11021 = vpop.f32.mrb[0].mxu0
    %v11022 = vadd.f32 %v10473, %v11021
    %v11023 = vpop.f32.mrb[0].mxu0
    %11024 = vmatprep.mubr.f32.mxu0 0.0
    %v11025 = vand.u32 %v8886, 4294901760
    %v11026 = vsub.f32 %v8886, %v11025
    %v11027 = vand.u32 %v11026, 4294901760
    %11028 = vmatmul.mubr.f32.gmra.mrb[0].mxu0 %v11027
    %v11029 = vpop.f32.mrb[0].mxu0
    %v11030 = vadd.f32 %v10480, %v11029
    %v11031 = vpop.f32.mrb[0].mxu0
    %11032 = vmatprep.mubr.f32.mxu0 0.0
    %v11033 = vand.u32 %v8889, 4294901760
    %v11034 = vsub.f32 %v8889, %v11033
    %v11035 = vand.u32 %v11034, 4294901760
    %11036 = vmatmul.mubr.f32.gmra.mrb[0].mxu0 %v11035
    %v11037 = vpop.f32.mrb[0].mxu0
    %v11038 = vadd.f32 %v10487, %v11037
    %v11039 = vpop.f32.mrb[0].mxu0
    %11040 = vmatprep.mubr.f32.mxu0 0.0
    %v11041 = vand.u32 %v8892, 4294901760
    %v11042 = vsub.f32 %v8892, %v11041
    %v11043 = vand.u32 %v11042, 4294901760
    %11044 = vmatmul.mubr.f32.gmra.mrb[0].mxu0 %v11043
    %v11045 = vpop.f32.mrb[0].mxu0
    %v11046 = vadd.f32 %v10494, %v11045
    %v11047 = vpop.f32.mrb[0].mxu0
    %11048 = vmatprep.mubr.f32.mxu0 0.0
    %v11049 = vand.u32 %v8895, 4294901760
    %v11050 = vsub.f32 %v8895, %v11049
    %v11051 = vand.u32 %v11050, 4294901760
    %11052 = vmatmul.mubr.f32.gmra.mrb[0].mxu0 %v11051
    %v11053 = vpop.f32.mrb[0].mxu0
    %v11054 = vadd.f32 %v10501, %v11053
    %v11055 = vpop.f32.mrb[0].mxu0
    %11056 = vmatprep.mubr.f32.mxu0 0.0
    %v11057 = vand.u32 %v8898, 4294901760
    %v11058 = vsub.f32 %v8898, %v11057
    %v11059 = vand.u32 %v11058, 4294901760
    %11060 = vmatmul.mubr.f32.gmra.mrb[0].mxu0 %v11059
    %v11061 = vpop.f32.mrb[0].mxu0
    %v11062 = vadd.f32 %v10508, %v11061
    %v11063 = vpop.f32.mrb[0].mxu0
    %11064 = vmatprep.mubr.f32.mxu0 0.0
    %v11065 = vand.u32 %v8901, 4294901760
    %v11066 = vsub.f32 %v8901, %v11065
    %v11067 = vand.u32 %v11066, 4294901760
    %11068 = vmatmul.mubr.f32.gmra.mrb[0].mxu0 %v11067
    %v11069 = vpop.f32.mrb[0].mxu0
    %v11070 = vadd.f32 %v10515, %v11069
    %v11071 = vpop.f32.mrb[0].mxu0
    %11072 = vmatprep.mubr.f32.mxu0 0.0
    %v11073 = vand.u32 %v8904, 4294901760
    %v11074 = vsub.f32 %v8904, %v11073
    %v11075 = vand.u32 %v11074, 4294901760
    %11076 = vmatmul.mubr.f32.gmra.mrb[0].mxu0 %v11075
    %v11077 = vpop.f32.mrb[0].mxu0
    %v11078 = vadd.f32 %v10522, %v11077
    %v11079 = vpop.f32.mrb[0].mxu0
    %11080 = vmatprep.mubr.f32.mxu0 0.0
    %v11081 = vand.u32 %v8907, 4294901760
    %v11082 = vsub.f32 %v8907, %v11081
    %v11083 = vand.u32 %v11082, 4294901760
    %11084 = vmatmul.mubr.f32.gmra.mrb[0].mxu0 %v11083
    %v11085 = vpop.f32.mrb[0].mxu0
    %v11086 = vadd.f32 %v10529, %v11085
    %v11087 = vpop.f32.mrb[0].mxu0
    %11088 = vmatprep.mubr.f32.mxu0 0.0
    %v11089 = vand.u32 %v8910, 4294901760
    %v11090 = vsub.f32 %v8910, %v11089
    %v11091 = vand.u32 %v11090, 4294901760
    %11092 = vmatmul.mubr.f32.gmra.mrb[0].mxu0 %v11091
    %v11093 = vpop.f32.mrb[0].mxu0
    %v11094 = vadd.f32 %v10536, %v11093
    %v11095 = vpop.f32.mrb[0].mxu0
    %11096 = vmatprep.mubr.f32.mxu0 0.0
    %v11097 = vand.u32 %v8913, 4294901760
    %v11098 = vsub.f32 %v8913, %v11097
    %v11099 = vand.u32 %v11098, 4294901760
    %11100 = vmatmul.mubr.f32.gmra.mrb[0].mxu0 %v11099
    %v11101 = vpop.f32.mrb[0].mxu0
    %v11102 = vadd.f32 %v10543, %v11101
    %v11103 = vpop.f32.mrb[0].mxu0
    %11104 = vmatprep.mubr.f32.mxu0 0.0
    %v11105 = vand.u32 %v8916, 4294901760
    %v11106 = vsub.f32 %v8916, %v11105
    %v11107 = vand.u32 %v11106, 4294901760
    %11108 = vmatmul.mubr.f32.gmra.mrb[0].mxu0 %v11107
    %v11109 = vpop.f32.mrb[0].mxu0
    %v11110 = vadd.f32 %v10550, %v11109
    %v11111 = vpop.f32.mrb[0].mxu0
    %11112 = vmatprep.mubr.f32.mxu0 0.0
    %v11113 = vand.u32 %v8919, 4294901760
    %v11114 = vsub.f32 %v8919, %v11113
    %v11115 = vand.u32 %v11114, 4294901760
    %11116 = vmatmul.mubr.f32.gmra.mrb[0].mxu0 %v11115
    %v11117 = vpop.f32.mrb[0].mxu0
    %v11118 = vadd.f32 %v10557, %v11117
    %v11119 = vpop.f32.mrb[0].mxu0
    %11120 = vmatprep.mubr.f32.mxu0 0.0
    %v11121 = vand.u32 %v8922, 4294901760
    %v11122 = vsub.f32 %v8922, %v11121
    %v11123 = vand.u32 %v11122, 4294901760
    %11124 = vmatmul.mubr.f32.gmra.mrb[0].mxu0 %v11123
    %v11125 = vpop.f32.mrb[0].mxu0
    %v11126 = vadd.f32 %v10564, %v11125
    %v11127 = vpop.f32.mrb[0].mxu0
    %11128 = vmatprep.mubr.f32.mxu0 0.0
    %v11129 = vand.u32 %v8925, 4294901760
    %v11130 = vsub.f32 %v8925, %v11129
    %v11131 = vand.u32 %v11130, 4294901760
    %11132 = vmatmul.mubr.f32.gmra.mrb[0].mxu0 %v11131
    %v11133 = vpop.f32.mrb[0].mxu0
    %v11134 = vadd.f32 %v10571, %v11133
    %v11135 = vpop.f32.mrb[0].mxu0
    %11136 = vmatprep.mubr.f32.mxu0 0.0
    %v11137 = vand.u32 %v8928, 4294901760
    %v11138 = vsub.f32 %v8928, %v11137
    %v11139 = vand.u32 %v11138, 4294901760
    %11140 = vmatmul.mubr.f32.gmra.mrb[0].mxu0 %v11139
    %v11141 = vpop.f32.mrb[0].mxu0
    %v11142 = vadd.f32 %v10578, %v11141
    %v11143 = vpop.f32.mrb[0].mxu0
    %11144 = vmatprep.mubr.f32.mxu0 0.0
    %v11145 = vand.u32 %v8931, 4294901760
    %v11146 = vsub.f32 %v8931, %v11145
    %v11147 = vand.u32 %v11146, 4294901760
    %11148 = vmatmul.mubr.f32.gmra.mrb[0].mxu0 %v11147
    %v11149 = vpop.f32.mrb[0].mxu0
    %v11150 = vadd.f32 %v10585, %v11149
    %v11151 = vpop.f32.mrb[0].mxu0
    %11152 = vmatprep.mubr.f32.mxu0 0.0
    %v11153 = vand.u32 %v8934, 4294901760
    %v11154 = vsub.f32 %v8934, %v11153
    %v11155 = vand.u32 %v11154, 4294901760
    %11156 = vmatmul.mubr.f32.gmra.mrb[0].mxu0 %v11155
    %v11157 = vpop.f32.mrb[0].mxu0
    %v11158 = vadd.f32 %v10592, %v11157
    %v11159 = vpop.f32.mrb[0].mxu0
    %11160 = vmatprep.mubr.f32.mxu0 0.0
    %v11161 = vand.u32 %v8937, 4294901760
    %v11162 = vsub.f32 %v8937, %v11161
    %v11163 = vand.u32 %v11162, 4294901760
    %11164 = vmatmul.mubr.f32.gmra.mrb[0].mxu0 %v11163
    %v11165 = vpop.f32.mrb[0].mxu0
    %v11166 = vadd.f32 %v10599, %v11165
    %v11167 = vpop.f32.mrb[0].mxu0
    %11168 = vmatprep.mubr.f32.mxu0 0.0
    %v11169 = vand.u32 %v8940, 4294901760
    %v11170 = vsub.f32 %v8940, %v11169
    %v11171 = vand.u32 %v11170, 4294901760
    %11172 = vmatmul.mubr.f32.gmra.mrb[0].mxu0 %v11171
    %v11173 = vpop.f32.mrb[0].mxu0
    %v11174 = vadd.f32 %v10606, %v11173
    %v11175 = vpop.f32.mrb[0].mxu0
    %11176 = vmatprep.mubr.f32.mxu0 0.0
    %v11177 = vand.u32 %v8943, 4294901760
    %v11178 = vsub.f32 %v8943, %v11177
    %v11179 = vand.u32 %v11178, 4294901760
    %11180 = vmatmul.mubr.f32.gmra.mrb[0].mxu0 %v11179
    %v11181 = vpop.f32.mrb[0].mxu0
    %v11182 = vadd.f32 %v10613, %v11181
    %v11183 = vpop.f32.mrb[0].mxu0
    %11184 = vmatprep.mubr.f32.mxu0 0.0
    %v11185 = vand.u32 %v8946, 4294901760
    %v11186 = vsub.f32 %v8946, %v11185
    %v11187 = vand.u32 %v11186, 4294901760
    %11188 = vmatmul.mubr.f32.gmra.mrb[0].mxu0 %v11187
    %v11189 = vpop.f32.mrb[0].mxu0
    %v11190 = vadd.f32 %v10620, %v11189
    %v11191 = vpop.f32.mrb[0].mxu0
    %11192 = vmatprep.mubr.f32.mxu0 0.0
    %v11193 = vand.u32 %v8949, 4294901760
    %v11194 = vsub.f32 %v8949, %v11193
    %v11195 = vand.u32 %v11194, 4294901760
    %11196 = vmatmul.mubr.f32.gmra.mrb[0].mxu0 %v11195
    %v11197 = vpop.f32.mrb[0].mxu0
    %v11198 = vadd.f32 %v10627, %v11197
    %v11199 = vpop.f32.mrb[0].mxu0
    %11200 = vmatprep.mubr.f32.mxu0 0.0
    %v11201 = vand.u32 %v8952, 4294901760
    %v11202 = vsub.f32 %v8952, %v11201
    %v11203 = vand.u32 %v11202, 4294901760
    %11204 = vmatmul.mubr.f32.gmra.mrb[0].mxu0 %v11203
    %v11205 = vpop.f32.mrb[0].mxu0
    %v11206 = vadd.f32 %v10634, %v11205
    %v11207 = vpop.f32.mrb[0].mxu0
    %11208 = vmatprep.mubr.f32.mxu0 0.0
    %v11209 = vand.u32 %v8955, 4294901760
    %v11210 = vsub.f32 %v8955, %v11209
    %v11211 = vand.u32 %v11210, 4294901760
    %11212 = vmatmul.mubr.f32.gmra.mrb[0].mxu0 %v11211
    %v11213 = vpop.f32.mrb[0].mxu0
    %v11214 = vadd.f32 %v10641, %v11213
    %v11215 = vpop.f32.mrb[0].mxu0
    %11216 = vmatprep.mubr.f32.mxu0 0.0
    %v11217 = vand.u32 %v8958, 4294901760
    %v11218 = vsub.f32 %v8958, %v11217
    %v11219 = vand.u32 %v11218, 4294901760
    %11220 = vmatmul.mubr.f32.gmra.mrb[0].mxu0 %v11219
    %v11221 = vpop.f32.mrb[0].mxu0
    %v11222 = vadd.f32 %v10648, %v11221
    %v11223 = vpop.f32.mrb[0].mxu0
    %11224 = vmatprep.mubr.f32.mxu0 0.0
    %v11225 = vand.u32 %v8961, 4294901760
    %v11226 = vsub.f32 %v8961, %v11225
    %v11227 = vand.u32 %v11226, 4294901760
    %11228 = vmatmul.mubr.f32.gmra.mrb[0].mxu0 %v11227
    %v11229 = vpop.f32.mrb[0].mxu0
    %v11230 = vadd.f32 %v10655, %v11229
    %v11231 = vpop.f32.mrb[0].mxu0
    %11232 = vmatprep.mubr.f32.mxu0 0.0
    %v11233 = vand.u32 %v8964, 4294901760
    %v11234 = vsub.f32 %v8964, %v11233
    %v11235 = vand.u32 %v11234, 4294901760
    %11236 = vmatmul.mubr.f32.gmra.mrb[0].mxu0 %v11235
    %v11237 = vpop.f32.mrb[0].mxu0
    %v11238 = vadd.f32 %v10662, %v11237
    %v11239 = vpop.f32.mrb[0].mxu0
    %11240 = vmatprep.mubr.f32.mxu0 0.0
    %v11241 = vand.u32 %v8967, 4294901760
    %v11242 = vsub.f32 %v8967, %v11241
    %v11243 = vand.u32 %v11242, 4294901760
    %11244 = vmatmul.mubr.f32.gmra.mrb[0].mxu0 %v11243
    %v11245 = vpop.f32.mrb[0].mxu0
    %v11246 = vadd.f32 %v10669, %v11245
    %v11247 = vpop.f32.mrb[0].mxu0
    %11248 = vmatprep.mubr.f32.mxu0 0.0
    %v11249 = vand.u32 %v8970, 4294901760
    %v11250 = vsub.f32 %v8970, %v11249
    %v11251 = vand.u32 %v11250, 4294901760
    %11252 = vmatmul.mubr.f32.gmra.mrb[0].mxu0 %v11251
    %v11253 = vpop.f32.mrb[0].mxu0
    %v11254 = vadd.f32 %v10676, %v11253
    %v11255 = vpop.f32.mrb[0].mxu0
    %11256 = vmatprep.mubr.f32.mxu0 0.0
    %v11257 = vand.u32 %v8973, 4294901760
    %v11258 = vsub.f32 %v8973, %v11257
    %v11259 = vand.u32 %v11258, 4294901760
    %11260 = vmatmul.mubr.f32.gmra.mrb[0].mxu0 %v11259
    %v11261 = vpop.f32.mrb[0].mxu0
    %v11262 = vadd.f32 %v10683, %v11261
    %v11263 = vpop.f32.mrb[0].mxu0
    %11264 = vmatprep.mubr.f32.mxu0 0.0
    %v11265 = vand.u32 %v8976, 4294901760
    %v11266 = vsub.f32 %v8976, %v11265
    %v11267 = vand.u32 %v11266, 4294901760
    %11268 = vmatmul.mubr.f32.gmra.mrb[0].mxu0 %v11267
    %v11269 = vpop.f32.mrb[0].mxu0
    %v11270 = vadd.f32 %v10690, %v11269
    %v11271 = vpop.f32.mrb[0].mxu0
    %11272 = vmatprep.mubr.f32.mxu0 0.0
    %v11273 = vand.u32 %v8979, 4294901760
    %v11274 = vsub.f32 %v8979, %v11273
    %v11275 = vand.u32 %v11274, 4294901760
    %11276 = vmatmul.mubr.f32.gmra.mrb[0].mxu0 %v11275
    %v11277 = vpop.f32.mrb[0].mxu0
    %v11278 = vadd.f32 %v10697, %v11277
    %v11279 = vpop.f32.mrb[0].mxu0
    %11280 = vmatprep.mubr.f32.mxu0 0.0
    %v11281 = vand.u32 %v8982, 4294901760
    %v11282 = vsub.f32 %v8982, %v11281
    %v11283 = vand.u32 %v11282, 4294901760
    %11284 = vmatmul.mubr.f32.gmra.mrb[0].mxu0 %v11283
    %v11285 = vpop.f32.mrb[0].mxu0
    %v11286 = vadd.f32 %v10704, %v11285
    %v11287 = vpop.f32.mrb[0].mxu0
    %11288 = vmatprep.mubr.f32.mxu0 0.0
    %v11289 = vand.u32 %v8985, 4294901760
    %v11290 = vsub.f32 %v8985, %v11289
    %v11291 = vand.u32 %v11290, 4294901760
    %11292 = vmatmul.mubr.f32.gmra.mrb[0].mxu0 %v11291
    %v11293 = vpop.f32.mrb[0].mxu0
    %v11294 = vadd.f32 %v10711, %v11293
    %v11295 = vpop.f32.mrb[0].mxu0
    %11296 = vmatprep.mubr.f32.mxu0 0.0
    %v11297 = vand.u32 %v8988, 4294901760
    %v11298 = vsub.f32 %v8988, %v11297
    %v11299 = vand.u32 %v11298, 4294901760
    %11300 = vmatmul.mubr.f32.gmra.mrb[0].mxu0 %v11299
    %v11301 = vpop.f32.mrb[0].mxu0
    %v11302 = vadd.f32 %v10718, %v11301
    %v11303 = vpop.f32.mrb[0].mxu0
    %11304 = vmatprep.mubr.f32.mxu0 0.0
    %v11305 = vand.u32 %v8991, 4294901760
    %v11306 = vsub.f32 %v8991, %v11305
    %v11307 = vand.u32 %v11306, 4294901760
    %11308 = vmatmul.mubr.f32.gmra.mrb[0].mxu0 %v11307
    %v11309 = vpop.f32.mrb[0].mxu0
    %v11310 = vadd.f32 %v10725, %v11309
    %v11311 = vpop.f32.mrb[0].mxu0
    %11312 = vmatprep.mubr.f32.mxu0 0.0
    %v11313 = vand.u32 %v8994, 4294901760
    %v11314 = vsub.f32 %v8994, %v11313
    %v11315 = vand.u32 %v11314, 4294901760
    %11316 = vmatmul.mubr.f32.gmra.mrb[0].mxu0 %v11315
    %v11317 = vpop.f32.mrb[0].mxu0
    %v11318 = vadd.f32 %v10732, %v11317
    %v11319 = vpop.f32.mrb[0].mxu0
    %11320 = vdwg.mxu0
    %11321 = vmatprep.subr.mxu0 0.0
    %v11322 = vand.u32 %v8788, 4294901760
    %v11323 = vsub.f32 %v8788, %v11322
    %v11324 = vand.u32 %v11323, 4294901760
    %11325 = vmatpush1.msra.mxu0 %v11324
    %11326 = vmatprep.subr.mxu0 0.0
    %v11327 = vand.u32 %v8789, 4294901760
    %v11328 = vsub.f32 %v8789, %v11327
    %v11329 = vand.u32 %v11328, 4294901760
    %11330 = vmatpush1.msra.mxu0 %v11329
    %11331 = vmatprep.subr.mxu0 0.0
    %v11332 = vand.u32 %v8790, 4294901760
    %v11333 = vsub.f32 %v8790, %v11332
    %v11334 = vand.u32 %v11333, 4294901760
    %11335 = vmatpush1.msra.mxu0 %v11334
    %11336 = vmatprep.subr.mxu0 0.0
    %v11337 = vand.u32 %v8791, 4294901760
    %v11338 = vsub.f32 %v8791, %v11337
    %v11339 = vand.u32 %v11338, 4294901760
    %11340 = vmatpush1.msra.mxu0 %v11339
    %11341 = vmatprep.subr.mxu0 0.0
    %v11342 = vand.u32 %v8792, 4294901760
    %v11343 = vsub.f32 %v8792, %v11342
    %v11344 = vand.u32 %v11343, 4294901760
    %11345 = vmatpush1.msra.mxu0 %v11344
    %11346 = vmatprep.subr.mxu0 0.0
    %v11347 = vand.u32 %v8793, 4294901760
    %v11348 = vsub.f32 %v8793, %v11347
    %v11349 = vand.u32 %v11348, 4294901760
    %11350 = vmatpush1.msra.mxu0 %v11349
    %11351 = vmatprep.subr.mxu0 0.0
    %v11352 = vand.u32 %v8794, 4294901760
    %v11353 = vsub.f32 %v8794, %v11352
    %v11354 = vand.u32 %v11353, 4294901760
    %11355 = vmatpush1.msra.mxu0 %v11354
    %11356 = vmatprep.subr.mxu0 0.0
    %v11357 = vand.u32 %v8795, 4294901760
    %v11358 = vsub.f32 %v8795, %v11357
    %v11359 = vand.u32 %v11358, 4294901760
    %11360 = vmatpush1.msra.mxu0 %v11359
    %11361 = vmatprep.subr.mxu0 0.0
    %v11362 = vand.u32 %v8796, 4294901760
    %v11363 = vsub.f32 %v8796, %v11362
    %v11364 = vand.u32 %v11363, 4294901760
    %11365 = vmatpush1.msra.mxu0 %v11364
    %11366 = vmatprep.subr.mxu0 0.0
    %11367 = vmatpush1.msra.mxu0 0.0
    %11368 = vmatprep.subr.mxu0 0.0
    %11369 = vmatpush1.msra.mxu0 0.0
    %11370 = vmatprep.subr.mxu0 0.0
    %11371 = vmatpush1.msra.mxu0 0.0
    %11372 = vmatprep.subr.mxu0 0.0
    %11373 = vmatpush1.msra.mxu0 0.0
    %11374 = vmatprep.subr.mxu0 0.0
    %11375 = vmatpush1.msra.mxu0 0.0
    %11376 = vmatprep.subr.mxu0 0.0
    %11377 = vmatpush1.msra.mxu0 0.0
    %11378 = vmatprep.subr.mxu0 0.0
    %11379 = vmatpush1.msra.mxu0 0.0
    %11380 = vmatprep.subr.mxu0 0.0
    %11381 = vmatpush1.msra.mxu0 0.0
    %11382 = vmatprep.subr.mxu0 0.0
    %11383 = vmatpush1.msra.mxu0 0.0
    %11384 = vmatprep.subr.mxu0 0.0
    %11385 = vmatpush1.msra.mxu0 0.0
    %11386 = vmatprep.subr.mxu0 0.0
    %11387 = vmatpush1.msra.mxu0 0.0
    %11388 = vmatprep.subr.mxu0 0.0
    %11389 = vmatpush1.msra.mxu0 0.0
    %11390 = vmatprep.subr.mxu0 0.0
    %11391 = vmatpush1.msra.mxu0 0.0
    %11392 = vmatprep.subr.mxu0 0.0
    %11393 = vmatpush1.msra.mxu0 0.0
    %11394 = vmatprep.subr.mxu0 0.0
    %11395 = vmatpush1.msra.mxu0 0.0
    %11396 = vmatprep.subr.mxu0 0.0
    %11397 = vmatpush1.msra.mxu0 0.0
    %11398 = vmatprep.subr.mxu0 0.0
    %11399 = vmatpush1.msra.mxu0 0.0
    %11400 = vmatprep.subr.mxu0 0.0
    %11401 = vmatpush1.msra.mxu0 0.0
    %11402 = vmatprep.subr.mxu0 0.0
    %11403 = vmatpush1.msra.mxu0 0.0
    %11404 = vmatprep.subr.mxu0 0.0
    %11405 = vmatpush1.msra.mxu0 0.0
    %11406 = vmatprep.subr.mxu0 0.0
    %11407 = vmatpush1.msra.mxu0 0.0
    %11408 = vmatprep.subr.mxu0 0.0
    %11409 = vmatpush1.msra.mxu0 0.0
    %11410 = vmatprep.subr.mxu0 0.0
    %11411 = vmatpush1.msra.mxu0 0.0
    %11412 = vmatprep.mubr.f32.mxu0 0.0
    %v11413 = vand.u32 %v8805, 4294901760
    %11414 = vmatmul.mubr.f32.gmra.mrb[0].mxu0 %v11413
    %v11415 = vpop.f32.mrb[0].mxu0
    %v11416 = vadd.f32 %v10814, %v11415
    %v11417 = vpop.f32.mrb[0].mxu0
    %11418 = vmatprep.mubr.f32.mxu0 0.0
    %v11419 = vand.u32 %v8808, 4294901760
    %11420 = vmatmul.mubr.f32.gmra.mrb[0].mxu0 %v11419
    %v11421 = vpop.f32.mrb[0].mxu0
    %v11422 = vadd.f32 %v10822, %v11421
    %v11423 = vpop.f32.mrb[0].mxu0
    %11424 = vmatprep.mubr.f32.mxu0 0.0
    %v11425 = vand.u32 %v8811, 4294901760
    %11426 = vmatmul.mubr.f32.gmra.mrb[0].mxu0 %v11425
    %v11427 = vpop.f32.mrb[0].mxu0
    %v11428 = vadd.f32 %v10830, %v11427
    %v11429 = vpop.f32.mrb[0].mxu0
    %11430 = vmatprep.mubr.f32.mxu0 0.0
    %v11431 = vand.u32 %v8814, 4294901760
    %11432 = vmatmul.mubr.f32.gmra.mrb[0].mxu0 %v11431
    %v11433 = vpop.f32.mrb[0].mxu0
    %v11434 = vadd.f32 %v10838, %v11433
    %v11435 = vpop.f32.mrb[0].mxu0
    %11436 = vmatprep.mubr.f32.mxu0 0.0
    %v11437 = vand.u32 %v8817, 4294901760
    %11438 = vmatmul.mubr.f32.gmra.mrb[0].mxu0 %v11437
    %v11439 = vpop.f32.mrb[0].mxu0
    %v11440 = vadd.f32 %v10846, %v11439
    %v11441 = vpop.f32.mrb[0].mxu0
    %11442 = vmatprep.mubr.f32.mxu0 0.0
    %v11443 = vand.u32 %v8820, 4294901760
    %11444 = vmatmul.mubr.f32.gmra.mrb[0].mxu0 %v11443
    %v11445 = vpop.f32.mrb[0].mxu0
    %v11446 = vadd.f32 %v10854, %v11445
    %v11447 = vpop.f32.mrb[0].mxu0
    %11448 = vmatprep.mubr.f32.mxu0 0.0
    %v11449 = vand.u32 %v8823, 4294901760
    %11450 = vmatmul.mubr.f32.gmra.mrb[0].mxu0 %v11449
    %v11451 = vpop.f32.mrb[0].mxu0
    %v11452 = vadd.f32 %v10862, %v11451
    %v11453 = vpop.f32.mrb[0].mxu0
    %11454 = vmatprep.mubr.f32.mxu0 0.0
    %v11455 = vand.u32 %v8826, 4294901760
    %11456 = vmatmul.mubr.f32.gmra.mrb[0].mxu0 %v11455
    %v11457 = vpop.f32.mrb[0].mxu0
    %v11458 = vadd.f32 %v10870, %v11457
    %v11459 = vpop.f32.mrb[0].mxu0
    %11460 = vmatprep.mubr.f32.mxu0 0.0
    %v11461 = vand.u32 %v8829, 4294901760
    %11462 = vmatmul.mubr.f32.gmra.mrb[0].mxu0 %v11461
    %v11463 = vpop.f32.mrb[0].mxu0
    %v11464 = vadd.f32 %v10878, %v11463
    %v11465 = vpop.f32.mrb[0].mxu0
    %11466 = vmatprep.mubr.f32.mxu0 0.0
    %v11467 = vand.u32 %v8832, 4294901760
    %11468 = vmatmul.mubr.f32.gmra.mrb[0].mxu0 %v11467
    %v11469 = vpop.f32.mrb[0].mxu0
    %v11470 = vadd.f32 %v10886, %v11469
    %v11471 = vpop.f32.mrb[0].mxu0
    %11472 = vmatprep.mubr.f32.mxu0 0.0
    %v11473 = vand.u32 %v8835, 4294901760
    %11474 = vmatmul.mubr.f32.gmra.mrb[0].mxu0 %v11473
    %v11475 = vpop.f32.mrb[0].mxu0
    %v11476 = vadd.f32 %v10894, %v11475
    %v11477 = vpop.f32.mrb[0].mxu0
    %11478 = vmatprep.mubr.f32.mxu0 0.0
    %v11479 = vand.u32 %v8838, 4294901760
    %11480 = vmatmul.mubr.f32.gmra.mrb[0].mxu0 %v11479
    %v11481 = vpop.f32.mrb[0].mxu0
    %v11482 = vadd.f32 %v10902, %v11481
    %v11483 = vpop.f32.mrb[0].mxu0
    %11484 = vmatprep.mubr.f32.mxu0 0.0
    %v11485 = vand.u32 %v8841, 4294901760
    %11486 = vmatmul.mubr.f32.gmra.mrb[0].mxu0 %v11485
    %v11487 = vpop.f32.mrb[0].mxu0
    %v11488 = vadd.f32 %v10910, %v11487
    %v11489 = vpop.f32.mrb[0].mxu0
    %11490 = vmatprep.mubr.f32.mxu0 0.0
    %v11491 = vand.u32 %v8844, 4294901760
    %11492 = vmatmul.mubr.f32.gmra.mrb[0].mxu0 %v11491
    %v11493 = vpop.f32.mrb[0].mxu0
    %v11494 = vadd.f32 %v10918, %v11493
    %v11495 = vpop.f32.mrb[0].mxu0
    %11496 = vmatprep.mubr.f32.mxu0 0.0
    %v11497 = vand.u32 %v8847, 4294901760
    %11498 = vmatmul.mubr.f32.gmra.mrb[0].mxu0 %v11497
    %v11499 = vpop.f32.mrb[0].mxu0
    %v11500 = vadd.f32 %v10926, %v11499
    %v11501 = vpop.f32.mrb[0].mxu0
    %11502 = vmatprep.mubr.f32.mxu0 0.0
    %v11503 = vand.u32 %v8850, 4294901760
    %11504 = vmatmul.mubr.f32.gmra.mrb[0].mxu0 %v11503
    %v11505 = vpop.f32.mrb[0].mxu0
    %v11506 = vadd.f32 %v10934, %v11505
    %v11507 = vpop.f32.mrb[0].mxu0
    %11508 = vmatprep.mubr.f32.mxu0 0.0
    %v11509 = vand.u32 %v8853, 4294901760
    %11510 = vmatmul.mubr.f32.gmra.mrb[0].mxu0 %v11509
    %v11511 = vpop.f32.mrb[0].mxu0
    %v11512 = vadd.f32 %v10942, %v11511
    %v11513 = vpop.f32.mrb[0].mxu0
    %11514 = vmatprep.mubr.f32.mxu0 0.0
    %v11515 = vand.u32 %v8856, 4294901760
    %11516 = vmatmul.mubr.f32.gmra.mrb[0].mxu0 %v11515
    %v11517 = vpop.f32.mrb[0].mxu0
    %v11518 = vadd.f32 %v10950, %v11517
    %v11519 = vpop.f32.mrb[0].mxu0
    %11520 = vmatprep.mubr.f32.mxu0 0.0
    %v11521 = vand.u32 %v8859, 4294901760
    %11522 = vmatmul.mubr.f32.gmra.mrb[0].mxu0 %v11521
    %v11523 = vpop.f32.mrb[0].mxu0
    %v11524 = vadd.f32 %v10958, %v11523
    %v11525 = vpop.f32.mrb[0].mxu0
    %11526 = vmatprep.mubr.f32.mxu0 0.0
    %v11527 = vand.u32 %v8862, 4294901760
    %11528 = vmatmul.mubr.f32.gmra.mrb[0].mxu0 %v11527
    %v11529 = vpop.f32.mrb[0].mxu0
    %v11530 = vadd.f32 %v10966, %v11529
    %v11531 = vpop.f32.mrb[0].mxu0
    %11532 = vmatprep.mubr.f32.mxu0 0.0
    %v11533 = vand.u32 %v8865, 4294901760
    %11534 = vmatmul.mubr.f32.gmra.mrb[0].mxu0 %v11533
    %v11535 = vpop.f32.mrb[0].mxu0
    %v11536 = vadd.f32 %v10974, %v11535
    %v11537 = vpop.f32.mrb[0].mxu0
    %11538 = vmatprep.mubr.f32.mxu0 0.0
    %v11539 = vand.u32 %v8868, 4294901760
    %11540 = vmatmul.mubr.f32.gmra.mrb[0].mxu0 %v11539
    %v11541 = vpop.f32.mrb[0].mxu0
    %v11542 = vadd.f32 %v10982, %v11541
    %v11543 = vpop.f32.mrb[0].mxu0
    %11544 = vmatprep.mubr.f32.mxu0 0.0
    %v11545 = vand.u32 %v8871, 4294901760
    %11546 = vmatmul.mubr.f32.gmra.mrb[0].mxu0 %v11545
    %v11547 = vpop.f32.mrb[0].mxu0
    %v11548 = vadd.f32 %v10990, %v11547
    %v11549 = vpop.f32.mrb[0].mxu0
    %11550 = vmatprep.mubr.f32.mxu0 0.0
    %v11551 = vand.u32 %v8874, 4294901760
    %11552 = vmatmul.mubr.f32.gmra.mrb[0].mxu0 %v11551
    %v11553 = vpop.f32.mrb[0].mxu0
    %v11554 = vadd.f32 %v10998, %v11553
    %v11555 = vpop.f32.mrb[0].mxu0
    %11556 = vmatprep.mubr.f32.mxu0 0.0
    %v11557 = vand.u32 %v8877, 4294901760
    %11558 = vmatmul.mubr.f32.gmra.mrb[0].mxu0 %v11557
    %v11559 = vpop.f32.mrb[0].mxu0
    %v11560 = vadd.f32 %v11006, %v11559
    %v11561 = vpop.f32.mrb[0].mxu0
    %11562 = vmatprep.mubr.f32.mxu0 0.0
    %v11563 = vand.u32 %v8880, 4294901760
    %11564 = vmatmul.mubr.f32.gmra.mrb[0].mxu0 %v11563
    %v11565 = vpop.f32.mrb[0].mxu0
    %v11566 = vadd.f32 %v11014, %v11565
    %v11567 = vpop.f32.mrb[0].mxu0
    %11568 = vmatprep.mubr.f32.mxu0 0.0
    %v11569 = vand.u32 %v8883, 4294901760
    %11570 = vmatmul.mubr.f32.gmra.mrb[0].mxu0 %v11569
    %v11571 = vpop.f32.mrb[0].mxu0
    %v11572 = vadd.f32 %v11022, %v11571
    %v11573 = vpop.f32.mrb[0].mxu0
    %11574 = vmatprep.mubr.f32.mxu0 0.0
    %v11575 = vand.u32 %v8886, 4294901760
    %11576 = vmatmul.mubr.f32.gmra.mrb[0].mxu0 %v11575
    %v11577 = vpop.f32.mrb[0].mxu0
    %v11578 = vadd.f32 %v11030, %v11577
    %v11579 = vpop.f32.mrb[0].mxu0
    %11580 = vmatprep.mubr.f32.mxu0 0.0
    %v11581 = vand.u32 %v8889, 4294901760
    %11582 = vmatmul.mubr.f32.gmra.mrb[0].mxu0 %v11581
    %v11583 = vpop.f32.mrb[0].mxu0
    %v11584 = vadd.f32 %v11038, %v11583
    %v11585 = vpop.f32.mrb[0].mxu0
    %11586 = vmatprep.mubr.f32.mxu0 0.0
    %v11587 = vand.u32 %v8892, 4294901760
    %11588 = vmatmul.mubr.f32.gmra.mrb[0].mxu0 %v11587
    %v11589 = vpop.f32.mrb[0].mxu0
    %v11590 = vadd.f32 %v11046, %v11589
    %v11591 = vpop.f32.mrb[0].mxu0
    %11592 = vmatprep.mubr.f32.mxu0 0.0
    %v11593 = vand.u32 %v8895, 4294901760
    %11594 = vmatmul.mubr.f32.gmra.mrb[0].mxu0 %v11593
    %v11595 = vpop.f32.mrb[0].mxu0
    %v11596 = vadd.f32 %v11054, %v11595
    %v11597 = vpop.f32.mrb[0].mxu0
    %11598 = vmatprep.mubr.f32.mxu0 0.0
    %v11599 = vand.u32 %v8898, 4294901760
    %11600 = vmatmul.mubr.f32.gmra.mrb[0].mxu0 %v11599
    %v11601 = vpop.f32.mrb[0].mxu0
    %v11602 = vadd.f32 %v11062, %v11601
    %v11603 = vpop.f32.mrb[0].mxu0
    %11604 = vmatprep.mubr.f32.mxu0 0.0
    %v11605 = vand.u32 %v8901, 4294901760
    %11606 = vmatmul.mubr.f32.gmra.mrb[0].mxu0 %v11605
    %v11607 = vpop.f32.mrb[0].mxu0
    %v11608 = vadd.f32 %v11070, %v11607
    %v11609 = vpop.f32.mrb[0].mxu0
    %11610 = vmatprep.mubr.f32.mxu0 0.0
    %v11611 = vand.u32 %v8904, 4294901760
    %11612 = vmatmul.mubr.f32.gmra.mrb[0].mxu0 %v11611
    %v11613 = vpop.f32.mrb[0].mxu0
    %v11614 = vadd.f32 %v11078, %v11613
    %v11615 = vpop.f32.mrb[0].mxu0
    %11616 = vmatprep.mubr.f32.mxu0 0.0
    %v11617 = vand.u32 %v8907, 4294901760
    %11618 = vmatmul.mubr.f32.gmra.mrb[0].mxu0 %v11617
    %v11619 = vpop.f32.mrb[0].mxu0
    %v11620 = vadd.f32 %v11086, %v11619
    %v11621 = vpop.f32.mrb[0].mxu0
    %11622 = vmatprep.mubr.f32.mxu0 0.0
    %v11623 = vand.u32 %v8910, 4294901760
    %11624 = vmatmul.mubr.f32.gmra.mrb[0].mxu0 %v11623
    %v11625 = vpop.f32.mrb[0].mxu0
    %v11626 = vadd.f32 %v11094, %v11625
    %v11627 = vpop.f32.mrb[0].mxu0
    %11628 = vmatprep.mubr.f32.mxu0 0.0
    %v11629 = vand.u32 %v8913, 4294901760
    %11630 = vmatmul.mubr.f32.gmra.mrb[0].mxu0 %v11629
    %v11631 = vpop.f32.mrb[0].mxu0
    %v11632 = vadd.f32 %v11102, %v11631
    %v11633 = vpop.f32.mrb[0].mxu0
    %11634 = vmatprep.mubr.f32.mxu0 0.0
    %v11635 = vand.u32 %v8916, 4294901760
    %11636 = vmatmul.mubr.f32.gmra.mrb[0].mxu0 %v11635
    %v11637 = vpop.f32.mrb[0].mxu0
    %v11638 = vadd.f32 %v11110, %v11637
    %v11639 = vpop.f32.mrb[0].mxu0
    %11640 = vmatprep.mubr.f32.mxu0 0.0
    %v11641 = vand.u32 %v8919, 4294901760
    %11642 = vmatmul.mubr.f32.gmra.mrb[0].mxu0 %v11641
    %v11643 = vpop.f32.mrb[0].mxu0
    %v11644 = vadd.f32 %v11118, %v11643
    %v11645 = vpop.f32.mrb[0].mxu0
    %11646 = vmatprep.mubr.f32.mxu0 0.0
    %v11647 = vand.u32 %v8922, 4294901760
    %11648 = vmatmul.mubr.f32.gmra.mrb[0].mxu0 %v11647
    %v11649 = vpop.f32.mrb[0].mxu0
    %v11650 = vadd.f32 %v11126, %v11649
    %v11651 = vpop.f32.mrb[0].mxu0
    %11652 = vmatprep.mubr.f32.mxu0 0.0
    %v11653 = vand.u32 %v8925, 4294901760
    %11654 = vmatmul.mubr.f32.gmra.mrb[0].mxu0 %v11653
    %v11655 = vpop.f32.mrb[0].mxu0
    %v11656 = vadd.f32 %v11134, %v11655
    %v11657 = vpop.f32.mrb[0].mxu0
    %11658 = vmatprep.mubr.f32.mxu0 0.0
    %v11659 = vand.u32 %v8928, 4294901760
    %11660 = vmatmul.mubr.f32.gmra.mrb[0].mxu0 %v11659
    %v11661 = vpop.f32.mrb[0].mxu0
    %v11662 = vadd.f32 %v11142, %v11661
    %v11663 = vpop.f32.mrb[0].mxu0
    %11664 = vmatprep.mubr.f32.mxu0 0.0
    %v11665 = vand.u32 %v8931, 4294901760
    %11666 = vmatmul.mubr.f32.gmra.mrb[0].mxu0 %v11665
    %v11667 = vpop.f32.mrb[0].mxu0
    %v11668 = vadd.f32 %v11150, %v11667
    %v11669 = vpop.f32.mrb[0].mxu0
    %11670 = vmatprep.mubr.f32.mxu0 0.0
    %v11671 = vand.u32 %v8934, 4294901760
    %11672 = vmatmul.mubr.f32.gmra.mrb[0].mxu0 %v11671
    %v11673 = vpop.f32.mrb[0].mxu0
    %v11674 = vadd.f32 %v11158, %v11673
    %v11675 = vpop.f32.mrb[0].mxu0
    %11676 = vmatprep.mubr.f32.mxu0 0.0
    %v11677 = vand.u32 %v8937, 4294901760
    %11678 = vmatmul.mubr.f32.gmra.mrb[0].mxu0 %v11677
    %v11679 = vpop.f32.mrb[0].mxu0
    %v11680 = vadd.f32 %v11166, %v11679
    %v11681 = vpop.f32.mrb[0].mxu0
    %11682 = vmatprep.mubr.f32.mxu0 0.0
    %v11683 = vand.u32 %v8940, 4294901760
    %11684 = vmatmul.mubr.f32.gmra.mrb[0].mxu0 %v11683
    %v11685 = vpop.f32.mrb[0].mxu0
    %v11686 = vadd.f32 %v11174, %v11685
    %v11687 = vpop.f32.mrb[0].mxu0
    %11688 = vmatprep.mubr.f32.mxu0 0.0
    %v11689 = vand.u32 %v8943, 4294901760
    %11690 = vmatmul.mubr.f32.gmra.mrb[0].mxu0 %v11689
    %v11691 = vpop.f32.mrb[0].mxu0
    %v11692 = vadd.f32 %v11182, %v11691
    %v11693 = vpop.f32.mrb[0].mxu0
    %11694 = vmatprep.mubr.f32.mxu0 0.0
    %v11695 = vand.u32 %v8946, 4294901760
    %11696 = vmatmul.mubr.f32.gmra.mrb[0].mxu0 %v11695
    %v11697 = vpop.f32.mrb[0].mxu0
    %v11698 = vadd.f32 %v11190, %v11697
    %v11699 = vpop.f32.mrb[0].mxu0
    %11700 = vmatprep.mubr.f32.mxu0 0.0
    %v11701 = vand.u32 %v8949, 4294901760
    %11702 = vmatmul.mubr.f32.gmra.mrb[0].mxu0 %v11701
    %v11703 = vpop.f32.mrb[0].mxu0
    %v11704 = vadd.f32 %v11198, %v11703
    %v11705 = vpop.f32.mrb[0].mxu0
    %11706 = vmatprep.mubr.f32.mxu0 0.0
    %v11707 = vand.u32 %v8952, 4294901760
    %11708 = vmatmul.mubr.f32.gmra.mrb[0].mxu0 %v11707
    %v11709 = vpop.f32.mrb[0].mxu0
    %v11710 = vadd.f32 %v11206, %v11709
    %v11711 = vpop.f32.mrb[0].mxu0
    %11712 = vmatprep.mubr.f32.mxu0 0.0
    %v11713 = vand.u32 %v8955, 4294901760
    %11714 = vmatmul.mubr.f32.gmra.mrb[0].mxu0 %v11713
    %v11715 = vpop.f32.mrb[0].mxu0
    %v11716 = vadd.f32 %v11214, %v11715
    %v11717 = vpop.f32.mrb[0].mxu0
    %11718 = vmatprep.mubr.f32.mxu0 0.0
    %v11719 = vand.u32 %v8958, 4294901760
    %11720 = vmatmul.mubr.f32.gmra.mrb[0].mxu0 %v11719
    %v11721 = vpop.f32.mrb[0].mxu0
    %v11722 = vadd.f32 %v11222, %v11721
    %v11723 = vpop.f32.mrb[0].mxu0
    %11724 = vmatprep.mubr.f32.mxu0 0.0
    %v11725 = vand.u32 %v8961, 4294901760
    %11726 = vmatmul.mubr.f32.gmra.mrb[0].mxu0 %v11725
    %v11727 = vpop.f32.mrb[0].mxu0
    %v11728 = vadd.f32 %v11230, %v11727
    %v11729 = vpop.f32.mrb[0].mxu0
    %11730 = vmatprep.mubr.f32.mxu0 0.0
    %v11731 = vand.u32 %v8964, 4294901760
    %11732 = vmatmul.mubr.f32.gmra.mrb[0].mxu0 %v11731
    %v11733 = vpop.f32.mrb[0].mxu0
    %v11734 = vadd.f32 %v11238, %v11733
    %v11735 = vpop.f32.mrb[0].mxu0
    %11736 = vmatprep.mubr.f32.mxu0 0.0
    %v11737 = vand.u32 %v8967, 4294901760
    %11738 = vmatmul.mubr.f32.gmra.mrb[0].mxu0 %v11737
    %v11739 = vpop.f32.mrb[0].mxu0
    %v11740 = vadd.f32 %v11246, %v11739
    %v11741 = vpop.f32.mrb[0].mxu0
    %11742 = vmatprep.mubr.f32.mxu0 0.0
    %v11743 = vand.u32 %v8970, 4294901760
    %11744 = vmatmul.mubr.f32.gmra.mrb[0].mxu0 %v11743
    %v11745 = vpop.f32.mrb[0].mxu0
    %v11746 = vadd.f32 %v11254, %v11745
    %v11747 = vpop.f32.mrb[0].mxu0
    %11748 = vmatprep.mubr.f32.mxu0 0.0
    %v11749 = vand.u32 %v8973, 4294901760
    %11750 = vmatmul.mubr.f32.gmra.mrb[0].mxu0 %v11749
    %v11751 = vpop.f32.mrb[0].mxu0
    %v11752 = vadd.f32 %v11262, %v11751
    %v11753 = vpop.f32.mrb[0].mxu0
    %11754 = vmatprep.mubr.f32.mxu0 0.0
    %v11755 = vand.u32 %v8976, 4294901760
    %11756 = vmatmul.mubr.f32.gmra.mrb[0].mxu0 %v11755
    %v11757 = vpop.f32.mrb[0].mxu0
    %v11758 = vadd.f32 %v11270, %v11757
    %v11759 = vpop.f32.mrb[0].mxu0
    %11760 = vmatprep.mubr.f32.mxu0 0.0
    %v11761 = vand.u32 %v8979, 4294901760
    %11762 = vmatmul.mubr.f32.gmra.mrb[0].mxu0 %v11761
    %v11763 = vpop.f32.mrb[0].mxu0
    %v11764 = vadd.f32 %v11278, %v11763
    %v11765 = vpop.f32.mrb[0].mxu0
    %11766 = vmatprep.mubr.f32.mxu0 0.0
    %v11767 = vand.u32 %v8982, 4294901760
    %11768 = vmatmul.mubr.f32.gmra.mrb[0].mxu0 %v11767
    %v11769 = vpop.f32.mrb[0].mxu0
    %v11770 = vadd.f32 %v11286, %v11769
    %v11771 = vpop.f32.mrb[0].mxu0
    %11772 = vmatprep.mubr.f32.mxu0 0.0
    %v11773 = vand.u32 %v8985, 4294901760
    %11774 = vmatmul.mubr.f32.gmra.mrb[0].mxu0 %v11773
    %v11775 = vpop.f32.mrb[0].mxu0
    %v11776 = vadd.f32 %v11294, %v11775
    %v11777 = vpop.f32.mrb[0].mxu0
    %11778 = vmatprep.mubr.f32.mxu0 0.0
    %v11779 = vand.u32 %v8988, 4294901760
    %11780 = vmatmul.mubr.f32.gmra.mrb[0].mxu0 %v11779
    %v11781 = vpop.f32.mrb[0].mxu0
    %v11782 = vadd.f32 %v11302, %v11781
    %v11783 = vpop.f32.mrb[0].mxu0
    %11784 = vmatprep.mubr.f32.mxu0 0.0
    %v11785 = vand.u32 %v8991, 4294901760
    %11786 = vmatmul.mubr.f32.gmra.mrb[0].mxu0 %v11785
    %v11787 = vpop.f32.mrb[0].mxu0
    %v11788 = vadd.f32 %v11310, %v11787
    %v11789 = vpop.f32.mrb[0].mxu0
    %11790 = vmatprep.mubr.f32.mxu0 0.0
    %v11791 = vand.u32 %v8994, 4294901760
    %11792 = vmatmul.mubr.f32.gmra.mrb[0].mxu0 %v11791
    %v11793 = vpop.f32.mrb[0].mxu0
    %v11794 = vadd.f32 %v11318, %v11793
    %v11795 = vpop.f32.mrb[0].mxu0
    %11796 = vdwg.mxu0
    %11797 = vmatprep.subr.mxu0 0.0
    %v11798 = vand.u32 %v8788, 4294901760
    %11799 = vmatpush1.msra.mxu0 %v11798
    %11800 = vmatprep.subr.mxu0 0.0
    %v11801 = vand.u32 %v8789, 4294901760
    %11802 = vmatpush1.msra.mxu0 %v11801
    %11803 = vmatprep.subr.mxu0 0.0
    %v11804 = vand.u32 %v8790, 4294901760
    %11805 = vmatpush1.msra.mxu0 %v11804
    %11806 = vmatprep.subr.mxu0 0.0
    %v11807 = vand.u32 %v8791, 4294901760
    %11808 = vmatpush1.msra.mxu0 %v11807
    %11809 = vmatprep.subr.mxu0 0.0
    %v11810 = vand.u32 %v8792, 4294901760
    %11811 = vmatpush1.msra.mxu0 %v11810
    %11812 = vmatprep.subr.mxu0 0.0
    %v11813 = vand.u32 %v8793, 4294901760
    %11814 = vmatpush1.msra.mxu0 %v11813
    %11815 = vmatprep.subr.mxu0 0.0
    %v11816 = vand.u32 %v8794, 4294901760
    %11817 = vmatpush1.msra.mxu0 %v11816
    %11818 = vmatprep.subr.mxu0 0.0
    %v11819 = vand.u32 %v8795, 4294901760
    %11820 = vmatpush1.msra.mxu0 %v11819
    %11821 = vmatprep.subr.mxu0 0.0
    %v11822 = vand.u32 %v8796, 4294901760
    %11823 = vmatpush1.msra.mxu0 %v11822
    %11824 = vmatprep.subr.mxu0 0.0
    %11825 = vmatpush1.msra.mxu0 0.0
    %11826 = vmatprep.subr.mxu0 0.0
    %11827 = vmatpush1.msra.mxu0 0.0
    %11828 = vmatprep.subr.mxu0 0.0
    %11829 = vmatpush1.msra.mxu0 0.0
    %11830 = vmatprep.subr.mxu0 0.0
    %11831 = vmatpush1.msra.mxu0 0.0
    %11832 = vmatprep.subr.mxu0 0.0
    %11833 = vmatpush1.msra.mxu0 0.0
    %11834 = vmatprep.subr.mxu0 0.0
    %11835 = vmatpush1.msra.mxu0 0.0
    %11836 = vmatprep.subr.mxu0 0.0
    %11837 = vmatpush1.msra.mxu0 0.0
    %11838 = vmatprep.subr.mxu0 0.0
    %11839 = vmatpush1.msra.mxu0 0.0
    %11840 = vmatprep.subr.mxu0 0.0
    %11841 = vmatpush1.msra.mxu0 0.0
    %11842 = vmatprep.subr.mxu0 0.0
    %11843 = vmatpush1.msra.mxu0 0.0
    %11844 = vmatprep.subr.mxu0 0.0
    %11845 = vmatpush1.msra.mxu0 0.0
    %11846 = vmatprep.subr.mxu0 0.0
    %11847 = vmatpush1.msra.mxu0 0.0
    %11848 = vmatprep.subr.mxu0 0.0
    %11849 = vmatpush1.msra.mxu0 0.0
    %11850 = vmatprep.subr.mxu0 0.0
    %11851 = vmatpush1.msra.mxu0 0.0
    %11852 = vmatprep.subr.mxu0 0.0
    %11853 = vmatpush1.msra.mxu0 0.0
    %11854 = vmatprep.subr.mxu0 0.0
    %11855 = vmatpush1.msra.mxu0 0.0
    %11856 = vmatprep.subr.mxu0 0.0
    %11857 = vmatpush1.msra.mxu0 0.0
    %11858 = vmatprep.subr.mxu0 0.0
    %11859 = vmatpush1.msra.mxu0 0.0
    %11860 = vmatprep.subr.mxu0 0.0
    %11861 = vmatpush1.msra.mxu0 0.0
    %11862 = vmatprep.subr.mxu0 0.0
    %11863 = vmatpush1.msra.mxu0 0.0
    %11864 = vmatprep.subr.mxu0 0.0
    %11865 = vmatpush1.msra.mxu0 0.0
    %11866 = vmatprep.subr.mxu0 0.0
    %11867 = vmatpush1.msra.mxu0 0.0
    %11868 = vmatprep.subr.mxu0 0.0
    %11869 = vmatpush1.msra.mxu0 0.0
    %11870 = vmatprep.mubr.f32.mxu0 0.0
    %v11871 = vand.u32 %v8805, 4294901760
    %11872 = vmatmul.mubr.f32.gmra.mrb[0].mxu0 %v11871
    %v11873 = vpop.f32.mrb[0].mxu0
    %v11874 = vadd.f32 %v11416, %v11873
    %v11875 = vpop.f32.mrb[0].mxu0
    %11876 = vmatprep.mubr.f32.mxu0 0.0
    %v11877 = vand.u32 %v8808, 4294901760
    %11878 = vmatmul.mubr.f32.gmra.mrb[0].mxu0 %v11877
    %v11879 = vpop.f32.mrb[0].mxu0
    %v11880 = vadd.f32 %v11422, %v11879
    %v11881 = vpop.f32.mrb[0].mxu0
    %11882 = vmatprep.mubr.f32.mxu0 0.0
    %v11883 = vand.u32 %v8811, 4294901760
    %11884 = vmatmul.mubr.f32.gmra.mrb[0].mxu0 %v11883
    %v11885 = vpop.f32.mrb[0].mxu0
    %v11886 = vadd.f32 %v11428, %v11885
    %v11887 = vpop.f32.mrb[0].mxu0
    %11888 = vmatprep.mubr.f32.mxu0 0.0
    %v11889 = vand.u32 %v8814, 4294901760
    %11890 = vmatmul.mubr.f32.gmra.mrb[0].mxu0 %v11889
    %v11891 = vpop.f32.mrb[0].mxu0
    %v11892 = vadd.f32 %v11434, %v11891
    %v11893 = vpop.f32.mrb[0].mxu0
    %11894 = vmatprep.mubr.f32.mxu0 0.0
    %v11895 = vand.u32 %v8817, 4294901760
    %11896 = vmatmul.mubr.f32.gmra.mrb[0].mxu0 %v11895
    %v11897 = vpop.f32.mrb[0].mxu0
    %v11898 = vadd.f32 %v11440, %v11897
    %v11899 = vpop.f32.mrb[0].mxu0
    %11900 = vmatprep.mubr.f32.mxu0 0.0
    %v11901 = vand.u32 %v8820, 4294901760
    %11902 = vmatmul.mubr.f32.gmra.mrb[0].mxu0 %v11901
    %v11903 = vpop.f32.mrb[0].mxu0
    %v11904 = vadd.f32 %v11446, %v11903
    %v11905 = vpop.f32.mrb[0].mxu0
    %11906 = vmatprep.mubr.f32.mxu0 0.0
    %v11907 = vand.u32 %v8823, 4294901760
    %11908 = vmatmul.mubr.f32.gmra.mrb[0].mxu0 %v11907
    %v11909 = vpop.f32.mrb[0].mxu0
    %v11910 = vadd.f32 %v11452, %v11909
    %v11911 = vpop.f32.mrb[0].mxu0
    %11912 = vmatprep.mubr.f32.mxu0 0.0
    %v11913 = vand.u32 %v8826, 4294901760
    %11914 = vmatmul.mubr.f32.gmra.mrb[0].mxu0 %v11913
    %v11915 = vpop.f32.mrb[0].mxu0
    %v11916 = vadd.f32 %v11458, %v11915
    %v11917 = vpop.f32.mrb[0].mxu0
    %11918 = vmatprep.mubr.f32.mxu0 0.0
    %v11919 = vand.u32 %v8829, 4294901760
    %11920 = vmatmul.mubr.f32.gmra.mrb[0].mxu0 %v11919
    %v11921 = vpop.f32.mrb[0].mxu0
    %v11922 = vadd.f32 %v11464, %v11921
    %v11923 = vpop.f32.mrb[0].mxu0
    %11924 = vmatprep.mubr.f32.mxu0 0.0
    %v11925 = vand.u32 %v8832, 4294901760
    %11926 = vmatmul.mubr.f32.gmra.mrb[0].mxu0 %v11925
    %v11927 = vpop.f32.mrb[0].mxu0
    %v11928 = vadd.f32 %v11470, %v11927
    %v11929 = vpop.f32.mrb[0].mxu0
    %11930 = vmatprep.mubr.f32.mxu0 0.0
    %v11931 = vand.u32 %v8835, 4294901760
    %11932 = vmatmul.mubr.f32.gmra.mrb[0].mxu0 %v11931
    %v11933 = vpop.f32.mrb[0].mxu0
    %v11934 = vadd.f32 %v11476, %v11933
    %v11935 = vpop.f32.mrb[0].mxu0
    %11936 = vmatprep.mubr.f32.mxu0 0.0
    %v11937 = vand.u32 %v8838, 4294901760
    %11938 = vmatmul.mubr.f32.gmra.mrb[0].mxu0 %v11937
    %v11939 = vpop.f32.mrb[0].mxu0
    %v11940 = vadd.f32 %v11482, %v11939
    %v11941 = vpop.f32.mrb[0].mxu0
    %11942 = vmatprep.mubr.f32.mxu0 0.0
    %v11943 = vand.u32 %v8841, 4294901760
    %11944 = vmatmul.mubr.f32.gmra.mrb[0].mxu0 %v11943
    %v11945 = vpop.f32.mrb[0].mxu0
    %v11946 = vadd.f32 %v11488, %v11945
    %v11947 = vpop.f32.mrb[0].mxu0
    %11948 = vmatprep.mubr.f32.mxu0 0.0
    %v11949 = vand.u32 %v8844, 4294901760
    %11950 = vmatmul.mubr.f32.gmra.mrb[0].mxu0 %v11949
    %v11951 = vpop.f32.mrb[0].mxu0
    %v11952 = vadd.f32 %v11494, %v11951
    %v11953 = vpop.f32.mrb[0].mxu0
    %11954 = vmatprep.mubr.f32.mxu0 0.0
    %v11955 = vand.u32 %v8847, 4294901760
    %11956 = vmatmul.mubr.f32.gmra.mrb[0].mxu0 %v11955
    %v11957 = vpop.f32.mrb[0].mxu0
    %v11958 = vadd.f32 %v11500, %v11957
    %v11959 = vpop.f32.mrb[0].mxu0
    %11960 = vmatprep.mubr.f32.mxu0 0.0
    %v11961 = vand.u32 %v8850, 4294901760
    %11962 = vmatmul.mubr.f32.gmra.mrb[0].mxu0 %v11961
    %v11963 = vpop.f32.mrb[0].mxu0
    %v11964 = vadd.f32 %v11506, %v11963
    %v11965 = vpop.f32.mrb[0].mxu0
    %11966 = vmatprep.mubr.f32.mxu0 0.0
    %v11967 = vand.u32 %v8853, 4294901760
    %11968 = vmatmul.mubr.f32.gmra.mrb[0].mxu0 %v11967
    %v11969 = vpop.f32.mrb[0].mxu0
    %v11970 = vadd.f32 %v11512, %v11969
    %v11971 = vpop.f32.mrb[0].mxu0
    %11972 = vmatprep.mubr.f32.mxu0 0.0
    %v11973 = vand.u32 %v8856, 4294901760
    %11974 = vmatmul.mubr.f32.gmra.mrb[0].mxu0 %v11973
    %v11975 = vpop.f32.mrb[0].mxu0
    %v11976 = vadd.f32 %v11518, %v11975
    %v11977 = vpop.f32.mrb[0].mxu0
    %11978 = vmatprep.mubr.f32.mxu0 0.0
    %v11979 = vand.u32 %v8859, 4294901760
    %11980 = vmatmul.mubr.f32.gmra.mrb[0].mxu0 %v11979
    %v11981 = vpop.f32.mrb[0].mxu0
    %v11982 = vadd.f32 %v11524, %v11981
    %v11983 = vpop.f32.mrb[0].mxu0
    %11984 = vmatprep.mubr.f32.mxu0 0.0
    %v11985 = vand.u32 %v8862, 4294901760
    %11986 = vmatmul.mubr.f32.gmra.mrb[0].mxu0 %v11985
    %v11987 = vpop.f32.mrb[0].mxu0
    %v11988 = vadd.f32 %v11530, %v11987
    %v11989 = vpop.f32.mrb[0].mxu0
    %11990 = vmatprep.mubr.f32.mxu0 0.0
    %v11991 = vand.u32 %v8865, 4294901760
    %11992 = vmatmul.mubr.f32.gmra.mrb[0].mxu0 %v11991
    %v11993 = vpop.f32.mrb[0].mxu0
    %v11994 = vadd.f32 %v11536, %v11993
    %v11995 = vpop.f32.mrb[0].mxu0
    %11996 = vmatprep.mubr.f32.mxu0 0.0
    %v11997 = vand.u32 %v8868, 4294901760
    %11998 = vmatmul.mubr.f32.gmra.mrb[0].mxu0 %v11997
    %v11999 = vpop.f32.mrb[0].mxu0
    %v12000 = vadd.f32 %v11542, %v11999
    %v12001 = vpop.f32.mrb[0].mxu0
    %12002 = vmatprep.mubr.f32.mxu0 0.0
    %v12003 = vand.u32 %v8871, 4294901760
    %12004 = vmatmul.mubr.f32.gmra.mrb[0].mxu0 %v12003
    %v12005 = vpop.f32.mrb[0].mxu0
    %v12006 = vadd.f32 %v11548, %v12005
    %v12007 = vpop.f32.mrb[0].mxu0
    %12008 = vmatprep.mubr.f32.mxu0 0.0
    %v12009 = vand.u32 %v8874, 4294901760
    %12010 = vmatmul.mubr.f32.gmra.mrb[0].mxu0 %v12009
    %v12011 = vpop.f32.mrb[0].mxu0
    %v12012 = vadd.f32 %v11554, %v12011
    %v12013 = vpop.f32.mrb[0].mxu0
    %12014 = vmatprep.mubr.f32.mxu0 0.0
    %v12015 = vand.u32 %v8877, 4294901760
    %12016 = vmatmul.mubr.f32.gmra.mrb[0].mxu0 %v12015
    %v12017 = vpop.f32.mrb[0].mxu0
    %v12018 = vadd.f32 %v11560, %v12017
    %v12019 = vpop.f32.mrb[0].mxu0
    %12020 = vmatprep.mubr.f32.mxu0 0.0
    %v12021 = vand.u32 %v8880, 4294901760
    %12022 = vmatmul.mubr.f32.gmra.mrb[0].mxu0 %v12021
    %v12023 = vpop.f32.mrb[0].mxu0
    %v12024 = vadd.f32 %v11566, %v12023
    %v12025 = vpop.f32.mrb[0].mxu0
    %12026 = vmatprep.mubr.f32.mxu0 0.0
    %v12027 = vand.u32 %v8883, 4294901760
    %12028 = vmatmul.mubr.f32.gmra.mrb[0].mxu0 %v12027
    %v12029 = vpop.f32.mrb[0].mxu0
    %v12030 = vadd.f32 %v11572, %v12029
    %v12031 = vpop.f32.mrb[0].mxu0
    %12032 = vmatprep.mubr.f32.mxu0 0.0
    %v12033 = vand.u32 %v8886, 4294901760
    %12034 = vmatmul.mubr.f32.gmra.mrb[0].mxu0 %v12033
    %v12035 = vpop.f32.mrb[0].mxu0
    %v12036 = vadd.f32 %v11578, %v12035
    %v12037 = vpop.f32.mrb[0].mxu0
    %12038 = vmatprep.mubr.f32.mxu0 0.0
    %v12039 = vand.u32 %v8889, 4294901760
    %12040 = vmatmul.mubr.f32.gmra.mrb[0].mxu0 %v12039
    %v12041 = vpop.f32.mrb[0].mxu0
    %v12042 = vadd.f32 %v11584, %v12041
    %v12043 = vpop.f32.mrb[0].mxu0
    %12044 = vmatprep.mubr.f32.mxu0 0.0
    %v12045 = vand.u32 %v8892, 4294901760
    %12046 = vmatmul.mubr.f32.gmra.mrb[0].mxu0 %v12045
    %v12047 = vpop.f32.mrb[0].mxu0
    %v12048 = vadd.f32 %v11590, %v12047
    %v12049 = vpop.f32.mrb[0].mxu0
    %12050 = vmatprep.mubr.f32.mxu0 0.0
    %v12051 = vand.u32 %v8895, 4294901760
    %12052 = vmatmul.mubr.f32.gmra.mrb[0].mxu0 %v12051
    %v12053 = vpop.f32.mrb[0].mxu0
    %v12054 = vadd.f32 %v11596, %v12053
    %v12055 = vpop.f32.mrb[0].mxu0
    %12056 = vmatprep.mubr.f32.mxu0 0.0
    %v12057 = vand.u32 %v8898, 4294901760
    %12058 = vmatmul.mubr.f32.gmra.mrb[0].mxu0 %v12057
    %v12059 = vpop.f32.mrb[0].mxu0
    %v12060 = vadd.f32 %v11602, %v12059
    %v12061 = vpop.f32.mrb[0].mxu0
    %12062 = vmatprep.mubr.f32.mxu0 0.0
    %v12063 = vand.u32 %v8901, 4294901760
    %12064 = vmatmul.mubr.f32.gmra.mrb[0].mxu0 %v12063
    %v12065 = vpop.f32.mrb[0].mxu0
    %v12066 = vadd.f32 %v11608, %v12065
    %v12067 = vpop.f32.mrb[0].mxu0
    %12068 = vmatprep.mubr.f32.mxu0 0.0
    %v12069 = vand.u32 %v8904, 4294901760
    %12070 = vmatmul.mubr.f32.gmra.mrb[0].mxu0 %v12069
    %v12071 = vpop.f32.mrb[0].mxu0
    %v12072 = vadd.f32 %v11614, %v12071
    %v12073 = vpop.f32.mrb[0].mxu0
    %12074 = vmatprep.mubr.f32.mxu0 0.0
    %v12075 = vand.u32 %v8907, 4294901760
    %12076 = vmatmul.mubr.f32.gmra.mrb[0].mxu0 %v12075
    %v12077 = vpop.f32.mrb[0].mxu0
    %v12078 = vadd.f32 %v11620, %v12077
    %v12079 = vpop.f32.mrb[0].mxu0
    %12080 = vmatprep.mubr.f32.mxu0 0.0
    %v12081 = vand.u32 %v8910, 4294901760
    %12082 = vmatmul.mubr.f32.gmra.mrb[0].mxu0 %v12081
    %v12083 = vpop.f32.mrb[0].mxu0
    %v12084 = vadd.f32 %v11626, %v12083
    %v12085 = vpop.f32.mrb[0].mxu0
    %12086 = vmatprep.mubr.f32.mxu0 0.0
    %v12087 = vand.u32 %v8913, 4294901760
    %12088 = vmatmul.mubr.f32.gmra.mrb[0].mxu0 %v12087
    %v12089 = vpop.f32.mrb[0].mxu0
    %v12090 = vadd.f32 %v11632, %v12089
    %v12091 = vpop.f32.mrb[0].mxu0
    %12092 = vmatprep.mubr.f32.mxu0 0.0
    %v12093 = vand.u32 %v8916, 4294901760
    %12094 = vmatmul.mubr.f32.gmra.mrb[0].mxu0 %v12093
    %v12095 = vpop.f32.mrb[0].mxu0
    %v12096 = vadd.f32 %v11638, %v12095
    %v12097 = vpop.f32.mrb[0].mxu0
    %12098 = vmatprep.mubr.f32.mxu0 0.0
    %v12099 = vand.u32 %v8919, 4294901760
    %12100 = vmatmul.mubr.f32.gmra.mrb[0].mxu0 %v12099
    %v12101 = vpop.f32.mrb[0].mxu0
    %v12102 = vadd.f32 %v11644, %v12101
    %v12103 = vpop.f32.mrb[0].mxu0
    %12104 = vmatprep.mubr.f32.mxu0 0.0
    %v12105 = vand.u32 %v8922, 4294901760
    %12106 = vmatmul.mubr.f32.gmra.mrb[0].mxu0 %v12105
    %v12107 = vpop.f32.mrb[0].mxu0
    %v12108 = vadd.f32 %v11650, %v12107
    %v12109 = vpop.f32.mrb[0].mxu0
    %12110 = vmatprep.mubr.f32.mxu0 0.0
    %v12111 = vand.u32 %v8925, 4294901760
    %12112 = vmatmul.mubr.f32.gmra.mrb[0].mxu0 %v12111
    %v12113 = vpop.f32.mrb[0].mxu0
    %v12114 = vadd.f32 %v11656, %v12113
    %v12115 = vpop.f32.mrb[0].mxu0
    %12116 = vmatprep.mubr.f32.mxu0 0.0
    %v12117 = vand.u32 %v8928, 4294901760
    %12118 = vmatmul.mubr.f32.gmra.mrb[0].mxu0 %v12117
    %v12119 = vpop.f32.mrb[0].mxu0
    %v12120 = vadd.f32 %v11662, %v12119
    %v12121 = vpop.f32.mrb[0].mxu0
    %12122 = vmatprep.mubr.f32.mxu0 0.0
    %v12123 = vand.u32 %v8931, 4294901760
    %12124 = vmatmul.mubr.f32.gmra.mrb[0].mxu0 %v12123
    %v12125 = vpop.f32.mrb[0].mxu0
    %v12126 = vadd.f32 %v11668, %v12125
    %v12127 = vpop.f32.mrb[0].mxu0
    %12128 = vmatprep.mubr.f32.mxu0 0.0
    %v12129 = vand.u32 %v8934, 4294901760
    %12130 = vmatmul.mubr.f32.gmra.mrb[0].mxu0 %v12129
    %v12131 = vpop.f32.mrb[0].mxu0
    %v12132 = vadd.f32 %v11674, %v12131
    %v12133 = vpop.f32.mrb[0].mxu0
    %12134 = vmatprep.mubr.f32.mxu0 0.0
    %v12135 = vand.u32 %v8937, 4294901760
    %12136 = vmatmul.mubr.f32.gmra.mrb[0].mxu0 %v12135
    %v12137 = vpop.f32.mrb[0].mxu0
    %v12138 = vadd.f32 %v11680, %v12137
    %v12139 = vpop.f32.mrb[0].mxu0
    %12140 = vmatprep.mubr.f32.mxu0 0.0
    %v12141 = vand.u32 %v8940, 4294901760
    %12142 = vmatmul.mubr.f32.gmra.mrb[0].mxu0 %v12141
    %v12143 = vpop.f32.mrb[0].mxu0
    %v12144 = vadd.f32 %v11686, %v12143
    %v12145 = vpop.f32.mrb[0].mxu0
    %12146 = vmatprep.mubr.f32.mxu0 0.0
    %v12147 = vand.u32 %v8943, 4294901760
    %12148 = vmatmul.mubr.f32.gmra.mrb[0].mxu0 %v12147
    %v12149 = vpop.f32.mrb[0].mxu0
    %v12150 = vadd.f32 %v11692, %v12149
    %v12151 = vpop.f32.mrb[0].mxu0
    %12152 = vmatprep.mubr.f32.mxu0 0.0
    %v12153 = vand.u32 %v8946, 4294901760
    %12154 = vmatmul.mubr.f32.gmra.mrb[0].mxu0 %v12153
    %v12155 = vpop.f32.mrb[0].mxu0
    %v12156 = vadd.f32 %v11698, %v12155
    %v12157 = vpop.f32.mrb[0].mxu0
    %12158 = vmatprep.mubr.f32.mxu0 0.0
    %v12159 = vand.u32 %v8949, 4294901760
    %12160 = vmatmul.mubr.f32.gmra.mrb[0].mxu0 %v12159
    %v12161 = vpop.f32.mrb[0].mxu0
    %v12162 = vadd.f32 %v11704, %v12161
    %v12163 = vpop.f32.mrb[0].mxu0
    %12164 = vmatprep.mubr.f32.mxu0 0.0
    %v12165 = vand.u32 %v8952, 4294901760
    %12166 = vmatmul.mubr.f32.gmra.mrb[0].mxu0 %v12165
    %v12167 = vpop.f32.mrb[0].mxu0
    %v12168 = vadd.f32 %v11710, %v12167
    %v12169 = vpop.f32.mrb[0].mxu0
    %12170 = vmatprep.mubr.f32.mxu0 0.0
    %v12171 = vand.u32 %v8955, 4294901760
    %12172 = vmatmul.mubr.f32.gmra.mrb[0].mxu0 %v12171
    %v12173 = vpop.f32.mrb[0].mxu0
    %v12174 = vadd.f32 %v11716, %v12173
    %v12175 = vpop.f32.mrb[0].mxu0
    %12176 = vmatprep.mubr.f32.mxu0 0.0
    %v12177 = vand.u32 %v8958, 4294901760
    %12178 = vmatmul.mubr.f32.gmra.mrb[0].mxu0 %v12177
    %v12179 = vpop.f32.mrb[0].mxu0
    %v12180 = vadd.f32 %v11722, %v12179
    %v12181 = vpop.f32.mrb[0].mxu0
    %12182 = vmatprep.mubr.f32.mxu0 0.0
    %v12183 = vand.u32 %v8961, 4294901760
    %12184 = vmatmul.mubr.f32.gmra.mrb[0].mxu0 %v12183
    %v12185 = vpop.f32.mrb[0].mxu0
    %v12186 = vadd.f32 %v11728, %v12185
    %v12187 = vpop.f32.mrb[0].mxu0
    %12188 = vmatprep.mubr.f32.mxu0 0.0
    %v12189 = vand.u32 %v8964, 4294901760
    %12190 = vmatmul.mubr.f32.gmra.mrb[0].mxu0 %v12189
    %v12191 = vpop.f32.mrb[0].mxu0
    %v12192 = vadd.f32 %v11734, %v12191
    %v12193 = vpop.f32.mrb[0].mxu0
    %12194 = vmatprep.mubr.f32.mxu0 0.0
    %v12195 = vand.u32 %v8967, 4294901760
    %12196 = vmatmul.mubr.f32.gmra.mrb[0].mxu0 %v12195
    %v12197 = vpop.f32.mrb[0].mxu0
    %v12198 = vadd.f32 %v11740, %v12197
    %v12199 = vpop.f32.mrb[0].mxu0
    %12200 = vmatprep.mubr.f32.mxu0 0.0
    %v12201 = vand.u32 %v8970, 4294901760
    %12202 = vmatmul.mubr.f32.gmra.mrb[0].mxu0 %v12201
    %v12203 = vpop.f32.mrb[0].mxu0
    %v12204 = vadd.f32 %v11746, %v12203
    %v12205 = vpop.f32.mrb[0].mxu0
    %12206 = vmatprep.mubr.f32.mxu0 0.0
    %v12207 = vand.u32 %v8973, 4294901760
    %12208 = vmatmul.mubr.f32.gmra.mrb[0].mxu0 %v12207
    %v12209 = vpop.f32.mrb[0].mxu0
    %v12210 = vadd.f32 %v11752, %v12209
    %v12211 = vpop.f32.mrb[0].mxu0
    %12212 = vmatprep.mubr.f32.mxu0 0.0
    %v12213 = vand.u32 %v8976, 4294901760
    %12214 = vmatmul.mubr.f32.gmra.mrb[0].mxu0 %v12213
    %v12215 = vpop.f32.mrb[0].mxu0
    %v12216 = vadd.f32 %v11758, %v12215
    %v12217 = vpop.f32.mrb[0].mxu0
    %12218 = vmatprep.mubr.f32.mxu0 0.0
    %v12219 = vand.u32 %v8979, 4294901760
    %12220 = vmatmul.mubr.f32.gmra.mrb[0].mxu0 %v12219
    %v12221 = vpop.f32.mrb[0].mxu0
    %v12222 = vadd.f32 %v11764, %v12221
    %v12223 = vpop.f32.mrb[0].mxu0
    %12224 = vmatprep.mubr.f32.mxu0 0.0
    %v12225 = vand.u32 %v8982, 4294901760
    %12226 = vmatmul.mubr.f32.gmra.mrb[0].mxu0 %v12225
    %v12227 = vpop.f32.mrb[0].mxu0
    %v12228 = vadd.f32 %v11770, %v12227
    %v12229 = vpop.f32.mrb[0].mxu0
    %12230 = vmatprep.mubr.f32.mxu0 0.0
    %v12231 = vand.u32 %v8985, 4294901760
    %12232 = vmatmul.mubr.f32.gmra.mrb[0].mxu0 %v12231
    %v12233 = vpop.f32.mrb[0].mxu0
    %v12234 = vadd.f32 %v11776, %v12233
    %v12235 = vpop.f32.mrb[0].mxu0
    %12236 = vmatprep.mubr.f32.mxu0 0.0
    %v12237 = vand.u32 %v8988, 4294901760
    %12238 = vmatmul.mubr.f32.gmra.mrb[0].mxu0 %v12237
    %v12239 = vpop.f32.mrb[0].mxu0
    %v12240 = vadd.f32 %v11782, %v12239
    %v12241 = vpop.f32.mrb[0].mxu0
    %12242 = vmatprep.mubr.f32.mxu0 0.0
    %v12243 = vand.u32 %v8991, 4294901760
    %12244 = vmatmul.mubr.f32.gmra.mrb[0].mxu0 %v12243
    %v12245 = vpop.f32.mrb[0].mxu0
    %v12246 = vadd.f32 %v11788, %v12245
    %v12247 = vpop.f32.mrb[0].mxu0
    %12248 = vmatprep.mubr.f32.mxu0 0.0
    %v12249 = vand.u32 %v8994, 4294901760
    %12250 = vmatmul.mubr.f32.gmra.mrb[0].mxu0 %v12249
    %v12251 = vpop.f32.mrb[0].mxu0
    %v12252 = vadd.f32 %v11794, %v12251
    %v12253 = vpop.f32.mrb[0].mxu0
    %12254 = vdwg.mxu0
    %v12255 = vsel %vm21, %v105, 0.0
    %v12256 = vsel %vm21, %v106, 0.0
    %v12257 = vsel %vm21, %v107, 0.0
    %v12258 = vsel %vm21, %v108, 0.0
    %v12259 = vsel %vm21, %v109, 0.0
    %v12260 = vsel %vm21, %v110, 0.0
    %v12261 = vsel %vm21, %v111, 0.0
    %v12262 = vsel %vm21, %v112, 0.0
    %v12263 = vsel %vm21, %v113, 0.0
    %v12264 = vsel %vm21, %v114, 0.0
    %v12265 = vsel %vm21, %v115, 0.0
    %v12266 = vsel %vm21, %v116, 0.0
    %v12267 = vsel %vm21, %v117, 0.0
    %v12268 = vsel %vm21, %v118, 0.0
    %v12269 = vsel %vm21, %v119, 0.0
    %v12270 = vsel %vm21, %v120, 0.0
    %v12271 = vsel %vm21, %v121, 0.0
    %v12272 = vsel %vm21, %v122, 0.0
    %v12273 = vsel %vm21, %v123, 0.0
    %v12274 = vsel %vm21, %v124, 0.0
    %v12275 = vsel %vm21, %v125, 0.0
    %v12276 = vsel %vm21, %v126, 0.0
    %v12277 = vsel %vm21, %v127, 0.0
    %v12278 = vsel %vm21, %v128, 0.0
    %v12279 = vsel %vm21, %v129, 0.0
    %v12280 = vsel %vm21, %v130, 0.0
    %v12281 = vsel %vm21, %v131, 0.0
    %v12282 = vsel %vm21, %v132, 0.0
    %v12283 = vsel %vm21, %v133, 0.0
    %v12284 = vsel %vm21, %v134, 0.0
    %v12285 = vsel %vm21, %v135, 0.0
    %v12286 = vsel %vm21, %v136, 0.0
    %v12287 = vsel %vm21, %v137, 0.0
    %v12288 = vsel %vm21, %v138, 0.0
    %v12289 = vsel %vm21, %v139, 0.0
    %v12290 = vsel %vm21, %v140, 0.0
    %v12291 = vsel %vm21, %v141, 0.0
    %v12292 = vsel %vm21, %v142, 0.0
    %v12293 = vsel %vm21, %v143, 0.0
    %v12294 = vsel %vm21, %v144, 0.0
    %v12295 = vsel %vm21, %v145, 0.0
    %v12296 = vsel %vm21, %v146, 0.0
    %v12297 = vsel %vm21, %v147, 0.0
    %v12298 = vsel %vm21, %v148, 0.0
    %v12299 = vsel %vm21, %v149, 0.0
    %v12300 = vsel %vm21, %v150, 0.0
    %v12301 = vsel %vm21, %v151, 0.0
    %v12302 = vsel %vm21, %v152, 0.0
    %v12303 = vsel %vm21, %v153, 0.0
    %v12304 = vsel %vm21, %v154, 0.0
    %v12305 = vsel %vm21, %v155, 0.0
    %v12306 = vsel %vm21, %v156, 0.0
    %v12307 = vsel %vm21, %v157, 0.0
    %v12308 = vsel %vm21, %v158, 0.0
    %v12309 = vsel %vm21, %v159, 0.0
    %v12310 = vsel %vm21, %v160, 0.0
    %v12311 = vsel %vm21, %v161, 0.0
    %v12312 = vsel %vm21, %v162, 0.0
    %v12313 = vsel %vm21, %v163, 0.0
    %v12314 = vsel %vm21, %v164, 0.0
    %v12315 = vsel %vm21, %v165, 0.0
    %v12316 = vsel %vm21, %v166, 0.0
    %v12317 = vsel %vm21, %v167, 0.0
    %v12318 = vsel %vm21, %v168, 0.0
    %v12319 = vadd.f32 %v11874, %v12255
    %v12320 = vadd.f32 %v11880, %v12256
    %v12321 = vadd.f32 %v11886, %v12257
    %v12322 = vadd.f32 %v11892, %v12258
    %v12323 = vadd.f32 %v11898, %v12259
    %v12324 = vadd.f32 %v11904, %v12260
    %v12325 = vadd.f32 %v11910, %v12261
    %v12326 = vadd.f32 %v11916, %v12262
    %v12327 = vadd.f32 %v11922, %v12263
    %v12328 = vadd.f32 %v11928, %v12264
    %v12329 = vadd.f32 %v11934, %v12265
    %v12330 = vadd.f32 %v11940, %v12266
    %v12331 = vadd.f32 %v11946, %v12267
    %v12332 = vadd.f32 %v11952, %v12268
    %v12333 = vadd.f32 %v11958, %v12269
    %v12334 = vadd.f32 %v11964, %v12270
    %v12335 = vadd.f32 %v11970, %v12271
    %v12336 = vadd.f32 %v11976, %v12272
    %v12337 = vadd.f32 %v11982, %v12273
    %v12338 = vadd.f32 %v11988, %v12274
    %v12339 = vadd.f32 %v11994, %v12275
    %v12340 = vadd.f32 %v12000, %v12276
    %v12341 = vadd.f32 %v12006, %v12277
    %v12342 = vadd.f32 %v12012, %v12278
    %v12343 = vadd.f32 %v12018, %v12279
    %v12344 = vadd.f32 %v12024, %v12280
    %v12345 = vadd.f32 %v12030, %v12281
    %v12346 = vadd.f32 %v12036, %v12282
    %v12347 = vadd.f32 %v12042, %v12283
    %v12348 = vadd.f32 %v12048, %v12284
    %v12349 = vadd.f32 %v12054, %v12285
    %v12350 = vadd.f32 %v12060, %v12286
    %v12351 = vadd.f32 %v12066, %v12287
    %v12352 = vadd.f32 %v12072, %v12288
    %v12353 = vadd.f32 %v12078, %v12289
    %v12354 = vadd.f32 %v12084, %v12290
    %v12355 = vadd.f32 %v12090, %v12291
    %v12356 = vadd.f32 %v12096, %v12292
    %v12357 = vadd.f32 %v12102, %v12293
    %v12358 = vadd.f32 %v12108, %v12294
    %v12359 = vadd.f32 %v12114, %v12295
    %v12360 = vadd.f32 %v12120, %v12296
    %v12361 = vadd.f32 %v12126, %v12297
    %v12362 = vadd.f32 %v12132, %v12298
    %v12363 = vadd.f32 %v12138, %v12299
    %v12364 = vadd.f32 %v12144, %v12300
    %v12365 = vadd.f32 %v12150, %v12301
    %v12366 = vadd.f32 %v12156, %v12302
    %v12367 = vadd.f32 %v12162, %v12303
    %v12368 = vadd.f32 %v12168, %v12304
    %v12369 = vadd.f32 %v12174, %v12305
    %v12370 = vadd.f32 %v12180, %v12306
    %v12371 = vadd.f32 %v12186, %v12307
    %v12372 = vadd.f32 %v12192, %v12308
    %v12373 = vadd.f32 %v12198, %v12309
    %v12374 = vadd.f32 %v12204, %v12310
    %v12375 = vadd.f32 %v12210, %v12311
    %v12376 = vadd.f32 %v12216, %v12312
    %v12377 = vadd.f32 %v12222, %v12313
    %v12378 = vadd.f32 %v12228, %v12314
    %v12379 = vadd.f32 %v12234, %v12315
    %v12380 = vadd.f32 %v12240, %v12316
    %v12381 = vadd.f32 %v12246, %v12317
    %v12382 = vadd.f32 %v12252, %v12318
    %v12383 = vmax.f32 %v12319, 0.0
    %v12384 = vmax.f32 %v12320, 0.0
    %v12385 = vmax.f32 %v12321, 0.0
    %v12386 = vmax.f32 %v12322, 0.0
    %v12387 = vmax.f32 %v12323, 0.0
    %v12388 = vmax.f32 %v12324, 0.0
    %v12389 = vmax.f32 %v12325, 0.0
    %v12390 = vmax.f32 %v12326, 0.0
    %v12391 = vmax.f32 %v12327, 0.0
    %v12392 = vmax.f32 %v12328, 0.0
    %v12393 = vmax.f32 %v12329, 0.0
    %v12394 = vmax.f32 %v12330, 0.0
    %v12395 = vmax.f32 %v12331, 0.0
    %v12396 = vmax.f32 %v12332, 0.0
    %v12397 = vmax.f32 %v12333, 0.0
    %v12398 = vmax.f32 %v12334, 0.0
    %v12399 = vmax.f32 %v12335, 0.0
    %v12400 = vmax.f32 %v12336, 0.0
    %v12401 = vmax.f32 %v12337, 0.0
    %v12402 = vmax.f32 %v12338, 0.0
    %v12403 = vmax.f32 %v12339, 0.0
    %v12404 = vmax.f32 %v12340, 0.0
    %v12405 = vmax.f32 %v12341, 0.0
    %v12406 = vmax.f32 %v12342, 0.0
    %v12407 = vmax.f32 %v12343, 0.0
    %v12408 = vmax.f32 %v12344, 0.0
    %v12409 = vmax.f32 %v12345, 0.0
    %v12410 = vmax.f32 %v12346, 0.0
    %v12411 = vmax.f32 %v12347, 0.0
    %v12412 = vmax.f32 %v12348, 0.0
    %v12413 = vmax.f32 %v12349, 0.0
    %v12414 = vmax.f32 %v12350, 0.0
    %v12415 = vmax.f32 %v12351, 0.0
    %v12416 = vmax.f32 %v12352, 0.0
    %v12417 = vmax.f32 %v12353, 0.0
    %v12418 = vmax.f32 %v12354, 0.0
    %v12419 = vmax.f32 %v12355, 0.0
    %v12420 = vmax.f32 %v12356, 0.0
    %v12421 = vmax.f32 %v12357, 0.0
    %v12422 = vmax.f32 %v12358, 0.0
    %v12423 = vmax.f32 %v12359, 0.0
    %v12424 = vmax.f32 %v12360, 0.0
    %v12425 = vmax.f32 %v12361, 0.0
    %v12426 = vmax.f32 %v12362, 0.0
    %v12427 = vmax.f32 %v12363, 0.0
    %v12428 = vmax.f32 %v12364, 0.0
    %v12429 = vmax.f32 %v12365, 0.0
    %v12430 = vmax.f32 %v12366, 0.0
    %v12431 = vmax.f32 %v12367, 0.0
    %v12432 = vmax.f32 %v12368, 0.0
    %v12433 = vmax.f32 %v12369, 0.0
    %v12434 = vmax.f32 %v12370, 0.0
    %v12435 = vmax.f32 %v12371, 0.0
    %v12436 = vmax.f32 %v12372, 0.0
    %v12437 = vmax.f32 %v12373, 0.0
    %v12438 = vmax.f32 %v12374, 0.0
    %v12439 = vmax.f32 %v12375, 0.0
    %v12440 = vmax.f32 %v12376, 0.0
    %v12441 = vmax.f32 %v12377, 0.0
    %v12442 = vmax.f32 %v12378, 0.0
    %v12443 = vmax.f32 %v12379, 0.0
    %v12444 = vmax.f32 %v12380, 0.0
    %v12445 = vmax.f32 %v12381, 0.0
    %v12446 = vmax.f32 %v12382, 0.0
    %12447 = vst [vmem:[#allocation3] sm:$0xff] %v12383
    %12448 = vst [vmem:[#allocation3 + $0x8] sm:$0xff] %v12384
    %12449 = vst [vmem:[#allocation3 + $0x10] sm:$0xff] %v12385
    %12450 = vst [vmem:[#allocation3 + $0x18] sm:$0xff] %v12386
    %12451 = vst [vmem:[#allocation3 + $0x20] sm:$0xff] %v12387
    %12452 = vst [vmem:[#allocation3 + $0x28] sm:$0xff] %v12388
    %12453 = vst [vmem:[#allocation3 + $0x30] sm:$0xff] %v12389
    %12454 = vst [vmem:[#allocation3 + $0x38] sm:$0xff] %v12390
    %12455 = vst [vmem:[#allocation3 + $0x40] sm:$0xff] %v12391
    %12456 = vst [vmem:[#allocation3 + $0x48] sm:$0xff] %v12392
    %12457 = vst [vmem:[#allocation3 + $0x50] sm:$0xff] %v12393
    %12458 = vst [vmem:[#allocation3 + $0x58] sm:$0xff] %v12394
    %12459 = vst [vmem:[#allocation3 + $0x60] sm:$0xff] %v12395
    %12460 = vst [vmem:[#allocation3 + $0x68] sm:$0xff] %v12396
    %12461 = vst [vmem:[#allocation3 + $0x70] sm:$0xff] %v12397
    %12462 = vst [vmem:[#allocation3 + $0x78] sm:$0xff] %v12398
    %12463 = vst [vmem:[#allocation3 + $0x80] sm:$0xff] %v12399
    %12464 = vst [vmem:[#allocation3 + $0x88] sm:$0xff] %v12400
    %12465 = vst [vmem:[#allocation3 + $0x90] sm:$0xff] %v12401
    %12466 = vst [vmem:[#allocation3 + $0x98] sm:$0xff] %v12402
    %12467 = vst [vmem:[#allocation3 + $0xa0] sm:$0xff] %v12403
    %12468 = vst [vmem:[#allocation3 + $0xa8] sm:$0xff] %v12404
    %12469 = vst [vmem:[#allocation3 + $0xb0] sm:$0xff] %v12405
    %12470 = vst [vmem:[#allocation3 + $0xb8] sm:$0xff] %v12406
    %12471 = vst [vmem:[#allocation3 + $0xc0] sm:$0xff] %v12407
    %12472 = vst [vmem:[#allocation3 + $0xc8] sm:$0xff] %v12408
    %12473 = vst [vmem:[#allocation3 + $0xd0] sm:$0xff] %v12409
    %12474 = vst [vmem:[#allocation3 + $0xd8] sm:$0xff] %v12410
    %12475 = vst [vmem:[#allocation3 + $0xe0] sm:$0xff] %v12411
    %12476 = vst [vmem:[#allocation3 + $0xe8] sm:$0xff] %v12412
    %12477 = vst [vmem:[#allocation3 + $0xf0] sm:$0xff] %v12413
    %12478 = vst [vmem:[#allocation3 + $0xf8] sm:$0xff] %v12414
    %12479 = vst [vmem:[#allocation3 + $0x100] sm:$0xff] %v12415
    %12480 = vst [vmem:[#allocation3 + $0x108] sm:$0xff] %v12416
    %12481 = vst [vmem:[#allocation3 + $0x110] sm:$0xff] %v12417
    %12482 = vst [vmem:[#allocation3 + $0x118] sm:$0xff] %v12418
    %12483 = vst [vmem:[#allocation3 + $0x120] sm:$0xff] %v12419
    %12484 = vst [vmem:[#allocation3 + $0x128] sm:$0xff] %v12420
    %12485 = vst [vmem:[#allocation3 + $0x130] sm:$0xff] %v12421
    %12486 = vst [vmem:[#allocation3 + $0x138] sm:$0xff] %v12422
    %12487 = vst [vmem:[#allocation3 + $0x140] sm:$0xff] %v12423
    %12488 = vst [vmem:[#allocation3 + $0x148] sm:$0xff] %v12424
    %12489 = vst [vmem:[#allocation3 + $0x150] sm:$0xff] %v12425
    %12490 = vst [vmem:[#allocation3 + $0x158] sm:$0xff] %v12426
    %12491 = vst [vmem:[#allocation3 + $0x160] sm:$0xff] %v12427
    %12492 = vst [vmem:[#allocation3 + $0x168] sm:$0xff] %v12428
    %12493 = vst [vmem:[#allocation3 + $0x170] sm:$0xff] %v12429
    %12494 = vst [vmem:[#allocation3 + $0x178] sm:$0xff] %v12430
    %12495 = vst [vmem:[#allocation3 + $0x180] sm:$0xff] %v12431
    %12496 = vst [vmem:[#allocation3 + $0x188] sm:$0xff] %v12432
    %12497 = vst [vmem:[#allocation3 + $0x190] sm:$0xff] %v12433
    %12498 = vst [vmem:[#allocation3 + $0x198] sm:$0xff] %v12434
    %12499 = vst [vmem:[#allocation3 + $0x1a0] sm:$0xff] %v12435
    %12500 = vst [vmem:[#allocation3 + $0x1a8] sm:$0xff] %v12436
    %12501 = vst [vmem:[#allocation3 + $0x1b0] sm:$0xff] %v12437
    %12502 = vst [vmem:[#allocation3 + $0x1b8] sm:$0xff] %v12438
    %12503 = vst [vmem:[#allocation3 + $0x1c0] sm:$0xff] %v12439
    %12504 = vst [vmem:[#allocation3 + $0x1c8] sm:$0xff] %v12440
    %12505 = vst [vmem:[#allocation3 + $0x1d0] sm:$0xff] %v12441
    %12506 = vst [vmem:[#allocation3 + $0x1d8] sm:$0xff] %v12442
    %12507 = vst [vmem:[#allocation3 + $0x1e0] sm:$0xff] %v12443
    %12508 = vst [vmem:[#allocation3 + $0x1e8] sm:$0xff] %v12444
    %12509 = vst [vmem:[#allocation3 + $0x1f0] sm:$0xff] %v12445
    %12510 = vst [vmem:[#allocation3 + $0x1f8] sm:$0xff] %v12446
    // Predicated region
    $region22: #{tpu_custom_call.1} parent=1 // pred_check
      _
    $region23: #{tpu_custom_call.1} parent=1 // pred_check_branch
      %12512 = sbr.rel (0) target = $region25
    $region24: #{tpu_custom_call.1} parent=1 // pred_region
      %s12514 = ssub.s32 8192, 8192
      %12515 = vsyncadd [#allocation4], %s12514
      %s12516 = sshll.u32 [#allocation3], 4
      %s12517 = int_to_ptr.vmem [resolvable:$true] %s12516
      %12522 = dma.vmem_to_hbm [thread:$0]  %s12517, 8192, %s5, [#allocation4], 128, 128, 8
    $region25: #{tpu_custom_call.1} parent=1 // pred_fallthru
      _
    // Predicated region
    $region26: #{tpu_custom_call.1} parent=1 // pred_check
      _
    $region27: #{tpu_custom_call.1} parent=1 // pred_check_branch
      %12524 = sbr.rel (0) target = $region29
    $region28: #{tpu_custom_call.1} parent=1 // pred_region
      %12525 = dma.done [#allocation4], 8192
    $region29: #{tpu_custom_call.1} parent=1 // pred_fallthru
      _
    %12526 = vsyncpa [#allocation4], 1

</llo_original>
